<compile_context>
chip_gen: v7x
topology: tpu7x:2x2x1
jax: 0.10.0
libtpu: 0.0.40
codegen_flags: <defaults>
</compile_context>

<pallas_src>
import jax
import jax.numpy as jnp
from jax import lax
from jax.experimental import pallas as pl
from jax.experimental.pallas import tpu as pltpu

NUM_SAMPLES = 160       # matches SDFToNeRF.__init__ (GradientBasedSampler)
NUM_IMPORTANCE = 32


# ----------------------------------------------------------------------------
# Pallas kernel: volume rendering of S samples per ray, tiled over rays.
# ----------------------------------------------------------------------------
def _render_kernel(params_ref, tri_ref, diff_ref, sdf_ref, z_ref, dirs_ref,
                   sh_ref, out_ref):
    alpha_p = params_ref[0]          # nn.Parameter alpha (scalar, SMEM)
    beta_p = params_ref[1]           # nn.Parameter beta  (scalar, SMEM)

    sdf = sdf_ref[...]               # (TR, S)
    z = z_ref[...]                   # (TR, S)
    d = dirs_ref[...]                # (TR, 3)
    tr, s = sdf.shape

    x = d[:, 0:1]                    # (TR, 1) broadcast over samples (lanes)
    y = d[:, 1:2]
    zd = d[:, 2:3]

    # sdf_to_density: sigmoid(alpha * (sdf + beta))
    sigma = 1.0 / (1.0 + jnp.exp(-alpha_p * (sdf + beta_p)))          # (TR, S)

    # delta_i = z_{i+1} - z_i (last sample -> 1e10).  The finite-difference matrix
    # is a constant VMEM-resident input; the matmul rides the otherwise-idle MXU,
    # avoiding unaligned lane slices + concatenate.
    dz = jnp.dot(z, diff_ref[...], preferred_element_type=jnp.float32)  # (TR, S)
    lane = lax.broadcasted_iota(jnp.int32, (tr, s), 1)
    delta = jnp.where(lane == s - 1, jnp.float32(1e10), dz)

    alpha_v = 1.0 - jnp.exp(-sigma * delta)                           # (TR, S)
    sd = sigma * delta

    # accumulated transmittance: T_i = prod_{j<i}(1 - alpha_j)
    #                                = exp(-sum_{j<i} sigma_j * delta_j)
    # exclusive cumsum along lanes as an MXU matmul with the constant
    # strict-upper-triangular 0/1 matrix (VMEM-resident).
    excl = jnp.dot(sd, tri_ref[...], preferred_element_type=jnp.float32)  # (TR, S)
    weights = jnp.exp(-excl) * alpha_v                                # (TR, S)
    wsum = jnp.sum(weights, axis=1, keepdims=True)                    # (TR, 1)

    # Weighted lane-reduction of every SH coefficient first (27 multiplies on
    # (TR,S) + 27 XLU reductions); the basis polynomial is then evaluated on
    # tiny (TR,1) vectors instead of full (TR,S) tiles.
    wk = [jnp.sum(weights * sh_ref[j], axis=1, keepdims=True) for j in range(27)]

    xx = x * x
    yy = y * y
    zz = zd * zd
    b1 = -0.488603 * y
    b2 = 0.488603 * zd
    b3 = -0.488603 * x
    b4 = 1.092548 * (x * y)
    b5 = -1.092548 * (y * zd)
    b6 = 0.315392 * (2.0 * zz - xx - yy)
    b7 = -1.092548 * (x * zd)
    b8 = 0.546274 * (xx - yy)

    chans = []
    for c in range(3):
        k = wk[9 * c: 9 * c + 9]
        chans.append(0.282095 * k[0] + b1 * k[1] + b2 * k[2] + b3 * k[3]
                     + b4 * k[4] + b5 * k[5] + b6 * k[6] + b7 * k[7]
                     + b8 * k[8])                                     # (TR, 1)

    # TODO(synk): output last dim is 3 -> masked store; lane-dense (3,R) layout
    # would need an in-kernel transpose and the output bytes here are tiny.
    out_ref[...] = jnp.concatenate(chans, axis=1) + 1.0 - wsum        # (TR, 3)


def render_rays(sdf, z_vals, dirs, sh, alpha_p, beta_p, tile_rays=128):
    """sdf, z_vals: (R, S); dirs: (R, 3); sh: (27, R, S) -> (R, 3)."""
    R, S = sdf.shape
    tile_rays = min(tile_rays, R)
    assert R % tile_rays == 0
    assert tile_rays == R or tile_rays % 8 == 0

    params = jnp.stack([jnp.asarray(alpha_p, jnp.float32),
                        jnp.asarray(beta_p, jnp.float32)])

    # Constant matrices, built once outside the kernel and kept VMEM-resident via
    # a constant index_map (no per-grid-step iota/compare rebuild, no re-DMA).
    idx = jnp.arange(S)
    tri = (idx[:, None] < idx[None, :]).astype(jnp.float32)            # (S, S)
    diff = ((idx[:, None] == idx[None, :] + 1).astype(jnp.float32)
            - (idx[:, None] == idx[None, :]).astype(jnp.float32))
    diff = diff * (idx[None, :] < S - 1).astype(jnp.float32)           # (S, S)

    return pl.pallas_call(
        _render_kernel,
        out_shape=jax.ShapeDtypeStruct((R, 3), jnp.float32),
        grid=(R // tile_rays,),
        in_specs=[
            pl.BlockSpec(memory_space=pltpu.MemorySpace.SMEM),          # alpha/beta
            pl.BlockSpec((S, S), lambda i: (0, 0)),                     # tri (resident)
            pl.BlockSpec((S, S), lambda i: (0, 0)),                     # diff (resident)
            pl.BlockSpec((tile_rays, S), lambda i: (i, 0)),             # sdf
            pl.BlockSpec((tile_rays, S), lambda i: (i, 0)),             # z_vals
            pl.BlockSpec((tile_rays, 3), lambda i: (i, 0)),             # dirs
            pl.BlockSpec((27, tile_rays, S), lambda i: (0, i, 0)),      # sh coeffs
        ],
        out_specs=pl.BlockSpec((tile_rays, 3), lambda i: (i, 0)),
        compiler_params=pltpu.CompilerParams(
            dimension_semantics=("parallel",)),
    )(params, tri, diff, sdf, z_vals, dirs, sh)


# ----------------------------------------------------------------------------
# Plain-JAX glue: sampler (SDFGrid.get_sdf / gradient / importance sampling).
# ----------------------------------------------------------------------------
def ray_aabb_intersection(rays_o, rays_d, min_bound, max_bound):
    inv_d = 1.0 / rays_d
    t_min = (min_bound - rays_o) * inv_d
    t_max = (max_bound - rays_o) * inv_d
    t_near = jnp.max(jnp.minimum(t_min, t_max), axis=-1)
    t_far = jnp.min(jnp.maximum(t_min, t_max), axis=-1)
    t_near = jnp.maximum(t_near, 0.0)
    valid = t_far > t_near
    return t_near, t_far, valid


def trilinear_sample_cm(grid, pts, min_bound, max_bound):
    """F.grid_sample(mode='bilinear', align_corners=True) equivalent.
    grid: (C, D, H, W); pts: (N, 3) world xyz; coord x->W, y->H, z->D.
    Returns CHANNEL-MAJOR (C, N) so SH values feed the kernel without a
    wrapper-side transpose. Indices are clamped (identical to zero-padding for
    in-bounds points)."""
    C, D, H, W = grid.shape
    pn = (pts - min_bound) / (max_bound - min_bound) * 2.0 - 1.0
    gx = (pn[:, 0] + 1.0) * 0.5 * (W - 1)
    gy = (pn[:, 1] + 1.0) * 0.5 * (H - 1)
    gz = (pn[:, 2] + 1.0) * 0.5 * (D - 1)
    x0f, y0f, z0f = jnp.floor(gx), jnp.floor(gy), jnp.floor(gz)
    wx, wy, wz = gx - x0f, gy - y0f, gz - z0f
    x0 = jnp.clip(x0f.astype(jnp.int32), 0, W - 1)
    x1 = jnp.clip(x0f.astype(jnp.int32) + 1, 0, W - 1)
    y0 = jnp.clip(y0f.astype(jnp.int32), 0, H - 1)
    y1 = jnp.clip(y0f.astype(jnp.int32) + 1, 0, H - 1)
    z0 = jnp.clip(z0f.astype(jnp.int32), 0, D - 1)
    z1 = jnp.clip(z0f.astype(jnp.int32) + 1, 0, D - 1)
    flat = grid.reshape(C, D * H * W)

    def corner(zi, yi, xi):
        return flat[:, (zi * H + yi) * W + xi]      # (C, N)

    return (corner(z0, y0, x0) * (1 - wz) * (1 - wy) * (1 - wx)
            + corner(z0, y0, x1) * (1 - wz) * (1 - wy) * wx
            + corner(z0, y1, x0) * (1 - wz) * wy * (1 - wx)
            + corner(z0, y1, x1) * (1 - wz) * wy * wx
            + corner(z1, y0, x0) * wz * (1 - wy) * (1 - wx)
            + corner(z1, y0, x1) * wz * (1 - wy) * wx
            + corner(z1, y1, x0) * wz * wy * (1 - wx)
            + corner(z1, y1, x1) * wz * wy * wx)    # (C, N)


def sample_uniform(key, rays_o, rays_d, t_near, t_far, num_samples, perturb=True):
    t = jnp.linspace(0.0, 1.0, num_samples)
    z = t_near[:, None] * (1 - t) + t_far[:, None] * t
    if perturb:
        mids = 0.5 * (z[:, 1:] + z[:, :-1])
        upper = jnp.concatenate([mids, z[:, -1:]], axis=-1)
        lower = jnp.concatenate([z[:, :1], mids], axis=-1)
        t_rand = jax.random.uniform(key, z.shape)
        z = lower + (upper - lower) * t_rand
    pts = rays_o[:, None, :] + rays_d[:, None, :] * z[:, :, None]
    return pts, z


def sample_pdf(key, bins, weights, n_samples):
    weights = weights + 1e-5
    pdf = weights / jnp.sum(weights, -1, keepdims=True)
    cdf = jnp.cumsum(pdf, -1)
    cdf = jnp.concatenate([jnp.zeros_like(cdf[..., :1]), cdf], -1)   # (R, S+1)
    bins = jnp.concatenate([bins[..., :1], bins], -1)                # (R, S+1)
    u = jax.random.uniform(key, cdf.shape[:-1] + (n_samples,))
    # searchsorted(right=True): count of cdf entries <= u
    inds = jnp.sum((cdf[..., None, :] <= u[..., :, None]).astype(jnp.int32), axis=-1)
    below = jnp.maximum(0, inds - 1)
    above = jnp.minimum(cdf.shape[-1] - 1, inds)
    cdf_b = jnp.take_along_axis(cdf, below, axis=-1)
    cdf_a = jnp.take_along_axis(cdf, above, axis=-1)
    bins_b = jnp.take_along_axis(bins, below, axis=-1)
    bins_a = jnp.take_along_axis(bins, above, axis=-1)
    denom = cdf_a - cdf_b
    denom = jnp.where(denom < 1e-5, jnp.ones_like(denom), denom)
    t = (u - cdf_b) / denom
    return bins_b + t * (bins_a - bins_b)


@jax.jit
def sdf_to_nerf_forward(key, grid_param, alpha_p, beta_p, rays_o, rays_d,
                        min_bound, max_bound):
    grid = grid_param[0]                              # (28, D, H, W); ch0 = sdf, 1:28 = SH
    t_near, t_far, _valid = ray_aabb_intersection(rays_o, rays_d, min_bound, max_bound)
    # TODO(synk): torch filters invalid rays with boolean indexing (dynamic shape);
    # rays here are constructed so all are valid (checked on host in __main__).

    k_u, k_pdf = jax.random.split(key)
    pts_u, z_u = sample_uniform(k_u, rays_o, rays_d, t_near, t_far,
                                NUM_SAMPLES, perturb=True)
    R = rays_o.shape[0]

    def sdf_fn(p):
        return trilinear_sample_cm(grid[0:1], p, min_bound, max_bound)[0]

    # SDF gradient (torch.autograd.grad equivalent) -> softmax weights.
    pts_flat = pts_u.reshape(-1, 3)
    grads = jax.grad(lambda p: sdf_fn(p).sum())(pts_flat).reshape(R, NUM_SAMPLES, 3)
    gmag = jnp.linalg.norm(grads, axis=-1)
    w = jax.nn.softmax(gmag, axis=-1)

    z_imp = sample_pdf(k_pdf, z_u, w, NUM_IMPORTANCE)
    pts_imp = rays_o[:, None, :] + rays_d[:, None, :] * z_imp[:, :, None]

    pts = jnp.concatenate([pts_u, pts_imp], axis=1)
    z_vals = jnp.concatenate([z_u, z_imp], axis=-1)
    order = jnp.argsort(z_vals, axis=-1)
    z_vals = jnp.take_along_axis(z_vals, order, axis=-1)
    pts = jnp.take_along_axis(pts, jnp.broadcast_to(order[..., None], pts.shape), axis=1)

    S = NUM_SAMPLES + NUM_IMPORTANCE
    pts_flat = pts.reshape(-1, 3)
    sdf_vals = sdf_fn(pts_flat).reshape(R, S)
    # channel-major directly: (27, R*S) -> (27, R, S); no HBM transpose round-trip.
    sh_vals = trilinear_sample_cm(grid[1:], pts_flat, min_bound, max_bound).reshape(27, R, S)

    return render_rays(sdf_vals, z_vals, rays_d, sh_vals, alpha_p, beta_p)


# ----------------------------------------------------------------------------
if __name__ == "__main__":
    key = jax.random.PRNGKey(0)
    k_grid, k_o, k_d, k_samp = jax.random.split(key, 4)

    resolution = (16, 16, 16)
    min_bound = jnp.array([-1.0, -1.0, -1.0], jnp.float32)
    max_bound = jnp.array([1.0, 1.0, 1.0], jnp.float32)

    # Parameters (deterministic). Module init is ones/100; add a small deterministic
    # perturbation so interpolation / gradient / importance sampling are nontrivial.
    grid_param = (jnp.ones((1, 28) + resolution, jnp.float32) / 100.0
                  + 0.05 * jax.random.normal(k_grid, (1, 28) + resolution, jnp.float32))
    alpha_param = jnp.float32(1.0)   # nn.Parameter(torch.tensor(1.0))
    beta_param = jnp.float32(0.0)    # nn.Parameter(torch.tensor(0.0))

    # 256 rays -> tile_rays=128 gives a 2-step grid (keeps both v7x TCs busy),
    # origins outside the box looking inward -> all rays valid by construction.
    R = 256
    oxy = jax.random.uniform(k_o, (R, 2), minval=-0.3, maxval=0.3)
    rays_o = jnp.concatenate([oxy, jnp.full((R, 1), -2.5)], axis=-1).astype(jnp.float32)
    dxy = jax.random.uniform(k_d, (R, 2), minval=-0.15, maxval=0.15) + 0.01
    rays_d = jnp.concatenate([dxy, jnp.ones((R, 1))], axis=-1)
    rays_d = (rays_d / jnp.linalg.norm(rays_d, axis=-1, keepdims=True)).astype(jnp.float32)

    # Validity check on host, outside the jitted forward (no trace-time host sync).
    _, _, valid = ray_aabb_intersection(rays_o, rays_d, min_bound, max_bound)
    assert bool(jnp.all(valid)), "example rays must all intersect the grid"

    out = sdf_to_nerf_forward(k_samp, grid_param, alpha_param, beta_param,
                              rays_o, rays_d, min_bound, max_bound)
    out = jax.block_until_ready(out)
    assert out.shape == (R, 3) and out.dtype == jnp.float32
    assert bool(jnp.all(jnp.isfinite(out)))
    print("KERNEL_OK")
</pallas_src>

<mosaic_0001>
module attributes {stable_mosaic.version = 11 : i64} {
  func.func private @main(%arg0: i32) attributes {dimension_semantics = [#tpu.dimension_semantics<core_parallel>], iteration_bounds = array<i64: 2>, tpu.core_type = #tpu.core_type<sc_scalar_subcore>, window_params = []} {
    return
  }
}

module attributes {stable_mosaic.version = 11 : i64} {
  func.func private @main(%arg0: i32) attributes {dimension_semantics = [#tpu.dimension_semantics<core_parallel>], iteration_bounds = array<i64: 2>, tpu.core_type = #tpu.core_type<sc_scalar_subcore>, window_params = []} {
    return
  }
}

module attributes {stable_mosaic.version = 11 : i64} {
  func.func @_render_kernel(%arg0: i32, %arg1: memref<2xf32, #tpu.memory_space<smem>>, %arg2: memref<192x192xf32, #tpu.memory_space<vmem>>, %arg3: memref<192x192xf32, #tpu.memory_space<vmem>>, %arg4: memref<128x192xf32, #tpu.memory_space<vmem>>, %arg5: memref<128x192xf32, #tpu.memory_space<vmem>>, %arg6: memref<128x3xf32, #tpu.memory_space<vmem>>, %arg7: memref<27x128x192xf32, #tpu.memory_space<vmem>>, %arg8: memref<128x3xf32, #tpu.memory_space<vmem>>) attributes {dimension_semantics = [#tpu.dimension_semantics<parallel>], iteration_bounds = array<i64: 2>, scalar_prefetch = 0 : i64, scratch_operands = 0 : i64, tpu.core_type = #tpu.core_type<tc>, window_params = [{transform_indices = @transform_0, window_bounds = array<i64: 2>}, {pipeline_mode = #tpu.pipeline_mode<synchronous>, transform_indices = @transform_1, window_bounds = array<i64: 192, 192>}, {pipeline_mode = #tpu.pipeline_mode<synchronous>, transform_indices = @transform_2, window_bounds = array<i64: 192, 192>}, {transform_indices = @transform_3, window_bounds = array<i64: 128, 192>}, {transform_indices = @transform_4, window_bounds = array<i64: 128, 192>}, {transform_indices = @transform_5, window_bounds = array<i64: 128, 3>}, {transform_indices = @transform_6, window_bounds = array<i64: 27, 128, 192>}, {transform_indices = @transform_7, window_bounds = array<i64: 128, 3>}]} {
    %c0 = arith.constant 0 : index
    %0 = memref.load %arg1[%c0] : memref<2xf32, #tpu.memory_space<smem>>
    %c1 = arith.constant 1 : index
    %1 = memref.load %arg1[%c1] : memref<2xf32, #tpu.memory_space<smem>>
    %c0_0 = arith.constant 0 : index
    %c0_1 = arith.constant 0 : index
    %2 = vector.load %arg4[%c0_0, %c0_1] : memref<128x192xf32, #tpu.memory_space<vmem>>, vector<128x192xf32>
    %c0_2 = arith.constant 0 : index
    %c0_3 = arith.constant 0 : index
    %3 = vector.load %arg5[%c0_2, %c0_3] : memref<128x192xf32, #tpu.memory_space<vmem>>, vector<128x192xf32>
    %c0_4 = arith.constant 0 : index
    %c0_5 = arith.constant 0 : index
    %4 = vector.load %arg6[%c0_4, %c0_5] : memref<128x3xf32, #tpu.memory_space<vmem>>, vector<128x3xf32>
    %5 = vector.extract_strided_slice %4 {offsets = [0, 0], sizes = [128, 1], strides = [1, 1]} : vector<128x3xf32> to vector<128x1xf32>
    %6 = vector.extract_strided_slice %4 {offsets = [0, 1], sizes = [128, 1], strides = [1, 1]} : vector<128x3xf32> to vector<128x1xf32>
    %7 = vector.extract_strided_slice %4 {offsets = [0, 2], sizes = [128, 1], strides = [1, 1]} : vector<128x3xf32> to vector<128x1xf32>
    %cst = arith.constant 0.000000e+00 : f32
    %8 = arith.subf %cst, %0 : f32
    %9 = vector.broadcast %1 : f32 to vector<128x192xf32>
    %10 = arith.addf %2, %9 : vector<128x192xf32>
    %11 = vector.broadcast %8 : f32 to vector<128x192xf32>
    %12 = arith.mulf %11, %10 : vector<128x192xf32>
    %13 = math.exp %12 : vector<128x192xf32>
    %cst_6 = arith.constant 1.000000e+00 : f32
    %14 = vector.broadcast %cst_6 : f32 to vector<128x192xf32>
    %15 = arith.addf %14, %13 : vector<128x192xf32>
    %cst_7 = arith.constant 1.000000e+00 : f32
    %16 = vector.broadcast %cst_7 : f32 to vector<128x192xf32>
    %17 = arith.divf %16, %15 : vector<128x192xf32>
    %c0_8 = arith.constant 0 : index
    %c0_9 = arith.constant 0 : index
    %18 = vector.load %arg3[%c0_8, %c0_9] : memref<192x192xf32, #tpu.memory_space<vmem>>, vector<192x192xf32>
    %cst_10 = arith.constant dense<0.000000e+00> : vector<128x192xf32>
    %19 = tpu.matmul %3, %18, %cst_10 {dimension_numbers = #tpu.dot_dimension_numbers<[1], [0], [0], [1], [0, 0, 1, 1], [], []>} : vector<128x192xf32>, vector<192x192xf32>, vector<128x192xf32> -> vector<128x192xf32>
    %20 = tpu.iota {dimensions = array<i32: 1>} : vector<128x192xi32>
    %c191_i32 = arith.constant 191 : i32
    %21 = vector.broadcast %c191_i32 : i32 to vector<128x192xi32>
    %22 = arith.cmpi eq, %20, %21 : vector<128x192xi32>
    %cst_11 = arith.constant 1.000000e+10 : f32
    %23 = vector.broadcast %cst_11 : f32 to vector<128x192xf32>
    %24 = arith.select %22, %23, %19 : vector<128x192xi1>, vector<128x192xf32>
    %cst_12 = arith.constant 0.000000e+00 : f32
    %25 = vector.broadcast %cst_12 : f32 to vector<128x192xf32>
    %26 = arith.subf %25, %17 : vector<128x192xf32>
    %27 = arith.mulf %26, %24 : vector<128x192xf32>
    %28 = math.exp %27 : vector<128x192xf32>
    %cst_13 = arith.constant 1.000000e+00 : f32
    %29 = vector.broadcast %cst_13 : f32 to vector<128x192xf32>
    %30 = arith.subf %29, %28 : vector<128x192xf32>
    %31 = arith.mulf %17, %24 : vector<128x192xf32>
    %c0_14 = arith.constant 0 : index
    %c0_15 = arith.constant 0 : index
    %32 = vector.load %arg2[%c0_14, %c0_15] : memref<192x192xf32, #tpu.memory_space<vmem>>, vector<192x192xf32>
    %cst_16 = arith.constant dense<0.000000e+00> : vector<128x192xf32>
    %33 = tpu.matmul %31, %32, %cst_16 {dimension_numbers = #tpu.dot_dimension_numbers<[1], [0], [0], [1], [0, 0, 1, 1], [], []>} : vector<128x192xf32>, vector<192x192xf32>, vector<128x192xf32> -> vector<128x192xf32>
    %cst_17 = arith.constant 0.000000e+00 : f32
    %34 = vector.broadcast %cst_17 : f32 to vector<128x192xf32>
    %35 = arith.subf %34, %33 : vector<128x192xf32>
    %36 = math.exp %35 : vector<128x192xf32>
    %37 = arith.mulf %36, %30 : vector<128x192xf32>
    %cst_18 = arith.constant dense<0.000000e+00> : vector<128xf32>
    %38 = vector.multi_reduction <add>, %37, %cst_18 [1] : vector<128x192xf32> to vector<128xf32>
    %39 = vector.shape_cast %38 : vector<128xf32> to vector<128x1xf32>
    %c0_19 = arith.constant 0 : index
    %c0_20 = arith.constant 0 : index
    %c0_21 = arith.constant 0 : index
    %40 = vector.load %arg7[%c0_19, %c0_20, %c0_21] : memref<27x128x192xf32, #tpu.memory_space<vmem>>, vector<1x128x192xf32>
    %41 = vector.shape_cast %40 : vector<1x128x192xf32> to vector<128x192xf32>
    %42 = arith.mulf %37, %41 : vector<128x192xf32>
    %cst_22 = arith.constant dense<0.000000e+00> : vector<128xf32>
    %43 = vector.multi_reduction <add>, %42, %cst_22 [1] : vector<128x192xf32> to vector<128xf32>
    %44 = vector.shape_cast %43 : vector<128xf32> to vector<128x1xf32>
    %c1_23 = arith.constant 1 : index
    %c0_24 = arith.constant 0 : index
    %c0_25 = arith.constant 0 : index
    %45 = vector.load %arg7[%c1_23, %c0_24, %c0_25] : memref<27x128x192xf32, #tpu.memory_space<vmem>>, vector<1x128x192xf32>
    %46 = vector.shape_cast %45 : vector<1x128x192xf32> to vector<128x192xf32>
    %47 = arith.mulf %37, %46 : vector<128x192xf32>
    %cst_26 = arith.constant dense<0.000000e+00> : vector<128xf32>
    %48 = vector.multi_reduction <add>, %47, %cst_26 [1] : vector<128x192xf32> to vector<128xf32>
    %49 = vector.shape_cast %48 : vector<128xf32> to vector<128x1xf32>
    %c2 = arith.constant 2 : index
    %c0_27 = arith.constant 0 : index
    %c0_28 = arith.constant 0 : index
    %50 = vector.load %arg7[%c2, %c0_27, %c0_28] : memref<27x128x192xf32, #tpu.memory_space<vmem>>, vector<1x128x192xf32>
    %51 = vector.shape_cast %50 : vector<1x128x192xf32> to vector<128x192xf32>
    %52 = arith.mulf %37, %51 : vector<128x192xf32>
    %cst_29 = arith.constant dense<0.000000e+00> : vector<128xf32>
    %53 = vector.multi_reduction <add>, %52, %cst_29 [1] : vector<128x192xf32> to vector<128xf32>
    %54 = vector.shape_cast %53 : vector<128xf32> to vector<128x1xf32>
    %c3 = arith.constant 3 : index
    %c0_30 = arith.constant 0 : index
    %c0_31 = arith.constant 0 : index
    %55 = vector.load %arg7[%c3, %c0_30, %c0_31] : memref<27x128x192xf32, #tpu.memory_space<vmem>>, vector<1x128x192xf32>
    %56 = vector.shape_cast %55 : vector<1x128x192xf32> to vector<128x192xf32>
    %57 = arith.mulf %37, %56 : vector<128x192xf32>
    %cst_32 = arith.constant dense<0.000000e+00> : vector<128xf32>
    %58 = vector.multi_reduction <add>, %57, %cst_32 [1] : vector<128x192xf32> to vector<128xf32>
    %59 = vector.shape_cast %58 : vector<128xf32> to vector<128x1xf32>
    %c4 = arith.constant 4 : index
    %c0_33 = arith.constant 0 : index
    %c0_34 = arith.constant 0 : index
    %60 = vector.load %arg7[%c4, %c0_33, %c0_34] : memref<27x128x192xf32, #tpu.memory_space<vmem>>, vector<1x128x192xf32>
    %61 = vector.shape_cast %60 : vector<1x128x192xf32> to vector<128x192xf32>
    %62 = arith.mulf %37, %61 : vector<128x192xf32>
    %cst_35 = arith.constant dense<0.000000e+00> : vector<128xf32>
    %63 = vector.multi_reduction <add>, %62, %cst_35 [1] : vector<128x192xf32> to vector<128xf32>
    %64 = vector.shape_cast %63 : vector<128xf32> to vector<128x1xf32>
    %c5 = arith.constant 5 : index
    %c0_36 = arith.constant 0 : index
    %c0_37 = arith.constant 0 : index
    %65 = vector.load %arg7[%c5, %c0_36, %c0_37] : memref<27x128x192xf32, #tpu.memory_space<vmem>>, vector<1x128x192xf32>
    %66 = vector.shape_cast %65 : vector<1x128x192xf32> to vector<128x192xf32>
    %67 = arith.mulf %37, %66 : vector<128x192xf32>
    %cst_38 = arith.constant dense<0.000000e+00> : vector<128xf32>
    %68 = vector.multi_reduction <add>, %67, %cst_38 [1] : vector<128x192xf32> to vector<128xf32>
    %69 = vector.shape_cast %68 : vector<128xf32> to vector<128x1xf32>
    %c6 = arith.constant 6 : index
    %c0_39 = arith.constant 0 : index
    %c0_40 = arith.constant 0 : index
    %70 = vector.load %arg7[%c6, %c0_39, %c0_40] : memref<27x128x192xf32, #tpu.memory_space<vmem>>, vector<1x128x192xf32>
    %71 = vector.shape_cast %70 : vector<1x128x192xf32> to vector<128x192xf32>
    %72 = arith.mulf %37, %71 : vector<128x192xf32>
    %cst_41 = arith.constant dense<0.000000e+00> : vector<128xf32>
    %73 = vector.multi_reduction <add>, %72, %cst_41 [1] : vector<128x192xf32> to vector<128xf32>
    %74 = vector.shape_cast %73 : vector<128xf32> to vector<128x1xf32>
    %c7 = arith.constant 7 : index
    %c0_42 = arith.constant 0 : index
    %c0_43 = arith.constant 0 : index
    %75 = vector.load %arg7[%c7, %c0_42, %c0_43] : memref<27x128x192xf32, #tpu.memory_space<vmem>>, vector<1x128x192xf32>
    %76 = vector.shape_cast %75 : vector<1x128x192xf32> to vector<128x192xf32>
    %77 = arith.mulf %37, %76 : vector<128x192xf32>
    %cst_44 = arith.constant dense<0.000000e+00> : vector<128xf32>
    %78 = vector.multi_reduction <add>, %77, %cst_44 [1] : vector<128x192xf32> to vector<128xf32>
    %79 = vector.shape_cast %78 : vector<128xf32> to vector<128x1xf32>
    %c8 = arith.constant 8 : index
    %c0_45 = arith.constant 0 : index
    %c0_46 = arith.constant 0 : index
    %80 = vector.load %arg7[%c8, %c0_45, %c0_46] : memref<27x128x192xf32, #tpu.memory_space<vmem>>, vector<1x128x192xf32>
    %81 = vector.shape_cast %80 : vector<1x128x192xf32> to vector<128x192xf32>
    %82 = arith.mulf %37, %81 : vector<128x192xf32>
    %cst_47 = arith.constant dense<0.000000e+00> : vector<128xf32>
    %83 = vector.multi_reduction <add>, %82, %cst_47 [1] : vector<128x192xf32> to vector<128xf32>
    %84 = vector.shape_cast %83 : vector<128xf32> to vector<128x1xf32>
    %c9 = arith.constant 9 : index
    %c0_48 = arith.constant 0 : index
    %c0_49 = arith.constant 0 : index
    %85 = vector.load %arg7[%c9, %c0_48, %c0_49] : memref<27x128x192xf32, #tpu.memory_space<vmem>>, vector<1x128x192xf32>
    %86 = vector.shape_cast %85 : vector<1x128x192xf32> to vector<128x192xf32>
    %87 = arith.mulf %37, %86 : vector<128x192xf32>
    %cst_50 = arith.constant dense<0.000000e+00> : vector<128xf32>
    %88 = vector.multi_reduction <add>, %87, %cst_50 [1] : vector<128x192xf32> to vector<128xf32>
    %89 = vector.shape_cast %88 : vector<128xf32> to vector<128x1xf32>
    %c10 = arith.constant 10 : index
    %c0_51 = arith.constant 0 : index
    %c0_52 = arith.constant 0 : index
    %90 = vector.load %arg7[%c10, %c0_51, %c0_52] : memref<27x128x192xf32, #tpu.memory_space<vmem>>, vector<1x128x192xf32>
    %91 = vector.shape_cast %90 : vector<1x128x192xf32> to vector<128x192xf32>
    %92 = arith.mulf %37, %91 : vector<128x192xf32>
    %cst_53 = arith.constant dense<0.000000e+00> : vector<128xf32>
    %93 = vector.multi_reduction <add>, %92, %cst_53 [1] : vector<128x192xf32> to vector<128xf32>
    %94 = vector.shape_cast %93 : vector<128xf32> to vector<128x1xf32>
    %c11 = arith.constant 11 : index
    %c0_54 = arith.constant 0 : index
    %c0_55 = arith.constant 0 : index
    %95 = vector.load %arg7[%c11, %c0_54, %c0_55] : memref<27x128x192xf32, #tpu.memory_space<vmem>>, vector<1x128x192xf32>
    %96 = vector.shape_cast %95 : vector<1x128x192xf32> to vector<128x192xf32>
    %97 = arith.mulf %37, %96 : vector<128x192xf32>
    %cst_56 = arith.constant dense<0.000000e+00> : vector<128xf32>
    %98 = vector.multi_reduction <add>, %97, %cst_56 [1] : vector<128x192xf32> to vector<128xf32>
    %99 = vector.shape_cast %98 : vector<128xf32> to vector<128x1xf32>
    %c12 = arith.constant 12 : index
    %c0_57 = arith.constant 0 : index
    %c0_58 = arith.constant 0 : index
    %100 = vector.load %arg7[%c12, %c0_57, %c0_58] : memref<27x128x192xf32, #tpu.memory_space<vmem>>, vector<1x128x192xf32>
    %101 = vector.shape_cast %100 : vector<1x128x192xf32> to vector<128x192xf32>
    %102 = arith.mulf %37, %101 : vector<128x192xf32>
    %cst_59 = arith.constant dense<0.000000e+00> : vector<128xf32>
    %103 = vector.multi_reduction <add>, %102, %cst_59 [1] : vector<128x192xf32> to vector<128xf32>
    %104 = vector.shape_cast %103 : vector<128xf32> to vector<128x1xf32>
    %c13 = arith.constant 13 : index
    %c0_60 = arith.constant 0 : index
    %c0_61 = arith.constant 0 : index
    %105 = vector.load %arg7[%c13, %c0_60, %c0_61] : memref<27x128x192xf32, #tpu.memory_space<vmem>>, vector<1x128x192xf32>
    %106 = vector.shape_cast %105 : vector<1x128x192xf32> to vector<128x192xf32>
    %107 = arith.mulf %37, %106 : vector<128x192xf32>
    %cst_62 = arith.constant dense<0.000000e+00> : vector<128xf32>
    %108 = vector.multi_reduction <add>, %107, %cst_62 [1] : vector<128x192xf32> to vector<128xf32>
    %109 = vector.shape_cast %108 : vector<128xf32> to vector<128x1xf32>
    %c14 = arith.constant 14 : index
    %c0_63 = arith.constant 0 : index
    %c0_64 = arith.constant 0 : index
    %110 = vector.load %arg7[%c14, %c0_63, %c0_64] : memref<27x128x192xf32, #tpu.memory_space<vmem>>, vector<1x128x192xf32>
    %111 = vector.shape_cast %110 : vector<1x128x192xf32> to vector<128x192xf32>
    %112 = arith.mulf %37, %111 : vector<128x192xf32>
    %cst_65 = arith.constant dense<0.000000e+00> : vector<128xf32>
    %113 = vector.multi_reduction <add>, %112, %cst_65 [1] : vector<128x192xf32> to vector<128xf32>
    %114 = vector.shape_cast %113 : vector<128xf32> to vector<128x1xf32>
    %c15 = arith.constant 15 : index
    %c0_66 = arith.constant 0 : index
    %c0_67 = arith.constant 0 : index
    %115 = vector.load %arg7[%c15, %c0_66, %c0_67] : memref<27x128x192xf32, #tpu.memory_space<vmem>>, vector<1x128x192xf32>
    %116 = vector.shape_cast %115 : vector<1x128x192xf32> to vector<128x192xf32>
    %117 = arith.mulf %37, %116 : vector<128x192xf32>
    %cst_68 = arith.constant dense<0.000000e+00> : vector<128xf32>
    %118 = vector.multi_reduction <add>, %117, %cst_68 [1] : vector<128x192xf32> to vector<128xf32>
    %119 = vector.shape_cast %118 : vector<128xf32> to vector<128x1xf32>
    %c16 = arith.constant 16 : index
    %c0_69 = arith.constant 0 : index
    %c0_70 = arith.constant 0 : index
    %120 = vector.load %arg7[%c16, %c0_69, %c0_70] : memref<27x128x192xf32, #tpu.memory_space<vmem>>, vector<1x128x192xf32>
    %121 = vector.shape_cast %120 : vector<1x128x192xf32> to vector<128x192xf32>
    %122 = arith.mulf %37, %121 : vector<128x192xf32>
    %cst_71 = arith.constant dense<0.000000e+00> : vector<128xf32>
    %123 = vector.multi_reduction <add>, %122, %cst_71 [1] : vector<128x192xf32> to vector<128xf32>
    %124 = vector.shape_cast %123 : vector<128xf32> to vector<128x1xf32>
    %c17 = arith.constant 17 : index
    %c0_72 = arith.constant 0 : index
    %c0_73 = arith.constant 0 : index
    %125 = vector.load %arg7[%c17, %c0_72, %c0_73] : memref<27x128x192xf32, #tpu.memory_space<vmem>>, vector<1x128x192xf32>
    %126 = vector.shape_cast %125 : vector<1x128x192xf32> to vector<128x192xf32>
    %127 = arith.mulf %37, %126 : vector<128x192xf32>
    %cst_74 = arith.constant dense<0.000000e+00> : vector<128xf32>
    %128 = vector.multi_reduction <add>, %127, %cst_74 [1] : vector<128x192xf32> to vector<128xf32>
    %129 = vector.shape_cast %128 : vector<128xf32> to vector<128x1xf32>
    %c18 = arith.constant 18 : index
    %c0_75 = arith.constant 0 : index
    %c0_76 = arith.constant 0 : index
    %130 = vector.load %arg7[%c18, %c0_75, %c0_76] : memref<27x128x192xf32, #tpu.memory_space<vmem>>, vector<1x128x192xf32>
    %131 = vector.shape_cast %130 : vector<1x128x192xf32> to vector<128x192xf32>
    %132 = arith.mulf %37, %131 : vector<128x192xf32>
    %cst_77 = arith.constant dense<0.000000e+00> : vector<128xf32>
    %133 = vector.multi_reduction <add>, %132, %cst_77 [1] : vector<128x192xf32> to vector<128xf32>
    %134 = vector.shape_cast %133 : vector<128xf32> to vector<128x1xf32>
    %c19 = arith.constant 19 : index
    %c0_78 = arith.constant 0 : index
    %c0_79 = arith.constant 0 : index
    %135 = vector.load %arg7[%c19, %c0_78, %c0_79] : memref<27x128x192xf32, #tpu.memory_space<vmem>>, vector<1x128x192xf32>
    %136 = vector.shape_cast %135 : vector<1x128x192xf32> to vector<128x192xf32>
    %137 = arith.mulf %37, %136 : vector<128x192xf32>
    %cst_80 = arith.constant dense<0.000000e+00> : vector<128xf32>
    %138 = vector.multi_reduction <add>, %137, %cst_80 [1] : vector<128x192xf32> to vector<128xf32>
    %139 = vector.shape_cast %138 : vector<128xf32> to vector<128x1xf32>
    %c20 = arith.constant 20 : index
    %c0_81 = arith.constant 0 : index
    %c0_82 = arith.constant 0 : index
    %140 = vector.load %arg7[%c20, %c0_81, %c0_82] : memref<27x128x192xf32, #tpu.memory_space<vmem>>, vector<1x128x192xf32>
    %141 = vector.shape_cast %140 : vector<1x128x192xf32> to vector<128x192xf32>
    %142 = arith.mulf %37, %141 : vector<128x192xf32>
    %cst_83 = arith.constant dense<0.000000e+00> : vector<128xf32>
    %143 = vector.multi_reduction <add>, %142, %cst_83 [1] : vector<128x192xf32> to vector<128xf32>
    %144 = vector.shape_cast %143 : vector<128xf32> to vector<128x1xf32>
    %c21 = arith.constant 21 : index
    %c0_84 = arith.constant 0 : index
    %c0_85 = arith.constant 0 : index
    %145 = vector.load %arg7[%c21, %c0_84, %c0_85] : memref<27x128x192xf32, #tpu.memory_space<vmem>>, vector<1x128x192xf32>
    %146 = vector.shape_cast %145 : vector<1x128x192xf32> to vector<128x192xf32>
    %147 = arith.mulf %37, %146 : vector<128x192xf32>
    %cst_86 = arith.constant dense<0.000000e+00> : vector<128xf32>
    %148 = vector.multi_reduction <add>, %147, %cst_86 [1] : vector<128x192xf32> to vector<128xf32>
    %149 = vector.shape_cast %148 : vector<128xf32> to vector<128x1xf32>
    %c22 = arith.constant 22 : index
    %c0_87 = arith.constant 0 : index
    %c0_88 = arith.constant 0 : index
    %150 = vector.load %arg7[%c22, %c0_87, %c0_88] : memref<27x128x192xf32, #tpu.memory_space<vmem>>, vector<1x128x192xf32>
    %151 = vector.shape_cast %150 : vector<1x128x192xf32> to vector<128x192xf32>
    %152 = arith.mulf %37, %151 : vector<128x192xf32>
    %cst_89 = arith.constant dense<0.000000e+00> : vector<128xf32>
    %153 = vector.multi_reduction <add>, %152, %cst_89 [1] : vector<128x192xf32> to vector<128xf32>
    %154 = vector.shape_cast %153 : vector<128xf32> to vector<128x1xf32>
    %c23 = arith.constant 23 : index
    %c0_90 = arith.constant 0 : index
    %c0_91 = arith.constant 0 : index
    %155 = vector.load %arg7[%c23, %c0_90, %c0_91] : memref<27x128x192xf32, #tpu.memory_space<vmem>>, vector<1x128x192xf32>
    %156 = vector.shape_cast %155 : vector<1x128x192xf32> to vector<128x192xf32>
    %157 = arith.mulf %37, %156 : vector<128x192xf32>
    %cst_92 = arith.constant dense<0.000000e+00> : vector<128xf32>
    %158 = vector.multi_reduction <add>, %157, %cst_92 [1] : vector<128x192xf32> to vector<128xf32>
    %159 = vector.shape_cast %158 : vector<128xf32> to vector<128x1xf32>
    %c24 = arith.constant 24 : index
    %c0_93 = arith.constant 0 : index
    %c0_94 = arith.constant 0 : index
    %160 = vector.load %arg7[%c24, %c0_93, %c0_94] : memref<27x128x192xf32, #tpu.memory_space<vmem>>, vector<1x128x192xf32>
    %161 = vector.shape_cast %160 : vector<1x128x192xf32> to vector<128x192xf32>
    %162 = arith.mulf %37, %161 : vector<128x192xf32>
    %cst_95 = arith.constant dense<0.000000e+00> : vector<128xf32>
    %163 = vector.multi_reduction <add>, %162, %cst_95 [1] : vector<128x192xf32> to vector<128xf32>
    %164 = vector.shape_cast %163 : vector<128xf32> to vector<128x1xf32>
    %c25 = arith.constant 25 : index
    %c0_96 = arith.constant 0 : index
    %c0_97 = arith.constant 0 : index
    %165 = vector.load %arg7[%c25, %c0_96, %c0_97] : memref<27x128x192xf32, #tpu.memory_space<vmem>>, vector<1x128x192xf32>
    %166 = vector.shape_cast %165 : vector<1x128x192xf32> to vector<128x192xf32>
    %167 = arith.mulf %37, %166 : vector<128x192xf32>
    %cst_98 = arith.constant dense<0.000000e+00> : vector<128xf32>
    %168 = vector.multi_reduction <add>, %167, %cst_98 [1] : vector<128x192xf32> to vector<128xf32>
    %169 = vector.shape_cast %168 : vector<128xf32> to vector<128x1xf32>
    %c26 = arith.constant 26 : index
    %c0_99 = arith.constant 0 : index
    %c0_100 = arith.constant 0 : index
    %170 = vector.load %arg7[%c26, %c0_99, %c0_100] : memref<27x128x192xf32, #tpu.memory_space<vmem>>, vector<1x128x192xf32>
    %171 = vector.shape_cast %170 : vector<1x128x192xf32> to vector<128x192xf32>
    %172 = arith.mulf %37, %171 : vector<128x192xf32>
    %cst_101 = arith.constant dense<0.000000e+00> : vector<128xf32>
    %173 = vector.multi_reduction <add>, %172, %cst_101 [1] : vector<128x192xf32> to vector<128xf32>
    %174 = vector.shape_cast %173 : vector<128xf32> to vector<128x1xf32>
    %175 = arith.mulf %5, %5 : vector<128x1xf32>
    %176 = arith.mulf %6, %6 : vector<128x1xf32>
    %177 = arith.mulf %7, %7 : vector<128x1xf32>
    %cst_102 = arith.constant -4.886030e-01 : f32
    %178 = vector.broadcast %cst_102 : f32 to vector<128x1xf32>
    %179 = arith.mulf %178, %6 : vector<128x1xf32>
    %cst_103 = arith.constant 4.886030e-01 : f32
    %180 = vector.broadcast %cst_103 : f32 to vector<128x1xf32>
    %181 = arith.mulf %180, %7 : vector<128x1xf32>
    %cst_104 = arith.constant -4.886030e-01 : f32
    %182 = vector.broadcast %cst_104 : f32 to vector<128x1xf32>
    %183 = arith.mulf %182, %5 : vector<128x1xf32>
    %184 = arith.mulf %5, %6 : vector<128x1xf32>
    %cst_105 = arith.constant 1.09254801 : f32
    %185 = vector.broadcast %cst_105 : f32 to vector<128x1xf32>
    %186 = arith.mulf %185, %184 : vector<128x1xf32>
    %187 = arith.mulf %6, %7 : vector<128x1xf32>
    %cst_106 = arith.constant -1.09254801 : f32
    %188 = vector.broadcast %cst_106 : f32 to vector<128x1xf32>
    %189 = arith.mulf %188, %187 : vector<128x1xf32>
    %cst_107 = arith.constant 2.000000e+00 : f32
    %190 = vector.broadcast %cst_107 : f32 to vector<128x1xf32>
    %191 = arith.mulf %190, %177 : vector<128x1xf32>
    %192 = arith.subf %191, %175 : vector<128x1xf32>
    %193 = arith.subf %192, %176 : vector<128x1xf32>
    %cst_108 = arith.constant 3.153920e-01 : f32
    %194 = vector.broadcast %cst_108 : f32 to vector<128x1xf32>
    %195 = arith.mulf %194, %193 : vector<128x1xf32>
    %196 = arith.mulf %5, %7 : vector<128x1xf32>
    %cst_109 = arith.constant -1.09254801 : f32
    %197 = vector.broadcast %cst_109 : f32 to vector<128x1xf32>
    %198 = arith.mulf %197, %196 : vector<128x1xf32>
    %199 = arith.subf %175, %176 : vector<128x1xf32>
    %cst_110 = arith.constant 5.462740e-01 : f32
    %200 = vector.broadcast %cst_110 : f32 to vector<128x1xf32>
    %201 = arith.mulf %200, %199 : vector<128x1xf32>
    %cst_111 = arith.constant 2.820950e-01 : f32
    %202 = vector.broadcast %cst_111 : f32 to vector<128x1xf32>
    %203 = arith.mulf %202, %44 : vector<128x1xf32>
    %204 = arith.mulf %179, %49 : vector<128x1xf32>
    %205 = arith.addf %203, %204 : vector<128x1xf32>
    %206 = arith.mulf %181, %54 : vector<128x1xf32>
    %207 = arith.addf %205, %206 : vector<128x1xf32>
    %208 = arith.mulf %183, %59 : vector<128x1xf32>
    %209 = arith.addf %207, %208 : vector<128x1xf32>
    %210 = arith.mulf %186, %64 : vector<128x1xf32>
    %211 = arith.addf %209, %210 : vector<128x1xf32>
    %212 = arith.mulf %189, %69 : vector<128x1xf32>
    %213 = arith.addf %211, %212 : vector<128x1xf32>
    %214 = arith.mulf %195, %74 : vector<128x1xf32>
    %215 = arith.addf %213, %214 : vector<128x1xf32>
    %216 = arith.mulf %198, %79 : vector<128x1xf32>
    %217 = arith.addf %215, %216 : vector<128x1xf32>
    %218 = arith.mulf %201, %84 : vector<128x1xf32>
    %219 = arith.addf %217, %218 : vector<128x1xf32>
    %cst_112 = arith.constant 2.820950e-01 : f32
    %220 = vector.broadcast %cst_112 : f32 to vector<128x1xf32>
    %221 = arith.mulf %220, %89 : vector<128x1xf32>
    %222 = arith.mulf %179, %94 : vector<128x1xf32>
    %223 = arith.addf %221, %222 : vector<128x1xf32>
    %224 = arith.mulf %181, %99 : vector<128x1xf32>
    %225 = arith.addf %223, %224 : vector<128x1xf32>
    %226 = arith.mulf %183, %104 : vector<128x1xf32>
    %227 = arith.addf %225, %226 : vector<128x1xf32>
    %228 = arith.mulf %186, %109 : vector<128x1xf32>
    %229 = arith.addf %227, %228 : vector<128x1xf32>
    %230 = arith.mulf %189, %114 : vector<128x1xf32>
    %231 = arith.addf %229, %230 : vector<128x1xf32>
    %232 = arith.mulf %195, %119 : vector<128x1xf32>
    %233 = arith.addf %231, %232 : vector<128x1xf32>
    %234 = arith.mulf %198, %124 : vector<128x1xf32>
    %235 = arith.addf %233, %234 : vector<128x1xf32>
    %236 = arith.mulf %201, %129 : vector<128x1xf32>
    %237 = arith.addf %235, %236 : vector<128x1xf32>
    %cst_113 = arith.constant 2.820950e-01 : f32
    %238 = vector.broadcast %cst_113 : f32 to vector<128x1xf32>
    %239 = arith.mulf %238, %134 : vector<128x1xf32>
    %240 = arith.mulf %179, %139 : vector<128x1xf32>
    %241 = arith.addf %239, %240 : vector<128x1xf32>
    %242 = arith.mulf %181, %144 : vector<128x1xf32>
    %243 = arith.addf %241, %242 : vector<128x1xf32>
    %244 = arith.mulf %183, %149 : vector<128x1xf32>
    %245 = arith.addf %243, %244 : vector<128x1xf32>
    %246 = arith.mulf %186, %154 : vector<128x1xf32>
    %247 = arith.addf %245, %246 : vector<128x1xf32>
    %248 = arith.mulf %189, %159 : vector<128x1xf32>
    %249 = arith.addf %247, %248 : vector<128x1xf32>
    %250 = arith.mulf %195, %164 : vector<128x1xf32>
    %251 = arith.addf %249, %250 : vector<128x1xf32>
    %252 = arith.mulf %198, %169 : vector<128x1xf32>
    %253 = arith.addf %251, %252 : vector<128x1xf32>
    %254 = arith.mulf %201, %174 : vector<128x1xf32>
    %255 = arith.addf %253, %254 : vector<128x1xf32>
    %256 = tpu.concatenate %219, %237, %255 in 1 : vector<128x1xf32>, vector<128x1xf32>, vector<128x1xf32> -> vector<128x3xf32>
    %cst_114 = arith.constant 1.000000e+00 : f32
    %257 = vector.broadcast %cst_114 : f32 to vector<128x3xf32>
    %258 = arith.addf %256, %257 : vector<128x3xf32>
    %259 = vector.broadcast %39 : vector<128x1xf32> to vector<128x3xf32>
    %260 = arith.subf %258, %259 : vector<128x3xf32>
    %c0_115 = arith.constant 0 : index
    %c0_116 = arith.constant 0 : index
    %261 = vector.load %arg8[%c0_115, %c0_116] : memref<128x3xf32, #tpu.memory_space<vmem>>, vector<128x3xf32>
    tpu.vector_store %arg8[%c0_115, %c0_116], %260 {strides = array<i32>} : memref<128x3xf32, #tpu.memory_space<vmem>>, vector<128x3xf32>,
    return
  }
  func.func @transform_0(%arg0: i32) -> i32 {
    %c0_i32 = arith.constant 0 : i32
    %c0_i32_0 = arith.constant 0 : i32
    return %c0_i32 : i32
  }
  func.func @transform_1(%arg0: i32) -> (i32, i32) {
    %c0_i32 = arith.constant 0 : i32
    %c0_i32_0 = arith.constant 0 : i32
    %c0_i32_1 = arith.constant 0 : i32
    return %c0_i32, %c0_i32_0 : i32, i32
  }
  func.func @transform_2(%arg0: i32) -> (i32, i32) {
    %c0_i32 = arith.constant 0 : i32
    %c0_i32_0 = arith.constant 0 : i32
    %c0_i32_1 = arith.constant 0 : i32
    return %c0_i32, %c0_i32_0 : i32, i32
  }
  func.func @transform_3(%arg0: i32) -> (i32, i32) {
    %c0_i32 = arith.constant 0 : i32
    %c0_i32_0 = arith.constant 0 : i32
    return %arg0, %c0_i32 : i32, i32
  }
  func.func @transform_4(%arg0: i32) -> (i32, i32) {
    %c0_i32 = arith.constant 0 : i32
    %c0_i32_0 = arith.constant 0 : i32
    return %arg0, %c0_i32 : i32, i32
  }
  func.func @transform_5(%arg0: i32) -> (i32, i32) {
    %c0_i32 = arith.constant 0 : i32
    %c0_i32_0 = arith.constant 0 : i32
    return %arg0, %c0_i32 : i32, i32
  }
  func.func @transform_6(%arg0: i32) -> (i32, i32, i32) {
    %c0_i32 = arith.constant 0 : i32
    %c0_i32_0 = arith.constant 0 : i32
    %c0_i32_1 = arith.constant 0 : i32
    return %c0_i32, %arg0, %c0_i32_0 : i32, i32, i32
  }
  func.func @transform_7(%arg0: i32) -> (i32, i32) {
    %c0_i32 = arith.constant 0 : i32
    %c0_i32_0 = arith.constant 0 : i32
    return %arg0, %c0_i32 : i32, i32
  }
}

</mosaic_0001>

<llo_original>
// kernel: sub.118
$region0: #{sub.118}
  #allocation4 [shape = 's32[1]{0}', space=sflag, size = 0x4, scoped, tag = 'scoped memory for sub.118']
  %s0 = inlined_call_operand.hbm [shape: f32[3], index: 0, kind: input, shape index: {}]
  %s1 = inlined_call_operand.hbm [shape: f32[3], index: 1, kind: input, shape index: {}]
  %s2 = inlined_call_operand.vmem [shape: f32[3], index: 2, kind: output, shape index: {}]
  $region1: #{sub.118} parent=0
    #allocation0 [shape = 'u8[512]{0}', space=vmem, size = 0x400, scoped, tag = 'operand span for operand 0']
    #allocation1 [shape = 's32[1]{0}', space=sflag, size = 0x4, scoped, tag = 'scoped memory for sub.118']
    #allocation2 [shape = 'u8[512]{0}', space=vmem, size = 0x400, scoped, tag = 'operand span for operand 1']
    #allocation3 [shape = 's32[1]{0}', space=sflag, size = 0x4, scoped, tag = 'scoped memory for sub.118']
    %3 = vsyncpa [#allocation1], 0
    %4 = vsyncpa [#allocation3], 0
    %s6 = ssub.s32 16, 16
    %7 = vsyncadd [#allocation1], %s6
    %s9 = sshll.u32 [#allocation0], 4
    %s10 = int_to_ptr.vmem [resolvable:$true] %s9
    %12 = dma.hbm_to_vmem [thread:$0]  %s0, 16, %s10, [#allocation1]
    %s14 = ssub.s32 16, 16
    %15 = vsyncadd [#allocation3], %s14
    %s17 = sshll.u32 [#allocation2], 4
    %s18 = int_to_ptr.vmem [resolvable:$true] %s17
    %20 = dma.hbm_to_vmem [thread:$0]  %s1, 16, %s18, [#allocation3]
    %21 = dma.done [#allocation1], 16
    %22 = dma.done [#allocation3], 16
    %v23 = vld [vmem:[#allocation0] sm:$0x1]
    %v24 = vld [vmem:[#allocation2] sm:$0x1]
    %25 = xla_tuple %v23, %v24
    %26 = xla_tuple %25
    %v27 = vsub.f32 %v23, %v24
    %28 = xla_tuple %v27
    %29 = vst [vmem:[%s2] sm:$0x1] %v27
    %30 = vsyncpa [#allocation1], 1
    %31 = vsyncpa [#allocation3], 1

// kernel: sdf_to_nerf_forward.3
$region0: #{sdf_to_nerf_forward.3}
  #allocation0 [shape = 'u32[]', space=smem, size = 0x4, offset = 0x4, fixed_abs, tag = 'smem constant byte address 0x4 - core index']
  #allocation1 [shape = 'u32[144,128]{1,0:T(1,128)}', space=vmem, size = 0x12000, scoped, tag = 'internal scratch']
  %s0 = inlined_call_operand.vmem [shape: f32[2], index: 0, kind: input, shape index: {}]
  %s1 = inlined_call_operand.vmem [shape: f32[192,192], index: 1, kind: input, shape index: {}]
  %s2 = inlined_call_operand.vmem [shape: f32[192,192], index: 2, kind: input, shape index: {}]
  %s3 = inlined_call_operand.vmem [shape: f32[256,192], index: 3, kind: input, shape index: {}]
  %s4 = inlined_call_operand.vmem [shape: f32[256,192], index: 4, kind: input, shape index: {}]
  %s5 = inlined_call_operand.vmem [shape: f32[256,3], index: 5, kind: input, shape index: {}]
  %s6 = inlined_call_operand.vmem [shape: f32[27,256,192], index: 6, kind: input, shape index: {}]
  %s7 = inlined_call_operand.vmem [shape: f32[256,3], index: 7, kind: output, shape index: {}]
  %s8 = sld [smem:[#allocation0]]
  $region88: #{sdf_to_nerf_forward.3} parent=0
    _
  %s10 = ssub.s32 1, %s8
  %s11 = scalar_select 0, %s10, %s8
  $region1: #{sdf_to_nerf_forward.3} parent=0
    #allocation2 [shape = 'u8[512]{0}', space=smem, size = 0x200, scoped, tag = 'input window, operand 0, single buffered']
    #allocation3 [shape = 's32[2]{0}', space=sflag, size = 0x8, scoped, tag = 'scoped memory for sdf_to_nerf_forward.3']
    #allocation4 [shape = 'u8[7077888]{0}', space=vmem, size = 0x6c0000, scoped, tag = 'input window, operand 6']
    %12 = vsyncpa [#allocation3], 0
    loop: start=0, step=1, limit=4
    $region2: #{sdf_to_nerf_forward.3} parent=1 // loop_pre_header
      _
    $region3: #{sdf_to_nerf_forward.3} parent=1 // loop_header
      %s14 = sphi 0, %s18
      %p15 = scmp.ge.s32.totalorder %s14, 4
      %s22 = sphi 0, %s22
      %s24 = sphi 0, %s22
      %s25 = sphi 0, %s24
      %s39 = sphi 0, %s25
      %s43 = sphi 0, %s43
      %s45 = sphi 0, %s43
      %s46 = sphi 0, %s45
      %s60 = sphi 0, %s46
      %s64 = sphi 0, %s64
      %s66 = sphi 0, %s64
      %s67 = sphi 0, %s66
      %s81 = sphi 0, %s67
      %s87 = sphi 0, %s89
      %s90 = sphi 0, %s87
      %s91 = sphi 0, %s90
      %s107 = sphi 0, %s91
      %s113 = sphi 0, %s115
      %s116 = sphi 0, %s113
      %s117 = sphi 0, %s116
      %s133 = sphi 0, %s117
      %s139 = sphi 0, %s141
      %s142 = sphi 0, %s139
      %s143 = sphi 0, %s142
      %s159 = sphi 0, %s143
      %s165 = sphi 0, %s167
      %s168 = sphi 0, %s165
      %s169 = sphi 0, %s168
      %s185 = sphi 0, %s169
      %s191 = sphi 0, %s193
      %s194 = sphi 0, %s191
      %s195 = sphi 0, %s194
      %s211 = sphi 0, %s195
    $region4: #{sdf_to_nerf_forward.3} parent=1 // loop_header_branch
      %17 = sbr.rel (%p15) target = $region8
    $region5: #{sdf_to_nerf_forward.3} parent=1 // loop_body
      %s19 = ssub.s32 %s14, 1
      %s20 = ssub.s32 %s14, 2
      %s21 = sadd.s32 %s14, 1
      %s23 = sadd.s32 %s22, 1
      %p26 = scmp.eq.s32.totalorder %s14, 1
      %p27 = scmp.ne.s32.totalorder %s22, %s24
      %p28 = scmp.eq.s32.totalorder %s14, 0
      %p29 = por %p27, %p28
      %p30 = scmp.ne.s32.totalorder %s22, %s24
      %p31 = scmp.eq.s32.totalorder %s19, 1
      %p32 = por %p30, %p31
      %p33 = scmp.ne.s32.totalorder %s24, %s25
      %p34 = scmp.eq.s32.totalorder %s19, 0
      %p35 = por %p33, %p34
      %p36 = scmp.ne.s32.totalorder %s24, %s25
      %p37 = scmp.eq.s32.totalorder %s20, 1
      %p38 = por %p36, %p37
      %p40 = scmp.ne.s32.totalorder %s25, %s39
      %p41 = scmp.eq.s32.totalorder %s20, 0
      %p42 = por %p40, %p41
      %s44 = sadd.s32 %s43, 1
      %p47 = scmp.eq.s32.totalorder %s14, 1
      %p48 = scmp.ne.s32.totalorder %s43, %s45
      %p49 = scmp.eq.s32.totalorder %s14, 0
      %p50 = por %p48, %p49
      %p51 = scmp.ne.s32.totalorder %s43, %s45
      %p52 = scmp.eq.s32.totalorder %s19, 1
      %p53 = por %p51, %p52
      %p54 = scmp.ne.s32.totalorder %s45, %s46
      %p55 = scmp.eq.s32.totalorder %s19, 0
      %p56 = por %p54, %p55
      %p57 = scmp.ne.s32.totalorder %s45, %s46
      %p58 = scmp.eq.s32.totalorder %s20, 1
      %p59 = por %p57, %p58
      %p61 = scmp.ne.s32.totalorder %s46, %s60
      %p62 = scmp.eq.s32.totalorder %s20, 0
      %p63 = por %p61, %p62
      %s65 = sadd.s32 %s64, 1
      %p68 = scmp.eq.s32.totalorder %s14, 1
      %p69 = scmp.ne.s32.totalorder %s64, %s66
      %p70 = scmp.eq.s32.totalorder %s14, 0
      %p71 = por %p69, %p70
      %p72 = scmp.ne.s32.totalorder %s64, %s66
      %p73 = scmp.eq.s32.totalorder %s19, 1
      %p74 = por %p72, %p73
      %p75 = scmp.ne.s32.totalorder %s66, %s67
      %p76 = scmp.eq.s32.totalorder %s19, 0
      %p77 = por %p75, %p76
      %p78 = scmp.ne.s32.totalorder %s66, %s67
      %p79 = scmp.eq.s32.totalorder %s20, 1
      %p80 = por %p78, %p79
      %p82 = scmp.ne.s32.totalorder %s67, %s81
      %p83 = scmp.eq.s32.totalorder %s20, 0
      %p84 = por %p82, %p83
      %s85 = ssub.s32 %s14, %s21
      %p86 = scmp.eq.s32.totalorder %s85, 0
      %s88 = sadd.s32 %s87, 1
      %s89 = scalar_select %p86, %s87, %s88
      %p92 = pneg %p86
      %p93 = scmp.eq.s32.totalorder %s14, 1
      %p94 = por %p92, %p93
      %p95 = scmp.ne.s32.totalorder %s87, %s90
      %p96 = scmp.eq.s32.totalorder %s14, 0
      %p97 = por %p95, %p96
      %p98 = scmp.ne.s32.totalorder %s87, %s90
      %p99 = scmp.eq.s32.totalorder %s19, 1
      %p100 = por %p98, %p99
      %p101 = scmp.ne.s32.totalorder %s90, %s91
      %p102 = scmp.eq.s32.totalorder %s19, 0
      %p103 = por %p101, %p102
      %p104 = scmp.ne.s32.totalorder %s90, %s91
      %p105 = scmp.eq.s32.totalorder %s20, 1
      %p106 = por %p104, %p105
      %p108 = scmp.ne.s32.totalorder %s91, %s107
      %p109 = scmp.eq.s32.totalorder %s20, 0
      %p110 = por %p108, %p109
      %s111 = ssub.s32 %s14, %s21
      %p112 = scmp.eq.s32.totalorder %s111, 0
      %s114 = sadd.s32 %s113, 1
      %s115 = scalar_select %p112, %s113, %s114
      %p118 = pneg %p112
      %p119 = scmp.eq.s32.totalorder %s14, 1
      %p120 = por %p118, %p119
      %p121 = scmp.ne.s32.totalorder %s113, %s116
      %p122 = scmp.eq.s32.totalorder %s14, 0
      %p123 = por %p121, %p122
      %p124 = scmp.ne.s32.totalorder %s113, %s116
      %p125 = scmp.eq.s32.totalorder %s19, 1
      %p126 = por %p124, %p125
      %p127 = scmp.ne.s32.totalorder %s116, %s117
      %p128 = scmp.eq.s32.totalorder %s19, 0
      %p129 = por %p127, %p128
      %p130 = scmp.ne.s32.totalorder %s116, %s117
      %p131 = scmp.eq.s32.totalorder %s20, 1
      %p132 = por %p130, %p131
      %p134 = scmp.ne.s32.totalorder %s117, %s133
      %p135 = scmp.eq.s32.totalorder %s20, 0
      %p136 = por %p134, %p135
      %s137 = ssub.s32 %s14, %s21
      %p138 = scmp.eq.s32.totalorder %s137, 0
      %s140 = sadd.s32 %s139, 1
      %s141 = scalar_select %p138, %s139, %s140
      %p144 = pneg %p138
      %p145 = scmp.eq.s32.totalorder %s14, 1
      %p146 = por %p144, %p145
      %p147 = scmp.ne.s32.totalorder %s139, %s142
      %p148 = scmp.eq.s32.totalorder %s14, 0
      %p149 = por %p147, %p148
      %p150 = scmp.ne.s32.totalorder %s139, %s142
      %p151 = scmp.eq.s32.totalorder %s19, 1
      %p152 = por %p150, %p151
      %p153 = scmp.ne.s32.totalorder %s142, %s143
      %p154 = scmp.eq.s32.totalorder %s19, 0
      %p155 = por %p153, %p154
      %p156 = scmp.ne.s32.totalorder %s142, %s143
      %p157 = scmp.eq.s32.totalorder %s20, 1
      %p158 = por %p156, %p157
      %p160 = scmp.ne.s32.totalorder %s143, %s159
      %p161 = scmp.eq.s32.totalorder %s20, 0
      %p162 = por %p160, %p161
      %s163 = ssub.s32 %s14, %s21
      %p164 = scmp.eq.s32.totalorder %s163, 0
      %s166 = sadd.s32 %s165, 1
      %s167 = scalar_select %p164, %s165, %s166
      %p170 = pneg %p164
      %p171 = scmp.eq.s32.totalorder %s14, 1
      %p172 = por %p170, %p171
      %p173 = scmp.ne.s32.totalorder %s165, %s168
      %p174 = scmp.eq.s32.totalorder %s14, 0
      %p175 = por %p173, %p174
      %p176 = scmp.ne.s32.totalorder %s165, %s168
      %p177 = scmp.eq.s32.totalorder %s19, 1
      %p178 = por %p176, %p177
      %p179 = scmp.ne.s32.totalorder %s168, %s169
      %p180 = scmp.eq.s32.totalorder %s19, 0
      %p181 = por %p179, %p180
      %p182 = scmp.ne.s32.totalorder %s168, %s169
      %p183 = scmp.eq.s32.totalorder %s20, 1
      %p184 = por %p182, %p183
      %p186 = scmp.ne.s32.totalorder %s169, %s185
      %p187 = scmp.eq.s32.totalorder %s20, 0
      %p188 = por %p186, %p187
      %s189 = ssub.s32 %s14, %s21
      %p190 = scmp.eq.s32.totalorder %s189, 0
      %s192 = sadd.s32 %s191, 1
      %s193 = scalar_select %p190, %s191, %s192
      %p196 = pneg %p190
      %p197 = scmp.eq.s32.totalorder %s14, 1
      %p198 = por %p196, %p197
      %p199 = scmp.ne.s32.totalorder %s191, %s194
      %p200 = scmp.eq.s32.totalorder %s14, 0
      %p201 = por %p199, %p200
      %p202 = scmp.ne.s32.totalorder %s191, %s194
      %p203 = scmp.eq.s32.totalorder %s19, 1
      %p204 = por %p202, %p203
      %p205 = scmp.ne.s32.totalorder %s194, %s195
      %p206 = scmp.eq.s32.totalorder %s19, 0
      %p207 = por %p205, %p206
      %p208 = scmp.ne.s32.totalorder %s194, %s195
      %p209 = scmp.eq.s32.totalorder %s20, 1
      %p210 = por %p208, %p209
      %p212 = scmp.ne.s32.totalorder %s195, %s211
      %p213 = scmp.eq.s32.totalorder %s20, 0
      %p214 = por %p212, %p213
      %p215 = scmp.le.s32.totalorder 1, %s14
      %p216 = scmp.lt.s32.totalorder %s14, 3
      %p217 = pnand %p215, %p216
      %p218 = pneg %p217
      // Predicated region
      $region9: #{sdf_to_nerf_forward.3} parent=5 // pred_check
        _
      $region10: #{sdf_to_nerf_forward.3} parent=5 // pred_check_branch
        %220 = sbr.rel (%p217) target = $region12
      $region11: #{sdf_to_nerf_forward.3} parent=5 // pred_region
        %s221 = ssub.s32 %s14, 1
        // Predicated region
        $region13: #{sdf_to_nerf_forward.3} parent=11 // pred_check
          %p222 = pneg %p35
        $region14: #{sdf_to_nerf_forward.3} parent=11 // pred_check_branch
          %224 = sbr.rel (%p222) target = $region16
        $region15: #{sdf_to_nerf_forward.3} parent=11 // pred_region
          %s226 = ssub.s32 16, 16
          %227 = vsyncadd [#allocation3], %s226
          %s229 = sshll.u32 %s0, 4
          %s230 = int_to_ptr.vmem [resolvable:$true] %s229
          %232 = dma.vmem_to_smem %s230, 16, [#allocation2], [#allocation3]
        $region16: #{sdf_to_nerf_forward.3} parent=11 // pred_fallthru
          _
        // Predicated region
        $region17: #{sdf_to_nerf_forward.3} parent=11 // pred_check
          %p233 = pneg %p56
        $region18: #{sdf_to_nerf_forward.3} parent=11 // pred_check_branch
          %235 = sbr.rel (%p233) target = $region20
        $region19: #{sdf_to_nerf_forward.3} parent=11 // pred_region
          _
        $region20: #{sdf_to_nerf_forward.3} parent=11 // pred_fallthru
          _
        // Predicated region
        $region21: #{sdf_to_nerf_forward.3} parent=11 // pred_check
          %p236 = pneg %p77
        $region22: #{sdf_to_nerf_forward.3} parent=11 // pred_check_branch
          %238 = sbr.rel (%p236) target = $region24
        $region23: #{sdf_to_nerf_forward.3} parent=11 // pred_region
          _
        $region24: #{sdf_to_nerf_forward.3} parent=11 // pred_fallthru
          _
      $region12: #{sdf_to_nerf_forward.3} parent=5 // pred_fallthru
        _
      %p239 = scmp.lt.s32.totalorder %s14, 2
      // Predicated region
      $region25: #{sdf_to_nerf_forward.3} parent=5 // pred_check
        %p240 = pneg %p239
      $region26: #{sdf_to_nerf_forward.3} parent=5 // pred_check_branch
        %242 = sbr.rel (%p240) target = $region28
      $region27: #{sdf_to_nerf_forward.3} parent=5 // pred_region
        // Predicated region
        $region29: #{sdf_to_nerf_forward.3} parent=27 // pred_check
          %p243 = pneg %p97
        $region30: #{sdf_to_nerf_forward.3} parent=27 // pred_check_branch
          %245 = sbr.rel (%p243) target = $region32
        $region31: #{sdf_to_nerf_forward.3} parent=27 // pred_region
          %s246 = smul.u32 16, %s14
          %p247 = scmp.lt.s32.totalorder %s246, 31
          %s248 = scalar_select %p247, %s246, 31
          %s249 = smul.addr %s248, 2
          %s250 = smul.addr %s249, 8
          %s251 = scalar_lea.vmem %s3, %s250
          %s252 = smul.u32 16, %s14
        $region32: #{sdf_to_nerf_forward.3} parent=27 // pred_fallthru
          _
        // Predicated region
        $region33: #{sdf_to_nerf_forward.3} parent=27 // pred_check
          %p253 = pneg %p123
        $region34: #{sdf_to_nerf_forward.3} parent=27 // pred_check_branch
          %255 = sbr.rel (%p253) target = $region36
        $region35: #{sdf_to_nerf_forward.3} parent=27 // pred_region
          %s256 = smul.u32 16, %s14
          %p257 = scmp.lt.s32.totalorder %s256, 31
          %s258 = scalar_select %p257, %s256, 31
          %s259 = smul.addr %s258, 2
          %s260 = smul.addr %s259, 8
          %s261 = scalar_lea.vmem %s4, %s260
          %s262 = smul.u32 16, %s14
        $region36: #{sdf_to_nerf_forward.3} parent=27 // pred_fallthru
          _
        // Predicated region
        $region37: #{sdf_to_nerf_forward.3} parent=27 // pred_check
          %p263 = pneg %p149
        $region38: #{sdf_to_nerf_forward.3} parent=27 // pred_check_branch
          %265 = sbr.rel (%p263) target = $region40
        $region39: #{sdf_to_nerf_forward.3} parent=27 // pred_region
          %s266 = smul.u32 16, %s14
          %p267 = scmp.lt.s32.totalorder %s266, 31
          %s268 = scalar_select %p267, %s266, 31
          %s269 = smul.addr %s268, 8
          %s270 = scalar_lea.vmem %s5, %s269
          %s271 = smul.u32 16, %s14
        $region40: #{sdf_to_nerf_forward.3} parent=27 // pred_fallthru
          _
        // Predicated region
        $region41: #{sdf_to_nerf_forward.3} parent=27 // pred_check
          %p272 = pneg %p175
        $region42: #{sdf_to_nerf_forward.3} parent=27 // pred_check_branch
          %274 = sbr.rel (%p272) target = $region44
        $region43: #{sdf_to_nerf_forward.3} parent=27 // pred_region
          %s275 = sand.u32 %s165, 1
          %s276 = sand.u32 %s165, 1
          %s277 = smul.addr %s276, 6912
          %s278 = scalar_lea.vmem [#allocation4], %s277
          %s279 = smul.u32 16, %s14
          %s280 = smul.addr %s279, 2
          %s281 = smul.addr %s280, 8
          %s282 = scalar_lea.vmem %s6, %s281
          // Predicated region
          $region45: #{sdf_to_nerf_forward.3} parent=43 // pred_check
            _
          $region46: #{sdf_to_nerf_forward.3} parent=43 // pred_check_branch
            %284 = sbr.rel (0) target = $region48
          $region47: #{sdf_to_nerf_forward.3} parent=43 // pred_region
            // Predicated region
            $region49: #{sdf_to_nerf_forward.3} parent=47 // pred_check
              _
            $region50: #{sdf_to_nerf_forward.3} parent=47 // pred_check_branch
              %286 = sbr.rel (0) target = $region52
            $region51: #{sdf_to_nerf_forward.3} parent=47 // pred_region
              loop: start=0, step=1, limit=1
              $region53: #{sdf_to_nerf_forward.3} parent=51 // loop_pre_header
                _
              $region54: #{sdf_to_nerf_forward.3} parent=51 // loop_header
                %s288 = sphi 0, %s292
                %p289 = scmp.ge.s32.totalorder %s288, 1
                %s293 = sphi %s282, %s282
                %s294 = sphi %s278, %s278
              $region55: #{sdf_to_nerf_forward.3} parent=51 // loop_header_branch
                %291 = sbr.rel (%p289) target = $region59
              $region56: #{sdf_to_nerf_forward.3} parent=51 // loop_body
                %v295 = vld [vmem:[%s293] sm:$0xff]
                %296 = vst [vmem:[%s294] sm:$0xff] %v295
                %v297 = vld [vmem:[%s293 + $0x8] sm:$0xff]
                %298 = vst [vmem:[%s294 + $0x8] sm:$0xff] %v297
                %v299 = vld [vmem:[%s293 + $0x10] sm:$0xff]
                %300 = vst [vmem:[%s294 + $0x10] sm:$0xff] %v299
                %v301 = vld [vmem:[%s293 + $0x18] sm:$0xff]
                %302 = vst [vmem:[%s294 + $0x18] sm:$0xff] %v301
                %v303 = vld [vmem:[%s293 + $0x20] sm:$0xff]
                %304 = vst [vmem:[%s294 + $0x20] sm:$0xff] %v303
                %v305 = vld [vmem:[%s293 + $0x28] sm:$0xff]
                %306 = vst [vmem:[%s294 + $0x28] sm:$0xff] %v305
                %v307 = vld [vmem:[%s293 + $0x30] sm:$0xff]
                %308 = vst [vmem:[%s294 + $0x30] sm:$0xff] %v307
                %v309 = vld [vmem:[%s293 + $0x38] sm:$0xff]
                %310 = vst [vmem:[%s294 + $0x38] sm:$0xff] %v309
                %v311 = vld [vmem:[%s293 + $0x40] sm:$0xff]
                %312 = vst [vmem:[%s294 + $0x40] sm:$0xff] %v311
                %v313 = vld [vmem:[%s293 + $0x48] sm:$0xff]
                %314 = vst [vmem:[%s294 + $0x48] sm:$0xff] %v313
                %v315 = vld [vmem:[%s293 + $0x50] sm:$0xff]
                %316 = vst [vmem:[%s294 + $0x50] sm:$0xff] %v315
                %v317 = vld [vmem:[%s293 + $0x58] sm:$0xff]
                %318 = vst [vmem:[%s294 + $0x58] sm:$0xff] %v317
                %v319 = vld [vmem:[%s293 + $0x60] sm:$0xff]
                %320 = vst [vmem:[%s294 + $0x60] sm:$0xff] %v319
                %v321 = vld [vmem:[%s293 + $0x68] sm:$0xff]
                %322 = vst [vmem:[%s294 + $0x68] sm:$0xff] %v321
                %v323 = vld [vmem:[%s293 + $0x70] sm:$0xff]
                %324 = vst [vmem:[%s294 + $0x70] sm:$0xff] %v323
                %v325 = vld [vmem:[%s293 + $0x78] sm:$0xff]
                %326 = vst [vmem:[%s294 + $0x78] sm:$0xff] %v325
                %v327 = vld [vmem:[%s293 + $0x80] sm:$0xff]
                %328 = vst [vmem:[%s294 + $0x80] sm:$0xff] %v327
                %v329 = vld [vmem:[%s293 + $0x88] sm:$0xff]
                %330 = vst [vmem:[%s294 + $0x88] sm:$0xff] %v329
                %v331 = vld [vmem:[%s293 + $0x90] sm:$0xff]
                %332 = vst [vmem:[%s294 + $0x90] sm:$0xff] %v331
                %v333 = vld [vmem:[%s293 + $0x98] sm:$0xff]
                %334 = vst [vmem:[%s294 + $0x98] sm:$0xff] %v333
                %v335 = vld [vmem:[%s293 + $0xa0] sm:$0xff]
                %336 = vst [vmem:[%s294 + $0xa0] sm:$0xff] %v335
                %v337 = vld [vmem:[%s293 + $0xa8] sm:$0xff]
                %338 = vst [vmem:[%s294 + $0xa8] sm:$0xff] %v337
                %v339 = vld [vmem:[%s293 + $0xb0] sm:$0xff]
                %340 = vst [vmem:[%s294 + $0xb0] sm:$0xff] %v339
                %v341 = vld [vmem:[%s293 + $0xb8] sm:$0xff]
                %342 = vst [vmem:[%s294 + $0xb8] sm:$0xff] %v341
                %v343 = vld [vmem:[%s293 + $0xc0] sm:$0xff]
                %344 = vst [vmem:[%s294 + $0xc0] sm:$0xff] %v343
                %v345 = vld [vmem:[%s293 + $0xc8] sm:$0xff]
                %346 = vst [vmem:[%s294 + $0xc8] sm:$0xff] %v345
                %v347 = vld [vmem:[%s293 + $0xd0] sm:$0xff]
                %348 = vst [vmem:[%s294 + $0xd0] sm:$0xff] %v347
                %v349 = vld [vmem:[%s293 + $0xd8] sm:$0xff]
                %350 = vst [vmem:[%s294 + $0xd8] sm:$0xff] %v349
                %v351 = vld [vmem:[%s293 + $0xe0] sm:$0xff]
                %352 = vst [vmem:[%s294 + $0xe0] sm:$0xff] %v351
                %v353 = vld [vmem:[%s293 + $0xe8] sm:$0xff]
                %354 = vst [vmem:[%s294 + $0xe8] sm:$0xff] %v353
                %v355 = vld [vmem:[%s293 + $0xf0] sm:$0xff]
                %356 = vst [vmem:[%s294 + $0xf0] sm:$0xff] %v355
                %v357 = vld [vmem:[%s293 + $0xf8] sm:$0xff]
                %358 = vst [vmem:[%s294 + $0xf8] sm:$0xff] %v357
                %v359 = vld [vmem:[%s293 + $0x200] sm:$0xff]
                %360 = vst [vmem:[%s294 + $0x100] sm:$0xff] %v359
                %v361 = vld [vmem:[%s293 + $0x208] sm:$0xff]
                %362 = vst [vmem:[%s294 + $0x108] sm:$0xff] %v361
                %v363 = vld [vmem:[%s293 + $0x210] sm:$0xff]
                %364 = vst [vmem:[%s294 + $0x110] sm:$0xff] %v363
                %v365 = vld [vmem:[%s293 + $0x218] sm:$0xff]
                %366 = vst [vmem:[%s294 + $0x118] sm:$0xff] %v365
                %v367 = vld [vmem:[%s293 + $0x220] sm:$0xff]
                %368 = vst [vmem:[%s294 + $0x120] sm:$0xff] %v367
                %v369 = vld [vmem:[%s293 + $0x228] sm:$0xff]
                %370 = vst [vmem:[%s294 + $0x128] sm:$0xff] %v369
                %v371 = vld [vmem:[%s293 + $0x230] sm:$0xff]
                %372 = vst [vmem:[%s294 + $0x130] sm:$0xff] %v371
                %v373 = vld [vmem:[%s293 + $0x238] sm:$0xff]
                %374 = vst [vmem:[%s294 + $0x138] sm:$0xff] %v373
                %v375 = vld [vmem:[%s293 + $0x240] sm:$0xff]
                %376 = vst [vmem:[%s294 + $0x140] sm:$0xff] %v375
                %v377 = vld [vmem:[%s293 + $0x248] sm:$0xff]
                %378 = vst [vmem:[%s294 + $0x148] sm:$0xff] %v377
                %v379 = vld [vmem:[%s293 + $0x250] sm:$0xff]
                %380 = vst [vmem:[%s294 + $0x150] sm:$0xff] %v379
                %v381 = vld [vmem:[%s293 + $0x258] sm:$0xff]
                %382 = vst [vmem:[%s294 + $0x158] sm:$0xff] %v381
                %v383 = vld [vmem:[%s293 + $0x260] sm:$0xff]
                %384 = vst [vmem:[%s294 + $0x160] sm:$0xff] %v383
                %v385 = vld [vmem:[%s293 + $0x268] sm:$0xff]
                %386 = vst [vmem:[%s294 + $0x168] sm:$0xff] %v385
                %v387 = vld [vmem:[%s293 + $0x270] sm:$0xff]
                %388 = vst [vmem:[%s294 + $0x170] sm:$0xff] %v387
                %v389 = vld [vmem:[%s293 + $0x278] sm:$0xff]
                %390 = vst [vmem:[%s294 + $0x178] sm:$0xff] %v389
                %v391 = vld [vmem:[%s293 + $0x280] sm:$0xff]
                %392 = vst [vmem:[%s294 + $0x180] sm:$0xff] %v391
                %v393 = vld [vmem:[%s293 + $0x288] sm:$0xff]
                %394 = vst [vmem:[%s294 + $0x188] sm:$0xff] %v393
                %v395 = vld [vmem:[%s293 + $0x290] sm:$0xff]
                %396 = vst [vmem:[%s294 + $0x190] sm:$0xff] %v395
                %v397 = vld [vmem:[%s293 + $0x298] sm:$0xff]
                %398 = vst [vmem:[%s294 + $0x198] sm:$0xff] %v397
                %v399 = vld [vmem:[%s293 + $0x2a0] sm:$0xff]
                %400 = vst [vmem:[%s294 + $0x1a0] sm:$0xff] %v399
                %v401 = vld [vmem:[%s293 + $0x2a8] sm:$0xff]
                %402 = vst [vmem:[%s294 + $0x1a8] sm:$0xff] %v401
                %v403 = vld [vmem:[%s293 + $0x2b0] sm:$0xff]
                %404 = vst [vmem:[%s294 + $0x1b0] sm:$0xff] %v403
                %v405 = vld [vmem:[%s293 + $0x2b8] sm:$0xff]
                %406 = vst [vmem:[%s294 + $0x1b8] sm:$0xff] %v405
                %v407 = vld [vmem:[%s293 + $0x2c0] sm:$0xff]
                %408 = vst [vmem:[%s294 + $0x1c0] sm:$0xff] %v407
                %v409 = vld [vmem:[%s293 + $0x2c8] sm:$0xff]
                %410 = vst [vmem:[%s294 + $0x1c8] sm:$0xff] %v409
                %v411 = vld [vmem:[%s293 + $0x2d0] sm:$0xff]
                %412 = vst [vmem:[%s294 + $0x1d0] sm:$0xff] %v411
                %v413 = vld [vmem:[%s293 + $0x2d8] sm:$0xff]
                %414 = vst [vmem:[%s294 + $0x1d8] sm:$0xff] %v413
                %v415 = vld [vmem:[%s293 + $0x2e0] sm:$0xff]
                %416 = vst [vmem:[%s294 + $0x1e0] sm:$0xff] %v415
                %v417 = vld [vmem:[%s293 + $0x2e8] sm:$0xff]
                %418 = vst [vmem:[%s294 + $0x1e8] sm:$0xff] %v417
                %v419 = vld [vmem:[%s293 + $0x2f0] sm:$0xff]
                %420 = vst [vmem:[%s294 + $0x1f0] sm:$0xff] %v419
                %v421 = vld [vmem:[%s293 + $0x2f8] sm:$0xff]
                %422 = vst [vmem:[%s294 + $0x1f8] sm:$0xff] %v421
                %v423 = vld [vmem:[%s293 + $0x400] sm:$0xff]
                %424 = vst [vmem:[%s294 + $0x200] sm:$0xff] %v423
                %v425 = vld [vmem:[%s293 + $0x408] sm:$0xff]
                %426 = vst [vmem:[%s294 + $0x208] sm:$0xff] %v425
                %v427 = vld [vmem:[%s293 + $0x410] sm:$0xff]
                %428 = vst [vmem:[%s294 + $0x210] sm:$0xff] %v427
                %v429 = vld [vmem:[%s293 + $0x418] sm:$0xff]
                %430 = vst [vmem:[%s294 + $0x218] sm:$0xff] %v429
                %v431 = vld [vmem:[%s293 + $0x420] sm:$0xff]
                %432 = vst [vmem:[%s294 + $0x220] sm:$0xff] %v431
                %v433 = vld [vmem:[%s293 + $0x428] sm:$0xff]
                %434 = vst [vmem:[%s294 + $0x228] sm:$0xff] %v433
                %v435 = vld [vmem:[%s293 + $0x430] sm:$0xff]
                %436 = vst [vmem:[%s294 + $0x230] sm:$0xff] %v435
                %v437 = vld [vmem:[%s293 + $0x438] sm:$0xff]
                %438 = vst [vmem:[%s294 + $0x238] sm:$0xff] %v437
                %v439 = vld [vmem:[%s293 + $0x440] sm:$0xff]
                %440 = vst [vmem:[%s294 + $0x240] sm:$0xff] %v439
                %v441 = vld [vmem:[%s293 + $0x448] sm:$0xff]
                %442 = vst [vmem:[%s294 + $0x248] sm:$0xff] %v441
                %v443 = vld [vmem:[%s293 + $0x450] sm:$0xff]
                %444 = vst [vmem:[%s294 + $0x250] sm:$0xff] %v443
                %v445 = vld [vmem:[%s293 + $0x458] sm:$0xff]
                %446 = vst [vmem:[%s294 + $0x258] sm:$0xff] %v445
                %v447 = vld [vmem:[%s293 + $0x460] sm:$0xff]
                %448 = vst [vmem:[%s294 + $0x260] sm:$0xff] %v447
                %v449 = vld [vmem:[%s293 + $0x468] sm:$0xff]
                %450 = vst [vmem:[%s294 + $0x268] sm:$0xff] %v449
                %v451 = vld [vmem:[%s293 + $0x470] sm:$0xff]
                %452 = vst [vmem:[%s294 + $0x270] sm:$0xff] %v451
                %v453 = vld [vmem:[%s293 + $0x478] sm:$0xff]
                %454 = vst [vmem:[%s294 + $0x278] sm:$0xff] %v453
                %v455 = vld [vmem:[%s293 + $0x480] sm:$0xff]
                %456 = vst [vmem:[%s294 + $0x280] sm:$0xff] %v455
                %v457 = vld [vmem:[%s293 + $0x488] sm:$0xff]
                %458 = vst [vmem:[%s294 + $0x288] sm:$0xff] %v457
                %v459 = vld [vmem:[%s293 + $0x490] sm:$0xff]
                %460 = vst [vmem:[%s294 + $0x290] sm:$0xff] %v459
                %v461 = vld [vmem:[%s293 + $0x498] sm:$0xff]
                %462 = vst [vmem:[%s294 + $0x298] sm:$0xff] %v461
                %v463 = vld [vmem:[%s293 + $0x4a0] sm:$0xff]
                %464 = vst [vmem:[%s294 + $0x2a0] sm:$0xff] %v463
                %v465 = vld [vmem:[%s293 + $0x4a8] sm:$0xff]
                %466 = vst [vmem:[%s294 + $0x2a8] sm:$0xff] %v465
                %v467 = vld [vmem:[%s293 + $0x4b0] sm:$0xff]
                %468 = vst [vmem:[%s294 + $0x2b0] sm:$0xff] %v467
                %v469 = vld [vmem:[%s293 + $0x4b8] sm:$0xff]
                %470 = vst [vmem:[%s294 + $0x2b8] sm:$0xff] %v469
                %v471 = vld [vmem:[%s293 + $0x4c0] sm:$0xff]
                %472 = vst [vmem:[%s294 + $0x2c0] sm:$0xff] %v471
                %v473 = vld [vmem:[%s293 + $0x4c8] sm:$0xff]
                %474 = vst [vmem:[%s294 + $0x2c8] sm:$0xff] %v473
                %v475 = vld [vmem:[%s293 + $0x4d0] sm:$0xff]
                %476 = vst [vmem:[%s294 + $0x2d0] sm:$0xff] %v475
                %v477 = vld [vmem:[%s293 + $0x4d8] sm:$0xff]
                %478 = vst [vmem:[%s294 + $0x2d8] sm:$0xff] %v477
                %v479 = vld [vmem:[%s293 + $0x4e0] sm:$0xff]
                %480 = vst [vmem:[%s294 + $0x2e0] sm:$0xff] %v479
                %v481 = vld [vmem:[%s293 + $0x4e8] sm:$0xff]
                %482 = vst [vmem:[%s294 + $0x2e8] sm:$0xff] %v481
                %v483 = vld [vmem:[%s293 + $0x4f0] sm:$0xff]
                %484 = vst [vmem:[%s294 + $0x2f0] sm:$0xff] %v483
                %v485 = vld [vmem:[%s293 + $0x4f8] sm:$0xff]
                %486 = vst [vmem:[%s294 + $0x2f8] sm:$0xff] %v485
                %v487 = vld [vmem:[%s293 + $0x600] sm:$0xff]
                %488 = vst [vmem:[%s294 + $0x300] sm:$0xff] %v487
                %v489 = vld [vmem:[%s293 + $0x608] sm:$0xff]
                %490 = vst [vmem:[%s294 + $0x308] sm:$0xff] %v489
                %v491 = vld [vmem:[%s293 + $0x610] sm:$0xff]
                %492 = vst [vmem:[%s294 + $0x310] sm:$0xff] %v491
                %v493 = vld [vmem:[%s293 + $0x618] sm:$0xff]
                %494 = vst [vmem:[%s294 + $0x318] sm:$0xff] %v493
                %v495 = vld [vmem:[%s293 + $0x620] sm:$0xff]
                %496 = vst [vmem:[%s294 + $0x320] sm:$0xff] %v495
                %v497 = vld [vmem:[%s293 + $0x628] sm:$0xff]
                %498 = vst [vmem:[%s294 + $0x328] sm:$0xff] %v497
                %v499 = vld [vmem:[%s293 + $0x630] sm:$0xff]
                %500 = vst [vmem:[%s294 + $0x330] sm:$0xff] %v499
                %v501 = vld [vmem:[%s293 + $0x638] sm:$0xff]
                %502 = vst [vmem:[%s294 + $0x338] sm:$0xff] %v501
                %v503 = vld [vmem:[%s293 + $0x640] sm:$0xff]
                %504 = vst [vmem:[%s294 + $0x340] sm:$0xff] %v503
                %v505 = vld [vmem:[%s293 + $0x648] sm:$0xff]
                %506 = vst [vmem:[%s294 + $0x348] sm:$0xff] %v505
                %v507 = vld [vmem:[%s293 + $0x650] sm:$0xff]
                %508 = vst [vmem:[%s294 + $0x350] sm:$0xff] %v507
                %v509 = vld [vmem:[%s293 + $0x658] sm:$0xff]
                %510 = vst [vmem:[%s294 + $0x358] sm:$0xff] %v509
                %v511 = vld [vmem:[%s293 + $0x660] sm:$0xff]
                %512 = vst [vmem:[%s294 + $0x360] sm:$0xff] %v511
                %v513 = vld [vmem:[%s293 + $0x668] sm:$0xff]
                %514 = vst [vmem:[%s294 + $0x368] sm:$0xff] %v513
                %v515 = vld [vmem:[%s293 + $0x670] sm:$0xff]
                %516 = vst [vmem:[%s294 + $0x370] sm:$0xff] %v515
                %v517 = vld [vmem:[%s293 + $0x678] sm:$0xff]
                %518 = vst [vmem:[%s294 + $0x378] sm:$0xff] %v517
                %v519 = vld [vmem:[%s293 + $0x680] sm:$0xff]
                %520 = vst [vmem:[%s294 + $0x380] sm:$0xff] %v519
                %v521 = vld [vmem:[%s293 + $0x688] sm:$0xff]
                %522 = vst [vmem:[%s294 + $0x388] sm:$0xff] %v521
                %v523 = vld [vmem:[%s293 + $0x690] sm:$0xff]
                %524 = vst [vmem:[%s294 + $0x390] sm:$0xff] %v523
                %v525 = vld [vmem:[%s293 + $0x698] sm:$0xff]
                %526 = vst [vmem:[%s294 + $0x398] sm:$0xff] %v525
                %v527 = vld [vmem:[%s293 + $0x6a0] sm:$0xff]
                %528 = vst [vmem:[%s294 + $0x3a0] sm:$0xff] %v527
                %v529 = vld [vmem:[%s293 + $0x6a8] sm:$0xff]
                %530 = vst [vmem:[%s294 + $0x3a8] sm:$0xff] %v529
                %v531 = vld [vmem:[%s293 + $0x6b0] sm:$0xff]
                %532 = vst [vmem:[%s294 + $0x3b0] sm:$0xff] %v531
                %v533 = vld [vmem:[%s293 + $0x6b8] sm:$0xff]
                %534 = vst [vmem:[%s294 + $0x3b8] sm:$0xff] %v533
                %v535 = vld [vmem:[%s293 + $0x6c0] sm:$0xff]
                %536 = vst [vmem:[%s294 + $0x3c0] sm:$0xff] %v535
                %v537 = vld [vmem:[%s293 + $0x6c8] sm:$0xff]
                %538 = vst [vmem:[%s294 + $0x3c8] sm:$0xff] %v537
                %v539 = vld [vmem:[%s293 + $0x6d0] sm:$0xff]
                %540 = vst [vmem:[%s294 + $0x3d0] sm:$0xff] %v539
                %v541 = vld [vmem:[%s293 + $0x6d8] sm:$0xff]
                %542 = vst [vmem:[%s294 + $0x3d8] sm:$0xff] %v541
                %v543 = vld [vmem:[%s293 + $0x6e0] sm:$0xff]
                %544 = vst [vmem:[%s294 + $0x3e0] sm:$0xff] %v543
                %v545 = vld [vmem:[%s293 + $0x6e8] sm:$0xff]
                %546 = vst [vmem:[%s294 + $0x3e8] sm:$0xff] %v545
                %v547 = vld [vmem:[%s293 + $0x6f0] sm:$0xff]
                %548 = vst [vmem:[%s294 + $0x3f0] sm:$0xff] %v547
                %v549 = vld [vmem:[%s293 + $0x6f8] sm:$0xff]
                %550 = vst [vmem:[%s294 + $0x3f8] sm:$0xff] %v549
                %v551 = vld [vmem:[%s293 + $0x800] sm:$0xff]
                %552 = vst [vmem:[%s294 + $0x400] sm:$0xff] %v551
                %v553 = vld [vmem:[%s293 + $0x808] sm:$0xff]
                %554 = vst [vmem:[%s294 + $0x408] sm:$0xff] %v553
                %v555 = vld [vmem:[%s293 + $0x810] sm:$0xff]
                %556 = vst [vmem:[%s294 + $0x410] sm:$0xff] %v555
                %v557 = vld [vmem:[%s293 + $0x818] sm:$0xff]
                %558 = vst [vmem:[%s294 + $0x418] sm:$0xff] %v557
                %v559 = vld [vmem:[%s293 + $0x820] sm:$0xff]
                %560 = vst [vmem:[%s294 + $0x420] sm:$0xff] %v559
                %v561 = vld [vmem:[%s293 + $0x828] sm:$0xff]
                %562 = vst [vmem:[%s294 + $0x428] sm:$0xff] %v561
                %v563 = vld [vmem:[%s293 + $0x830] sm:$0xff]
                %564 = vst [vmem:[%s294 + $0x430] sm:$0xff] %v563
                %v565 = vld [vmem:[%s293 + $0x838] sm:$0xff]
                %566 = vst [vmem:[%s294 + $0x438] sm:$0xff] %v565
                %v567 = vld [vmem:[%s293 + $0x840] sm:$0xff]
                %568 = vst [vmem:[%s294 + $0x440] sm:$0xff] %v567
                %v569 = vld [vmem:[%s293 + $0x848] sm:$0xff]
                %570 = vst [vmem:[%s294 + $0x448] sm:$0xff] %v569
                %v571 = vld [vmem:[%s293 + $0x850] sm:$0xff]
                %572 = vst [vmem:[%s294 + $0x450] sm:$0xff] %v571
                %v573 = vld [vmem:[%s293 + $0x858] sm:$0xff]
                %574 = vst [vmem:[%s294 + $0x458] sm:$0xff] %v573
                %v575 = vld [vmem:[%s293 + $0x860] sm:$0xff]
                %576 = vst [vmem:[%s294 + $0x460] sm:$0xff] %v575
                %v577 = vld [vmem:[%s293 + $0x868] sm:$0xff]
                %578 = vst [vmem:[%s294 + $0x468] sm:$0xff] %v577
                %v579 = vld [vmem:[%s293 + $0x870] sm:$0xff]
                %580 = vst [vmem:[%s294 + $0x470] sm:$0xff] %v579
                %v581 = vld [vmem:[%s293 + $0x878] sm:$0xff]
                %582 = vst [vmem:[%s294 + $0x478] sm:$0xff] %v581
                %v583 = vld [vmem:[%s293 + $0x880] sm:$0xff]
                %584 = vst [vmem:[%s294 + $0x480] sm:$0xff] %v583
                %v585 = vld [vmem:[%s293 + $0x888] sm:$0xff]
                %586 = vst [vmem:[%s294 + $0x488] sm:$0xff] %v585
                %v587 = vld [vmem:[%s293 + $0x890] sm:$0xff]
                %588 = vst [vmem:[%s294 + $0x490] sm:$0xff] %v587
                %v589 = vld [vmem:[%s293 + $0x898] sm:$0xff]
                %590 = vst [vmem:[%s294 + $0x498] sm:$0xff] %v589
                %v591 = vld [vmem:[%s293 + $0x8a0] sm:$0xff]
                %592 = vst [vmem:[%s294 + $0x4a0] sm:$0xff] %v591
                %v593 = vld [vmem:[%s293 + $0x8a8] sm:$0xff]
                %594 = vst [vmem:[%s294 + $0x4a8] sm:$0xff] %v593
                %v595 = vld [vmem:[%s293 + $0x8b0] sm:$0xff]
                %596 = vst [vmem:[%s294 + $0x4b0] sm:$0xff] %v595
                %v597 = vld [vmem:[%s293 + $0x8b8] sm:$0xff]
                %598 = vst [vmem:[%s294 + $0x4b8] sm:$0xff] %v597
                %v599 = vld [vmem:[%s293 + $0x8c0] sm:$0xff]
                %600 = vst [vmem:[%s294 + $0x4c0] sm:$0xff] %v599
                %v601 = vld [vmem:[%s293 + $0x8c8] sm:$0xff]
                %602 = vst [vmem:[%s294 + $0x4c8] sm:$0xff] %v601
                %v603 = vld [vmem:[%s293 + $0x8d0] sm:$0xff]
                %604 = vst [vmem:[%s294 + $0x4d0] sm:$0xff] %v603
                %v605 = vld [vmem:[%s293 + $0x8d8] sm:$0xff]
                %606 = vst [vmem:[%s294 + $0x4d8] sm:$0xff] %v605
                %v607 = vld [vmem:[%s293 + $0x8e0] sm:$0xff]
                %608 = vst [vmem:[%s294 + $0x4e0] sm:$0xff] %v607
                %v609 = vld [vmem:[%s293 + $0x8e8] sm:$0xff]
                %610 = vst [vmem:[%s294 + $0x4e8] sm:$0xff] %v609
                %v611 = vld [vmem:[%s293 + $0x8f0] sm:$0xff]
                %612 = vst [vmem:[%s294 + $0x4f0] sm:$0xff] %v611
                %v613 = vld [vmem:[%s293 + $0x8f8] sm:$0xff]
                %614 = vst [vmem:[%s294 + $0x4f8] sm:$0xff] %v613
                %v615 = vld [vmem:[%s293 + $0xa00] sm:$0xff]
                %616 = vst [vmem:[%s294 + $0x500] sm:$0xff] %v615
                %v617 = vld [vmem:[%s293 + $0xa08] sm:$0xff]
                %618 = vst [vmem:[%s294 + $0x508] sm:$0xff] %v617
                %v619 = vld [vmem:[%s293 + $0xa10] sm:$0xff]
                %620 = vst [vmem:[%s294 + $0x510] sm:$0xff] %v619
                %v621 = vld [vmem:[%s293 + $0xa18] sm:$0xff]
                %622 = vst [vmem:[%s294 + $0x518] sm:$0xff] %v621
                %v623 = vld [vmem:[%s293 + $0xa20] sm:$0xff]
                %624 = vst [vmem:[%s294 + $0x520] sm:$0xff] %v623
                %v625 = vld [vmem:[%s293 + $0xa28] sm:$0xff]
                %626 = vst [vmem:[%s294 + $0x528] sm:$0xff] %v625
                %v627 = vld [vmem:[%s293 + $0xa30] sm:$0xff]
                %628 = vst [vmem:[%s294 + $0x530] sm:$0xff] %v627
                %v629 = vld [vmem:[%s293 + $0xa38] sm:$0xff]
                %630 = vst [vmem:[%s294 + $0x538] sm:$0xff] %v629
                %v631 = vld [vmem:[%s293 + $0xa40] sm:$0xff]
                %632 = vst [vmem:[%s294 + $0x540] sm:$0xff] %v631
                %v633 = vld [vmem:[%s293 + $0xa48] sm:$0xff]
                %634 = vst [vmem:[%s294 + $0x548] sm:$0xff] %v633
                %v635 = vld [vmem:[%s293 + $0xa50] sm:$0xff]
                %636 = vst [vmem:[%s294 + $0x550] sm:$0xff] %v635
                %v637 = vld [vmem:[%s293 + $0xa58] sm:$0xff]
                %638 = vst [vmem:[%s294 + $0x558] sm:$0xff] %v637
                %v639 = vld [vmem:[%s293 + $0xa60] sm:$0xff]
                %640 = vst [vmem:[%s294 + $0x560] sm:$0xff] %v639
                %v641 = vld [vmem:[%s293 + $0xa68] sm:$0xff]
                %642 = vst [vmem:[%s294 + $0x568] sm:$0xff] %v641
                %v643 = vld [vmem:[%s293 + $0xa70] sm:$0xff]
                %644 = vst [vmem:[%s294 + $0x570] sm:$0xff] %v643
                %v645 = vld [vmem:[%s293 + $0xa78] sm:$0xff]
                %646 = vst [vmem:[%s294 + $0x578] sm:$0xff] %v645
                %v647 = vld [vmem:[%s293 + $0xa80] sm:$0xff]
                %648 = vst [vmem:[%s294 + $0x580] sm:$0xff] %v647
                %v649 = vld [vmem:[%s293 + $0xa88] sm:$0xff]
                %650 = vst [vmem:[%s294 + $0x588] sm:$0xff] %v649
                %v651 = vld [vmem:[%s293 + $0xa90] sm:$0xff]
                %652 = vst [vmem:[%s294 + $0x590] sm:$0xff] %v651
                %v653 = vld [vmem:[%s293 + $0xa98] sm:$0xff]
                %654 = vst [vmem:[%s294 + $0x598] sm:$0xff] %v653
                %v655 = vld [vmem:[%s293 + $0xaa0] sm:$0xff]
                %656 = vst [vmem:[%s294 + $0x5a0] sm:$0xff] %v655
                %v657 = vld [vmem:[%s293 + $0xaa8] sm:$0xff]
                %658 = vst [vmem:[%s294 + $0x5a8] sm:$0xff] %v657
                %v659 = vld [vmem:[%s293 + $0xab0] sm:$0xff]
                %660 = vst [vmem:[%s294 + $0x5b0] sm:$0xff] %v659
                %v661 = vld [vmem:[%s293 + $0xab8] sm:$0xff]
                %662 = vst [vmem:[%s294 + $0x5b8] sm:$0xff] %v661
                %v663 = vld [vmem:[%s293 + $0xac0] sm:$0xff]
                %664 = vst [vmem:[%s294 + $0x5c0] sm:$0xff] %v663
                %v665 = vld [vmem:[%s293 + $0xac8] sm:$0xff]
                %666 = vst [vmem:[%s294 + $0x5c8] sm:$0xff] %v665
                %v667 = vld [vmem:[%s293 + $0xad0] sm:$0xff]
                %668 = vst [vmem:[%s294 + $0x5d0] sm:$0xff] %v667
                %v669 = vld [vmem:[%s293 + $0xad8] sm:$0xff]
                %670 = vst [vmem:[%s294 + $0x5d8] sm:$0xff] %v669
                %v671 = vld [vmem:[%s293 + $0xae0] sm:$0xff]
                %672 = vst [vmem:[%s294 + $0x5e0] sm:$0xff] %v671
                %v673 = vld [vmem:[%s293 + $0xae8] sm:$0xff]
                %674 = vst [vmem:[%s294 + $0x5e8] sm:$0xff] %v673
                %v675 = vld [vmem:[%s293 + $0xaf0] sm:$0xff]
                %676 = vst [vmem:[%s294 + $0x5f0] sm:$0xff] %v675
                %v677 = vld [vmem:[%s293 + $0xaf8] sm:$0xff]
                %678 = vst [vmem:[%s294 + $0x5f8] sm:$0xff] %v677
                %v679 = vld [vmem:[%s293 + $0xc00] sm:$0xff]
                %680 = vst [vmem:[%s294 + $0x600] sm:$0xff] %v679
                %v681 = vld [vmem:[%s293 + $0xc08] sm:$0xff]
                %682 = vst [vmem:[%s294 + $0x608] sm:$0xff] %v681
                %v683 = vld [vmem:[%s293 + $0xc10] sm:$0xff]
                %684 = vst [vmem:[%s294 + $0x610] sm:$0xff] %v683
                %v685 = vld [vmem:[%s293 + $0xc18] sm:$0xff]
                %686 = vst [vmem:[%s294 + $0x618] sm:$0xff] %v685
                %v687 = vld [vmem:[%s293 + $0xc20] sm:$0xff]
                %688 = vst [vmem:[%s294 + $0x620] sm:$0xff] %v687
                %v689 = vld [vmem:[%s293 + $0xc28] sm:$0xff]
                %690 = vst [vmem:[%s294 + $0x628] sm:$0xff] %v689
                %v691 = vld [vmem:[%s293 + $0xc30] sm:$0xff]
                %692 = vst [vmem:[%s294 + $0x630] sm:$0xff] %v691
                %v693 = vld [vmem:[%s293 + $0xc38] sm:$0xff]
                %694 = vst [vmem:[%s294 + $0x638] sm:$0xff] %v693
                %v695 = vld [vmem:[%s293 + $0xc40] sm:$0xff]
                %696 = vst [vmem:[%s294 + $0x640] sm:$0xff] %v695
                %v697 = vld [vmem:[%s293 + $0xc48] sm:$0xff]
                %698 = vst [vmem:[%s294 + $0x648] sm:$0xff] %v697
                %v699 = vld [vmem:[%s293 + $0xc50] sm:$0xff]
                %700 = vst [vmem:[%s294 + $0x650] sm:$0xff] %v699
                %v701 = vld [vmem:[%s293 + $0xc58] sm:$0xff]
                %702 = vst [vmem:[%s294 + $0x658] sm:$0xff] %v701
                %v703 = vld [vmem:[%s293 + $0xc60] sm:$0xff]
                %704 = vst [vmem:[%s294 + $0x660] sm:$0xff] %v703
                %v705 = vld [vmem:[%s293 + $0xc68] sm:$0xff]
                %706 = vst [vmem:[%s294 + $0x668] sm:$0xff] %v705
                %v707 = vld [vmem:[%s293 + $0xc70] sm:$0xff]
                %708 = vst [vmem:[%s294 + $0x670] sm:$0xff] %v707
                %v709 = vld [vmem:[%s293 + $0xc78] sm:$0xff]
                %710 = vst [vmem:[%s294 + $0x678] sm:$0xff] %v709
                %v711 = vld [vmem:[%s293 + $0xc80] sm:$0xff]
                %712 = vst [vmem:[%s294 + $0x680] sm:$0xff] %v711
                %v713 = vld [vmem:[%s293 + $0xc88] sm:$0xff]
                %714 = vst [vmem:[%s294 + $0x688] sm:$0xff] %v713
                %v715 = vld [vmem:[%s293 + $0xc90] sm:$0xff]
                %716 = vst [vmem:[%s294 + $0x690] sm:$0xff] %v715
                %v717 = vld [vmem:[%s293 + $0xc98] sm:$0xff]
                %718 = vst [vmem:[%s294 + $0x698] sm:$0xff] %v717
                %v719 = vld [vmem:[%s293 + $0xca0] sm:$0xff]
                %720 = vst [vmem:[%s294 + $0x6a0] sm:$0xff] %v719
                %v721 = vld [vmem:[%s293 + $0xca8] sm:$0xff]
                %722 = vst [vmem:[%s294 + $0x6a8] sm:$0xff] %v721
                %v723 = vld [vmem:[%s293 + $0xcb0] sm:$0xff]
                %724 = vst [vmem:[%s294 + $0x6b0] sm:$0xff] %v723
                %v725 = vld [vmem:[%s293 + $0xcb8] sm:$0xff]
                %726 = vst [vmem:[%s294 + $0x6b8] sm:$0xff] %v725
                %v727 = vld [vmem:[%s293 + $0xcc0] sm:$0xff]
                %728 = vst [vmem:[%s294 + $0x6c0] sm:$0xff] %v727
                %v729 = vld [vmem:[%s293 + $0xcc8] sm:$0xff]
                %730 = vst [vmem:[%s294 + $0x6c8] sm:$0xff] %v729
                %v731 = vld [vmem:[%s293 + $0xcd0] sm:$0xff]
                %732 = vst [vmem:[%s294 + $0x6d0] sm:$0xff] %v731
                %v733 = vld [vmem:[%s293 + $0xcd8] sm:$0xff]
                %734 = vst [vmem:[%s294 + $0x6d8] sm:$0xff] %v733
                %v735 = vld [vmem:[%s293 + $0xce0] sm:$0xff]
                %736 = vst [vmem:[%s294 + $0x6e0] sm:$0xff] %v735
                %v737 = vld [vmem:[%s293 + $0xce8] sm:$0xff]
                %738 = vst [vmem:[%s294 + $0x6e8] sm:$0xff] %v737
                %v739 = vld [vmem:[%s293 + $0xcf0] sm:$0xff]
                %740 = vst [vmem:[%s294 + $0x6f0] sm:$0xff] %v739
                %v741 = vld [vmem:[%s293 + $0xcf8] sm:$0xff]
                %742 = vst [vmem:[%s294 + $0x6f8] sm:$0xff] %v741
                %v743 = vld [vmem:[%s293 + $0xe00] sm:$0xff]
                %744 = vst [vmem:[%s294 + $0x700] sm:$0xff] %v743
                %v745 = vld [vmem:[%s293 + $0xe08] sm:$0xff]
                %746 = vst [vmem:[%s294 + $0x708] sm:$0xff] %v745
                %v747 = vld [vmem:[%s293 + $0xe10] sm:$0xff]
                %748 = vst [vmem:[%s294 + $0x710] sm:$0xff] %v747
                %v749 = vld [vmem:[%s293 + $0xe18] sm:$0xff]
                %750 = vst [vmem:[%s294 + $0x718] sm:$0xff] %v749
                %v751 = vld [vmem:[%s293 + $0xe20] sm:$0xff]
                %752 = vst [vmem:[%s294 + $0x720] sm:$0xff] %v751
                %v753 = vld [vmem:[%s293 + $0xe28] sm:$0xff]
                %754 = vst [vmem:[%s294 + $0x728] sm:$0xff] %v753
                %v755 = vld [vmem:[%s293 + $0xe30] sm:$0xff]
                %756 = vst [vmem:[%s294 + $0x730] sm:$0xff] %v755
                %v757 = vld [vmem:[%s293 + $0xe38] sm:$0xff]
                %758 = vst [vmem:[%s294 + $0x738] sm:$0xff] %v757
                %v759 = vld [vmem:[%s293 + $0xe40] sm:$0xff]
                %760 = vst [vmem:[%s294 + $0x740] sm:$0xff] %v759
                %v761 = vld [vmem:[%s293 + $0xe48] sm:$0xff]
                %762 = vst [vmem:[%s294 + $0x748] sm:$0xff] %v761
                %v763 = vld [vmem:[%s293 + $0xe50] sm:$0xff]
                %764 = vst [vmem:[%s294 + $0x750] sm:$0xff] %v763
                %v765 = vld [vmem:[%s293 + $0xe58] sm:$0xff]
                %766 = vst [vmem:[%s294 + $0x758] sm:$0xff] %v765
                %v767 = vld [vmem:[%s293 + $0xe60] sm:$0xff]
                %768 = vst [vmem:[%s294 + $0x760] sm:$0xff] %v767
                %v769 = vld [vmem:[%s293 + $0xe68] sm:$0xff]
                %770 = vst [vmem:[%s294 + $0x768] sm:$0xff] %v769
                %v771 = vld [vmem:[%s293 + $0xe70] sm:$0xff]
                %772 = vst [vmem:[%s294 + $0x770] sm:$0xff] %v771
                %v773 = vld [vmem:[%s293 + $0xe78] sm:$0xff]
                %774 = vst [vmem:[%s294 + $0x778] sm:$0xff] %v773
                %v775 = vld [vmem:[%s293 + $0xe80] sm:$0xff]
                %776 = vst [vmem:[%s294 + $0x780] sm:$0xff] %v775
                %v777 = vld [vmem:[%s293 + $0xe88] sm:$0xff]
                %778 = vst [vmem:[%s294 + $0x788] sm:$0xff] %v777
                %v779 = vld [vmem:[%s293 + $0xe90] sm:$0xff]
                %780 = vst [vmem:[%s294 + $0x790] sm:$0xff] %v779
                %v781 = vld [vmem:[%s293 + $0xe98] sm:$0xff]
                %782 = vst [vmem:[%s294 + $0x798] sm:$0xff] %v781
                %v783 = vld [vmem:[%s293 + $0xea0] sm:$0xff]
                %784 = vst [vmem:[%s294 + $0x7a0] sm:$0xff] %v783
                %v785 = vld [vmem:[%s293 + $0xea8] sm:$0xff]
                %786 = vst [vmem:[%s294 + $0x7a8] sm:$0xff] %v785
                %v787 = vld [vmem:[%s293 + $0xeb0] sm:$0xff]
                %788 = vst [vmem:[%s294 + $0x7b0] sm:$0xff] %v787
                %v789 = vld [vmem:[%s293 + $0xeb8] sm:$0xff]
                %790 = vst [vmem:[%s294 + $0x7b8] sm:$0xff] %v789
                %v791 = vld [vmem:[%s293 + $0xec0] sm:$0xff]
                %792 = vst [vmem:[%s294 + $0x7c0] sm:$0xff] %v791
                %v793 = vld [vmem:[%s293 + $0xec8] sm:$0xff]
                %794 = vst [vmem:[%s294 + $0x7c8] sm:$0xff] %v793
                %v795 = vld [vmem:[%s293 + $0xed0] sm:$0xff]
                %796 = vst [vmem:[%s294 + $0x7d0] sm:$0xff] %v795
                %v797 = vld [vmem:[%s293 + $0xed8] sm:$0xff]
                %798 = vst [vmem:[%s294 + $0x7d8] sm:$0xff] %v797
                %v799 = vld [vmem:[%s293 + $0xee0] sm:$0xff]
                %800 = vst [vmem:[%s294 + $0x7e0] sm:$0xff] %v799
                %v801 = vld [vmem:[%s293 + $0xee8] sm:$0xff]
                %802 = vst [vmem:[%s294 + $0x7e8] sm:$0xff] %v801
                %v803 = vld [vmem:[%s293 + $0xef0] sm:$0xff]
                %804 = vst [vmem:[%s294 + $0x7f0] sm:$0xff] %v803
                %v805 = vld [vmem:[%s293 + $0xef8] sm:$0xff]
                %806 = vst [vmem:[%s294 + $0x7f8] sm:$0xff] %v805
                %v807 = vld [vmem:[%s293 + $0x1000] sm:$0xff]
                %808 = vst [vmem:[%s294 + $0x800] sm:$0xff] %v807
                %v809 = vld [vmem:[%s293 + $0x1008] sm:$0xff]
                %810 = vst [vmem:[%s294 + $0x808] sm:$0xff] %v809
                %v811 = vld [vmem:[%s293 + $0x1010] sm:$0xff]
                %812 = vst [vmem:[%s294 + $0x810] sm:$0xff] %v811
                %v813 = vld [vmem:[%s293 + $0x1018] sm:$0xff]
                %814 = vst [vmem:[%s294 + $0x818] sm:$0xff] %v813
                %v815 = vld [vmem:[%s293 + $0x1020] sm:$0xff]
                %816 = vst [vmem:[%s294 + $0x820] sm:$0xff] %v815
                %v817 = vld [vmem:[%s293 + $0x1028] sm:$0xff]
                %818 = vst [vmem:[%s294 + $0x828] sm:$0xff] %v817
                %v819 = vld [vmem:[%s293 + $0x1030] sm:$0xff]
                %820 = vst [vmem:[%s294 + $0x830] sm:$0xff] %v819
                %v821 = vld [vmem:[%s293 + $0x1038] sm:$0xff]
                %822 = vst [vmem:[%s294 + $0x838] sm:$0xff] %v821
                %v823 = vld [vmem:[%s293 + $0x1040] sm:$0xff]
                %824 = vst [vmem:[%s294 + $0x840] sm:$0xff] %v823
                %v825 = vld [vmem:[%s293 + $0x1048] sm:$0xff]
                %826 = vst [vmem:[%s294 + $0x848] sm:$0xff] %v825
                %v827 = vld [vmem:[%s293 + $0x1050] sm:$0xff]
                %828 = vst [vmem:[%s294 + $0x850] sm:$0xff] %v827
                %v829 = vld [vmem:[%s293 + $0x1058] sm:$0xff]
                %830 = vst [vmem:[%s294 + $0x858] sm:$0xff] %v829
                %v831 = vld [vmem:[%s293 + $0x1060] sm:$0xff]
                %832 = vst [vmem:[%s294 + $0x860] sm:$0xff] %v831
                %v833 = vld [vmem:[%s293 + $0x1068] sm:$0xff]
                %834 = vst [vmem:[%s294 + $0x868] sm:$0xff] %v833
                %v835 = vld [vmem:[%s293 + $0x1070] sm:$0xff]
                %836 = vst [vmem:[%s294 + $0x870] sm:$0xff] %v835
                %v837 = vld [vmem:[%s293 + $0x1078] sm:$0xff]
                %838 = vst [vmem:[%s294 + $0x878] sm:$0xff] %v837
                %v839 = vld [vmem:[%s293 + $0x1080] sm:$0xff]
                %840 = vst [vmem:[%s294 + $0x880] sm:$0xff] %v839
                %v841 = vld [vmem:[%s293 + $0x1088] sm:$0xff]
                %842 = vst [vmem:[%s294 + $0x888] sm:$0xff] %v841
                %v843 = vld [vmem:[%s293 + $0x1090] sm:$0xff]
                %844 = vst [vmem:[%s294 + $0x890] sm:$0xff] %v843
                %v845 = vld [vmem:[%s293 + $0x1098] sm:$0xff]
                %846 = vst [vmem:[%s294 + $0x898] sm:$0xff] %v845
                %v847 = vld [vmem:[%s293 + $0x10a0] sm:$0xff]
                %848 = vst [vmem:[%s294 + $0x8a0] sm:$0xff] %v847
                %v849 = vld [vmem:[%s293 + $0x10a8] sm:$0xff]
                %850 = vst [vmem:[%s294 + $0x8a8] sm:$0xff] %v849
                %v851 = vld [vmem:[%s293 + $0x10b0] sm:$0xff]
                %852 = vst [vmem:[%s294 + $0x8b0] sm:$0xff] %v851
                %v853 = vld [vmem:[%s293 + $0x10b8] sm:$0xff]
                %854 = vst [vmem:[%s294 + $0x8b8] sm:$0xff] %v853
                %v855 = vld [vmem:[%s293 + $0x10c0] sm:$0xff]
                %856 = vst [vmem:[%s294 + $0x8c0] sm:$0xff] %v855
                %v857 = vld [vmem:[%s293 + $0x10c8] sm:$0xff]
                %858 = vst [vmem:[%s294 + $0x8c8] sm:$0xff] %v857
                %v859 = vld [vmem:[%s293 + $0x10d0] sm:$0xff]
                %860 = vst [vmem:[%s294 + $0x8d0] sm:$0xff] %v859
                %v861 = vld [vmem:[%s293 + $0x10d8] sm:$0xff]
                %862 = vst [vmem:[%s294 + $0x8d8] sm:$0xff] %v861
                %v863 = vld [vmem:[%s293 + $0x10e0] sm:$0xff]
                %864 = vst [vmem:[%s294 + $0x8e0] sm:$0xff] %v863
                %v865 = vld [vmem:[%s293 + $0x10e8] sm:$0xff]
                %866 = vst [vmem:[%s294 + $0x8e8] sm:$0xff] %v865
                %v867 = vld [vmem:[%s293 + $0x10f0] sm:$0xff]
                %868 = vst [vmem:[%s294 + $0x8f0] sm:$0xff] %v867
                %v869 = vld [vmem:[%s293 + $0x10f8] sm:$0xff]
                %870 = vst [vmem:[%s294 + $0x8f8] sm:$0xff] %v869
                %v871 = vld [vmem:[%s293 + $0x1200] sm:$0xff]
                %872 = vst [vmem:[%s294 + $0x900] sm:$0xff] %v871
                %v873 = vld [vmem:[%s293 + $0x1208] sm:$0xff]
                %874 = vst [vmem:[%s294 + $0x908] sm:$0xff] %v873
                %v875 = vld [vmem:[%s293 + $0x1210] sm:$0xff]
                %876 = vst [vmem:[%s294 + $0x910] sm:$0xff] %v875
                %v877 = vld [vmem:[%s293 + $0x1218] sm:$0xff]
                %878 = vst [vmem:[%s294 + $0x918] sm:$0xff] %v877
                %v879 = vld [vmem:[%s293 + $0x1220] sm:$0xff]
                %880 = vst [vmem:[%s294 + $0x920] sm:$0xff] %v879
                %v881 = vld [vmem:[%s293 + $0x1228] sm:$0xff]
                %882 = vst [vmem:[%s294 + $0x928] sm:$0xff] %v881
                %v883 = vld [vmem:[%s293 + $0x1230] sm:$0xff]
                %884 = vst [vmem:[%s294 + $0x930] sm:$0xff] %v883
                %v885 = vld [vmem:[%s293 + $0x1238] sm:$0xff]
                %886 = vst [vmem:[%s294 + $0x938] sm:$0xff] %v885
                %v887 = vld [vmem:[%s293 + $0x1240] sm:$0xff]
                %888 = vst [vmem:[%s294 + $0x940] sm:$0xff] %v887
                %v889 = vld [vmem:[%s293 + $0x1248] sm:$0xff]
                %890 = vst [vmem:[%s294 + $0x948] sm:$0xff] %v889
                %v891 = vld [vmem:[%s293 + $0x1250] sm:$0xff]
                %892 = vst [vmem:[%s294 + $0x950] sm:$0xff] %v891
                %v893 = vld [vmem:[%s293 + $0x1258] sm:$0xff]
                %894 = vst [vmem:[%s294 + $0x958] sm:$0xff] %v893
                %v895 = vld [vmem:[%s293 + $0x1260] sm:$0xff]
                %896 = vst [vmem:[%s294 + $0x960] sm:$0xff] %v895
                %v897 = vld [vmem:[%s293 + $0x1268] sm:$0xff]
                %898 = vst [vmem:[%s294 + $0x968] sm:$0xff] %v897
                %v899 = vld [vmem:[%s293 + $0x1270] sm:$0xff]
                %900 = vst [vmem:[%s294 + $0x970] sm:$0xff] %v899
                %v901 = vld [vmem:[%s293 + $0x1278] sm:$0xff]
                %902 = vst [vmem:[%s294 + $0x978] sm:$0xff] %v901
                %v903 = vld [vmem:[%s293 + $0x1280] sm:$0xff]
                %904 = vst [vmem:[%s294 + $0x980] sm:$0xff] %v903
                %v905 = vld [vmem:[%s293 + $0x1288] sm:$0xff]
                %906 = vst [vmem:[%s294 + $0x988] sm:$0xff] %v905
                %v907 = vld [vmem:[%s293 + $0x1290] sm:$0xff]
                %908 = vst [vmem:[%s294 + $0x990] sm:$0xff] %v907
                %v909 = vld [vmem:[%s293 + $0x1298] sm:$0xff]
                %910 = vst [vmem:[%s294 + $0x998] sm:$0xff] %v909
                %v911 = vld [vmem:[%s293 + $0x12a0] sm:$0xff]
                %912 = vst [vmem:[%s294 + $0x9a0] sm:$0xff] %v911
                %v913 = vld [vmem:[%s293 + $0x12a8] sm:$0xff]
                %914 = vst [vmem:[%s294 + $0x9a8] sm:$0xff] %v913
                %v915 = vld [vmem:[%s293 + $0x12b0] sm:$0xff]
                %916 = vst [vmem:[%s294 + $0x9b0] sm:$0xff] %v915
                %v917 = vld [vmem:[%s293 + $0x12b8] sm:$0xff]
                %918 = vst [vmem:[%s294 + $0x9b8] sm:$0xff] %v917
                %v919 = vld [vmem:[%s293 + $0x12c0] sm:$0xff]
                %920 = vst [vmem:[%s294 + $0x9c0] sm:$0xff] %v919
                %v921 = vld [vmem:[%s293 + $0x12c8] sm:$0xff]
                %922 = vst [vmem:[%s294 + $0x9c8] sm:$0xff] %v921
                %v923 = vld [vmem:[%s293 + $0x12d0] sm:$0xff]
                %924 = vst [vmem:[%s294 + $0x9d0] sm:$0xff] %v923
                %v925 = vld [vmem:[%s293 + $0x12d8] sm:$0xff]
                %926 = vst [vmem:[%s294 + $0x9d8] sm:$0xff] %v925
                %v927 = vld [vmem:[%s293 + $0x12e0] sm:$0xff]
                %928 = vst [vmem:[%s294 + $0x9e0] sm:$0xff] %v927
                %v929 = vld [vmem:[%s293 + $0x12e8] sm:$0xff]
                %930 = vst [vmem:[%s294 + $0x9e8] sm:$0xff] %v929
                %v931 = vld [vmem:[%s293 + $0x12f0] sm:$0xff]
                %932 = vst [vmem:[%s294 + $0x9f0] sm:$0xff] %v931
                %v933 = vld [vmem:[%s293 + $0x12f8] sm:$0xff]
                %934 = vst [vmem:[%s294 + $0x9f8] sm:$0xff] %v933
                %v935 = vld [vmem:[%s293 + $0x1400] sm:$0xff]
                %936 = vst [vmem:[%s294 + $0xa00] sm:$0xff] %v935
                %v937 = vld [vmem:[%s293 + $0x1408] sm:$0xff]
                %938 = vst [vmem:[%s294 + $0xa08] sm:$0xff] %v937
                %v939 = vld [vmem:[%s293 + $0x1410] sm:$0xff]
                %940 = vst [vmem:[%s294 + $0xa10] sm:$0xff] %v939
                %v941 = vld [vmem:[%s293 + $0x1418] sm:$0xff]
                %942 = vst [vmem:[%s294 + $0xa18] sm:$0xff] %v941
                %v943 = vld [vmem:[%s293 + $0x1420] sm:$0xff]
                %944 = vst [vmem:[%s294 + $0xa20] sm:$0xff] %v943
                %v945 = vld [vmem:[%s293 + $0x1428] sm:$0xff]
                %946 = vst [vmem:[%s294 + $0xa28] sm:$0xff] %v945
                %v947 = vld [vmem:[%s293 + $0x1430] sm:$0xff]
                %948 = vst [vmem:[%s294 + $0xa30] sm:$0xff] %v947
                %v949 = vld [vmem:[%s293 + $0x1438] sm:$0xff]
                %950 = vst [vmem:[%s294 + $0xa38] sm:$0xff] %v949
                %v951 = vld [vmem:[%s293 + $0x1440] sm:$0xff]
                %952 = vst [vmem:[%s294 + $0xa40] sm:$0xff] %v951
                %v953 = vld [vmem:[%s293 + $0x1448] sm:$0xff]
                %954 = vst [vmem:[%s294 + $0xa48] sm:$0xff] %v953
                %v955 = vld [vmem:[%s293 + $0x1450] sm:$0xff]
                %956 = vst [vmem:[%s294 + $0xa50] sm:$0xff] %v955
                %v957 = vld [vmem:[%s293 + $0x1458] sm:$0xff]
                %958 = vst [vmem:[%s294 + $0xa58] sm:$0xff] %v957
                %v959 = vld [vmem:[%s293 + $0x1460] sm:$0xff]
                %960 = vst [vmem:[%s294 + $0xa60] sm:$0xff] %v959
                %v961 = vld [vmem:[%s293 + $0x1468] sm:$0xff]
                %962 = vst [vmem:[%s294 + $0xa68] sm:$0xff] %v961
                %v963 = vld [vmem:[%s293 + $0x1470] sm:$0xff]
                %964 = vst [vmem:[%s294 + $0xa70] sm:$0xff] %v963
                %v965 = vld [vmem:[%s293 + $0x1478] sm:$0xff]
                %966 = vst [vmem:[%s294 + $0xa78] sm:$0xff] %v965
                %v967 = vld [vmem:[%s293 + $0x1480] sm:$0xff]
                %968 = vst [vmem:[%s294 + $0xa80] sm:$0xff] %v967
                %v969 = vld [vmem:[%s293 + $0x1488] sm:$0xff]
                %970 = vst [vmem:[%s294 + $0xa88] sm:$0xff] %v969
                %v971 = vld [vmem:[%s293 + $0x1490] sm:$0xff]
                %972 = vst [vmem:[%s294 + $0xa90] sm:$0xff] %v971
                %v973 = vld [vmem:[%s293 + $0x1498] sm:$0xff]
                %974 = vst [vmem:[%s294 + $0xa98] sm:$0xff] %v973
                %v975 = vld [vmem:[%s293 + $0x14a0] sm:$0xff]
                %976 = vst [vmem:[%s294 + $0xaa0] sm:$0xff] %v975
                %v977 = vld [vmem:[%s293 + $0x14a8] sm:$0xff]
                %978 = vst [vmem:[%s294 + $0xaa8] sm:$0xff] %v977
                %v979 = vld [vmem:[%s293 + $0x14b0] sm:$0xff]
                %980 = vst [vmem:[%s294 + $0xab0] sm:$0xff] %v979
                %v981 = vld [vmem:[%s293 + $0x14b8] sm:$0xff]
                %982 = vst [vmem:[%s294 + $0xab8] sm:$0xff] %v981
                %v983 = vld [vmem:[%s293 + $0x14c0] sm:$0xff]
                %984 = vst [vmem:[%s294 + $0xac0] sm:$0xff] %v983
                %v985 = vld [vmem:[%s293 + $0x14c8] sm:$0xff]
                %986 = vst [vmem:[%s294 + $0xac8] sm:$0xff] %v985
                %v987 = vld [vmem:[%s293 + $0x14d0] sm:$0xff]
                %988 = vst [vmem:[%s294 + $0xad0] sm:$0xff] %v987
                %v989 = vld [vmem:[%s293 + $0x14d8] sm:$0xff]
                %990 = vst [vmem:[%s294 + $0xad8] sm:$0xff] %v989
                %v991 = vld [vmem:[%s293 + $0x14e0] sm:$0xff]
                %992 = vst [vmem:[%s294 + $0xae0] sm:$0xff] %v991
                %v993 = vld [vmem:[%s293 + $0x14e8] sm:$0xff]
                %994 = vst [vmem:[%s294 + $0xae8] sm:$0xff] %v993
                %v995 = vld [vmem:[%s293 + $0x14f0] sm:$0xff]
                %996 = vst [vmem:[%s294 + $0xaf0] sm:$0xff] %v995
                %v997 = vld [vmem:[%s293 + $0x14f8] sm:$0xff]
                %998 = vst [vmem:[%s294 + $0xaf8] sm:$0xff] %v997
                %v999 = vld [vmem:[%s293 + $0x1600] sm:$0xff]
                %1000 = vst [vmem:[%s294 + $0xb00] sm:$0xff] %v999
                %v1001 = vld [vmem:[%s293 + $0x1608] sm:$0xff]
                %1002 = vst [vmem:[%s294 + $0xb08] sm:$0xff] %v1001
                %v1003 = vld [vmem:[%s293 + $0x1610] sm:$0xff]
                %1004 = vst [vmem:[%s294 + $0xb10] sm:$0xff] %v1003
                %v1005 = vld [vmem:[%s293 + $0x1618] sm:$0xff]
                %1006 = vst [vmem:[%s294 + $0xb18] sm:$0xff] %v1005
                %v1007 = vld [vmem:[%s293 + $0x1620] sm:$0xff]
                %1008 = vst [vmem:[%s294 + $0xb20] sm:$0xff] %v1007
                %v1009 = vld [vmem:[%s293 + $0x1628] sm:$0xff]
                %1010 = vst [vmem:[%s294 + $0xb28] sm:$0xff] %v1009
                %v1011 = vld [vmem:[%s293 + $0x1630] sm:$0xff]
                %1012 = vst [vmem:[%s294 + $0xb30] sm:$0xff] %v1011
                %v1013 = vld [vmem:[%s293 + $0x1638] sm:$0xff]
                %1014 = vst [vmem:[%s294 + $0xb38] sm:$0xff] %v1013
                %v1015 = vld [vmem:[%s293 + $0x1640] sm:$0xff]
                %1016 = vst [vmem:[%s294 + $0xb40] sm:$0xff] %v1015
                %v1017 = vld [vmem:[%s293 + $0x1648] sm:$0xff]
                %1018 = vst [vmem:[%s294 + $0xb48] sm:$0xff] %v1017
                %v1019 = vld [vmem:[%s293 + $0x1650] sm:$0xff]
                %1020 = vst [vmem:[%s294 + $0xb50] sm:$0xff] %v1019
                %v1021 = vld [vmem:[%s293 + $0x1658] sm:$0xff]
                %1022 = vst [vmem:[%s294 + $0xb58] sm:$0xff] %v1021
                %v1023 = vld [vmem:[%s293 + $0x1660] sm:$0xff]
                %1024 = vst [vmem:[%s294 + $0xb60] sm:$0xff] %v1023
                %v1025 = vld [vmem:[%s293 + $0x1668] sm:$0xff]
                %1026 = vst [vmem:[%s294 + $0xb68] sm:$0xff] %v1025
                %v1027 = vld [vmem:[%s293 + $0x1670] sm:$0xff]
                %1028 = vst [vmem:[%s294 + $0xb70] sm:$0xff] %v1027
                %v1029 = vld [vmem:[%s293 + $0x1678] sm:$0xff]
                %1030 = vst [vmem:[%s294 + $0xb78] sm:$0xff] %v1029
                %v1031 = vld [vmem:[%s293 + $0x1680] sm:$0xff]
                %1032 = vst [vmem:[%s294 + $0xb80] sm:$0xff] %v1031
                %v1033 = vld [vmem:[%s293 + $0x1688] sm:$0xff]
                %1034 = vst [vmem:[%s294 + $0xb88] sm:$0xff] %v1033
                %v1035 = vld [vmem:[%s293 + $0x1690] sm:$0xff]
                %1036 = vst [vmem:[%s294 + $0xb90] sm:$0xff] %v1035
                %v1037 = vld [vmem:[%s293 + $0x1698] sm:$0xff]
                %1038 = vst [vmem:[%s294 + $0xb98] sm:$0xff] %v1037
                %v1039 = vld [vmem:[%s293 + $0x16a0] sm:$0xff]
                %1040 = vst [vmem:[%s294 + $0xba0] sm:$0xff] %v1039
                %v1041 = vld [vmem:[%s293 + $0x16a8] sm:$0xff]
                %1042 = vst [vmem:[%s294 + $0xba8] sm:$0xff] %v1041
                %v1043 = vld [vmem:[%s293 + $0x16b0] sm:$0xff]
                %1044 = vst [vmem:[%s294 + $0xbb0] sm:$0xff] %v1043
                %v1045 = vld [vmem:[%s293 + $0x16b8] sm:$0xff]
                %1046 = vst [vmem:[%s294 + $0xbb8] sm:$0xff] %v1045
                %v1047 = vld [vmem:[%s293 + $0x16c0] sm:$0xff]
                %1048 = vst [vmem:[%s294 + $0xbc0] sm:$0xff] %v1047
                %v1049 = vld [vmem:[%s293 + $0x16c8] sm:$0xff]
                %1050 = vst [vmem:[%s294 + $0xbc8] sm:$0xff] %v1049
                %v1051 = vld [vmem:[%s293 + $0x16d0] sm:$0xff]
                %1052 = vst [vmem:[%s294 + $0xbd0] sm:$0xff] %v1051
                %v1053 = vld [vmem:[%s293 + $0x16d8] sm:$0xff]
                %1054 = vst [vmem:[%s294 + $0xbd8] sm:$0xff] %v1053
                %v1055 = vld [vmem:[%s293 + $0x16e0] sm:$0xff]
                %1056 = vst [vmem:[%s294 + $0xbe0] sm:$0xff] %v1055
                %v1057 = vld [vmem:[%s293 + $0x16e8] sm:$0xff]
                %1058 = vst [vmem:[%s294 + $0xbe8] sm:$0xff] %v1057
                %v1059 = vld [vmem:[%s293 + $0x16f0] sm:$0xff]
                %1060 = vst [vmem:[%s294 + $0xbf0] sm:$0xff] %v1059
                %v1061 = vld [vmem:[%s293 + $0x16f8] sm:$0xff]
                %1062 = vst [vmem:[%s294 + $0xbf8] sm:$0xff] %v1061
                %v1063 = vld [vmem:[%s293 + $0x1800] sm:$0xff]
                %1064 = vst [vmem:[%s294 + $0xc00] sm:$0xff] %v1063
                %v1065 = vld [vmem:[%s293 + $0x1808] sm:$0xff]
                %1066 = vst [vmem:[%s294 + $0xc08] sm:$0xff] %v1065
                %v1067 = vld [vmem:[%s293 + $0x1810] sm:$0xff]
                %1068 = vst [vmem:[%s294 + $0xc10] sm:$0xff] %v1067
                %v1069 = vld [vmem:[%s293 + $0x1818] sm:$0xff]
                %1070 = vst [vmem:[%s294 + $0xc18] sm:$0xff] %v1069
                %v1071 = vld [vmem:[%s293 + $0x1820] sm:$0xff]
                %1072 = vst [vmem:[%s294 + $0xc20] sm:$0xff] %v1071
                %v1073 = vld [vmem:[%s293 + $0x1828] sm:$0xff]
                %1074 = vst [vmem:[%s294 + $0xc28] sm:$0xff] %v1073
                %v1075 = vld [vmem:[%s293 + $0x1830] sm:$0xff]
                %1076 = vst [vmem:[%s294 + $0xc30] sm:$0xff] %v1075
                %v1077 = vld [vmem:[%s293 + $0x1838] sm:$0xff]
                %1078 = vst [vmem:[%s294 + $0xc38] sm:$0xff] %v1077
                %v1079 = vld [vmem:[%s293 + $0x1840] sm:$0xff]
                %1080 = vst [vmem:[%s294 + $0xc40] sm:$0xff] %v1079
                %v1081 = vld [vmem:[%s293 + $0x1848] sm:$0xff]
                %1082 = vst [vmem:[%s294 + $0xc48] sm:$0xff] %v1081
                %v1083 = vld [vmem:[%s293 + $0x1850] sm:$0xff]
                %1084 = vst [vmem:[%s294 + $0xc50] sm:$0xff] %v1083
                %v1085 = vld [vmem:[%s293 + $0x1858] sm:$0xff]
                %1086 = vst [vmem:[%s294 + $0xc58] sm:$0xff] %v1085
                %v1087 = vld [vmem:[%s293 + $0x1860] sm:$0xff]
                %1088 = vst [vmem:[%s294 + $0xc60] sm:$0xff] %v1087
                %v1089 = vld [vmem:[%s293 + $0x1868] sm:$0xff]
                %1090 = vst [vmem:[%s294 + $0xc68] sm:$0xff] %v1089
                %v1091 = vld [vmem:[%s293 + $0x1870] sm:$0xff]
                %1092 = vst [vmem:[%s294 + $0xc70] sm:$0xff] %v1091
                %v1093 = vld [vmem:[%s293 + $0x1878] sm:$0xff]
                %1094 = vst [vmem:[%s294 + $0xc78] sm:$0xff] %v1093
                %v1095 = vld [vmem:[%s293 + $0x1880] sm:$0xff]
                %1096 = vst [vmem:[%s294 + $0xc80] sm:$0xff] %v1095
                %v1097 = vld [vmem:[%s293 + $0x1888] sm:$0xff]
                %1098 = vst [vmem:[%s294 + $0xc88] sm:$0xff] %v1097
                %v1099 = vld [vmem:[%s293 + $0x1890] sm:$0xff]
                %1100 = vst [vmem:[%s294 + $0xc90] sm:$0xff] %v1099
                %v1101 = vld [vmem:[%s293 + $0x1898] sm:$0xff]
                %1102 = vst [vmem:[%s294 + $0xc98] sm:$0xff] %v1101
                %v1103 = vld [vmem:[%s293 + $0x18a0] sm:$0xff]
                %1104 = vst [vmem:[%s294 + $0xca0] sm:$0xff] %v1103
                %v1105 = vld [vmem:[%s293 + $0x18a8] sm:$0xff]
                %1106 = vst [vmem:[%s294 + $0xca8] sm:$0xff] %v1105
                %v1107 = vld [vmem:[%s293 + $0x18b0] sm:$0xff]
                %1108 = vst [vmem:[%s294 + $0xcb0] sm:$0xff] %v1107
                %v1109 = vld [vmem:[%s293 + $0x18b8] sm:$0xff]
                %1110 = vst [vmem:[%s294 + $0xcb8] sm:$0xff] %v1109
                %v1111 = vld [vmem:[%s293 + $0x18c0] sm:$0xff]
                %1112 = vst [vmem:[%s294 + $0xcc0] sm:$0xff] %v1111
                %v1113 = vld [vmem:[%s293 + $0x18c8] sm:$0xff]
                %1114 = vst [vmem:[%s294 + $0xcc8] sm:$0xff] %v1113
                %v1115 = vld [vmem:[%s293 + $0x18d0] sm:$0xff]
                %1116 = vst [vmem:[%s294 + $0xcd0] sm:$0xff] %v1115
                %v1117 = vld [vmem:[%s293 + $0x18d8] sm:$0xff]
                %1118 = vst [vmem:[%s294 + $0xcd8] sm:$0xff] %v1117
                %v1119 = vld [vmem:[%s293 + $0x18e0] sm:$0xff]
                %1120 = vst [vmem:[%s294 + $0xce0] sm:$0xff] %v1119
                %v1121 = vld [vmem:[%s293 + $0x18e8] sm:$0xff]
                %1122 = vst [vmem:[%s294 + $0xce8] sm:$0xff] %v1121
                %v1123 = vld [vmem:[%s293 + $0x18f0] sm:$0xff]
                %1124 = vst [vmem:[%s294 + $0xcf0] sm:$0xff] %v1123
                %v1125 = vld [vmem:[%s293 + $0x18f8] sm:$0xff]
                %1126 = vst [vmem:[%s294 + $0xcf8] sm:$0xff] %v1125
                %v1127 = vld [vmem:[%s293 + $0x1a00] sm:$0xff]
                %1128 = vst [vmem:[%s294 + $0xd00] sm:$0xff] %v1127
                %v1129 = vld [vmem:[%s293 + $0x1a08] sm:$0xff]
                %1130 = vst [vmem:[%s294 + $0xd08] sm:$0xff] %v1129
                %v1131 = vld [vmem:[%s293 + $0x1a10] sm:$0xff]
                %1132 = vst [vmem:[%s294 + $0xd10] sm:$0xff] %v1131
                %v1133 = vld [vmem:[%s293 + $0x1a18] sm:$0xff]
                %1134 = vst [vmem:[%s294 + $0xd18] sm:$0xff] %v1133
                %v1135 = vld [vmem:[%s293 + $0x1a20] sm:$0xff]
                %1136 = vst [vmem:[%s294 + $0xd20] sm:$0xff] %v1135
                %v1137 = vld [vmem:[%s293 + $0x1a28] sm:$0xff]
                %1138 = vst [vmem:[%s294 + $0xd28] sm:$0xff] %v1137
                %v1139 = vld [vmem:[%s293 + $0x1a30] sm:$0xff]
                %1140 = vst [vmem:[%s294 + $0xd30] sm:$0xff] %v1139
                %v1141 = vld [vmem:[%s293 + $0x1a38] sm:$0xff]
                %1142 = vst [vmem:[%s294 + $0xd38] sm:$0xff] %v1141
                %v1143 = vld [vmem:[%s293 + $0x1a40] sm:$0xff]
                %1144 = vst [vmem:[%s294 + $0xd40] sm:$0xff] %v1143
                %v1145 = vld [vmem:[%s293 + $0x1a48] sm:$0xff]
                %1146 = vst [vmem:[%s294 + $0xd48] sm:$0xff] %v1145
                %v1147 = vld [vmem:[%s293 + $0x1a50] sm:$0xff]
                %1148 = vst [vmem:[%s294 + $0xd50] sm:$0xff] %v1147
                %v1149 = vld [vmem:[%s293 + $0x1a58] sm:$0xff]
                %1150 = vst [vmem:[%s294 + $0xd58] sm:$0xff] %v1149
                %v1151 = vld [vmem:[%s293 + $0x1a60] sm:$0xff]
                %1152 = vst [vmem:[%s294 + $0xd60] sm:$0xff] %v1151
                %v1153 = vld [vmem:[%s293 + $0x1a68] sm:$0xff]
                %1154 = vst [vmem:[%s294 + $0xd68] sm:$0xff] %v1153
                %v1155 = vld [vmem:[%s293 + $0x1a70] sm:$0xff]
                %1156 = vst [vmem:[%s294 + $0xd70] sm:$0xff] %v1155
                %v1157 = vld [vmem:[%s293 + $0x1a78] sm:$0xff]
                %1158 = vst [vmem:[%s294 + $0xd78] sm:$0xff] %v1157
                %v1159 = vld [vmem:[%s293 + $0x1a80] sm:$0xff]
                %1160 = vst [vmem:[%s294 + $0xd80] sm:$0xff] %v1159
                %v1161 = vld [vmem:[%s293 + $0x1a88] sm:$0xff]
                %1162 = vst [vmem:[%s294 + $0xd88] sm:$0xff] %v1161
                %v1163 = vld [vmem:[%s293 + $0x1a90] sm:$0xff]
                %1164 = vst [vmem:[%s294 + $0xd90] sm:$0xff] %v1163
                %v1165 = vld [vmem:[%s293 + $0x1a98] sm:$0xff]
                %1166 = vst [vmem:[%s294 + $0xd98] sm:$0xff] %v1165
                %v1167 = vld [vmem:[%s293 + $0x1aa0] sm:$0xff]
                %1168 = vst [vmem:[%s294 + $0xda0] sm:$0xff] %v1167
                %v1169 = vld [vmem:[%s293 + $0x1aa8] sm:$0xff]
                %1170 = vst [vmem:[%s294 + $0xda8] sm:$0xff] %v1169
                %v1171 = vld [vmem:[%s293 + $0x1ab0] sm:$0xff]
                %1172 = vst [vmem:[%s294 + $0xdb0] sm:$0xff] %v1171
                %v1173 = vld [vmem:[%s293 + $0x1ab8] sm:$0xff]
                %1174 = vst [vmem:[%s294 + $0xdb8] sm:$0xff] %v1173
                %v1175 = vld [vmem:[%s293 + $0x1ac0] sm:$0xff]
                %1176 = vst [vmem:[%s294 + $0xdc0] sm:$0xff] %v1175
                %v1177 = vld [vmem:[%s293 + $0x1ac8] sm:$0xff]
                %1178 = vst [vmem:[%s294 + $0xdc8] sm:$0xff] %v1177
                %v1179 = vld [vmem:[%s293 + $0x1ad0] sm:$0xff]
                %1180 = vst [vmem:[%s294 + $0xdd0] sm:$0xff] %v1179
                %v1181 = vld [vmem:[%s293 + $0x1ad8] sm:$0xff]
                %1182 = vst [vmem:[%s294 + $0xdd8] sm:$0xff] %v1181
                %v1183 = vld [vmem:[%s293 + $0x1ae0] sm:$0xff]
                %1184 = vst [vmem:[%s294 + $0xde0] sm:$0xff] %v1183
                %v1185 = vld [vmem:[%s293 + $0x1ae8] sm:$0xff]
                %1186 = vst [vmem:[%s294 + $0xde8] sm:$0xff] %v1185
                %v1187 = vld [vmem:[%s293 + $0x1af0] sm:$0xff]
                %1188 = vst [vmem:[%s294 + $0xdf0] sm:$0xff] %v1187
                %v1189 = vld [vmem:[%s293 + $0x1af8] sm:$0xff]
                %1190 = vst [vmem:[%s294 + $0xdf8] sm:$0xff] %v1189
                %v1191 = vld [vmem:[%s293 + $0x1c00] sm:$0xff]
                %1192 = vst [vmem:[%s294 + $0xe00] sm:$0xff] %v1191
                %v1193 = vld [vmem:[%s293 + $0x1c08] sm:$0xff]
                %1194 = vst [vmem:[%s294 + $0xe08] sm:$0xff] %v1193
                %v1195 = vld [vmem:[%s293 + $0x1c10] sm:$0xff]
                %1196 = vst [vmem:[%s294 + $0xe10] sm:$0xff] %v1195
                %v1197 = vld [vmem:[%s293 + $0x1c18] sm:$0xff]
                %1198 = vst [vmem:[%s294 + $0xe18] sm:$0xff] %v1197
                %v1199 = vld [vmem:[%s293 + $0x1c20] sm:$0xff]
                %1200 = vst [vmem:[%s294 + $0xe20] sm:$0xff] %v1199
                %v1201 = vld [vmem:[%s293 + $0x1c28] sm:$0xff]
                %1202 = vst [vmem:[%s294 + $0xe28] sm:$0xff] %v1201
                %v1203 = vld [vmem:[%s293 + $0x1c30] sm:$0xff]
                %1204 = vst [vmem:[%s294 + $0xe30] sm:$0xff] %v1203
                %v1205 = vld [vmem:[%s293 + $0x1c38] sm:$0xff]
                %1206 = vst [vmem:[%s294 + $0xe38] sm:$0xff] %v1205
                %v1207 = vld [vmem:[%s293 + $0x1c40] sm:$0xff]
                %1208 = vst [vmem:[%s294 + $0xe40] sm:$0xff] %v1207
                %v1209 = vld [vmem:[%s293 + $0x1c48] sm:$0xff]
                %1210 = vst [vmem:[%s294 + $0xe48] sm:$0xff] %v1209
                %v1211 = vld [vmem:[%s293 + $0x1c50] sm:$0xff]
                %1212 = vst [vmem:[%s294 + $0xe50] sm:$0xff] %v1211
                %v1213 = vld [vmem:[%s293 + $0x1c58] sm:$0xff]
                %1214 = vst [vmem:[%s294 + $0xe58] sm:$0xff] %v1213
                %v1215 = vld [vmem:[%s293 + $0x1c60] sm:$0xff]
                %1216 = vst [vmem:[%s294 + $0xe60] sm:$0xff] %v1215
                %v1217 = vld [vmem:[%s293 + $0x1c68] sm:$0xff]
                %1218 = vst [vmem:[%s294 + $0xe68] sm:$0xff] %v1217
                %v1219 = vld [vmem:[%s293 + $0x1c70] sm:$0xff]
                %1220 = vst [vmem:[%s294 + $0xe70] sm:$0xff] %v1219
                %v1221 = vld [vmem:[%s293 + $0x1c78] sm:$0xff]
                %1222 = vst [vmem:[%s294 + $0xe78] sm:$0xff] %v1221
                %v1223 = vld [vmem:[%s293 + $0x1c80] sm:$0xff]
                %1224 = vst [vmem:[%s294 + $0xe80] sm:$0xff] %v1223
                %v1225 = vld [vmem:[%s293 + $0x1c88] sm:$0xff]
                %1226 = vst [vmem:[%s294 + $0xe88] sm:$0xff] %v1225
                %v1227 = vld [vmem:[%s293 + $0x1c90] sm:$0xff]
                %1228 = vst [vmem:[%s294 + $0xe90] sm:$0xff] %v1227
                %v1229 = vld [vmem:[%s293 + $0x1c98] sm:$0xff]
                %1230 = vst [vmem:[%s294 + $0xe98] sm:$0xff] %v1229
                %v1231 = vld [vmem:[%s293 + $0x1ca0] sm:$0xff]
                %1232 = vst [vmem:[%s294 + $0xea0] sm:$0xff] %v1231
                %v1233 = vld [vmem:[%s293 + $0x1ca8] sm:$0xff]
                %1234 = vst [vmem:[%s294 + $0xea8] sm:$0xff] %v1233
                %v1235 = vld [vmem:[%s293 + $0x1cb0] sm:$0xff]
                %1236 = vst [vmem:[%s294 + $0xeb0] sm:$0xff] %v1235
                %v1237 = vld [vmem:[%s293 + $0x1cb8] sm:$0xff]
                %1238 = vst [vmem:[%s294 + $0xeb8] sm:$0xff] %v1237
                %v1239 = vld [vmem:[%s293 + $0x1cc0] sm:$0xff]
                %1240 = vst [vmem:[%s294 + $0xec0] sm:$0xff] %v1239
                %v1241 = vld [vmem:[%s293 + $0x1cc8] sm:$0xff]
                %1242 = vst [vmem:[%s294 + $0xec8] sm:$0xff] %v1241
                %v1243 = vld [vmem:[%s293 + $0x1cd0] sm:$0xff]
                %1244 = vst [vmem:[%s294 + $0xed0] sm:$0xff] %v1243
                %v1245 = vld [vmem:[%s293 + $0x1cd8] sm:$0xff]
                %1246 = vst [vmem:[%s294 + $0xed8] sm:$0xff] %v1245
                %v1247 = vld [vmem:[%s293 + $0x1ce0] sm:$0xff]
                %1248 = vst [vmem:[%s294 + $0xee0] sm:$0xff] %v1247
                %v1249 = vld [vmem:[%s293 + $0x1ce8] sm:$0xff]
                %1250 = vst [vmem:[%s294 + $0xee8] sm:$0xff] %v1249
                %v1251 = vld [vmem:[%s293 + $0x1cf0] sm:$0xff]
                %1252 = vst [vmem:[%s294 + $0xef0] sm:$0xff] %v1251
                %v1253 = vld [vmem:[%s293 + $0x1cf8] sm:$0xff]
                %1254 = vst [vmem:[%s294 + $0xef8] sm:$0xff] %v1253
                %v1255 = vld [vmem:[%s293 + $0x1e00] sm:$0xff]
                %1256 = vst [vmem:[%s294 + $0xf00] sm:$0xff] %v1255
                %v1257 = vld [vmem:[%s293 + $0x1e08] sm:$0xff]
                %1258 = vst [vmem:[%s294 + $0xf08] sm:$0xff] %v1257
                %v1259 = vld [vmem:[%s293 + $0x1e10] sm:$0xff]
                %1260 = vst [vmem:[%s294 + $0xf10] sm:$0xff] %v1259
                %v1261 = vld [vmem:[%s293 + $0x1e18] sm:$0xff]
                %1262 = vst [vmem:[%s294 + $0xf18] sm:$0xff] %v1261
                %v1263 = vld [vmem:[%s293 + $0x1e20] sm:$0xff]
                %1264 = vst [vmem:[%s294 + $0xf20] sm:$0xff] %v1263
                %v1265 = vld [vmem:[%s293 + $0x1e28] sm:$0xff]
                %1266 = vst [vmem:[%s294 + $0xf28] sm:$0xff] %v1265
                %v1267 = vld [vmem:[%s293 + $0x1e30] sm:$0xff]
                %1268 = vst [vmem:[%s294 + $0xf30] sm:$0xff] %v1267
                %v1269 = vld [vmem:[%s293 + $0x1e38] sm:$0xff]
                %1270 = vst [vmem:[%s294 + $0xf38] sm:$0xff] %v1269
                %v1271 = vld [vmem:[%s293 + $0x1e40] sm:$0xff]
                %1272 = vst [vmem:[%s294 + $0xf40] sm:$0xff] %v1271
                %v1273 = vld [vmem:[%s293 + $0x1e48] sm:$0xff]
                %1274 = vst [vmem:[%s294 + $0xf48] sm:$0xff] %v1273
                %v1275 = vld [vmem:[%s293 + $0x1e50] sm:$0xff]
                %1276 = vst [vmem:[%s294 + $0xf50] sm:$0xff] %v1275
                %v1277 = vld [vmem:[%s293 + $0x1e58] sm:$0xff]
                %1278 = vst [vmem:[%s294 + $0xf58] sm:$0xff] %v1277
                %v1279 = vld [vmem:[%s293 + $0x1e60] sm:$0xff]
                %1280 = vst [vmem:[%s294 + $0xf60] sm:$0xff] %v1279
                %v1281 = vld [vmem:[%s293 + $0x1e68] sm:$0xff]
                %1282 = vst [vmem:[%s294 + $0xf68] sm:$0xff] %v1281
                %v1283 = vld [vmem:[%s293 + $0x1e70] sm:$0xff]
                %1284 = vst [vmem:[%s294 + $0xf70] sm:$0xff] %v1283
                %v1285 = vld [vmem:[%s293 + $0x1e78] sm:$0xff]
                %1286 = vst [vmem:[%s294 + $0xf78] sm:$0xff] %v1285
                %v1287 = vld [vmem:[%s293 + $0x1e80] sm:$0xff]
                %1288 = vst [vmem:[%s294 + $0xf80] sm:$0xff] %v1287
                %v1289 = vld [vmem:[%s293 + $0x1e88] sm:$0xff]
                %1290 = vst [vmem:[%s294 + $0xf88] sm:$0xff] %v1289
                %v1291 = vld [vmem:[%s293 + $0x1e90] sm:$0xff]
                %1292 = vst [vmem:[%s294 + $0xf90] sm:$0xff] %v1291
                %v1293 = vld [vmem:[%s293 + $0x1e98] sm:$0xff]
                %1294 = vst [vmem:[%s294 + $0xf98] sm:$0xff] %v1293
                %v1295 = vld [vmem:[%s293 + $0x1ea0] sm:$0xff]
                %1296 = vst [vmem:[%s294 + $0xfa0] sm:$0xff] %v1295
                %v1297 = vld [vmem:[%s293 + $0x1ea8] sm:$0xff]
                %1298 = vst [vmem:[%s294 + $0xfa8] sm:$0xff] %v1297
                %v1299 = vld [vmem:[%s293 + $0x1eb0] sm:$0xff]
                %1300 = vst [vmem:[%s294 + $0xfb0] sm:$0xff] %v1299
                %v1301 = vld [vmem:[%s293 + $0x1eb8] sm:$0xff]
                %1302 = vst [vmem:[%s294 + $0xfb8] sm:$0xff] %v1301
                %v1303 = vld [vmem:[%s293 + $0x1ec0] sm:$0xff]
                %1304 = vst [vmem:[%s294 + $0xfc0] sm:$0xff] %v1303
                %v1305 = vld [vmem:[%s293 + $0x1ec8] sm:$0xff]
                %1306 = vst [vmem:[%s294 + $0xfc8] sm:$0xff] %v1305
                %v1307 = vld [vmem:[%s293 + $0x1ed0] sm:$0xff]
                %1308 = vst [vmem:[%s294 + $0xfd0] sm:$0xff] %v1307
                %v1309 = vld [vmem:[%s293 + $0x1ed8] sm:$0xff]
                %1310 = vst [vmem:[%s294 + $0xfd8] sm:$0xff] %v1309
                %v1311 = vld [vmem:[%s293 + $0x1ee0] sm:$0xff]
                %1312 = vst [vmem:[%s294 + $0xfe0] sm:$0xff] %v1311
                %v1313 = vld [vmem:[%s293 + $0x1ee8] sm:$0xff]
                %1314 = vst [vmem:[%s294 + $0xfe8] sm:$0xff] %v1313
                %v1315 = vld [vmem:[%s293 + $0x1ef0] sm:$0xff]
                %1316 = vst [vmem:[%s294 + $0xff0] sm:$0xff] %v1315
                %v1317 = vld [vmem:[%s293 + $0x1ef8] sm:$0xff]
                %1318 = vst [vmem:[%s294 + $0xff8] sm:$0xff] %v1317
                %v1319 = vld [vmem:[%s293 + $0x2000] sm:$0xff]
                %1320 = vst [vmem:[%s294 + $0x1000] sm:$0xff] %v1319
                %v1321 = vld [vmem:[%s293 + $0x2008] sm:$0xff]
                %1322 = vst [vmem:[%s294 + $0x1008] sm:$0xff] %v1321
                %v1323 = vld [vmem:[%s293 + $0x2010] sm:$0xff]
                %1324 = vst [vmem:[%s294 + $0x1010] sm:$0xff] %v1323
                %v1325 = vld [vmem:[%s293 + $0x2018] sm:$0xff]
                %1326 = vst [vmem:[%s294 + $0x1018] sm:$0xff] %v1325
                %v1327 = vld [vmem:[%s293 + $0x2020] sm:$0xff]
                %1328 = vst [vmem:[%s294 + $0x1020] sm:$0xff] %v1327
                %v1329 = vld [vmem:[%s293 + $0x2028] sm:$0xff]
                %1330 = vst [vmem:[%s294 + $0x1028] sm:$0xff] %v1329
                %v1331 = vld [vmem:[%s293 + $0x2030] sm:$0xff]
                %1332 = vst [vmem:[%s294 + $0x1030] sm:$0xff] %v1331
                %v1333 = vld [vmem:[%s293 + $0x2038] sm:$0xff]
                %1334 = vst [vmem:[%s294 + $0x1038] sm:$0xff] %v1333
                %v1335 = vld [vmem:[%s293 + $0x2040] sm:$0xff]
                %1336 = vst [vmem:[%s294 + $0x1040] sm:$0xff] %v1335
                %v1337 = vld [vmem:[%s293 + $0x2048] sm:$0xff]
                %1338 = vst [vmem:[%s294 + $0x1048] sm:$0xff] %v1337
                %v1339 = vld [vmem:[%s293 + $0x2050] sm:$0xff]
                %1340 = vst [vmem:[%s294 + $0x1050] sm:$0xff] %v1339
                %v1341 = vld [vmem:[%s293 + $0x2058] sm:$0xff]
                %1342 = vst [vmem:[%s294 + $0x1058] sm:$0xff] %v1341
                %v1343 = vld [vmem:[%s293 + $0x2060] sm:$0xff]
                %1344 = vst [vmem:[%s294 + $0x1060] sm:$0xff] %v1343
                %v1345 = vld [vmem:[%s293 + $0x2068] sm:$0xff]
                %1346 = vst [vmem:[%s294 + $0x1068] sm:$0xff] %v1345
                %v1347 = vld [vmem:[%s293 + $0x2070] sm:$0xff]
                %1348 = vst [vmem:[%s294 + $0x1070] sm:$0xff] %v1347
                %v1349 = vld [vmem:[%s293 + $0x2078] sm:$0xff]
                %1350 = vst [vmem:[%s294 + $0x1078] sm:$0xff] %v1349
                %v1351 = vld [vmem:[%s293 + $0x2080] sm:$0xff]
                %1352 = vst [vmem:[%s294 + $0x1080] sm:$0xff] %v1351
                %v1353 = vld [vmem:[%s293 + $0x2088] sm:$0xff]
                %1354 = vst [vmem:[%s294 + $0x1088] sm:$0xff] %v1353
                %v1355 = vld [vmem:[%s293 + $0x2090] sm:$0xff]
                %1356 = vst [vmem:[%s294 + $0x1090] sm:$0xff] %v1355
                %v1357 = vld [vmem:[%s293 + $0x2098] sm:$0xff]
                %1358 = vst [vmem:[%s294 + $0x1098] sm:$0xff] %v1357
                %v1359 = vld [vmem:[%s293 + $0x20a0] sm:$0xff]
                %1360 = vst [vmem:[%s294 + $0x10a0] sm:$0xff] %v1359
                %v1361 = vld [vmem:[%s293 + $0x20a8] sm:$0xff]
                %1362 = vst [vmem:[%s294 + $0x10a8] sm:$0xff] %v1361
                %v1363 = vld [vmem:[%s293 + $0x20b0] sm:$0xff]
                %1364 = vst [vmem:[%s294 + $0x10b0] sm:$0xff] %v1363
                %v1365 = vld [vmem:[%s293 + $0x20b8] sm:$0xff]
                %1366 = vst [vmem:[%s294 + $0x10b8] sm:$0xff] %v1365
                %v1367 = vld [vmem:[%s293 + $0x20c0] sm:$0xff]
                %1368 = vst [vmem:[%s294 + $0x10c0] sm:$0xff] %v1367
                %v1369 = vld [vmem:[%s293 + $0x20c8] sm:$0xff]
                %1370 = vst [vmem:[%s294 + $0x10c8] sm:$0xff] %v1369
                %v1371 = vld [vmem:[%s293 + $0x20d0] sm:$0xff]
                %1372 = vst [vmem:[%s294 + $0x10d0] sm:$0xff] %v1371
                %v1373 = vld [vmem:[%s293 + $0x20d8] sm:$0xff]
                %1374 = vst [vmem:[%s294 + $0x10d8] sm:$0xff] %v1373
                %v1375 = vld [vmem:[%s293 + $0x20e0] sm:$0xff]
                %1376 = vst [vmem:[%s294 + $0x10e0] sm:$0xff] %v1375
                %v1377 = vld [vmem:[%s293 + $0x20e8] sm:$0xff]
                %1378 = vst [vmem:[%s294 + $0x10e8] sm:$0xff] %v1377
                %v1379 = vld [vmem:[%s293 + $0x20f0] sm:$0xff]
                %1380 = vst [vmem:[%s294 + $0x10f0] sm:$0xff] %v1379
                %v1381 = vld [vmem:[%s293 + $0x20f8] sm:$0xff]
                %1382 = vst [vmem:[%s294 + $0x10f8] sm:$0xff] %v1381
                %v1383 = vld [vmem:[%s293 + $0x2200] sm:$0xff]
                %1384 = vst [vmem:[%s294 + $0x1100] sm:$0xff] %v1383
                %v1385 = vld [vmem:[%s293 + $0x2208] sm:$0xff]
                %1386 = vst [vmem:[%s294 + $0x1108] sm:$0xff] %v1385
                %v1387 = vld [vmem:[%s293 + $0x2210] sm:$0xff]
                %1388 = vst [vmem:[%s294 + $0x1110] sm:$0xff] %v1387
                %v1389 = vld [vmem:[%s293 + $0x2218] sm:$0xff]
                %1390 = vst [vmem:[%s294 + $0x1118] sm:$0xff] %v1389
                %v1391 = vld [vmem:[%s293 + $0x2220] sm:$0xff]
                %1392 = vst [vmem:[%s294 + $0x1120] sm:$0xff] %v1391
                %v1393 = vld [vmem:[%s293 + $0x2228] sm:$0xff]
                %1394 = vst [vmem:[%s294 + $0x1128] sm:$0xff] %v1393
                %v1395 = vld [vmem:[%s293 + $0x2230] sm:$0xff]
                %1396 = vst [vmem:[%s294 + $0x1130] sm:$0xff] %v1395
                %v1397 = vld [vmem:[%s293 + $0x2238] sm:$0xff]
                %1398 = vst [vmem:[%s294 + $0x1138] sm:$0xff] %v1397
                %v1399 = vld [vmem:[%s293 + $0x2240] sm:$0xff]
                %1400 = vst [vmem:[%s294 + $0x1140] sm:$0xff] %v1399
                %v1401 = vld [vmem:[%s293 + $0x2248] sm:$0xff]
                %1402 = vst [vmem:[%s294 + $0x1148] sm:$0xff] %v1401
                %v1403 = vld [vmem:[%s293 + $0x2250] sm:$0xff]
                %1404 = vst [vmem:[%s294 + $0x1150] sm:$0xff] %v1403
                %v1405 = vld [vmem:[%s293 + $0x2258] sm:$0xff]
                %1406 = vst [vmem:[%s294 + $0x1158] sm:$0xff] %v1405
                %v1407 = vld [vmem:[%s293 + $0x2260] sm:$0xff]
                %1408 = vst [vmem:[%s294 + $0x1160] sm:$0xff] %v1407
                %v1409 = vld [vmem:[%s293 + $0x2268] sm:$0xff]
                %1410 = vst [vmem:[%s294 + $0x1168] sm:$0xff] %v1409
                %v1411 = vld [vmem:[%s293 + $0x2270] sm:$0xff]
                %1412 = vst [vmem:[%s294 + $0x1170] sm:$0xff] %v1411
                %v1413 = vld [vmem:[%s293 + $0x2278] sm:$0xff]
                %1414 = vst [vmem:[%s294 + $0x1178] sm:$0xff] %v1413
                %v1415 = vld [vmem:[%s293 + $0x2280] sm:$0xff]
                %1416 = vst [vmem:[%s294 + $0x1180] sm:$0xff] %v1415
                %v1417 = vld [vmem:[%s293 + $0x2288] sm:$0xff]
                %1418 = vst [vmem:[%s294 + $0x1188] sm:$0xff] %v1417
                %v1419 = vld [vmem:[%s293 + $0x2290] sm:$0xff]
                %1420 = vst [vmem:[%s294 + $0x1190] sm:$0xff] %v1419
                %v1421 = vld [vmem:[%s293 + $0x2298] sm:$0xff]
                %1422 = vst [vmem:[%s294 + $0x1198] sm:$0xff] %v1421
                %v1423 = vld [vmem:[%s293 + $0x22a0] sm:$0xff]
                %1424 = vst [vmem:[%s294 + $0x11a0] sm:$0xff] %v1423
                %v1425 = vld [vmem:[%s293 + $0x22a8] sm:$0xff]
                %1426 = vst [vmem:[%s294 + $0x11a8] sm:$0xff] %v1425
                %v1427 = vld [vmem:[%s293 + $0x22b0] sm:$0xff]
                %1428 = vst [vmem:[%s294 + $0x11b0] sm:$0xff] %v1427
                %v1429 = vld [vmem:[%s293 + $0x22b8] sm:$0xff]
                %1430 = vst [vmem:[%s294 + $0x11b8] sm:$0xff] %v1429
                %v1431 = vld [vmem:[%s293 + $0x22c0] sm:$0xff]
                %1432 = vst [vmem:[%s294 + $0x11c0] sm:$0xff] %v1431
                %v1433 = vld [vmem:[%s293 + $0x22c8] sm:$0xff]
                %1434 = vst [vmem:[%s294 + $0x11c8] sm:$0xff] %v1433
                %v1435 = vld [vmem:[%s293 + $0x22d0] sm:$0xff]
                %1436 = vst [vmem:[%s294 + $0x11d0] sm:$0xff] %v1435
                %v1437 = vld [vmem:[%s293 + $0x22d8] sm:$0xff]
                %1438 = vst [vmem:[%s294 + $0x11d8] sm:$0xff] %v1437
                %v1439 = vld [vmem:[%s293 + $0x22e0] sm:$0xff]
                %1440 = vst [vmem:[%s294 + $0x11e0] sm:$0xff] %v1439
                %v1441 = vld [vmem:[%s293 + $0x22e8] sm:$0xff]
                %1442 = vst [vmem:[%s294 + $0x11e8] sm:$0xff] %v1441
                %v1443 = vld [vmem:[%s293 + $0x22f0] sm:$0xff]
                %1444 = vst [vmem:[%s294 + $0x11f0] sm:$0xff] %v1443
                %v1445 = vld [vmem:[%s293 + $0x22f8] sm:$0xff]
                %1446 = vst [vmem:[%s294 + $0x11f8] sm:$0xff] %v1445
                %v1447 = vld [vmem:[%s293 + $0x2400] sm:$0xff]
                %1448 = vst [vmem:[%s294 + $0x1200] sm:$0xff] %v1447
                %v1449 = vld [vmem:[%s293 + $0x2408] sm:$0xff]
                %1450 = vst [vmem:[%s294 + $0x1208] sm:$0xff] %v1449
                %v1451 = vld [vmem:[%s293 + $0x2410] sm:$0xff]
                %1452 = vst [vmem:[%s294 + $0x1210] sm:$0xff] %v1451
                %v1453 = vld [vmem:[%s293 + $0x2418] sm:$0xff]
                %1454 = vst [vmem:[%s294 + $0x1218] sm:$0xff] %v1453
                %v1455 = vld [vmem:[%s293 + $0x2420] sm:$0xff]
                %1456 = vst [vmem:[%s294 + $0x1220] sm:$0xff] %v1455
                %v1457 = vld [vmem:[%s293 + $0x2428] sm:$0xff]
                %1458 = vst [vmem:[%s294 + $0x1228] sm:$0xff] %v1457
                %v1459 = vld [vmem:[%s293 + $0x2430] sm:$0xff]
                %1460 = vst [vmem:[%s294 + $0x1230] sm:$0xff] %v1459
                %v1461 = vld [vmem:[%s293 + $0x2438] sm:$0xff]
                %1462 = vst [vmem:[%s294 + $0x1238] sm:$0xff] %v1461
                %v1463 = vld [vmem:[%s293 + $0x2440] sm:$0xff]
                %1464 = vst [vmem:[%s294 + $0x1240] sm:$0xff] %v1463
                %v1465 = vld [vmem:[%s293 + $0x2448] sm:$0xff]
                %1466 = vst [vmem:[%s294 + $0x1248] sm:$0xff] %v1465
                %v1467 = vld [vmem:[%s293 + $0x2450] sm:$0xff]
                %1468 = vst [vmem:[%s294 + $0x1250] sm:$0xff] %v1467
                %v1469 = vld [vmem:[%s293 + $0x2458] sm:$0xff]
                %1470 = vst [vmem:[%s294 + $0x1258] sm:$0xff] %v1469
                %v1471 = vld [vmem:[%s293 + $0x2460] sm:$0xff]
                %1472 = vst [vmem:[%s294 + $0x1260] sm:$0xff] %v1471
                %v1473 = vld [vmem:[%s293 + $0x2468] sm:$0xff]
                %1474 = vst [vmem:[%s294 + $0x1268] sm:$0xff] %v1473
                %v1475 = vld [vmem:[%s293 + $0x2470] sm:$0xff]
                %1476 = vst [vmem:[%s294 + $0x1270] sm:$0xff] %v1475
                %v1477 = vld [vmem:[%s293 + $0x2478] sm:$0xff]
                %1478 = vst [vmem:[%s294 + $0x1278] sm:$0xff] %v1477
                %v1479 = vld [vmem:[%s293 + $0x2480] sm:$0xff]
                %1480 = vst [vmem:[%s294 + $0x1280] sm:$0xff] %v1479
                %v1481 = vld [vmem:[%s293 + $0x2488] sm:$0xff]
                %1482 = vst [vmem:[%s294 + $0x1288] sm:$0xff] %v1481
                %v1483 = vld [vmem:[%s293 + $0x2490] sm:$0xff]
                %1484 = vst [vmem:[%s294 + $0x1290] sm:$0xff] %v1483
                %v1485 = vld [vmem:[%s293 + $0x2498] sm:$0xff]
                %1486 = vst [vmem:[%s294 + $0x1298] sm:$0xff] %v1485
                %v1487 = vld [vmem:[%s293 + $0x24a0] sm:$0xff]
                %1488 = vst [vmem:[%s294 + $0x12a0] sm:$0xff] %v1487
                %v1489 = vld [vmem:[%s293 + $0x24a8] sm:$0xff]
                %1490 = vst [vmem:[%s294 + $0x12a8] sm:$0xff] %v1489
                %v1491 = vld [vmem:[%s293 + $0x24b0] sm:$0xff]
                %1492 = vst [vmem:[%s294 + $0x12b0] sm:$0xff] %v1491
                %v1493 = vld [vmem:[%s293 + $0x24b8] sm:$0xff]
                %1494 = vst [vmem:[%s294 + $0x12b8] sm:$0xff] %v1493
                %v1495 = vld [vmem:[%s293 + $0x24c0] sm:$0xff]
                %1496 = vst [vmem:[%s294 + $0x12c0] sm:$0xff] %v1495
                %v1497 = vld [vmem:[%s293 + $0x24c8] sm:$0xff]
                %1498 = vst [vmem:[%s294 + $0x12c8] sm:$0xff] %v1497
                %v1499 = vld [vmem:[%s293 + $0x24d0] sm:$0xff]
                %1500 = vst [vmem:[%s294 + $0x12d0] sm:$0xff] %v1499
                %v1501 = vld [vmem:[%s293 + $0x24d8] sm:$0xff]
                %1502 = vst [vmem:[%s294 + $0x12d8] sm:$0xff] %v1501
                %v1503 = vld [vmem:[%s293 + $0x24e0] sm:$0xff]
                %1504 = vst [vmem:[%s294 + $0x12e0] sm:$0xff] %v1503
                %v1505 = vld [vmem:[%s293 + $0x24e8] sm:$0xff]
                %1506 = vst [vmem:[%s294 + $0x12e8] sm:$0xff] %v1505
                %v1507 = vld [vmem:[%s293 + $0x24f0] sm:$0xff]
                %1508 = vst [vmem:[%s294 + $0x12f0] sm:$0xff] %v1507
                %v1509 = vld [vmem:[%s293 + $0x24f8] sm:$0xff]
                %1510 = vst [vmem:[%s294 + $0x12f8] sm:$0xff] %v1509
                %v1511 = vld [vmem:[%s293 + $0x2600] sm:$0xff]
                %1512 = vst [vmem:[%s294 + $0x1300] sm:$0xff] %v1511
                %v1513 = vld [vmem:[%s293 + $0x2608] sm:$0xff]
                %1514 = vst [vmem:[%s294 + $0x1308] sm:$0xff] %v1513
                %v1515 = vld [vmem:[%s293 + $0x2610] sm:$0xff]
                %1516 = vst [vmem:[%s294 + $0x1310] sm:$0xff] %v1515
                %v1517 = vld [vmem:[%s293 + $0x2618] sm:$0xff]
                %1518 = vst [vmem:[%s294 + $0x1318] sm:$0xff] %v1517
                %v1519 = vld [vmem:[%s293 + $0x2620] sm:$0xff]
                %1520 = vst [vmem:[%s294 + $0x1320] sm:$0xff] %v1519
                %v1521 = vld [vmem:[%s293 + $0x2628] sm:$0xff]
                %1522 = vst [vmem:[%s294 + $0x1328] sm:$0xff] %v1521
                %v1523 = vld [vmem:[%s293 + $0x2630] sm:$0xff]
                %1524 = vst [vmem:[%s294 + $0x1330] sm:$0xff] %v1523
                %v1525 = vld [vmem:[%s293 + $0x2638] sm:$0xff]
                %1526 = vst [vmem:[%s294 + $0x1338] sm:$0xff] %v1525
                %v1527 = vld [vmem:[%s293 + $0x2640] sm:$0xff]
                %1528 = vst [vmem:[%s294 + $0x1340] sm:$0xff] %v1527
                %v1529 = vld [vmem:[%s293 + $0x2648] sm:$0xff]
                %1530 = vst [vmem:[%s294 + $0x1348] sm:$0xff] %v1529
                %v1531 = vld [vmem:[%s293 + $0x2650] sm:$0xff]
                %1532 = vst [vmem:[%s294 + $0x1350] sm:$0xff] %v1531
                %v1533 = vld [vmem:[%s293 + $0x2658] sm:$0xff]
                %1534 = vst [vmem:[%s294 + $0x1358] sm:$0xff] %v1533
                %v1535 = vld [vmem:[%s293 + $0x2660] sm:$0xff]
                %1536 = vst [vmem:[%s294 + $0x1360] sm:$0xff] %v1535
                %v1537 = vld [vmem:[%s293 + $0x2668] sm:$0xff]
                %1538 = vst [vmem:[%s294 + $0x1368] sm:$0xff] %v1537
                %v1539 = vld [vmem:[%s293 + $0x2670] sm:$0xff]
                %1540 = vst [vmem:[%s294 + $0x1370] sm:$0xff] %v1539
                %v1541 = vld [vmem:[%s293 + $0x2678] sm:$0xff]
                %1542 = vst [vmem:[%s294 + $0x1378] sm:$0xff] %v1541
                %v1543 = vld [vmem:[%s293 + $0x2680] sm:$0xff]
                %1544 = vst [vmem:[%s294 + $0x1380] sm:$0xff] %v1543
                %v1545 = vld [vmem:[%s293 + $0x2688] sm:$0xff]
                %1546 = vst [vmem:[%s294 + $0x1388] sm:$0xff] %v1545
                %v1547 = vld [vmem:[%s293 + $0x2690] sm:$0xff]
                %1548 = vst [vmem:[%s294 + $0x1390] sm:$0xff] %v1547
                %v1549 = vld [vmem:[%s293 + $0x2698] sm:$0xff]
                %1550 = vst [vmem:[%s294 + $0x1398] sm:$0xff] %v1549
                %v1551 = vld [vmem:[%s293 + $0x26a0] sm:$0xff]
                %1552 = vst [vmem:[%s294 + $0x13a0] sm:$0xff] %v1551
                %v1553 = vld [vmem:[%s293 + $0x26a8] sm:$0xff]
                %1554 = vst [vmem:[%s294 + $0x13a8] sm:$0xff] %v1553
                %v1555 = vld [vmem:[%s293 + $0x26b0] sm:$0xff]
                %1556 = vst [vmem:[%s294 + $0x13b0] sm:$0xff] %v1555
                %v1557 = vld [vmem:[%s293 + $0x26b8] sm:$0xff]
                %1558 = vst [vmem:[%s294 + $0x13b8] sm:$0xff] %v1557
                %v1559 = vld [vmem:[%s293 + $0x26c0] sm:$0xff]
                %1560 = vst [vmem:[%s294 + $0x13c0] sm:$0xff] %v1559
                %v1561 = vld [vmem:[%s293 + $0x26c8] sm:$0xff]
                %1562 = vst [vmem:[%s294 + $0x13c8] sm:$0xff] %v1561
                %v1563 = vld [vmem:[%s293 + $0x26d0] sm:$0xff]
                %1564 = vst [vmem:[%s294 + $0x13d0] sm:$0xff] %v1563
                %v1565 = vld [vmem:[%s293 + $0x26d8] sm:$0xff]
                %1566 = vst [vmem:[%s294 + $0x13d8] sm:$0xff] %v1565
                %v1567 = vld [vmem:[%s293 + $0x26e0] sm:$0xff]
                %1568 = vst [vmem:[%s294 + $0x13e0] sm:$0xff] %v1567
                %v1569 = vld [vmem:[%s293 + $0x26e8] sm:$0xff]
                %1570 = vst [vmem:[%s294 + $0x13e8] sm:$0xff] %v1569
                %v1571 = vld [vmem:[%s293 + $0x26f0] sm:$0xff]
                %1572 = vst [vmem:[%s294 + $0x13f0] sm:$0xff] %v1571
                %v1573 = vld [vmem:[%s293 + $0x26f8] sm:$0xff]
                %1574 = vst [vmem:[%s294 + $0x13f8] sm:$0xff] %v1573
                %v1575 = vld [vmem:[%s293 + $0x2800] sm:$0xff]
                %1576 = vst [vmem:[%s294 + $0x1400] sm:$0xff] %v1575
                %v1577 = vld [vmem:[%s293 + $0x2808] sm:$0xff]
                %1578 = vst [vmem:[%s294 + $0x1408] sm:$0xff] %v1577
                %v1579 = vld [vmem:[%s293 + $0x2810] sm:$0xff]
                %1580 = vst [vmem:[%s294 + $0x1410] sm:$0xff] %v1579
                %v1581 = vld [vmem:[%s293 + $0x2818] sm:$0xff]
                %1582 = vst [vmem:[%s294 + $0x1418] sm:$0xff] %v1581
                %v1583 = vld [vmem:[%s293 + $0x2820] sm:$0xff]
                %1584 = vst [vmem:[%s294 + $0x1420] sm:$0xff] %v1583
                %v1585 = vld [vmem:[%s293 + $0x2828] sm:$0xff]
                %1586 = vst [vmem:[%s294 + $0x1428] sm:$0xff] %v1585
                %v1587 = vld [vmem:[%s293 + $0x2830] sm:$0xff]
                %1588 = vst [vmem:[%s294 + $0x1430] sm:$0xff] %v1587
                %v1589 = vld [vmem:[%s293 + $0x2838] sm:$0xff]
                %1590 = vst [vmem:[%s294 + $0x1438] sm:$0xff] %v1589
                %v1591 = vld [vmem:[%s293 + $0x2840] sm:$0xff]
                %1592 = vst [vmem:[%s294 + $0x1440] sm:$0xff] %v1591
                %v1593 = vld [vmem:[%s293 + $0x2848] sm:$0xff]
                %1594 = vst [vmem:[%s294 + $0x1448] sm:$0xff] %v1593
                %v1595 = vld [vmem:[%s293 + $0x2850] sm:$0xff]
                %1596 = vst [vmem:[%s294 + $0x1450] sm:$0xff] %v1595
                %v1597 = vld [vmem:[%s293 + $0x2858] sm:$0xff]
                %1598 = vst [vmem:[%s294 + $0x1458] sm:$0xff] %v1597
                %v1599 = vld [vmem:[%s293 + $0x2860] sm:$0xff]
                %1600 = vst [vmem:[%s294 + $0x1460] sm:$0xff] %v1599
                %v1601 = vld [vmem:[%s293 + $0x2868] sm:$0xff]
                %1602 = vst [vmem:[%s294 + $0x1468] sm:$0xff] %v1601
                %v1603 = vld [vmem:[%s293 + $0x2870] sm:$0xff]
                %1604 = vst [vmem:[%s294 + $0x1470] sm:$0xff] %v1603
                %v1605 = vld [vmem:[%s293 + $0x2878] sm:$0xff]
                %1606 = vst [vmem:[%s294 + $0x1478] sm:$0xff] %v1605
                %v1607 = vld [vmem:[%s293 + $0x2880] sm:$0xff]
                %1608 = vst [vmem:[%s294 + $0x1480] sm:$0xff] %v1607
                %v1609 = vld [vmem:[%s293 + $0x2888] sm:$0xff]
                %1610 = vst [vmem:[%s294 + $0x1488] sm:$0xff] %v1609
                %v1611 = vld [vmem:[%s293 + $0x2890] sm:$0xff]
                %1612 = vst [vmem:[%s294 + $0x1490] sm:$0xff] %v1611
                %v1613 = vld [vmem:[%s293 + $0x2898] sm:$0xff]
                %1614 = vst [vmem:[%s294 + $0x1498] sm:$0xff] %v1613
                %v1615 = vld [vmem:[%s293 + $0x28a0] sm:$0xff]
                %1616 = vst [vmem:[%s294 + $0x14a0] sm:$0xff] %v1615
                %v1617 = vld [vmem:[%s293 + $0x28a8] sm:$0xff]
                %1618 = vst [vmem:[%s294 + $0x14a8] sm:$0xff] %v1617
                %v1619 = vld [vmem:[%s293 + $0x28b0] sm:$0xff]
                %1620 = vst [vmem:[%s294 + $0x14b0] sm:$0xff] %v1619
                %v1621 = vld [vmem:[%s293 + $0x28b8] sm:$0xff]
                %1622 = vst [vmem:[%s294 + $0x14b8] sm:$0xff] %v1621
                %v1623 = vld [vmem:[%s293 + $0x28c0] sm:$0xff]
                %1624 = vst [vmem:[%s294 + $0x14c0] sm:$0xff] %v1623
                %v1625 = vld [vmem:[%s293 + $0x28c8] sm:$0xff]
                %1626 = vst [vmem:[%s294 + $0x14c8] sm:$0xff] %v1625
                %v1627 = vld [vmem:[%s293 + $0x28d0] sm:$0xff]
                %1628 = vst [vmem:[%s294 + $0x14d0] sm:$0xff] %v1627
                %v1629 = vld [vmem:[%s293 + $0x28d8] sm:$0xff]
                %1630 = vst [vmem:[%s294 + $0x14d8] sm:$0xff] %v1629
                %v1631 = vld [vmem:[%s293 + $0x28e0] sm:$0xff]
                %1632 = vst [vmem:[%s294 + $0x14e0] sm:$0xff] %v1631
                %v1633 = vld [vmem:[%s293 + $0x28e8] sm:$0xff]
                %1634 = vst [vmem:[%s294 + $0x14e8] sm:$0xff] %v1633
                %v1635 = vld [vmem:[%s293 + $0x28f0] sm:$0xff]
                %1636 = vst [vmem:[%s294 + $0x14f0] sm:$0xff] %v1635
                %v1637 = vld [vmem:[%s293 + $0x28f8] sm:$0xff]
                %1638 = vst [vmem:[%s294 + $0x14f8] sm:$0xff] %v1637
                %v1639 = vld [vmem:[%s293 + $0x2a00] sm:$0xff]
                %1640 = vst [vmem:[%s294 + $0x1500] sm:$0xff] %v1639
                %v1641 = vld [vmem:[%s293 + $0x2a08] sm:$0xff]
                %1642 = vst [vmem:[%s294 + $0x1508] sm:$0xff] %v1641
                %v1643 = vld [vmem:[%s293 + $0x2a10] sm:$0xff]
                %1644 = vst [vmem:[%s294 + $0x1510] sm:$0xff] %v1643
                %v1645 = vld [vmem:[%s293 + $0x2a18] sm:$0xff]
                %1646 = vst [vmem:[%s294 + $0x1518] sm:$0xff] %v1645
                %v1647 = vld [vmem:[%s293 + $0x2a20] sm:$0xff]
                %1648 = vst [vmem:[%s294 + $0x1520] sm:$0xff] %v1647
                %v1649 = vld [vmem:[%s293 + $0x2a28] sm:$0xff]
                %1650 = vst [vmem:[%s294 + $0x1528] sm:$0xff] %v1649
                %v1651 = vld [vmem:[%s293 + $0x2a30] sm:$0xff]
                %1652 = vst [vmem:[%s294 + $0x1530] sm:$0xff] %v1651
                %v1653 = vld [vmem:[%s293 + $0x2a38] sm:$0xff]
                %1654 = vst [vmem:[%s294 + $0x1538] sm:$0xff] %v1653
                %v1655 = vld [vmem:[%s293 + $0x2a40] sm:$0xff]
                %1656 = vst [vmem:[%s294 + $0x1540] sm:$0xff] %v1655
                %v1657 = vld [vmem:[%s293 + $0x2a48] sm:$0xff]
                %1658 = vst [vmem:[%s294 + $0x1548] sm:$0xff] %v1657
                %v1659 = vld [vmem:[%s293 + $0x2a50] sm:$0xff]
                %1660 = vst [vmem:[%s294 + $0x1550] sm:$0xff] %v1659
                %v1661 = vld [vmem:[%s293 + $0x2a58] sm:$0xff]
                %1662 = vst [vmem:[%s294 + $0x1558] sm:$0xff] %v1661
                %v1663 = vld [vmem:[%s293 + $0x2a60] sm:$0xff]
                %1664 = vst [vmem:[%s294 + $0x1560] sm:$0xff] %v1663
                %v1665 = vld [vmem:[%s293 + $0x2a68] sm:$0xff]
                %1666 = vst [vmem:[%s294 + $0x1568] sm:$0xff] %v1665
                %v1667 = vld [vmem:[%s293 + $0x2a70] sm:$0xff]
                %1668 = vst [vmem:[%s294 + $0x1570] sm:$0xff] %v1667
                %v1669 = vld [vmem:[%s293 + $0x2a78] sm:$0xff]
                %1670 = vst [vmem:[%s294 + $0x1578] sm:$0xff] %v1669
                %v1671 = vld [vmem:[%s293 + $0x2a80] sm:$0xff]
                %1672 = vst [vmem:[%s294 + $0x1580] sm:$0xff] %v1671
                %v1673 = vld [vmem:[%s293 + $0x2a88] sm:$0xff]
                %1674 = vst [vmem:[%s294 + $0x1588] sm:$0xff] %v1673
                %v1675 = vld [vmem:[%s293 + $0x2a90] sm:$0xff]
                %1676 = vst [vmem:[%s294 + $0x1590] sm:$0xff] %v1675
                %v1677 = vld [vmem:[%s293 + $0x2a98] sm:$0xff]
                %1678 = vst [vmem:[%s294 + $0x1598] sm:$0xff] %v1677
                %v1679 = vld [vmem:[%s293 + $0x2aa0] sm:$0xff]
                %1680 = vst [vmem:[%s294 + $0x15a0] sm:$0xff] %v1679
                %v1681 = vld [vmem:[%s293 + $0x2aa8] sm:$0xff]
                %1682 = vst [vmem:[%s294 + $0x15a8] sm:$0xff] %v1681
                %v1683 = vld [vmem:[%s293 + $0x2ab0] sm:$0xff]
                %1684 = vst [vmem:[%s294 + $0x15b0] sm:$0xff] %v1683
                %v1685 = vld [vmem:[%s293 + $0x2ab8] sm:$0xff]
                %1686 = vst [vmem:[%s294 + $0x15b8] sm:$0xff] %v1685
                %v1687 = vld [vmem:[%s293 + $0x2ac0] sm:$0xff]
                %1688 = vst [vmem:[%s294 + $0x15c0] sm:$0xff] %v1687
                %v1689 = vld [vmem:[%s293 + $0x2ac8] sm:$0xff]
                %1690 = vst [vmem:[%s294 + $0x15c8] sm:$0xff] %v1689
                %v1691 = vld [vmem:[%s293 + $0x2ad0] sm:$0xff]
                %1692 = vst [vmem:[%s294 + $0x15d0] sm:$0xff] %v1691
                %v1693 = vld [vmem:[%s293 + $0x2ad8] sm:$0xff]
                %1694 = vst [vmem:[%s294 + $0x15d8] sm:$0xff] %v1693
                %v1695 = vld [vmem:[%s293 + $0x2ae0] sm:$0xff]
                %1696 = vst [vmem:[%s294 + $0x15e0] sm:$0xff] %v1695
                %v1697 = vld [vmem:[%s293 + $0x2ae8] sm:$0xff]
                %1698 = vst [vmem:[%s294 + $0x15e8] sm:$0xff] %v1697
                %v1699 = vld [vmem:[%s293 + $0x2af0] sm:$0xff]
                %1700 = vst [vmem:[%s294 + $0x15f0] sm:$0xff] %v1699
                %v1701 = vld [vmem:[%s293 + $0x2af8] sm:$0xff]
                %1702 = vst [vmem:[%s294 + $0x15f8] sm:$0xff] %v1701
                %v1703 = vld [vmem:[%s293 + $0x2c00] sm:$0xff]
                %1704 = vst [vmem:[%s294 + $0x1600] sm:$0xff] %v1703
                %v1705 = vld [vmem:[%s293 + $0x2c08] sm:$0xff]
                %1706 = vst [vmem:[%s294 + $0x1608] sm:$0xff] %v1705
                %v1707 = vld [vmem:[%s293 + $0x2c10] sm:$0xff]
                %1708 = vst [vmem:[%s294 + $0x1610] sm:$0xff] %v1707
                %v1709 = vld [vmem:[%s293 + $0x2c18] sm:$0xff]
                %1710 = vst [vmem:[%s294 + $0x1618] sm:$0xff] %v1709
                %v1711 = vld [vmem:[%s293 + $0x2c20] sm:$0xff]
                %1712 = vst [vmem:[%s294 + $0x1620] sm:$0xff] %v1711
                %v1713 = vld [vmem:[%s293 + $0x2c28] sm:$0xff]
                %1714 = vst [vmem:[%s294 + $0x1628] sm:$0xff] %v1713
                %v1715 = vld [vmem:[%s293 + $0x2c30] sm:$0xff]
                %1716 = vst [vmem:[%s294 + $0x1630] sm:$0xff] %v1715
                %v1717 = vld [vmem:[%s293 + $0x2c38] sm:$0xff]
                %1718 = vst [vmem:[%s294 + $0x1638] sm:$0xff] %v1717
                %v1719 = vld [vmem:[%s293 + $0x2c40] sm:$0xff]
                %1720 = vst [vmem:[%s294 + $0x1640] sm:$0xff] %v1719
                %v1721 = vld [vmem:[%s293 + $0x2c48] sm:$0xff]
                %1722 = vst [vmem:[%s294 + $0x1648] sm:$0xff] %v1721
                %v1723 = vld [vmem:[%s293 + $0x2c50] sm:$0xff]
                %1724 = vst [vmem:[%s294 + $0x1650] sm:$0xff] %v1723
                %v1725 = vld [vmem:[%s293 + $0x2c58] sm:$0xff]
                %1726 = vst [vmem:[%s294 + $0x1658] sm:$0xff] %v1725
                %v1727 = vld [vmem:[%s293 + $0x2c60] sm:$0xff]
                %1728 = vst [vmem:[%s294 + $0x1660] sm:$0xff] %v1727
                %v1729 = vld [vmem:[%s293 + $0x2c68] sm:$0xff]
                %1730 = vst [vmem:[%s294 + $0x1668] sm:$0xff] %v1729
                %v1731 = vld [vmem:[%s293 + $0x2c70] sm:$0xff]
                %1732 = vst [vmem:[%s294 + $0x1670] sm:$0xff] %v1731
                %v1733 = vld [vmem:[%s293 + $0x2c78] sm:$0xff]
                %1734 = vst [vmem:[%s294 + $0x1678] sm:$0xff] %v1733
                %v1735 = vld [vmem:[%s293 + $0x2c80] sm:$0xff]
                %1736 = vst [vmem:[%s294 + $0x1680] sm:$0xff] %v1735
                %v1737 = vld [vmem:[%s293 + $0x2c88] sm:$0xff]
                %1738 = vst [vmem:[%s294 + $0x1688] sm:$0xff] %v1737
                %v1739 = vld [vmem:[%s293 + $0x2c90] sm:$0xff]
                %1740 = vst [vmem:[%s294 + $0x1690] sm:$0xff] %v1739
                %v1741 = vld [vmem:[%s293 + $0x2c98] sm:$0xff]
                %1742 = vst [vmem:[%s294 + $0x1698] sm:$0xff] %v1741
                %v1743 = vld [vmem:[%s293 + $0x2ca0] sm:$0xff]
                %1744 = vst [vmem:[%s294 + $0x16a0] sm:$0xff] %v1743
                %v1745 = vld [vmem:[%s293 + $0x2ca8] sm:$0xff]
                %1746 = vst [vmem:[%s294 + $0x16a8] sm:$0xff] %v1745
                %v1747 = vld [vmem:[%s293 + $0x2cb0] sm:$0xff]
                %1748 = vst [vmem:[%s294 + $0x16b0] sm:$0xff] %v1747
                %v1749 = vld [vmem:[%s293 + $0x2cb8] sm:$0xff]
                %1750 = vst [vmem:[%s294 + $0x16b8] sm:$0xff] %v1749
                %v1751 = vld [vmem:[%s293 + $0x2cc0] sm:$0xff]
                %1752 = vst [vmem:[%s294 + $0x16c0] sm:$0xff] %v1751
                %v1753 = vld [vmem:[%s293 + $0x2cc8] sm:$0xff]
                %1754 = vst [vmem:[%s294 + $0x16c8] sm:$0xff] %v1753
                %v1755 = vld [vmem:[%s293 + $0x2cd0] sm:$0xff]
                %1756 = vst [vmem:[%s294 + $0x16d0] sm:$0xff] %v1755
                %v1757 = vld [vmem:[%s293 + $0x2cd8] sm:$0xff]
                %1758 = vst [vmem:[%s294 + $0x16d8] sm:$0xff] %v1757
                %v1759 = vld [vmem:[%s293 + $0x2ce0] sm:$0xff]
                %1760 = vst [vmem:[%s294 + $0x16e0] sm:$0xff] %v1759
                %v1761 = vld [vmem:[%s293 + $0x2ce8] sm:$0xff]
                %1762 = vst [vmem:[%s294 + $0x16e8] sm:$0xff] %v1761
                %v1763 = vld [vmem:[%s293 + $0x2cf0] sm:$0xff]
                %1764 = vst [vmem:[%s294 + $0x16f0] sm:$0xff] %v1763
                %v1765 = vld [vmem:[%s293 + $0x2cf8] sm:$0xff]
                %1766 = vst [vmem:[%s294 + $0x16f8] sm:$0xff] %v1765
                %v1767 = vld [vmem:[%s293 + $0x2e00] sm:$0xff]
                %1768 = vst [vmem:[%s294 + $0x1700] sm:$0xff] %v1767
                %v1769 = vld [vmem:[%s293 + $0x2e08] sm:$0xff]
                %1770 = vst [vmem:[%s294 + $0x1708] sm:$0xff] %v1769
                %v1771 = vld [vmem:[%s293 + $0x2e10] sm:$0xff]
                %1772 = vst [vmem:[%s294 + $0x1710] sm:$0xff] %v1771
                %v1773 = vld [vmem:[%s293 + $0x2e18] sm:$0xff]
                %1774 = vst [vmem:[%s294 + $0x1718] sm:$0xff] %v1773
                %v1775 = vld [vmem:[%s293 + $0x2e20] sm:$0xff]
                %1776 = vst [vmem:[%s294 + $0x1720] sm:$0xff] %v1775
                %v1777 = vld [vmem:[%s293 + $0x2e28] sm:$0xff]
                %1778 = vst [vmem:[%s294 + $0x1728] sm:$0xff] %v1777
                %v1779 = vld [vmem:[%s293 + $0x2e30] sm:$0xff]
                %1780 = vst [vmem:[%s294 + $0x1730] sm:$0xff] %v1779
                %v1781 = vld [vmem:[%s293 + $0x2e38] sm:$0xff]
                %1782 = vst [vmem:[%s294 + $0x1738] sm:$0xff] %v1781
                %v1783 = vld [vmem:[%s293 + $0x2e40] sm:$0xff]
                %1784 = vst [vmem:[%s294 + $0x1740] sm:$0xff] %v1783
                %v1785 = vld [vmem:[%s293 + $0x2e48] sm:$0xff]
                %1786 = vst [vmem:[%s294 + $0x1748] sm:$0xff] %v1785
                %v1787 = vld [vmem:[%s293 + $0x2e50] sm:$0xff]
                %1788 = vst [vmem:[%s294 + $0x1750] sm:$0xff] %v1787
                %v1789 = vld [vmem:[%s293 + $0x2e58] sm:$0xff]
                %1790 = vst [vmem:[%s294 + $0x1758] sm:$0xff] %v1789
                %v1791 = vld [vmem:[%s293 + $0x2e60] sm:$0xff]
                %1792 = vst [vmem:[%s294 + $0x1760] sm:$0xff] %v1791
                %v1793 = vld [vmem:[%s293 + $0x2e68] sm:$0xff]
                %1794 = vst [vmem:[%s294 + $0x1768] sm:$0xff] %v1793
                %v1795 = vld [vmem:[%s293 + $0x2e70] sm:$0xff]
                %1796 = vst [vmem:[%s294 + $0x1770] sm:$0xff] %v1795
                %v1797 = vld [vmem:[%s293 + $0x2e78] sm:$0xff]
                %1798 = vst [vmem:[%s294 + $0x1778] sm:$0xff] %v1797
                %v1799 = vld [vmem:[%s293 + $0x2e80] sm:$0xff]
                %1800 = vst [vmem:[%s294 + $0x1780] sm:$0xff] %v1799
                %v1801 = vld [vmem:[%s293 + $0x2e88] sm:$0xff]
                %1802 = vst [vmem:[%s294 + $0x1788] sm:$0xff] %v1801
                %v1803 = vld [vmem:[%s293 + $0x2e90] sm:$0xff]
                %1804 = vst [vmem:[%s294 + $0x1790] sm:$0xff] %v1803
                %v1805 = vld [vmem:[%s293 + $0x2e98] sm:$0xff]
                %1806 = vst [vmem:[%s294 + $0x1798] sm:$0xff] %v1805
                %v1807 = vld [vmem:[%s293 + $0x2ea0] sm:$0xff]
                %1808 = vst [vmem:[%s294 + $0x17a0] sm:$0xff] %v1807
                %v1809 = vld [vmem:[%s293 + $0x2ea8] sm:$0xff]
                %1810 = vst [vmem:[%s294 + $0x17a8] sm:$0xff] %v1809
                %v1811 = vld [vmem:[%s293 + $0x2eb0] sm:$0xff]
                %1812 = vst [vmem:[%s294 + $0x17b0] sm:$0xff] %v1811
                %v1813 = vld [vmem:[%s293 + $0x2eb8] sm:$0xff]
                %1814 = vst [vmem:[%s294 + $0x17b8] sm:$0xff] %v1813
                %v1815 = vld [vmem:[%s293 + $0x2ec0] sm:$0xff]
                %1816 = vst [vmem:[%s294 + $0x17c0] sm:$0xff] %v1815
                %v1817 = vld [vmem:[%s293 + $0x2ec8] sm:$0xff]
                %1818 = vst [vmem:[%s294 + $0x17c8] sm:$0xff] %v1817
                %v1819 = vld [vmem:[%s293 + $0x2ed0] sm:$0xff]
                %1820 = vst [vmem:[%s294 + $0x17d0] sm:$0xff] %v1819
                %v1821 = vld [vmem:[%s293 + $0x2ed8] sm:$0xff]
                %1822 = vst [vmem:[%s294 + $0x17d8] sm:$0xff] %v1821
                %v1823 = vld [vmem:[%s293 + $0x2ee0] sm:$0xff]
                %1824 = vst [vmem:[%s294 + $0x17e0] sm:$0xff] %v1823
                %v1825 = vld [vmem:[%s293 + $0x2ee8] sm:$0xff]
                %1826 = vst [vmem:[%s294 + $0x17e8] sm:$0xff] %v1825
                %v1827 = vld [vmem:[%s293 + $0x2ef0] sm:$0xff]
                %1828 = vst [vmem:[%s294 + $0x17f0] sm:$0xff] %v1827
                %v1829 = vld [vmem:[%s293 + $0x2ef8] sm:$0xff]
                %1830 = vst [vmem:[%s294 + $0x17f8] sm:$0xff] %v1829
                %v1831 = vld [vmem:[%s293 + $0x3000] sm:$0xff]
                %1832 = vst [vmem:[%s294 + $0x1800] sm:$0xff] %v1831
                %v1833 = vld [vmem:[%s293 + $0x3008] sm:$0xff]
                %1834 = vst [vmem:[%s294 + $0x1808] sm:$0xff] %v1833
                %v1835 = vld [vmem:[%s293 + $0x3010] sm:$0xff]
                %1836 = vst [vmem:[%s294 + $0x1810] sm:$0xff] %v1835
                %v1837 = vld [vmem:[%s293 + $0x3018] sm:$0xff]
                %1838 = vst [vmem:[%s294 + $0x1818] sm:$0xff] %v1837
                %v1839 = vld [vmem:[%s293 + $0x3020] sm:$0xff]
                %1840 = vst [vmem:[%s294 + $0x1820] sm:$0xff] %v1839
                %v1841 = vld [vmem:[%s293 + $0x3028] sm:$0xff]
                %1842 = vst [vmem:[%s294 + $0x1828] sm:$0xff] %v1841
                %v1843 = vld [vmem:[%s293 + $0x3030] sm:$0xff]
                %1844 = vst [vmem:[%s294 + $0x1830] sm:$0xff] %v1843
                %v1845 = vld [vmem:[%s293 + $0x3038] sm:$0xff]
                %1846 = vst [vmem:[%s294 + $0x1838] sm:$0xff] %v1845
                %v1847 = vld [vmem:[%s293 + $0x3040] sm:$0xff]
                %1848 = vst [vmem:[%s294 + $0x1840] sm:$0xff] %v1847
                %v1849 = vld [vmem:[%s293 + $0x3048] sm:$0xff]
                %1850 = vst [vmem:[%s294 + $0x1848] sm:$0xff] %v1849
                %v1851 = vld [vmem:[%s293 + $0x3050] sm:$0xff]
                %1852 = vst [vmem:[%s294 + $0x1850] sm:$0xff] %v1851
                %v1853 = vld [vmem:[%s293 + $0x3058] sm:$0xff]
                %1854 = vst [vmem:[%s294 + $0x1858] sm:$0xff] %v1853
                %v1855 = vld [vmem:[%s293 + $0x3060] sm:$0xff]
                %1856 = vst [vmem:[%s294 + $0x1860] sm:$0xff] %v1855
                %v1857 = vld [vmem:[%s293 + $0x3068] sm:$0xff]
                %1858 = vst [vmem:[%s294 + $0x1868] sm:$0xff] %v1857
                %v1859 = vld [vmem:[%s293 + $0x3070] sm:$0xff]
                %1860 = vst [vmem:[%s294 + $0x1870] sm:$0xff] %v1859
                %v1861 = vld [vmem:[%s293 + $0x3078] sm:$0xff]
                %1862 = vst [vmem:[%s294 + $0x1878] sm:$0xff] %v1861
                %v1863 = vld [vmem:[%s293 + $0x3080] sm:$0xff]
                %1864 = vst [vmem:[%s294 + $0x1880] sm:$0xff] %v1863
                %v1865 = vld [vmem:[%s293 + $0x3088] sm:$0xff]
                %1866 = vst [vmem:[%s294 + $0x1888] sm:$0xff] %v1865
                %v1867 = vld [vmem:[%s293 + $0x3090] sm:$0xff]
                %1868 = vst [vmem:[%s294 + $0x1890] sm:$0xff] %v1867
                %v1869 = vld [vmem:[%s293 + $0x3098] sm:$0xff]
                %1870 = vst [vmem:[%s294 + $0x1898] sm:$0xff] %v1869
                %v1871 = vld [vmem:[%s293 + $0x30a0] sm:$0xff]
                %1872 = vst [vmem:[%s294 + $0x18a0] sm:$0xff] %v1871
                %v1873 = vld [vmem:[%s293 + $0x30a8] sm:$0xff]
                %1874 = vst [vmem:[%s294 + $0x18a8] sm:$0xff] %v1873
                %v1875 = vld [vmem:[%s293 + $0x30b0] sm:$0xff]
                %1876 = vst [vmem:[%s294 + $0x18b0] sm:$0xff] %v1875
                %v1877 = vld [vmem:[%s293 + $0x30b8] sm:$0xff]
                %1878 = vst [vmem:[%s294 + $0x18b8] sm:$0xff] %v1877
                %v1879 = vld [vmem:[%s293 + $0x30c0] sm:$0xff]
                %1880 = vst [vmem:[%s294 + $0x18c0] sm:$0xff] %v1879
                %v1881 = vld [vmem:[%s293 + $0x30c8] sm:$0xff]
                %1882 = vst [vmem:[%s294 + $0x18c8] sm:$0xff] %v1881
                %v1883 = vld [vmem:[%s293 + $0x30d0] sm:$0xff]
                %1884 = vst [vmem:[%s294 + $0x18d0] sm:$0xff] %v1883
                %v1885 = vld [vmem:[%s293 + $0x30d8] sm:$0xff]
                %1886 = vst [vmem:[%s294 + $0x18d8] sm:$0xff] %v1885
                %v1887 = vld [vmem:[%s293 + $0x30e0] sm:$0xff]
                %1888 = vst [vmem:[%s294 + $0x18e0] sm:$0xff] %v1887
                %v1889 = vld [vmem:[%s293 + $0x30e8] sm:$0xff]
                %1890 = vst [vmem:[%s294 + $0x18e8] sm:$0xff] %v1889
                %v1891 = vld [vmem:[%s293 + $0x30f0] sm:$0xff]
                %1892 = vst [vmem:[%s294 + $0x18f0] sm:$0xff] %v1891
                %v1893 = vld [vmem:[%s293 + $0x30f8] sm:$0xff]
                %1894 = vst [vmem:[%s294 + $0x18f8] sm:$0xff] %v1893
                %v1895 = vld [vmem:[%s293 + $0x3200] sm:$0xff]
                %1896 = vst [vmem:[%s294 + $0x1900] sm:$0xff] %v1895
                %v1897 = vld [vmem:[%s293 + $0x3208] sm:$0xff]
                %1898 = vst [vmem:[%s294 + $0x1908] sm:$0xff] %v1897
                %v1899 = vld [vmem:[%s293 + $0x3210] sm:$0xff]
                %1900 = vst [vmem:[%s294 + $0x1910] sm:$0xff] %v1899
                %v1901 = vld [vmem:[%s293 + $0x3218] sm:$0xff]
                %1902 = vst [vmem:[%s294 + $0x1918] sm:$0xff] %v1901
                %v1903 = vld [vmem:[%s293 + $0x3220] sm:$0xff]
                %1904 = vst [vmem:[%s294 + $0x1920] sm:$0xff] %v1903
                %v1905 = vld [vmem:[%s293 + $0x3228] sm:$0xff]
                %1906 = vst [vmem:[%s294 + $0x1928] sm:$0xff] %v1905
                %v1907 = vld [vmem:[%s293 + $0x3230] sm:$0xff]
                %1908 = vst [vmem:[%s294 + $0x1930] sm:$0xff] %v1907
                %v1909 = vld [vmem:[%s293 + $0x3238] sm:$0xff]
                %1910 = vst [vmem:[%s294 + $0x1938] sm:$0xff] %v1909
                %v1911 = vld [vmem:[%s293 + $0x3240] sm:$0xff]
                %1912 = vst [vmem:[%s294 + $0x1940] sm:$0xff] %v1911
                %v1913 = vld [vmem:[%s293 + $0x3248] sm:$0xff]
                %1914 = vst [vmem:[%s294 + $0x1948] sm:$0xff] %v1913
                %v1915 = vld [vmem:[%s293 + $0x3250] sm:$0xff]
                %1916 = vst [vmem:[%s294 + $0x1950] sm:$0xff] %v1915
                %v1917 = vld [vmem:[%s293 + $0x3258] sm:$0xff]
                %1918 = vst [vmem:[%s294 + $0x1958] sm:$0xff] %v1917
                %v1919 = vld [vmem:[%s293 + $0x3260] sm:$0xff]
                %1920 = vst [vmem:[%s294 + $0x1960] sm:$0xff] %v1919
                %v1921 = vld [vmem:[%s293 + $0x3268] sm:$0xff]
                %1922 = vst [vmem:[%s294 + $0x1968] sm:$0xff] %v1921
                %v1923 = vld [vmem:[%s293 + $0x3270] sm:$0xff]
                %1924 = vst [vmem:[%s294 + $0x1970] sm:$0xff] %v1923
                %v1925 = vld [vmem:[%s293 + $0x3278] sm:$0xff]
                %1926 = vst [vmem:[%s294 + $0x1978] sm:$0xff] %v1925
                %v1927 = vld [vmem:[%s293 + $0x3280] sm:$0xff]
                %1928 = vst [vmem:[%s294 + $0x1980] sm:$0xff] %v1927
                %v1929 = vld [vmem:[%s293 + $0x3288] sm:$0xff]
                %1930 = vst [vmem:[%s294 + $0x1988] sm:$0xff] %v1929
                %v1931 = vld [vmem:[%s293 + $0x3290] sm:$0xff]
                %1932 = vst [vmem:[%s294 + $0x1990] sm:$0xff] %v1931
                %v1933 = vld [vmem:[%s293 + $0x3298] sm:$0xff]
                %1934 = vst [vmem:[%s294 + $0x1998] sm:$0xff] %v1933
                %v1935 = vld [vmem:[%s293 + $0x32a0] sm:$0xff]
                %1936 = vst [vmem:[%s294 + $0x19a0] sm:$0xff] %v1935
                %v1937 = vld [vmem:[%s293 + $0x32a8] sm:$0xff]
                %1938 = vst [vmem:[%s294 + $0x19a8] sm:$0xff] %v1937
                %v1939 = vld [vmem:[%s293 + $0x32b0] sm:$0xff]
                %1940 = vst [vmem:[%s294 + $0x19b0] sm:$0xff] %v1939
                %v1941 = vld [vmem:[%s293 + $0x32b8] sm:$0xff]
                %1942 = vst [vmem:[%s294 + $0x19b8] sm:$0xff] %v1941
                %v1943 = vld [vmem:[%s293 + $0x32c0] sm:$0xff]
                %1944 = vst [vmem:[%s294 + $0x19c0] sm:$0xff] %v1943
                %v1945 = vld [vmem:[%s293 + $0x32c8] sm:$0xff]
                %1946 = vst [vmem:[%s294 + $0x19c8] sm:$0xff] %v1945
                %v1947 = vld [vmem:[%s293 + $0x32d0] sm:$0xff]
                %1948 = vst [vmem:[%s294 + $0x19d0] sm:$0xff] %v1947
                %v1949 = vld [vmem:[%s293 + $0x32d8] sm:$0xff]
                %1950 = vst [vmem:[%s294 + $0x19d8] sm:$0xff] %v1949
                %v1951 = vld [vmem:[%s293 + $0x32e0] sm:$0xff]
                %1952 = vst [vmem:[%s294 + $0x19e0] sm:$0xff] %v1951
                %v1953 = vld [vmem:[%s293 + $0x32e8] sm:$0xff]
                %1954 = vst [vmem:[%s294 + $0x19e8] sm:$0xff] %v1953
                %v1955 = vld [vmem:[%s293 + $0x32f0] sm:$0xff]
                %1956 = vst [vmem:[%s294 + $0x19f0] sm:$0xff] %v1955
                %v1957 = vld [vmem:[%s293 + $0x32f8] sm:$0xff]
                %1958 = vst [vmem:[%s294 + $0x19f8] sm:$0xff] %v1957
                %v1959 = vld [vmem:[%s293 + $0x3400] sm:$0xff]
                %1960 = vst [vmem:[%s294 + $0x1a00] sm:$0xff] %v1959
                %v1961 = vld [vmem:[%s293 + $0x3408] sm:$0xff]
                %1962 = vst [vmem:[%s294 + $0x1a08] sm:$0xff] %v1961
                %v1963 = vld [vmem:[%s293 + $0x3410] sm:$0xff]
                %1964 = vst [vmem:[%s294 + $0x1a10] sm:$0xff] %v1963
                %v1965 = vld [vmem:[%s293 + $0x3418] sm:$0xff]
                %1966 = vst [vmem:[%s294 + $0x1a18] sm:$0xff] %v1965
                %v1967 = vld [vmem:[%s293 + $0x3420] sm:$0xff]
                %1968 = vst [vmem:[%s294 + $0x1a20] sm:$0xff] %v1967
                %v1969 = vld [vmem:[%s293 + $0x3428] sm:$0xff]
                %1970 = vst [vmem:[%s294 + $0x1a28] sm:$0xff] %v1969
                %v1971 = vld [vmem:[%s293 + $0x3430] sm:$0xff]
                %1972 = vst [vmem:[%s294 + $0x1a30] sm:$0xff] %v1971
                %v1973 = vld [vmem:[%s293 + $0x3438] sm:$0xff]
                %1974 = vst [vmem:[%s294 + $0x1a38] sm:$0xff] %v1973
                %v1975 = vld [vmem:[%s293 + $0x3440] sm:$0xff]
                %1976 = vst [vmem:[%s294 + $0x1a40] sm:$0xff] %v1975
                %v1977 = vld [vmem:[%s293 + $0x3448] sm:$0xff]
                %1978 = vst [vmem:[%s294 + $0x1a48] sm:$0xff] %v1977
                %v1979 = vld [vmem:[%s293 + $0x3450] sm:$0xff]
                %1980 = vst [vmem:[%s294 + $0x1a50] sm:$0xff] %v1979
                %v1981 = vld [vmem:[%s293 + $0x3458] sm:$0xff]
                %1982 = vst [vmem:[%s294 + $0x1a58] sm:$0xff] %v1981
                %v1983 = vld [vmem:[%s293 + $0x3460] sm:$0xff]
                %1984 = vst [vmem:[%s294 + $0x1a60] sm:$0xff] %v1983
                %v1985 = vld [vmem:[%s293 + $0x3468] sm:$0xff]
                %1986 = vst [vmem:[%s294 + $0x1a68] sm:$0xff] %v1985
                %v1987 = vld [vmem:[%s293 + $0x3470] sm:$0xff]
                %1988 = vst [vmem:[%s294 + $0x1a70] sm:$0xff] %v1987
                %v1989 = vld [vmem:[%s293 + $0x3478] sm:$0xff]
                %1990 = vst [vmem:[%s294 + $0x1a78] sm:$0xff] %v1989
                %v1991 = vld [vmem:[%s293 + $0x3480] sm:$0xff]
                %1992 = vst [vmem:[%s294 + $0x1a80] sm:$0xff] %v1991
                %v1993 = vld [vmem:[%s293 + $0x3488] sm:$0xff]
                %1994 = vst [vmem:[%s294 + $0x1a88] sm:$0xff] %v1993
                %v1995 = vld [vmem:[%s293 + $0x3490] sm:$0xff]
                %1996 = vst [vmem:[%s294 + $0x1a90] sm:$0xff] %v1995
                %v1997 = vld [vmem:[%s293 + $0x3498] sm:$0xff]
                %1998 = vst [vmem:[%s294 + $0x1a98] sm:$0xff] %v1997
                %v1999 = vld [vmem:[%s293 + $0x34a0] sm:$0xff]
                %2000 = vst [vmem:[%s294 + $0x1aa0] sm:$0xff] %v1999
                %v2001 = vld [vmem:[%s293 + $0x34a8] sm:$0xff]
                %2002 = vst [vmem:[%s294 + $0x1aa8] sm:$0xff] %v2001
                %v2003 = vld [vmem:[%s293 + $0x34b0] sm:$0xff]
                %2004 = vst [vmem:[%s294 + $0x1ab0] sm:$0xff] %v2003
                %v2005 = vld [vmem:[%s293 + $0x34b8] sm:$0xff]
                %2006 = vst [vmem:[%s294 + $0x1ab8] sm:$0xff] %v2005
                %v2007 = vld [vmem:[%s293 + $0x34c0] sm:$0xff]
                %2008 = vst [vmem:[%s294 + $0x1ac0] sm:$0xff] %v2007
                %v2009 = vld [vmem:[%s293 + $0x34c8] sm:$0xff]
                %2010 = vst [vmem:[%s294 + $0x1ac8] sm:$0xff] %v2009
                %v2011 = vld [vmem:[%s293 + $0x34d0] sm:$0xff]
                %2012 = vst [vmem:[%s294 + $0x1ad0] sm:$0xff] %v2011
                %v2013 = vld [vmem:[%s293 + $0x34d8] sm:$0xff]
                %2014 = vst [vmem:[%s294 + $0x1ad8] sm:$0xff] %v2013
                %v2015 = vld [vmem:[%s293 + $0x34e0] sm:$0xff]
                %2016 = vst [vmem:[%s294 + $0x1ae0] sm:$0xff] %v2015
                %v2017 = vld [vmem:[%s293 + $0x34e8] sm:$0xff]
                %2018 = vst [vmem:[%s294 + $0x1ae8] sm:$0xff] %v2017
                %v2019 = vld [vmem:[%s293 + $0x34f0] sm:$0xff]
                %2020 = vst [vmem:[%s294 + $0x1af0] sm:$0xff] %v2019
                %v2021 = vld [vmem:[%s293 + $0x34f8] sm:$0xff]
                %2022 = vst [vmem:[%s294 + $0x1af8] sm:$0xff] %v2021
              $region57: #{sdf_to_nerf_forward.3} parent=51 // loop_footer
                %s292 = sadd.s32 1, %s288
              $region58: #{sdf_to_nerf_forward.3} parent=51 // loop_footer_branch
                %287 = sbr.rel target = $region54
              $region59: #{sdf_to_nerf_forward.3} parent=51 // loop_exit
                _
            $region52: #{sdf_to_nerf_forward.3} parent=47 // pred_fallthru
              _
            // Predicated region
            $region60: #{sdf_to_nerf_forward.3} parent=47 // pred_check
              _
            $region61: #{sdf_to_nerf_forward.3} parent=47 // pred_check_branch
              %2024 = sbr.rel target = $region63
            $region62: #{sdf_to_nerf_forward.3} parent=47 // pred_region
              _
            $region63: #{sdf_to_nerf_forward.3} parent=47 // pred_fallthru
              _
          $region48: #{sdf_to_nerf_forward.3} parent=43 // pred_fallthru
            _
          %2025 = vnop
        $region44: #{sdf_to_nerf_forward.3} parent=27 // pred_fallthru
          _
      $region28: #{sdf_to_nerf_forward.3} parent=5 // pred_fallthru
        _
      %p2026 = scmp.le.s32.totalorder 1, %s14
      %p2027 = scmp.lt.s32.totalorder %s14, 3
      %p2028 = pnand %p2026, %p2027
      %p2029 = pneg %p2028
      // Predicated region
      $region64: #{sdf_to_nerf_forward.3} parent=5 // pred_check
        _
      $region65: #{sdf_to_nerf_forward.3} parent=5 // pred_check_branch
        %2031 = sbr.rel (%p2028) target = $region67
      $region66: #{sdf_to_nerf_forward.3} parent=5 // pred_region
        %s2032 = ssub.s32 %s14, 1
        // Predicated region
        $region68: #{sdf_to_nerf_forward.3} parent=66 // pred_check
          %p2033 = pneg %p35
        $region69: #{sdf_to_nerf_forward.3} parent=66 // pred_check_branch
          %2035 = sbr.rel (%p2033) target = $region71
        $region70: #{sdf_to_nerf_forward.3} parent=66 // pred_region
          %2036 = dma.done [#allocation3], 16
        $region71: #{sdf_to_nerf_forward.3} parent=66 // pred_fallthru
          _
        %s2037 = sand.u32 %s168, 1
        %s2038 = sand.u32 %s168, 1
        %s2039 = smul.addr %s2038, 6912
        %s2040 = scalar_lea.vmem [#allocation4], %s2039
        // Predicated region
        $region72: #{sdf_to_nerf_forward.3} parent=66 // pred_check
          %p2041 = pneg %p181
        $region73: #{sdf_to_nerf_forward.3} parent=66 // pred_check_branch
          %2043 = sbr.rel (%p2041) target = $region75
        $region74: #{sdf_to_nerf_forward.3} parent=66 // pred_region
          _
        $region75: #{sdf_to_nerf_forward.3} parent=66 // pred_fallthru
          _
        %2044 = sfence
        %p2045 = pneg %p35
        %p2046 = pneg %p32
        %p2047 = pneg %p56
        %p2048 = pneg %p53
        %p2049 = pneg %p77
        %p2050 = pneg %p74
        %s2051 = smul.u32 16, %s19
        %p2052 = scmp.lt.s32.totalorder %s2051, 31
        %s2053 = scalar_select %p2052, %s2051, 31
        %s2054 = smul.addr %s2053, 2
        %s2055 = smul.addr %s2054, 8
        %s2056 = scalar_lea.vmem %s3, %s2055
        %p2057 = pneg %p103
        %p2058 = pneg %p100
        %s2059 = smul.u32 16, %s19
        %p2060 = scmp.lt.s32.totalorder %s2059, 31
        %s2061 = scalar_select %p2060, %s2059, 31
        %s2062 = smul.addr %s2061, 2
        %s2063 = smul.addr %s2062, 8
        %s2064 = scalar_lea.vmem %s4, %s2063
        %p2065 = pneg %p129
        %p2066 = pneg %p126
        %s2067 = smul.u32 16, %s19
        %p2068 = scmp.lt.s32.totalorder %s2067, 31
        %s2069 = scalar_select %p2068, %s2067, 31
        %s2070 = smul.addr %s2069, 8
        %s2071 = scalar_lea.vmem %s5, %s2070
        %p2072 = pneg %p155
        %p2073 = pneg %p152
        %s2074 = sand.u32 %s168, 1
        %s2075 = sand.u32 %s168, 1
        %s2076 = smul.addr %s2075, 6912
        %s2077 = scalar_lea.vmem [#allocation4], %s2076
        %p2078 = pneg %p181
        %p2079 = pneg %p178
        %p2080 = pneg %p207
        %p2081 = pneg %p204
        %s2082 = smul.u32 16, %s19
        %p2083 = scmp.lt.s32.totalorder %s2082, 31
        %s2084 = scalar_select %p2083, %s2082, 31
        %s2085 = smul.addr %s2084, 8
        %s2086 = scalar_lea.vmem %s7, %s2085
        %s2087 = smul.u32 16, %s19
        %p2088 = scmp.lt.s32.totalorder %s2087, 31
        %s2089 = scalar_select %p2088, %s2087, 31
        %s2090 = smul.addr %s2089, 2
        %s2091 = smul.addr %s2090, 8
        %s2092 = scalar_lea.vmem %s3, %s2091
        %s2093 = smul.u32 16, %s19
        %s2094 = smul.u32 16, %s19
        %p2095 = scmp.lt.s32.totalorder %s2094, 31
        %s2096 = scalar_select %p2095, %s2094, 31
        %s2097 = smul.addr %s2096, 2
        %s2098 = smul.addr %s2097, 8
        %s2099 = scalar_lea.vmem %s4, %s2098
        %s2100 = smul.u32 16, %s19
        %s2101 = smul.u32 16, %s19
        %p2102 = scmp.lt.s32.totalorder %s2101, 31
        %s2103 = scalar_select %p2102, %s2101, 31
        %s2104 = smul.addr %s2103, 8
        %s2105 = scalar_lea.vmem %s5, %s2104
        %s2106 = smul.u32 16, %s19
        %s2107 = smul.u32 16, %s19
        %s2108 = smul.u32 16, %s19
        %p2109 = scmp.lt.s32.totalorder %s2108, 31
        %s2110 = scalar_select %p2109, %s2108, 31
        %s2111 = smul.addr %s2110, 8
        %s2112 = scalar_lea.vmem %s7, %s2111
        %s2113 = smul.u32 16, %s19
        %s2114 = sld [smem:[#allocation2]]
        %s2115 = sld [smem:[#allocation2 + $0x1]]
        %v2116 = vld [vmem:[%s2092] sm:$0xff]
        %v2117 = vld [vmem:[%s2092 + $0x8] sm:$0xff]
        %v2118 = vld [vmem:[%s2092 + $0x10] sm:$0xff]
        %v2119 = vld [vmem:[%s2092 + $0x18] sm:$0xff]
        %v2120 = vld [vmem:[%s2092 + $0x20] sm:$0xff]
        %v2121 = vld [vmem:[%s2092 + $0x28] sm:$0xff]
        %v2122 = vld [vmem:[%s2092 + $0x30] sm:$0xff]
        %v2123 = vld [vmem:[%s2092 + $0x38] sm:$0xff]
        %v2124 = vld [vmem:[%s2092 + $0x40] sm:$0xff]
        %v2125 = vld [vmem:[%s2092 + $0x48] sm:$0xff]
        %v2126 = vld [vmem:[%s2092 + $0x50] sm:$0xff]
        %v2127 = vld [vmem:[%s2092 + $0x58] sm:$0xff]
        %v2128 = vld [vmem:[%s2092 + $0x60] sm:$0xff]
        %v2129 = vld [vmem:[%s2092 + $0x68] sm:$0xff]
        %v2130 = vld [vmem:[%s2092 + $0x70] sm:$0xff]
        %v2131 = vld [vmem:[%s2092 + $0x78] sm:$0xff]
        %v2132 = vld [vmem:[%s2092 + $0x80] sm:$0xff]
        %v2133 = vld [vmem:[%s2092 + $0x88] sm:$0xff]
        %v2134 = vld [vmem:[%s2092 + $0x90] sm:$0xff]
        %v2135 = vld [vmem:[%s2092 + $0x98] sm:$0xff]
        %v2136 = vld [vmem:[%s2092 + $0xa0] sm:$0xff]
        %v2137 = vld [vmem:[%s2092 + $0xa8] sm:$0xff]
        %v2138 = vld [vmem:[%s2092 + $0xb0] sm:$0xff]
        %v2139 = vld [vmem:[%s2092 + $0xb8] sm:$0xff]
        %v2140 = vld [vmem:[%s2092 + $0xc0] sm:$0xff]
        %v2141 = vld [vmem:[%s2092 + $0xc8] sm:$0xff]
        %v2142 = vld [vmem:[%s2092 + $0xd0] sm:$0xff]
        %v2143 = vld [vmem:[%s2092 + $0xd8] sm:$0xff]
        %v2144 = vld [vmem:[%s2092 + $0xe0] sm:$0xff]
        %v2145 = vld [vmem:[%s2092 + $0xe8] sm:$0xff]
        %v2146 = vld [vmem:[%s2092 + $0xf0] sm:$0xff]
        %v2147 = vld [vmem:[%s2092 + $0xf8] sm:$0xff]
        %v2148 = vld [vmem:[%s2099] sm:$0xff]
        %v2149 = vld [vmem:[%s2099 + $0x8] sm:$0xff]
        %v2150 = vld [vmem:[%s2099 + $0x10] sm:$0xff]
        %v2151 = vld [vmem:[%s2099 + $0x18] sm:$0xff]
        %v2152 = vld [vmem:[%s2099 + $0x20] sm:$0xff]
        %v2153 = vld [vmem:[%s2099 + $0x28] sm:$0xff]
        %v2154 = vld [vmem:[%s2099 + $0x30] sm:$0xff]
        %v2155 = vld [vmem:[%s2099 + $0x38] sm:$0xff]
        %v2156 = vld [vmem:[%s2099 + $0x40] sm:$0xff]
        %v2157 = vld [vmem:[%s2099 + $0x48] sm:$0xff]
        %v2158 = vld [vmem:[%s2099 + $0x50] sm:$0xff]
        %v2159 = vld [vmem:[%s2099 + $0x58] sm:$0xff]
        %v2160 = vld [vmem:[%s2099 + $0x60] sm:$0xff]
        %v2161 = vld [vmem:[%s2099 + $0x68] sm:$0xff]
        %v2162 = vld [vmem:[%s2099 + $0x70] sm:$0xff]
        %v2163 = vld [vmem:[%s2099 + $0x78] sm:$0xff]
        %v2164 = vld [vmem:[%s2099 + $0x80] sm:$0xff]
        %v2165 = vld [vmem:[%s2099 + $0x88] sm:$0xff]
        %v2166 = vld [vmem:[%s2099 + $0x90] sm:$0xff]
        %v2167 = vld [vmem:[%s2099 + $0x98] sm:$0xff]
        %v2168 = vld [vmem:[%s2099 + $0xa0] sm:$0xff]
        %v2169 = vld [vmem:[%s2099 + $0xa8] sm:$0xff]
        %v2170 = vld [vmem:[%s2099 + $0xb0] sm:$0xff]
        %v2171 = vld [vmem:[%s2099 + $0xb8] sm:$0xff]
        %v2172 = vld [vmem:[%s2099 + $0xc0] sm:$0xff]
        %v2173 = vld [vmem:[%s2099 + $0xc8] sm:$0xff]
        %v2174 = vld [vmem:[%s2099 + $0xd0] sm:$0xff]
        %v2175 = vld [vmem:[%s2099 + $0xd8] sm:$0xff]
        %v2176 = vld [vmem:[%s2099 + $0xe0] sm:$0xff]
        %v2177 = vld [vmem:[%s2099 + $0xe8] sm:$0xff]
        %v2178 = vld [vmem:[%s2099 + $0xf0] sm:$0xff]
        %v2179 = vld [vmem:[%s2099 + $0xf8] sm:$0xff]
        %v2180 = vld [vmem:[%s2105] sm:$0xff]
        %v2181 = vld [vmem:[%s2105 + $0x8] sm:$0xff]
        %v2182 = vld [vmem:[%s2105 + $0x10] sm:$0xff]
        %v2183 = vld [vmem:[%s2105 + $0x18] sm:$0xff]
        %v2184 = vld [vmem:[%s2105 + $0x20] sm:$0xff]
        %v2185 = vld [vmem:[%s2105 + $0x28] sm:$0xff]
        %v2186 = vld [vmem:[%s2105 + $0x30] sm:$0xff]
        %v2187 = vld [vmem:[%s2105 + $0x38] sm:$0xff]
        %v2188 = vld [vmem:[%s2105 + $0x40] sm:$0xff]
        %v2189 = vld [vmem:[%s2105 + $0x48] sm:$0xff]
        %v2190 = vld [vmem:[%s2105 + $0x50] sm:$0xff]
        %v2191 = vld [vmem:[%s2105 + $0x58] sm:$0xff]
        %v2192 = vld [vmem:[%s2105 + $0x60] sm:$0xff]
        %v2193 = vld [vmem:[%s2105 + $0x68] sm:$0xff]
        %v2194 = vld [vmem:[%s2105 + $0x70] sm:$0xff]
        %v2195 = vld [vmem:[%s2105 + $0x78] sm:$0xff]
        %s2196 = ssub.f32 0.0, %s2114
        %v2197 = vstv %s2115
        %v2198 = vadd.f32 %v2116, %v2197
        %v2199 = vadd.f32 %v2117, %v2197
        %v2200 = vadd.f32 %v2118, %v2197
        %v2201 = vadd.f32 %v2119, %v2197
        %v2202 = vadd.f32 %v2120, %v2197
        %v2203 = vadd.f32 %v2121, %v2197
        %v2204 = vadd.f32 %v2122, %v2197
        %v2205 = vadd.f32 %v2123, %v2197
        %v2206 = vadd.f32 %v2124, %v2197
        %v2207 = vadd.f32 %v2125, %v2197
        %v2208 = vadd.f32 %v2126, %v2197
        %v2209 = vadd.f32 %v2127, %v2197
        %v2210 = vadd.f32 %v2128, %v2197
        %v2211 = vadd.f32 %v2129, %v2197
        %v2212 = vadd.f32 %v2130, %v2197
        %v2213 = vadd.f32 %v2131, %v2197
        %v2214 = vadd.f32 %v2132, %v2197
        %v2215 = vadd.f32 %v2133, %v2197
        %v2216 = vadd.f32 %v2134, %v2197
        %v2217 = vadd.f32 %v2135, %v2197
        %v2218 = vadd.f32 %v2136, %v2197
        %v2219 = vadd.f32 %v2137, %v2197
        %v2220 = vadd.f32 %v2138, %v2197
        %v2221 = vadd.f32 %v2139, %v2197
        %v2222 = vadd.f32 %v2140, %v2197
        %v2223 = vadd.f32 %v2141, %v2197
        %v2224 = vadd.f32 %v2142, %v2197
        %v2225 = vadd.f32 %v2143, %v2197
        %v2226 = vadd.f32 %v2144, %v2197
        %v2227 = vadd.f32 %v2145, %v2197
        %v2228 = vadd.f32 %v2146, %v2197
        %v2229 = vadd.f32 %v2147, %v2197
        %v2230 = vstv %s2196
        %v2231 = vmul.f32 %v2230, %v2198
        %v2232 = vmul.f32 %v2230, %v2199
        %v2233 = vmul.f32 %v2230, %v2200
        %v2234 = vmul.f32 %v2230, %v2201
        %v2235 = vmul.f32 %v2230, %v2202
        %v2236 = vmul.f32 %v2230, %v2203
        %v2237 = vmul.f32 %v2230, %v2204
        %v2238 = vmul.f32 %v2230, %v2205
        %v2239 = vmul.f32 %v2230, %v2206
        %v2240 = vmul.f32 %v2230, %v2207
        %v2241 = vmul.f32 %v2230, %v2208
        %v2242 = vmul.f32 %v2230, %v2209
        %v2243 = vmul.f32 %v2230, %v2210
        %v2244 = vmul.f32 %v2230, %v2211
        %v2245 = vmul.f32 %v2230, %v2212
        %v2246 = vmul.f32 %v2230, %v2213
        %v2247 = vmul.f32 %v2230, %v2214
        %v2248 = vmul.f32 %v2230, %v2215
        %v2249 = vmul.f32 %v2230, %v2216
        %v2250 = vmul.f32 %v2230, %v2217
        %v2251 = vmul.f32 %v2230, %v2218
        %v2252 = vmul.f32 %v2230, %v2219
        %v2253 = vmul.f32 %v2230, %v2220
        %v2254 = vmul.f32 %v2230, %v2221
        %v2255 = vmul.f32 %v2230, %v2222
        %v2256 = vmul.f32 %v2230, %v2223
        %v2257 = vmul.f32 %v2230, %v2224
        %v2258 = vmul.f32 %v2230, %v2225
        %v2259 = vmul.f32 %v2230, %v2226
        %v2260 = vmul.f32 %v2230, %v2227
        %v2261 = vmul.f32 %v2230, %v2228
        %v2262 = vmul.f32 %v2230, %v2229
        %v2263 = vmul.f32 %v2231, 1.442695
        %v2264 = vpow.pop %v2263
        %v2265 = vmul.f32 %v2232, 1.442695
        %v2266 = vpow.pop %v2265
        %v2267 = vmul.f32 %v2233, 1.442695
        %v2268 = vpow.pop %v2267
        %v2269 = vmul.f32 %v2234, 1.442695
        %v2270 = vpow.pop %v2269
        %v2271 = vmul.f32 %v2235, 1.442695
        %v2272 = vpow.pop %v2271
        %v2273 = vmul.f32 %v2236, 1.442695
        %v2274 = vpow.pop %v2273
        %v2275 = vmul.f32 %v2237, 1.442695
        %v2276 = vpow.pop %v2275
        %v2277 = vmul.f32 %v2238, 1.442695
        %v2278 = vpow.pop %v2277
        %v2279 = vmul.f32 %v2239, 1.442695
        %v2280 = vpow.pop %v2279
        %v2281 = vmul.f32 %v2240, 1.442695
        %v2282 = vpow.pop %v2281
        %v2283 = vmul.f32 %v2241, 1.442695
        %v2284 = vpow.pop %v2283
        %v2285 = vmul.f32 %v2242, 1.442695
        %v2286 = vpow.pop %v2285
        %v2287 = vmul.f32 %v2243, 1.442695
        %v2288 = vpow.pop %v2287
        %v2289 = vmul.f32 %v2244, 1.442695
        %v2290 = vpow.pop %v2289
        %v2291 = vmul.f32 %v2245, 1.442695
        %v2292 = vpow.pop %v2291
        %v2293 = vmul.f32 %v2246, 1.442695
        %v2294 = vpow.pop %v2293
        %v2295 = vmul.f32 %v2247, 1.442695
        %v2296 = vpow.pop %v2295
        %v2297 = vmul.f32 %v2248, 1.442695
        %v2298 = vpow.pop %v2297
        %v2299 = vmul.f32 %v2249, 1.442695
        %v2300 = vpow.pop %v2299
        %v2301 = vmul.f32 %v2250, 1.442695
        %v2302 = vpow.pop %v2301
        %v2303 = vmul.f32 %v2251, 1.442695
        %v2304 = vpow.pop %v2303
        %v2305 = vmul.f32 %v2252, 1.442695
        %v2306 = vpow.pop %v2305
        %v2307 = vmul.f32 %v2253, 1.442695
        %v2308 = vpow.pop %v2307
        %v2309 = vmul.f32 %v2254, 1.442695
        %v2310 = vpow.pop %v2309
        %v2311 = vmul.f32 %v2255, 1.442695
        %v2312 = vpow.pop %v2311
        %v2313 = vmul.f32 %v2256, 1.442695
        %v2314 = vpow.pop %v2313
        %v2315 = vmul.f32 %v2257, 1.442695
        %v2316 = vpow.pop %v2315
        %v2317 = vmul.f32 %v2258, 1.442695
        %v2318 = vpow.pop %v2317
        %v2319 = vmul.f32 %v2259, 1.442695
        %v2320 = vpow.pop %v2319
        %v2321 = vmul.f32 %v2260, 1.442695
        %v2322 = vpow.pop %v2321
        %v2323 = vmul.f32 %v2261, 1.442695
        %v2324 = vpow.pop %v2323
        %v2325 = vmul.f32 %v2262, 1.442695
        %v2326 = vpow.pop %v2325
        %v2327 = vadd.f32 %v2264, 1.0
        %v2328 = vadd.f32 %v2266, 1.0
        %v2329 = vadd.f32 %v2268, 1.0
        %v2330 = vadd.f32 %v2270, 1.0
        %v2331 = vadd.f32 %v2272, 1.0
        %v2332 = vadd.f32 %v2274, 1.0
        %v2333 = vadd.f32 %v2276, 1.0
        %v2334 = vadd.f32 %v2278, 1.0
        %v2335 = vadd.f32 %v2280, 1.0
        %v2336 = vadd.f32 %v2282, 1.0
        %v2337 = vadd.f32 %v2284, 1.0
        %v2338 = vadd.f32 %v2286, 1.0
        %v2339 = vadd.f32 %v2288, 1.0
        %v2340 = vadd.f32 %v2290, 1.0
        %v2341 = vadd.f32 %v2292, 1.0
        %v2342 = vadd.f32 %v2294, 1.0
        %v2343 = vadd.f32 %v2296, 1.0
        %v2344 = vadd.f32 %v2298, 1.0
        %v2345 = vadd.f32 %v2300, 1.0
        %v2346 = vadd.f32 %v2302, 1.0
        %v2347 = vadd.f32 %v2304, 1.0
        %v2348 = vadd.f32 %v2306, 1.0
        %v2349 = vadd.f32 %v2308, 1.0
        %v2350 = vadd.f32 %v2310, 1.0
        %v2351 = vadd.f32 %v2312, 1.0
        %v2352 = vadd.f32 %v2314, 1.0
        %v2353 = vadd.f32 %v2316, 1.0
        %v2354 = vadd.f32 %v2318, 1.0
        %v2355 = vadd.f32 %v2320, 1.0
        %v2356 = vadd.f32 %v2322, 1.0
        %v2357 = vadd.f32 %v2324, 1.0
        %v2358 = vadd.f32 %v2326, 1.0
        %v2359 = vrcp.pop %v2327
        %v2360 = vmul.f32 1.0, %v2359
        %v2361 = vrcp.pop %v2328
        %v2362 = vmul.f32 1.0, %v2361
        %v2363 = vrcp.pop %v2329
        %v2364 = vmul.f32 1.0, %v2363
        %v2365 = vrcp.pop %v2330
        %v2366 = vmul.f32 1.0, %v2365
        %v2367 = vrcp.pop %v2331
        %v2368 = vmul.f32 1.0, %v2367
        %v2369 = vrcp.pop %v2332
        %v2370 = vmul.f32 1.0, %v2369
        %v2371 = vrcp.pop %v2333
        %v2372 = vmul.f32 1.0, %v2371
        %v2373 = vrcp.pop %v2334
        %v2374 = vmul.f32 1.0, %v2373
        %v2375 = vrcp.pop %v2335
        %v2376 = vmul.f32 1.0, %v2375
        %v2377 = vrcp.pop %v2336
        %v2378 = vmul.f32 1.0, %v2377
        %v2379 = vrcp.pop %v2337
        %v2380 = vmul.f32 1.0, %v2379
        %v2381 = vrcp.pop %v2338
        %v2382 = vmul.f32 1.0, %v2381
        %v2383 = vrcp.pop %v2339
        %v2384 = vmul.f32 1.0, %v2383
        %v2385 = vrcp.pop %v2340
        %v2386 = vmul.f32 1.0, %v2385
        %v2387 = vrcp.pop %v2341
        %v2388 = vmul.f32 1.0, %v2387
        %v2389 = vrcp.pop %v2342
        %v2390 = vmul.f32 1.0, %v2389
        %v2391 = vrcp.pop %v2343
        %v2392 = vmul.f32 1.0, %v2391
        %v2393 = vrcp.pop %v2344
        %v2394 = vmul.f32 1.0, %v2393
        %v2395 = vrcp.pop %v2345
        %v2396 = vmul.f32 1.0, %v2395
        %v2397 = vrcp.pop %v2346
        %v2398 = vmul.f32 1.0, %v2397
        %v2399 = vrcp.pop %v2347
        %v2400 = vmul.f32 1.0, %v2399
        %v2401 = vrcp.pop %v2348
        %v2402 = vmul.f32 1.0, %v2401
        %v2403 = vrcp.pop %v2349
        %v2404 = vmul.f32 1.0, %v2403
        %v2405 = vrcp.pop %v2350
        %v2406 = vmul.f32 1.0, %v2405
        %v2407 = vrcp.pop %v2351
        %v2408 = vmul.f32 1.0, %v2407
        %v2409 = vrcp.pop %v2352
        %v2410 = vmul.f32 1.0, %v2409
        %v2411 = vrcp.pop %v2353
        %v2412 = vmul.f32 1.0, %v2411
        %v2413 = vrcp.pop %v2354
        %v2414 = vmul.f32 1.0, %v2413
        %v2415 = vrcp.pop %v2355
        %v2416 = vmul.f32 1.0, %v2415
        %v2417 = vrcp.pop %v2356
        %v2418 = vmul.f32 1.0, %v2417
        %v2419 = vrcp.pop %v2357
        %v2420 = vmul.f32 1.0, %v2419
        %v2421 = vrcp.pop %v2358
        %v2422 = vmul.f32 1.0, %v2421
        %v2423 = vld [vmem:[%s2] sm:$0xff]
        %v2424 = vld [vmem:[%s2 + $0x8] sm:$0xff]
        %v2425 = vld [vmem:[%s2 + $0x10] sm:$0xff]
        %v2426 = vld [vmem:[%s2 + $0x18] sm:$0xff]
        %v2427 = vld [vmem:[%s2 + $0x20] sm:$0xff]
        %v2428 = vld [vmem:[%s2 + $0x28] sm:$0xff]
        %v2429 = vld [vmem:[%s2 + $0x30] sm:$0xff]
        %v2430 = vld [vmem:[%s2 + $0x38] sm:$0xff]
        %v2431 = vld [vmem:[%s2 + $0x40] sm:$0xff]
        %v2432 = vld [vmem:[%s2 + $0x48] sm:$0xff]
        %v2433 = vld [vmem:[%s2 + $0x50] sm:$0xff]
        %v2434 = vld [vmem:[%s2 + $0x58] sm:$0xff]
        %v2435 = vld [vmem:[%s2 + $0x60] sm:$0xff]
        %v2436 = vld [vmem:[%s2 + $0x68] sm:$0xff]
        %v2437 = vld [vmem:[%s2 + $0x70] sm:$0xff]
        %v2438 = vld [vmem:[%s2 + $0x78] sm:$0xff]
        %v2439 = vld [vmem:[%s2 + $0x80] sm:$0xff]
        %v2440 = vld [vmem:[%s2 + $0x88] sm:$0xff]
        %v2441 = vld [vmem:[%s2 + $0x90] sm:$0xff]
        %v2442 = vld [vmem:[%s2 + $0x98] sm:$0xff]
        %v2443 = vld [vmem:[%s2 + $0xa0] sm:$0xff]
        %v2444 = vld [vmem:[%s2 + $0xa8] sm:$0xff]
        %v2445 = vld [vmem:[%s2 + $0xb0] sm:$0xff]
        %v2446 = vld [vmem:[%s2 + $0xb8] sm:$0xff]
        %v2447 = vld [vmem:[%s2 + $0xc0] sm:$0xff]
        %v2448 = vld [vmem:[%s2 + $0xc8] sm:$0xff]
        %v2449 = vld [vmem:[%s2 + $0xd0] sm:$0xff]
        %v2450 = vld [vmem:[%s2 + $0xd8] sm:$0xff]
        %v2451 = vld [vmem:[%s2 + $0xe0] sm:$0xff]
        %v2452 = vld [vmem:[%s2 + $0xe8] sm:$0xff]
        %v2453 = vld [vmem:[%s2 + $0xf0] sm:$0xff]
        %v2454 = vld [vmem:[%s2 + $0xf8] sm:$0xff]
        %v2455 = vld [vmem:[%s2 + $0x100] sm:$0xff]
        %v2456 = vld [vmem:[%s2 + $0x108] sm:$0xff]
        %v2457 = vld [vmem:[%s2 + $0x110] sm:$0xff]
        %v2458 = vld [vmem:[%s2 + $0x118] sm:$0xff]
        %v2459 = vld [vmem:[%s2 + $0x120] sm:$0xff]
        %v2460 = vld [vmem:[%s2 + $0x128] sm:$0xff]
        %v2461 = vld [vmem:[%s2 + $0x130] sm:$0xff]
        %v2462 = vld [vmem:[%s2 + $0x138] sm:$0xff]
        %v2463 = vld [vmem:[%s2 + $0x140] sm:$0xff]
        %v2464 = vld [vmem:[%s2 + $0x148] sm:$0xff]
        %v2465 = vld [vmem:[%s2 + $0x150] sm:$0xff]
        %v2466 = vld [vmem:[%s2 + $0x158] sm:$0xff]
        %v2467 = vld [vmem:[%s2 + $0x160] sm:$0xff]
        %v2468 = vld [vmem:[%s2 + $0x168] sm:$0xff]
        %v2469 = vld [vmem:[%s2 + $0x170] sm:$0xff]
        %v2470 = vld [vmem:[%s2 + $0x178] sm:$0xff]
        %vm2471 = vcmask 523264
        %v2473 = vsel %vm2471, %v2149, 0
        %v2476 = vsel %vm2471, %v2151, 0
        %v2479 = vsel %vm2471, %v2153, 0
        %v2482 = vsel %vm2471, %v2155, 0
        %v2485 = vsel %vm2471, %v2157, 0
        %v2488 = vsel %vm2471, %v2159, 0
        %v2491 = vsel %vm2471, %v2161, 0
        %v2494 = vsel %vm2471, %v2163, 0
        %v2497 = vsel %vm2471, %v2165, 0
        %v2500 = vsel %vm2471, %v2167, 0
        %v2503 = vsel %vm2471, %v2169, 0
        %v2506 = vsel %vm2471, %v2171, 0
        %v2509 = vsel %vm2471, %v2173, 0
        %v2512 = vsel %vm2471, %v2175, 0
        %v2515 = vsel %vm2471, %v2177, 0
        %v2518 = vsel %vm2471, %v2179, 0
        %2520 = vmatprep.subr.mxu0 %v2424
        %2521 = vmatpush1.msra.mxu0 %v2423
        %2522 = vmatprep.subr.mxu0 %v2426
        %2523 = vmatpush1.msra.mxu0 %v2425
        %2524 = vmatprep.subr.mxu0 %v2428
        %2525 = vmatpush1.msra.mxu0 %v2427
        %2526 = vmatprep.subr.mxu0 %v2430
        %2527 = vmatpush1.msra.mxu0 %v2429
        %2528 = vmatprep.subr.mxu0 %v2432
        %2529 = vmatpush1.msra.mxu0 %v2431
        %2530 = vmatprep.subr.mxu0 %v2434
        %2531 = vmatpush1.msra.mxu0 %v2433
        %2532 = vmatprep.subr.mxu0 %v2436
        %2533 = vmatpush1.msra.mxu0 %v2435
        %2534 = vmatprep.subr.mxu0 %v2438
        %2535 = vmatpush1.msra.mxu0 %v2437
        %2536 = vmatprep.subr.mxu0 %v2440
        %2537 = vmatpush1.msra.mxu0 %v2439
        %2538 = vmatprep.subr.mxu0 %v2442
        %2539 = vmatpush1.msra.mxu0 %v2441
        %2540 = vmatprep.subr.mxu0 %v2444
        %2541 = vmatpush1.msra.mxu0 %v2443
        %2542 = vmatprep.subr.mxu0 %v2446
        %2543 = vmatpush1.msra.mxu0 %v2445
        %2544 = vmatprep.subr.mxu0 %v2448
        %2545 = vmatpush1.msra.mxu0 %v2447
        %2546 = vmatprep.subr.mxu0 %v2450
        %2547 = vmatpush1.msra.mxu0 %v2449
        %2548 = vmatprep.subr.mxu0 %v2452
        %2549 = vmatpush1.msra.mxu0 %v2451
        %2550 = vmatprep.subr.mxu0 %v2454
        %2551 = vmatpush1.msra.mxu0 %v2453
        %2552 = vmatprep.subr.mxu0 %v2456
        %2553 = vmatpush1.msra.mxu0 %v2455
        %2554 = vmatprep.subr.mxu0 %v2458
        %2555 = vmatpush1.msra.mxu0 %v2457
        %2556 = vmatprep.subr.mxu0 %v2460
        %2557 = vmatpush1.msra.mxu0 %v2459
        %2558 = vmatprep.subr.mxu0 %v2462
        %2559 = vmatpush1.msra.mxu0 %v2461
        %2560 = vmatprep.subr.mxu0 %v2464
        %2561 = vmatpush1.msra.mxu0 %v2463
        %2562 = vmatprep.subr.mxu0 %v2466
        %2563 = vmatpush1.msra.mxu0 %v2465
        %2564 = vmatprep.subr.mxu0 %v2468
        %2565 = vmatpush1.msra.mxu0 %v2467
        %2566 = vmatprep.subr.mxu0 %v2470
        %2567 = vmatpush1.msra.mxu0 %v2469
        %2568 = vmatprep.subr.mxu0 0.0
        %2569 = vmatpush1.msra.mxu0 0.0
        %2570 = vmatprep.subr.mxu0 0.0
        %2571 = vmatpush1.msra.mxu0 0.0
        %2572 = vmatprep.subr.mxu0 0.0
        %2573 = vmatpush1.msra.mxu0 0.0
        %2574 = vmatprep.subr.mxu0 0.0
        %2575 = vmatpush1.msra.mxu0 0.0
        %2576 = vmatprep.subr.mxu0 0.0
        %2577 = vmatpush1.msra.mxu0 0.0
        %2578 = vmatprep.subr.mxu0 0.0
        %2579 = vmatpush1.msra.mxu0 0.0
        %2580 = vmatprep.subr.mxu0 0.0
        %2581 = vmatpush1.msra.mxu0 0.0
        %2582 = vmatprep.subr.mxu0 0.0
        %2583 = vmatpush1.msra.mxu0 0.0
        %2584 = vmatprep.mubr.f32.mxu0 %v2473
        %2585 = vmatmul.mubr.f32.gmra.mrb[0].mxu0 %v2148
        %v2586 = vpop.f32.mrb[0].mxu0
        %v2587 = vadd.f32 0.0, %v2586
        %v2588 = vpop.f32.mrb[0].mxu0
        %v2589 = vadd.f32 0.0, %v2588
        %2590 = vmatprep.mubr.f32.mxu0 %v2476
        %2591 = vmatmul.mubr.f32.gmra.mrb[0].mxu0 %v2150
        %v2592 = vpop.f32.mrb[0].mxu0
        %v2593 = vadd.f32 0.0, %v2592
        %v2594 = vpop.f32.mrb[0].mxu0
        %v2595 = vadd.f32 0.0, %v2594
        %2596 = vmatprep.mubr.f32.mxu0 %v2479
        %2597 = vmatmul.mubr.f32.gmra.mrb[0].mxu0 %v2152
        %v2598 = vpop.f32.mrb[0].mxu0
        %v2599 = vadd.f32 0.0, %v2598
        %v2600 = vpop.f32.mrb[0].mxu0
        %v2601 = vadd.f32 0.0, %v2600
        %2602 = vmatprep.mubr.f32.mxu0 %v2482
        %2603 = vmatmul.mubr.f32.gmra.mrb[0].mxu0 %v2154
        %v2604 = vpop.f32.mrb[0].mxu0
        %v2605 = vadd.f32 0.0, %v2604
        %v2606 = vpop.f32.mrb[0].mxu0
        %v2607 = vadd.f32 0.0, %v2606
        %2608 = vmatprep.mubr.f32.mxu0 %v2485
        %2609 = vmatmul.mubr.f32.gmra.mrb[0].mxu0 %v2156
        %v2610 = vpop.f32.mrb[0].mxu0
        %v2611 = vadd.f32 0.0, %v2610
        %v2612 = vpop.f32.mrb[0].mxu0
        %v2613 = vadd.f32 0.0, %v2612
        %2614 = vmatprep.mubr.f32.mxu0 %v2488
        %2615 = vmatmul.mubr.f32.gmra.mrb[0].mxu0 %v2158
        %v2616 = vpop.f32.mrb[0].mxu0
        %v2617 = vadd.f32 0.0, %v2616
        %v2618 = vpop.f32.mrb[0].mxu0
        %v2619 = vadd.f32 0.0, %v2618
        %2620 = vmatprep.mubr.f32.mxu0 %v2491
        %2621 = vmatmul.mubr.f32.gmra.mrb[0].mxu0 %v2160
        %v2622 = vpop.f32.mrb[0].mxu0
        %v2623 = vadd.f32 0.0, %v2622
        %v2624 = vpop.f32.mrb[0].mxu0
        %v2625 = vadd.f32 0.0, %v2624
        %2626 = vmatprep.mubr.f32.mxu0 %v2494
        %2627 = vmatmul.mubr.f32.gmra.mrb[0].mxu0 %v2162
        %v2628 = vpop.f32.mrb[0].mxu0
        %v2629 = vadd.f32 0.0, %v2628
        %v2630 = vpop.f32.mrb[0].mxu0
        %v2631 = vadd.f32 0.0, %v2630
        %2632 = vmatprep.mubr.f32.mxu0 %v2497
        %2633 = vmatmul.mubr.f32.gmra.mrb[0].mxu0 %v2164
        %v2634 = vpop.f32.mrb[0].mxu0
        %v2635 = vadd.f32 0.0, %v2634
        %v2636 = vpop.f32.mrb[0].mxu0
        %v2637 = vadd.f32 0.0, %v2636
        %2638 = vmatprep.mubr.f32.mxu0 %v2500
        %2639 = vmatmul.mubr.f32.gmra.mrb[0].mxu0 %v2166
        %v2640 = vpop.f32.mrb[0].mxu0
        %v2641 = vadd.f32 0.0, %v2640
        %v2642 = vpop.f32.mrb[0].mxu0
        %v2643 = vadd.f32 0.0, %v2642
        %2644 = vmatprep.mubr.f32.mxu0 %v2503
        %2645 = vmatmul.mubr.f32.gmra.mrb[0].mxu0 %v2168
        %v2646 = vpop.f32.mrb[0].mxu0
        %v2647 = vadd.f32 0.0, %v2646
        %v2648 = vpop.f32.mrb[0].mxu0
        %v2649 = vadd.f32 0.0, %v2648
        %2650 = vmatprep.mubr.f32.mxu0 %v2506
        %2651 = vmatmul.mubr.f32.gmra.mrb[0].mxu0 %v2170
        %v2652 = vpop.f32.mrb[0].mxu0
        %v2653 = vadd.f32 0.0, %v2652
        %v2654 = vpop.f32.mrb[0].mxu0
        %v2655 = vadd.f32 0.0, %v2654
        %2656 = vmatprep.mubr.f32.mxu0 %v2509
        %2657 = vmatmul.mubr.f32.gmra.mrb[0].mxu0 %v2172
        %v2658 = vpop.f32.mrb[0].mxu0
        %v2659 = vadd.f32 0.0, %v2658
        %v2660 = vpop.f32.mrb[0].mxu0
        %v2661 = vadd.f32 0.0, %v2660
        %2662 = vmatprep.mubr.f32.mxu0 %v2512
        %2663 = vmatmul.mubr.f32.gmra.mrb[0].mxu0 %v2174
        %v2664 = vpop.f32.mrb[0].mxu0
        %v2665 = vadd.f32 0.0, %v2664
        %v2666 = vpop.f32.mrb[0].mxu0
        %v2667 = vadd.f32 0.0, %v2666
        %2668 = vmatprep.mubr.f32.mxu0 %v2515
        %2669 = vmatmul.mubr.f32.gmra.mrb[0].mxu0 %v2176
        %v2670 = vpop.f32.mrb[0].mxu0
        %v2671 = vadd.f32 0.0, %v2670
        %v2672 = vpop.f32.mrb[0].mxu0
        %v2673 = vadd.f32 0.0, %v2672
        %2674 = vmatprep.mubr.f32.mxu0 %v2518
        %2675 = vmatmul.mubr.f32.gmra.mrb[0].mxu0 %v2178
        %v2676 = vpop.f32.mrb[0].mxu0
        %v2677 = vadd.f32 0.0, %v2676
        %v2678 = vpop.f32.mrb[0].mxu0
        %v2679 = vadd.f32 0.0, %v2678
        %2680 = vdwg.mxu0
        %v2681 = vlaneseq
        %v2682 = vand.u32 %v2681, 127
        %v2683 = vadd.s32 %v2682, 128
        %vm2684 = vcmp.eq.s32.totalorder %v2682, 191
        %vm2685 = vcmp.eq.s32.totalorder %v2683, 191
        %v2686 = vsel %vm2684, 1e+10, %v2587
        %v2687 = vsel %vm2685, 1e+10, %v2589
        %v2688 = vsel %vm2684, 1e+10, %v2593
        %v2689 = vsel %vm2685, 1e+10, %v2595
        %v2690 = vsel %vm2684, 1e+10, %v2599
        %v2691 = vsel %vm2685, 1e+10, %v2601
        %v2692 = vsel %vm2684, 1e+10, %v2605
        %v2693 = vsel %vm2685, 1e+10, %v2607
        %v2694 = vsel %vm2684, 1e+10, %v2611
        %v2695 = vsel %vm2685, 1e+10, %v2613
        %v2696 = vsel %vm2684, 1e+10, %v2617
        %v2697 = vsel %vm2685, 1e+10, %v2619
        %v2698 = vsel %vm2684, 1e+10, %v2623
        %v2699 = vsel %vm2685, 1e+10, %v2625
        %v2700 = vsel %vm2684, 1e+10, %v2629
        %v2701 = vsel %vm2685, 1e+10, %v2631
        %v2702 = vsel %vm2684, 1e+10, %v2635
        %v2703 = vsel %vm2685, 1e+10, %v2637
        %v2704 = vsel %vm2684, 1e+10, %v2641
        %v2705 = vsel %vm2685, 1e+10, %v2643
        %v2706 = vsel %vm2684, 1e+10, %v2647
        %v2707 = vsel %vm2685, 1e+10, %v2649
        %v2708 = vsel %vm2684, 1e+10, %v2653
        %v2709 = vsel %vm2685, 1e+10, %v2655
        %v2710 = vsel %vm2684, 1e+10, %v2659
        %v2711 = vsel %vm2685, 1e+10, %v2661
        %v2712 = vsel %vm2684, 1e+10, %v2665
        %v2713 = vsel %vm2685, 1e+10, %v2667
        %v2714 = vsel %vm2684, 1e+10, %v2671
        %v2715 = vsel %vm2685, 1e+10, %v2673
        %v2716 = vsel %vm2684, 1e+10, %v2677
        %v2717 = vsel %vm2685, 1e+10, %v2679
        %v2718 = vsub.f32 0.0, %v2360
        %v2719 = vsub.f32 0.0, %v2362
        %v2720 = vsub.f32 0.0, %v2364
        %v2721 = vsub.f32 0.0, %v2366
        %v2722 = vsub.f32 0.0, %v2368
        %v2723 = vsub.f32 0.0, %v2370
        %v2724 = vsub.f32 0.0, %v2372
        %v2725 = vsub.f32 0.0, %v2374
        %v2726 = vsub.f32 0.0, %v2376
        %v2727 = vsub.f32 0.0, %v2378
        %v2728 = vsub.f32 0.0, %v2380
        %v2729 = vsub.f32 0.0, %v2382
        %v2730 = vsub.f32 0.0, %v2384
        %v2731 = vsub.f32 0.0, %v2386
        %v2732 = vsub.f32 0.0, %v2388
        %v2733 = vsub.f32 0.0, %v2390
        %v2734 = vsub.f32 0.0, %v2392
        %v2735 = vsub.f32 0.0, %v2394
        %v2736 = vsub.f32 0.0, %v2396
        %v2737 = vsub.f32 0.0, %v2398
        %v2738 = vsub.f32 0.0, %v2400
        %v2739 = vsub.f32 0.0, %v2402
        %v2740 = vsub.f32 0.0, %v2404
        %v2741 = vsub.f32 0.0, %v2406
        %v2742 = vsub.f32 0.0, %v2408
        %v2743 = vsub.f32 0.0, %v2410
        %v2744 = vsub.f32 0.0, %v2412
        %v2745 = vsub.f32 0.0, %v2414
        %v2746 = vsub.f32 0.0, %v2416
        %v2747 = vsub.f32 0.0, %v2418
        %v2748 = vsub.f32 0.0, %v2420
        %v2749 = vsub.f32 0.0, %v2422
        %v2750 = vmul.f32 %v2718, %v2686
        %v2751 = vmul.f32 %v2719, %v2687
        %v2752 = vmul.f32 %v2720, %v2688
        %v2753 = vmul.f32 %v2721, %v2689
        %v2754 = vmul.f32 %v2722, %v2690
        %v2755 = vmul.f32 %v2723, %v2691
        %v2756 = vmul.f32 %v2724, %v2692
        %v2757 = vmul.f32 %v2725, %v2693
        %v2758 = vmul.f32 %v2726, %v2694
        %v2759 = vmul.f32 %v2727, %v2695
        %v2760 = vmul.f32 %v2728, %v2696
        %v2761 = vmul.f32 %v2729, %v2697
        %v2762 = vmul.f32 %v2730, %v2698
        %v2763 = vmul.f32 %v2731, %v2699
        %v2764 = vmul.f32 %v2732, %v2700
        %v2765 = vmul.f32 %v2733, %v2701
        %v2766 = vmul.f32 %v2734, %v2702
        %v2767 = vmul.f32 %v2735, %v2703
        %v2768 = vmul.f32 %v2736, %v2704
        %v2769 = vmul.f32 %v2737, %v2705
        %v2770 = vmul.f32 %v2738, %v2706
        %v2771 = vmul.f32 %v2739, %v2707
        %v2772 = vmul.f32 %v2740, %v2708
        %v2773 = vmul.f32 %v2741, %v2709
        %v2774 = vmul.f32 %v2742, %v2710
        %v2775 = vmul.f32 %v2743, %v2711
        %v2776 = vmul.f32 %v2744, %v2712
        %v2777 = vmul.f32 %v2745, %v2713
        %v2778 = vmul.f32 %v2746, %v2714
        %v2779 = vmul.f32 %v2747, %v2715
        %v2780 = vmul.f32 %v2748, %v2716
        %v2781 = vmul.f32 %v2749, %v2717
        %v2782 = vmul.f32 %v2750, 1.442695
        %v2783 = vpow.pop %v2782
        %v2784 = vmul.f32 %v2751, 1.442695
        %v2785 = vpow.pop %v2784
        %v2786 = vmul.f32 %v2752, 1.442695
        %v2787 = vpow.pop %v2786
        %v2788 = vmul.f32 %v2753, 1.442695
        %v2789 = vpow.pop %v2788
        %v2790 = vmul.f32 %v2754, 1.442695
        %v2791 = vpow.pop %v2790
        %v2792 = vmul.f32 %v2755, 1.442695
        %v2793 = vpow.pop %v2792
        %v2794 = vmul.f32 %v2756, 1.442695
        %v2795 = vpow.pop %v2794
        %v2796 = vmul.f32 %v2757, 1.442695
        %v2797 = vpow.pop %v2796
        %v2798 = vmul.f32 %v2758, 1.442695
        %v2799 = vpow.pop %v2798
        %v2800 = vmul.f32 %v2759, 1.442695
        %v2801 = vpow.pop %v2800
        %v2802 = vmul.f32 %v2760, 1.442695
        %v2803 = vpow.pop %v2802
        %v2804 = vmul.f32 %v2761, 1.442695
        %v2805 = vpow.pop %v2804
        %v2806 = vmul.f32 %v2762, 1.442695
        %v2807 = vpow.pop %v2806
        %v2808 = vmul.f32 %v2763, 1.442695
        %v2809 = vpow.pop %v2808
        %v2810 = vmul.f32 %v2764, 1.442695
        %v2811 = vpow.pop %v2810
        %v2812 = vmul.f32 %v2765, 1.442695
        %v2813 = vpow.pop %v2812
        %v2814 = vmul.f32 %v2766, 1.442695
        %v2815 = vpow.pop %v2814
        %v2816 = vmul.f32 %v2767, 1.442695
        %v2817 = vpow.pop %v2816
        %v2818 = vmul.f32 %v2768, 1.442695
        %v2819 = vpow.pop %v2818
        %v2820 = vmul.f32 %v2769, 1.442695
        %v2821 = vpow.pop %v2820
        %v2822 = vmul.f32 %v2770, 1.442695
        %v2823 = vpow.pop %v2822
        %v2824 = vmul.f32 %v2771, 1.442695
        %v2825 = vpow.pop %v2824
        %v2826 = vmul.f32 %v2772, 1.442695
        %v2827 = vpow.pop %v2826
        %v2828 = vmul.f32 %v2773, 1.442695
        %v2829 = vpow.pop %v2828
        %v2830 = vmul.f32 %v2774, 1.442695
        %v2831 = vpow.pop %v2830
        %v2832 = vmul.f32 %v2775, 1.442695
        %v2833 = vpow.pop %v2832
        %v2834 = vmul.f32 %v2776, 1.442695
        %v2835 = vpow.pop %v2834
        %v2836 = vmul.f32 %v2777, 1.442695
        %v2837 = vpow.pop %v2836
        %v2838 = vmul.f32 %v2778, 1.442695
        %v2839 = vpow.pop %v2838
        %v2840 = vmul.f32 %v2779, 1.442695
        %v2841 = vpow.pop %v2840
        %v2842 = vmul.f32 %v2780, 1.442695
        %v2843 = vpow.pop %v2842
        %v2844 = vmul.f32 %v2781, 1.442695
        %v2845 = vpow.pop %v2844
        %v2846 = vsub.f32 1.0, %v2783
        %v2847 = vsub.f32 1.0, %v2785
        %v2848 = vsub.f32 1.0, %v2787
        %v2849 = vsub.f32 1.0, %v2789
        %v2850 = vsub.f32 1.0, %v2791
        %v2851 = vsub.f32 1.0, %v2793
        %v2852 = vsub.f32 1.0, %v2795
        %v2853 = vsub.f32 1.0, %v2797
        %v2854 = vsub.f32 1.0, %v2799
        %v2855 = vsub.f32 1.0, %v2801
        %v2856 = vsub.f32 1.0, %v2803
        %v2857 = vsub.f32 1.0, %v2805
        %v2858 = vsub.f32 1.0, %v2807
        %v2859 = vsub.f32 1.0, %v2809
        %v2860 = vsub.f32 1.0, %v2811
        %v2861 = vsub.f32 1.0, %v2813
        %v2862 = vsub.f32 1.0, %v2815
        %v2863 = vsub.f32 1.0, %v2817
        %v2864 = vsub.f32 1.0, %v2819
        %v2865 = vsub.f32 1.0, %v2821
        %v2866 = vsub.f32 1.0, %v2823
        %v2867 = vsub.f32 1.0, %v2825
        %v2868 = vsub.f32 1.0, %v2827
        %v2869 = vsub.f32 1.0, %v2829
        %v2870 = vsub.f32 1.0, %v2831
        %v2871 = vsub.f32 1.0, %v2833
        %v2872 = vsub.f32 1.0, %v2835
        %v2873 = vsub.f32 1.0, %v2837
        %v2874 = vsub.f32 1.0, %v2839
        %v2875 = vsub.f32 1.0, %v2841
        %v2876 = vsub.f32 1.0, %v2843
        %v2877 = vsub.f32 1.0, %v2845
        %v2878 = vmul.f32 %v2360, %v2686
        %v2879 = vmul.f32 %v2362, %v2687
        %v2880 = vmul.f32 %v2364, %v2688
        %v2881 = vmul.f32 %v2366, %v2689
        %v2882 = vmul.f32 %v2368, %v2690
        %v2883 = vmul.f32 %v2370, %v2691
        %v2884 = vmul.f32 %v2372, %v2692
        %v2885 = vmul.f32 %v2374, %v2693
        %v2886 = vmul.f32 %v2376, %v2694
        %v2887 = vmul.f32 %v2378, %v2695
        %v2888 = vmul.f32 %v2380, %v2696
        %v2889 = vmul.f32 %v2382, %v2697
        %v2890 = vmul.f32 %v2384, %v2698
        %v2891 = vmul.f32 %v2386, %v2699
        %v2892 = vmul.f32 %v2388, %v2700
        %v2893 = vmul.f32 %v2390, %v2701
        %v2894 = vmul.f32 %v2392, %v2702
        %v2895 = vmul.f32 %v2394, %v2703
        %v2896 = vmul.f32 %v2396, %v2704
        %v2897 = vmul.f32 %v2398, %v2705
        %v2898 = vmul.f32 %v2400, %v2706
        %v2899 = vmul.f32 %v2402, %v2707
        %v2900 = vmul.f32 %v2404, %v2708
        %v2901 = vmul.f32 %v2406, %v2709
        %v2902 = vmul.f32 %v2408, %v2710
        %v2903 = vmul.f32 %v2410, %v2711
        %v2904 = vmul.f32 %v2412, %v2712
        %v2905 = vmul.f32 %v2414, %v2713
        %v2906 = vmul.f32 %v2416, %v2714
        %v2907 = vmul.f32 %v2418, %v2715
        %v2908 = vmul.f32 %v2420, %v2716
        %v2909 = vmul.f32 %v2422, %v2717
        %v2910 = vld [vmem:[%s1] sm:$0xff]
        %v2911 = vld [vmem:[%s1 + $0x8] sm:$0xff]
        %v2912 = vld [vmem:[%s1 + $0x10] sm:$0xff]
        %v2913 = vld [vmem:[%s1 + $0x18] sm:$0xff]
        %v2914 = vld [vmem:[%s1 + $0x20] sm:$0xff]
        %v2915 = vld [vmem:[%s1 + $0x28] sm:$0xff]
        %v2916 = vld [vmem:[%s1 + $0x30] sm:$0xff]
        %v2917 = vld [vmem:[%s1 + $0x38] sm:$0xff]
        %v2918 = vld [vmem:[%s1 + $0x40] sm:$0xff]
        %v2919 = vld [vmem:[%s1 + $0x48] sm:$0xff]
        %v2920 = vld [vmem:[%s1 + $0x50] sm:$0xff]
        %v2921 = vld [vmem:[%s1 + $0x58] sm:$0xff]
        %v2922 = vld [vmem:[%s1 + $0x60] sm:$0xff]
        %v2923 = vld [vmem:[%s1 + $0x68] sm:$0xff]
        %v2924 = vld [vmem:[%s1 + $0x70] sm:$0xff]
        %v2925 = vld [vmem:[%s1 + $0x78] sm:$0xff]
        %v2926 = vld [vmem:[%s1 + $0x80] sm:$0xff]
        %v2927 = vld [vmem:[%s1 + $0x88] sm:$0xff]
        %v2928 = vld [vmem:[%s1 + $0x90] sm:$0xff]
        %v2929 = vld [vmem:[%s1 + $0x98] sm:$0xff]
        %v2930 = vld [vmem:[%s1 + $0xa0] sm:$0xff]
        %v2931 = vld [vmem:[%s1 + $0xa8] sm:$0xff]
        %v2932 = vld [vmem:[%s1 + $0xb0] sm:$0xff]
        %v2933 = vld [vmem:[%s1 + $0xb8] sm:$0xff]
        %v2934 = vld [vmem:[%s1 + $0xc0] sm:$0xff]
        %v2935 = vld [vmem:[%s1 + $0xc8] sm:$0xff]
        %v2936 = vld [vmem:[%s1 + $0xd0] sm:$0xff]
        %v2937 = vld [vmem:[%s1 + $0xd8] sm:$0xff]
        %v2938 = vld [vmem:[%s1 + $0xe0] sm:$0xff]
        %v2939 = vld [vmem:[%s1 + $0xe8] sm:$0xff]
        %v2940 = vld [vmem:[%s1 + $0xf0] sm:$0xff]
        %v2941 = vld [vmem:[%s1 + $0xf8] sm:$0xff]
        %v2942 = vld [vmem:[%s1 + $0x100] sm:$0xff]
        %v2943 = vld [vmem:[%s1 + $0x108] sm:$0xff]
        %v2944 = vld [vmem:[%s1 + $0x110] sm:$0xff]
        %v2945 = vld [vmem:[%s1 + $0x118] sm:$0xff]
        %v2946 = vld [vmem:[%s1 + $0x120] sm:$0xff]
        %v2947 = vld [vmem:[%s1 + $0x128] sm:$0xff]
        %v2948 = vld [vmem:[%s1 + $0x130] sm:$0xff]
        %v2949 = vld [vmem:[%s1 + $0x138] sm:$0xff]
        %v2950 = vld [vmem:[%s1 + $0x140] sm:$0xff]
        %v2951 = vld [vmem:[%s1 + $0x148] sm:$0xff]
        %v2952 = vld [vmem:[%s1 + $0x150] sm:$0xff]
        %v2953 = vld [vmem:[%s1 + $0x158] sm:$0xff]
        %v2954 = vld [vmem:[%s1 + $0x160] sm:$0xff]
        %v2955 = vld [vmem:[%s1 + $0x168] sm:$0xff]
        %v2956 = vld [vmem:[%s1 + $0x170] sm:$0xff]
        %v2957 = vld [vmem:[%s1 + $0x178] sm:$0xff]
        %v2959 = vsel %vm2471, %v2879, 0
        %v2962 = vsel %vm2471, %v2881, 0
        %v2965 = vsel %vm2471, %v2883, 0
        %v2968 = vsel %vm2471, %v2885, 0
        %v2971 = vsel %vm2471, %v2887, 0
        %v2974 = vsel %vm2471, %v2889, 0
        %v2977 = vsel %vm2471, %v2891, 0
        %v2980 = vsel %vm2471, %v2893, 0
        %v2983 = vsel %vm2471, %v2895, 0
        %v2986 = vsel %vm2471, %v2897, 0
        %v2989 = vsel %vm2471, %v2899, 0
        %v2992 = vsel %vm2471, %v2901, 0
        %v2995 = vsel %vm2471, %v2903, 0
        %v2998 = vsel %vm2471, %v2905, 0
        %v3001 = vsel %vm2471, %v2907, 0
        %v3004 = vsel %vm2471, %v2909, 0
        %3006 = vmatprep.subr.mxu0 %v2911
        %3007 = vmatpush1.msra.mxu0 %v2910
        %3008 = vmatprep.subr.mxu0 %v2913
        %3009 = vmatpush1.msra.mxu0 %v2912
        %3010 = vmatprep.subr.mxu0 %v2915
        %3011 = vmatpush1.msra.mxu0 %v2914
        %3012 = vmatprep.subr.mxu0 %v2917
        %3013 = vmatpush1.msra.mxu0 %v2916
        %3014 = vmatprep.subr.mxu0 %v2919
        %3015 = vmatpush1.msra.mxu0 %v2918
        %3016 = vmatprep.subr.mxu0 %v2921
        %3017 = vmatpush1.msra.mxu0 %v2920
        %3018 = vmatprep.subr.mxu0 %v2923
        %3019 = vmatpush1.msra.mxu0 %v2922
        %3020 = vmatprep.subr.mxu0 %v2925
        %3021 = vmatpush1.msra.mxu0 %v2924
        %3022 = vmatprep.subr.mxu0 %v2927
        %3023 = vmatpush1.msra.mxu0 %v2926
        %3024 = vmatprep.subr.mxu0 %v2929
        %3025 = vmatpush1.msra.mxu0 %v2928
        %3026 = vmatprep.subr.mxu0 %v2931
        %3027 = vmatpush1.msra.mxu0 %v2930
        %3028 = vmatprep.subr.mxu0 %v2933
        %3029 = vmatpush1.msra.mxu0 %v2932
        %3030 = vmatprep.subr.mxu0 %v2935
        %3031 = vmatpush1.msra.mxu0 %v2934
        %3032 = vmatprep.subr.mxu0 %v2937
        %3033 = vmatpush1.msra.mxu0 %v2936
        %3034 = vmatprep.subr.mxu0 %v2939
        %3035 = vmatpush1.msra.mxu0 %v2938
        %3036 = vmatprep.subr.mxu0 %v2941
        %3037 = vmatpush1.msra.mxu0 %v2940
        %3038 = vmatprep.subr.mxu0 %v2943
        %3039 = vmatpush1.msra.mxu0 %v2942
        %3040 = vmatprep.subr.mxu0 %v2945
        %3041 = vmatpush1.msra.mxu0 %v2944
        %3042 = vmatprep.subr.mxu0 %v2947
        %3043 = vmatpush1.msra.mxu0 %v2946
        %3044 = vmatprep.subr.mxu0 %v2949
        %3045 = vmatpush1.msra.mxu0 %v2948
        %3046 = vmatprep.subr.mxu0 %v2951
        %3047 = vmatpush1.msra.mxu0 %v2950
        %3048 = vmatprep.subr.mxu0 %v2953
        %3049 = vmatpush1.msra.mxu0 %v2952
        %3050 = vmatprep.subr.mxu0 %v2955
        %3051 = vmatpush1.msra.mxu0 %v2954
        %3052 = vmatprep.subr.mxu0 %v2957
        %3053 = vmatpush1.msra.mxu0 %v2956
        %3054 = vmatprep.subr.mxu0 0.0
        %3055 = vmatpush1.msra.mxu0 0.0
        %3056 = vmatprep.subr.mxu0 0.0
        %3057 = vmatpush1.msra.mxu0 0.0
        %3058 = vmatprep.subr.mxu0 0.0
        %3059 = vmatpush1.msra.mxu0 0.0
        %3060 = vmatprep.subr.mxu0 0.0
        %3061 = vmatpush1.msra.mxu0 0.0
        %3062 = vmatprep.subr.mxu0 0.0
        %3063 = vmatpush1.msra.mxu0 0.0
        %3064 = vmatprep.subr.mxu0 0.0
        %3065 = vmatpush1.msra.mxu0 0.0
        %3066 = vmatprep.subr.mxu0 0.0
        %3067 = vmatpush1.msra.mxu0 0.0
        %3068 = vmatprep.subr.mxu0 0.0
        %3069 = vmatpush1.msra.mxu0 0.0
        %3070 = vmatprep.mubr.f32.mxu0 %v2959
        %3071 = vmatmul.mubr.f32.gmra.mrb[0].mxu0 %v2878
        %v3072 = vpop.f32.mrb[0].mxu0
        %v3073 = vadd.f32 0.0, %v3072
        %v3074 = vpop.f32.mrb[0].mxu0
        %v3075 = vadd.f32 0.0, %v3074
        %3076 = vmatprep.mubr.f32.mxu0 %v2962
        %3077 = vmatmul.mubr.f32.gmra.mrb[0].mxu0 %v2880
        %v3078 = vpop.f32.mrb[0].mxu0
        %v3079 = vadd.f32 0.0, %v3078
        %v3080 = vpop.f32.mrb[0].mxu0
        %v3081 = vadd.f32 0.0, %v3080
        %3082 = vmatprep.mubr.f32.mxu0 %v2965
        %3083 = vmatmul.mubr.f32.gmra.mrb[0].mxu0 %v2882
        %v3084 = vpop.f32.mrb[0].mxu0
        %v3085 = vadd.f32 0.0, %v3084
        %v3086 = vpop.f32.mrb[0].mxu0
        %v3087 = vadd.f32 0.0, %v3086
        %3088 = vmatprep.mubr.f32.mxu0 %v2968
        %3089 = vmatmul.mubr.f32.gmra.mrb[0].mxu0 %v2884
        %v3090 = vpop.f32.mrb[0].mxu0
        %v3091 = vadd.f32 0.0, %v3090
        %v3092 = vpop.f32.mrb[0].mxu0
        %v3093 = vadd.f32 0.0, %v3092
        %3094 = vmatprep.mubr.f32.mxu0 %v2971
        %3095 = vmatmul.mubr.f32.gmra.mrb[0].mxu0 %v2886
        %v3096 = vpop.f32.mrb[0].mxu0
        %v3097 = vadd.f32 0.0, %v3096
        %v3098 = vpop.f32.mrb[0].mxu0
        %v3099 = vadd.f32 0.0, %v3098
        %3100 = vmatprep.mubr.f32.mxu0 %v2974
        %3101 = vmatmul.mubr.f32.gmra.mrb[0].mxu0 %v2888
        %v3102 = vpop.f32.mrb[0].mxu0
        %v3103 = vadd.f32 0.0, %v3102
        %v3104 = vpop.f32.mrb[0].mxu0
        %v3105 = vadd.f32 0.0, %v3104
        %3106 = vmatprep.mubr.f32.mxu0 %v2977
        %3107 = vmatmul.mubr.f32.gmra.mrb[0].mxu0 %v2890
        %v3108 = vpop.f32.mrb[0].mxu0
        %v3109 = vadd.f32 0.0, %v3108
        %v3110 = vpop.f32.mrb[0].mxu0
        %v3111 = vadd.f32 0.0, %v3110
        %3112 = vmatprep.mubr.f32.mxu0 %v2980
        %3113 = vmatmul.mubr.f32.gmra.mrb[0].mxu0 %v2892
        %v3114 = vpop.f32.mrb[0].mxu0
        %v3115 = vadd.f32 0.0, %v3114
        %v3116 = vpop.f32.mrb[0].mxu0
        %v3117 = vadd.f32 0.0, %v3116
        %3118 = vmatprep.mubr.f32.mxu0 %v2983
        %3119 = vmatmul.mubr.f32.gmra.mrb[0].mxu0 %v2894
        %v3120 = vpop.f32.mrb[0].mxu0
        %v3121 = vadd.f32 0.0, %v3120
        %v3122 = vpop.f32.mrb[0].mxu0
        %v3123 = vadd.f32 0.0, %v3122
        %3124 = vmatprep.mubr.f32.mxu0 %v2986
        %3125 = vmatmul.mubr.f32.gmra.mrb[0].mxu0 %v2896
        %v3126 = vpop.f32.mrb[0].mxu0
        %v3127 = vadd.f32 0.0, %v3126
        %v3128 = vpop.f32.mrb[0].mxu0
        %v3129 = vadd.f32 0.0, %v3128
        %3130 = vmatprep.mubr.f32.mxu0 %v2989
        %3131 = vmatmul.mubr.f32.gmra.mrb[0].mxu0 %v2898
        %v3132 = vpop.f32.mrb[0].mxu0
        %v3133 = vadd.f32 0.0, %v3132
        %v3134 = vpop.f32.mrb[0].mxu0
        %v3135 = vadd.f32 0.0, %v3134
        %3136 = vmatprep.mubr.f32.mxu0 %v2992
        %3137 = vmatmul.mubr.f32.gmra.mrb[0].mxu0 %v2900
        %v3138 = vpop.f32.mrb[0].mxu0
        %v3139 = vadd.f32 0.0, %v3138
        %v3140 = vpop.f32.mrb[0].mxu0
        %v3141 = vadd.f32 0.0, %v3140
        %3142 = vmatprep.mubr.f32.mxu0 %v2995
        %3143 = vmatmul.mubr.f32.gmra.mrb[0].mxu0 %v2902
        %v3144 = vpop.f32.mrb[0].mxu0
        %v3145 = vadd.f32 0.0, %v3144
        %v3146 = vpop.f32.mrb[0].mxu0
        %v3147 = vadd.f32 0.0, %v3146
        %3148 = vmatprep.mubr.f32.mxu0 %v2998
        %3149 = vmatmul.mubr.f32.gmra.mrb[0].mxu0 %v2904
        %v3150 = vpop.f32.mrb[0].mxu0
        %v3151 = vadd.f32 0.0, %v3150
        %v3152 = vpop.f32.mrb[0].mxu0
        %v3153 = vadd.f32 0.0, %v3152
        %3154 = vmatprep.mubr.f32.mxu0 %v3001
        %3155 = vmatmul.mubr.f32.gmra.mrb[0].mxu0 %v2906
        %v3156 = vpop.f32.mrb[0].mxu0
        %v3157 = vadd.f32 0.0, %v3156
        %v3158 = vpop.f32.mrb[0].mxu0
        %v3159 = vadd.f32 0.0, %v3158
        %3160 = vmatprep.mubr.f32.mxu0 %v3004
        %3161 = vmatmul.mubr.f32.gmra.mrb[0].mxu0 %v2908
        %v3162 = vpop.f32.mrb[0].mxu0
        %v3163 = vadd.f32 0.0, %v3162
        %v3164 = vpop.f32.mrb[0].mxu0
        %v3165 = vadd.f32 0.0, %v3164
        %3166 = vdwg.mxu0
        %v3167 = vsub.f32 0.0, %v3073
        %v3168 = vsub.f32 0.0, %v3075
        %v3169 = vsub.f32 0.0, %v3079
        %v3170 = vsub.f32 0.0, %v3081
        %v3171 = vsub.f32 0.0, %v3085
        %v3172 = vsub.f32 0.0, %v3087
        %v3173 = vsub.f32 0.0, %v3091
        %v3174 = vsub.f32 0.0, %v3093
        %v3175 = vsub.f32 0.0, %v3097
        %v3176 = vsub.f32 0.0, %v3099
        %v3177 = vsub.f32 0.0, %v3103
        %v3178 = vsub.f32 0.0, %v3105
        %v3179 = vsub.f32 0.0, %v3109
        %v3180 = vsub.f32 0.0, %v3111
        %v3181 = vsub.f32 0.0, %v3115
        %v3182 = vsub.f32 0.0, %v3117
        %v3183 = vsub.f32 0.0, %v3121
        %v3184 = vsub.f32 0.0, %v3123
        %v3185 = vsub.f32 0.0, %v3127
        %v3186 = vsub.f32 0.0, %v3129
        %v3187 = vsub.f32 0.0, %v3133
        %v3188 = vsub.f32 0.0, %v3135
        %v3189 = vsub.f32 0.0, %v3139
        %v3190 = vsub.f32 0.0, %v3141
        %v3191 = vsub.f32 0.0, %v3145
        %v3192 = vsub.f32 0.0, %v3147
        %v3193 = vsub.f32 0.0, %v3151
        %v3194 = vsub.f32 0.0, %v3153
        %v3195 = vsub.f32 0.0, %v3157
        %v3196 = vsub.f32 0.0, %v3159
        %v3197 = vsub.f32 0.0, %v3163
        %v3198 = vsub.f32 0.0, %v3165
        %v3199 = vmul.f32 %v3167, 1.442695
        %v3200 = vpow.pop %v3199
        %v3201 = vmul.f32 %v3168, 1.442695
        %v3202 = vpow.pop %v3201
        %v3203 = vmul.f32 %v3169, 1.442695
        %v3204 = vpow.pop %v3203
        %v3205 = vmul.f32 %v3170, 1.442695
        %v3206 = vpow.pop %v3205
        %v3207 = vmul.f32 %v3171, 1.442695
        %v3208 = vpow.pop %v3207
        %v3209 = vmul.f32 %v3172, 1.442695
        %v3210 = vpow.pop %v3209
        %v3211 = vmul.f32 %v3173, 1.442695
        %v3212 = vpow.pop %v3211
        %v3213 = vmul.f32 %v3174, 1.442695
        %v3214 = vpow.pop %v3213
        %v3215 = vmul.f32 %v3175, 1.442695
        %v3216 = vpow.pop %v3215
        %v3217 = vmul.f32 %v3176, 1.442695
        %v3218 = vpow.pop %v3217
        %v3219 = vmul.f32 %v3177, 1.442695
        %v3220 = vpow.pop %v3219
        %v3221 = vmul.f32 %v3178, 1.442695
        %v3222 = vpow.pop %v3221
        %v3223 = vmul.f32 %v3179, 1.442695
        %v3224 = vpow.pop %v3223
        %v3225 = vmul.f32 %v3180, 1.442695
        %v3226 = vpow.pop %v3225
        %v3227 = vmul.f32 %v3181, 1.442695
        %v3228 = vpow.pop %v3227
        %v3229 = vmul.f32 %v3182, 1.442695
        %v3230 = vpow.pop %v3229
        %v3231 = vmul.f32 %v3183, 1.442695
        %v3232 = vpow.pop %v3231
        %v3233 = vmul.f32 %v3184, 1.442695
        %v3234 = vpow.pop %v3233
        %v3235 = vmul.f32 %v3185, 1.442695
        %v3236 = vpow.pop %v3235
        %v3237 = vmul.f32 %v3186, 1.442695
        %v3238 = vpow.pop %v3237
        %v3239 = vmul.f32 %v3187, 1.442695
        %v3240 = vpow.pop %v3239
        %v3241 = vmul.f32 %v3188, 1.442695
        %v3242 = vpow.pop %v3241
        %v3243 = vmul.f32 %v3189, 1.442695
        %v3244 = vpow.pop %v3243
        %v3245 = vmul.f32 %v3190, 1.442695
        %v3246 = vpow.pop %v3245
        %v3247 = vmul.f32 %v3191, 1.442695
        %v3248 = vpow.pop %v3247
        %v3249 = vmul.f32 %v3192, 1.442695
        %v3250 = vpow.pop %v3249
        %v3251 = vmul.f32 %v3193, 1.442695
        %v3252 = vpow.pop %v3251
        %v3253 = vmul.f32 %v3194, 1.442695
        %v3254 = vpow.pop %v3253
        %v3255 = vmul.f32 %v3195, 1.442695
        %v3256 = vpow.pop %v3255
        %v3257 = vmul.f32 %v3196, 1.442695
        %v3258 = vpow.pop %v3257
        %v3259 = vmul.f32 %v3197, 1.442695
        %v3260 = vpow.pop %v3259
        %v3261 = vmul.f32 %v3198, 1.442695
        %v3262 = vpow.pop %v3261
        %v3263 = vmul.f32 %v3200, %v2846
        %v3264 = vmul.f32 %v3202, %v2847
        %v3265 = vmul.f32 %v3204, %v2848
        %v3266 = vmul.f32 %v3206, %v2849
        %v3267 = vmul.f32 %v3208, %v2850
        %v3268 = vmul.f32 %v3210, %v2851
        %v3269 = vmul.f32 %v3212, %v2852
        %v3270 = vmul.f32 %v3214, %v2853
        %v3271 = vmul.f32 %v3216, %v2854
        %v3272 = vmul.f32 %v3218, %v2855
        %v3273 = vmul.f32 %v3220, %v2856
        %v3274 = vmul.f32 %v3222, %v2857
        %v3275 = vmul.f32 %v3224, %v2858
        %v3276 = vmul.f32 %v3226, %v2859
        %v3277 = vmul.f32 %v3228, %v2860
        %v3278 = vmul.f32 %v3230, %v2861
        %v3279 = vmul.f32 %v3232, %v2862
        %v3280 = vmul.f32 %v3234, %v2863
        %v3281 = vmul.f32 %v3236, %v2864
        %v3282 = vmul.f32 %v3238, %v2865
        %v3283 = vmul.f32 %v3240, %v2866
        %v3284 = vmul.f32 %v3242, %v2867
        %v3285 = vmul.f32 %v3244, %v2868
        %v3286 = vmul.f32 %v3246, %v2869
        %v3287 = vmul.f32 %v3248, %v2870
        %v3288 = vmul.f32 %v3250, %v2871
        %v3289 = vmul.f32 %v3252, %v2872
        %v3290 = vmul.f32 %v3254, %v2873
        %v3291 = vmul.f32 %v3256, %v2874
        %v3292 = vmul.f32 %v3258, %v2875
        %v3293 = vmul.f32 %v3260, %v2876
        %v3294 = vmul.f32 %v3262, %v2877
        %v3295 = vsel %vm2471, %v3264, 0.0
        %v3296 = vadd.f32 %v3263, %v3295
        %3297 = vadd.xlane.f32.xlu0 %v3296
        %v3298 = vpop.xlane.xlu0 %3297
        %v3299 = vsel %vm2471, %v3266, 0.0
        %v3300 = vadd.f32 %v3265, %v3299
        %3301 = vadd.xlane.f32.xlu0 %v3300
        %v3302 = vpop.xlane.xlu0 %3301
        %v3303 = vsel %vm2471, %v3268, 0.0
        %v3304 = vadd.f32 %v3267, %v3303
        %3305 = vadd.xlane.f32.xlu0 %v3304
        %v3306 = vpop.xlane.xlu0 %3305
        %v3307 = vsel %vm2471, %v3270, 0.0
        %v3308 = vadd.f32 %v3269, %v3307
        %3309 = vadd.xlane.f32.xlu0 %v3308
        %v3310 = vpop.xlane.xlu0 %3309
        %v3311 = vsel %vm2471, %v3272, 0.0
        %v3312 = vadd.f32 %v3271, %v3311
        %3313 = vadd.xlane.f32.xlu0 %v3312
        %v3314 = vpop.xlane.xlu0 %3313
        %v3315 = vsel %vm2471, %v3274, 0.0
        %v3316 = vadd.f32 %v3273, %v3315
        %3317 = vadd.xlane.f32.xlu0 %v3316
        %v3318 = vpop.xlane.xlu0 %3317
        %v3319 = vsel %vm2471, %v3276, 0.0
        %v3320 = vadd.f32 %v3275, %v3319
        %3321 = vadd.xlane.f32.xlu0 %v3320
        %v3322 = vpop.xlane.xlu0 %3321
        %v3323 = vsel %vm2471, %v3278, 0.0
        %v3324 = vadd.f32 %v3277, %v3323
        %3325 = vadd.xlane.f32.xlu0 %v3324
        %v3326 = vpop.xlane.xlu0 %3325
        %v3327 = vsel %vm2471, %v3280, 0.0
        %v3328 = vadd.f32 %v3279, %v3327
        %3329 = vadd.xlane.f32.xlu0 %v3328
        %v3330 = vpop.xlane.xlu0 %3329
        %v3331 = vsel %vm2471, %v3282, 0.0
        %v3332 = vadd.f32 %v3281, %v3331
        %3333 = vadd.xlane.f32.xlu0 %v3332
        %v3334 = vpop.xlane.xlu0 %3333
        %v3335 = vsel %vm2471, %v3284, 0.0
        %v3336 = vadd.f32 %v3283, %v3335
        %3337 = vadd.xlane.f32.xlu0 %v3336
        %v3338 = vpop.xlane.xlu0 %3337
        %v3339 = vsel %vm2471, %v3286, 0.0
        %v3340 = vadd.f32 %v3285, %v3339
        %3341 = vadd.xlane.f32.xlu0 %v3340
        %v3342 = vpop.xlane.xlu0 %3341
        %v3343 = vsel %vm2471, %v3288, 0.0
        %v3344 = vadd.f32 %v3287, %v3343
        %3345 = vadd.xlane.f32.xlu0 %v3344
        %v3346 = vpop.xlane.xlu0 %3345
        %v3347 = vsel %vm2471, %v3290, 0.0
        %v3348 = vadd.f32 %v3289, %v3347
        %3349 = vadd.xlane.f32.xlu0 %v3348
        %v3350 = vpop.xlane.xlu0 %3349
        %v3351 = vsel %vm2471, %v3292, 0.0
        %v3352 = vadd.f32 %v3291, %v3351
        %3353 = vadd.xlane.f32.xlu0 %v3352
        %v3354 = vpop.xlane.xlu0 %3353
        %v3355 = vsel %vm2471, %v3294, 0.0
        %v3356 = vadd.f32 %v3293, %v3355
        %3357 = vadd.xlane.f32.xlu0 %v3356
        %v3358 = vpop.xlane.xlu0 %3357
        %v3359 = vld [vmem:[%s2040] sm:$0xff]
        %v3360 = vld [vmem:[%s2040 + $0x8] sm:$0xff]
        %v3361 = vld [vmem:[%s2040 + $0x10] sm:$0xff]
        %v3362 = vld [vmem:[%s2040 + $0x18] sm:$0xff]
        %v3363 = vld [vmem:[%s2040 + $0x20] sm:$0xff]
        %v3364 = vld [vmem:[%s2040 + $0x28] sm:$0xff]
        %v3365 = vld [vmem:[%s2040 + $0x30] sm:$0xff]
        %v3366 = vld [vmem:[%s2040 + $0x38] sm:$0xff]
        %v3367 = vld [vmem:[%s2040 + $0x40] sm:$0xff]
        %v3368 = vld [vmem:[%s2040 + $0x48] sm:$0xff]
        %v3369 = vld [vmem:[%s2040 + $0x50] sm:$0xff]
        %v3370 = vld [vmem:[%s2040 + $0x58] sm:$0xff]
        %v3371 = vld [vmem:[%s2040 + $0x60] sm:$0xff]
        %v3372 = vld [vmem:[%s2040 + $0x68] sm:$0xff]
        %v3373 = vld [vmem:[%s2040 + $0x70] sm:$0xff]
        %v3374 = vld [vmem:[%s2040 + $0x78] sm:$0xff]
        %v3375 = vld [vmem:[%s2040 + $0x80] sm:$0xff]
        %v3376 = vld [vmem:[%s2040 + $0x88] sm:$0xff]
        %v3377 = vld [vmem:[%s2040 + $0x90] sm:$0xff]
        %v3378 = vld [vmem:[%s2040 + $0x98] sm:$0xff]
        %v3379 = vld [vmem:[%s2040 + $0xa0] sm:$0xff]
        %v3380 = vld [vmem:[%s2040 + $0xa8] sm:$0xff]
        %v3381 = vld [vmem:[%s2040 + $0xb0] sm:$0xff]
        %v3382 = vld [vmem:[%s2040 + $0xb8] sm:$0xff]
        %v3383 = vld [vmem:[%s2040 + $0xc0] sm:$0xff]
        %v3384 = vld [vmem:[%s2040 + $0xc8] sm:$0xff]
        %v3385 = vld [vmem:[%s2040 + $0xd0] sm:$0xff]
        %v3386 = vld [vmem:[%s2040 + $0xd8] sm:$0xff]
        %v3387 = vld [vmem:[%s2040 + $0xe0] sm:$0xff]
        %v3388 = vld [vmem:[%s2040 + $0xe8] sm:$0xff]
        %v3389 = vld [vmem:[%s2040 + $0xf0] sm:$0xff]
        %v3390 = vld [vmem:[%s2040 + $0xf8] sm:$0xff]
        %v3391 = vmul.f32 %v3263, %v3359
        %v3392 = vmul.f32 %v3264, %v3360
        %v3393 = vmul.f32 %v3265, %v3361
        %v3394 = vmul.f32 %v3266, %v3362
        %v3395 = vmul.f32 %v3267, %v3363
        %v3396 = vmul.f32 %v3268, %v3364
        %v3397 = vmul.f32 %v3269, %v3365
        %v3398 = vmul.f32 %v3270, %v3366
        %v3399 = vmul.f32 %v3271, %v3367
        %v3400 = vmul.f32 %v3272, %v3368
        %v3401 = vmul.f32 %v3273, %v3369
        %v3402 = vmul.f32 %v3274, %v3370
        %v3403 = vmul.f32 %v3275, %v3371
        %v3404 = vmul.f32 %v3276, %v3372
        %v3405 = vmul.f32 %v3277, %v3373
        %v3406 = vmul.f32 %v3278, %v3374
        %v3407 = vmul.f32 %v3279, %v3375
        %v3408 = vmul.f32 %v3280, %v3376
        %v3409 = vmul.f32 %v3281, %v3377
        %v3410 = vmul.f32 %v3282, %v3378
        %v3411 = vmul.f32 %v3283, %v3379
        %v3412 = vmul.f32 %v3284, %v3380
        %v3413 = vmul.f32 %v3285, %v3381
        %v3414 = vmul.f32 %v3286, %v3382
        %v3415 = vmul.f32 %v3287, %v3383
        %v3416 = vmul.f32 %v3288, %v3384
        %v3417 = vmul.f32 %v3289, %v3385
        %v3418 = vmul.f32 %v3290, %v3386
        %v3419 = vmul.f32 %v3291, %v3387
        %v3420 = vmul.f32 %v3292, %v3388
        %v3421 = vmul.f32 %v3293, %v3389
        %v3422 = vmul.f32 %v3294, %v3390
        %v3423 = vsel %vm2471, %v3392, 0.0
        %v3424 = vadd.f32 %v3391, %v3423
        %3425 = vadd.xlane.f32.xlu0 %v3424
        %v3426 = vpop.xlane.xlu0 %3425
        %v3427 = vsel %vm2471, %v3394, 0.0
        %v3428 = vadd.f32 %v3393, %v3427
        %3429 = vadd.xlane.f32.xlu0 %v3428
        %v3430 = vpop.xlane.xlu0 %3429
        %v3431 = vsel %vm2471, %v3396, 0.0
        %v3432 = vadd.f32 %v3395, %v3431
        %3433 = vadd.xlane.f32.xlu0 %v3432
        %v3434 = vpop.xlane.xlu0 %3433
        %v3435 = vsel %vm2471, %v3398, 0.0
        %v3436 = vadd.f32 %v3397, %v3435
        %3437 = vadd.xlane.f32.xlu0 %v3436
        %v3438 = vpop.xlane.xlu0 %3437
        %v3439 = vsel %vm2471, %v3400, 0.0
        %v3440 = vadd.f32 %v3399, %v3439
        %3441 = vadd.xlane.f32.xlu0 %v3440
        %v3442 = vpop.xlane.xlu0 %3441
        %v3443 = vsel %vm2471, %v3402, 0.0
        %v3444 = vadd.f32 %v3401, %v3443
        %3445 = vadd.xlane.f32.xlu0 %v3444
        %v3446 = vpop.xlane.xlu0 %3445
        %v3447 = vsel %vm2471, %v3404, 0.0
        %v3448 = vadd.f32 %v3403, %v3447
        %3449 = vadd.xlane.f32.xlu0 %v3448
        %v3450 = vpop.xlane.xlu0 %3449
        %v3451 = vsel %vm2471, %v3406, 0.0
        %v3452 = vadd.f32 %v3405, %v3451
        %3453 = vadd.xlane.f32.xlu0 %v3452
        %v3454 = vpop.xlane.xlu0 %3453
        %v3455 = vsel %vm2471, %v3408, 0.0
        %v3456 = vadd.f32 %v3407, %v3455
        %3457 = vadd.xlane.f32.xlu0 %v3456
        %v3458 = vpop.xlane.xlu0 %3457
        %v3459 = vsel %vm2471, %v3410, 0.0
        %v3460 = vadd.f32 %v3409, %v3459
        %3461 = vadd.xlane.f32.xlu0 %v3460
        %v3462 = vpop.xlane.xlu0 %3461
        %v3463 = vsel %vm2471, %v3412, 0.0
        %v3464 = vadd.f32 %v3411, %v3463
        %3465 = vadd.xlane.f32.xlu0 %v3464
        %v3466 = vpop.xlane.xlu0 %3465
        %v3467 = vsel %vm2471, %v3414, 0.0
        %v3468 = vadd.f32 %v3413, %v3467
        %3469 = vadd.xlane.f32.xlu0 %v3468
        %v3470 = vpop.xlane.xlu0 %3469
        %v3471 = vsel %vm2471, %v3416, 0.0
        %v3472 = vadd.f32 %v3415, %v3471
        %3473 = vadd.xlane.f32.xlu0 %v3472
        %v3474 = vpop.xlane.xlu0 %3473
        %v3475 = vsel %vm2471, %v3418, 0.0
        %v3476 = vadd.f32 %v3417, %v3475
        %3477 = vadd.xlane.f32.xlu0 %v3476
        %v3478 = vpop.xlane.xlu0 %3477
        %v3479 = vsel %vm2471, %v3420, 0.0
        %v3480 = vadd.f32 %v3419, %v3479
        %3481 = vadd.xlane.f32.xlu0 %v3480
        %v3482 = vpop.xlane.xlu0 %3481
        %v3483 = vsel %vm2471, %v3422, 0.0
        %v3484 = vadd.f32 %v3421, %v3483
        %3485 = vadd.xlane.f32.xlu0 %v3484
        %v3486 = vpop.xlane.xlu0 %3485
        %s3487 = scalar_lea.vmem %s2040, 256 [#allocation4]
        %v3488 = vld [vmem:[%s3487] sm:$0xff]
        %v3489 = vld [vmem:[%s3487 + $0x8] sm:$0xff]
        %v3490 = vld [vmem:[%s3487 + $0x10] sm:$0xff]
        %v3491 = vld [vmem:[%s3487 + $0x18] sm:$0xff]
        %v3492 = vld [vmem:[%s3487 + $0x20] sm:$0xff]
        %v3493 = vld [vmem:[%s3487 + $0x28] sm:$0xff]
        %v3494 = vld [vmem:[%s3487 + $0x30] sm:$0xff]
        %v3495 = vld [vmem:[%s3487 + $0x38] sm:$0xff]
        %v3496 = vld [vmem:[%s3487 + $0x40] sm:$0xff]
        %v3497 = vld [vmem:[%s3487 + $0x48] sm:$0xff]
        %v3498 = vld [vmem:[%s3487 + $0x50] sm:$0xff]
        %v3499 = vld [vmem:[%s3487 + $0x58] sm:$0xff]
        %v3500 = vld [vmem:[%s3487 + $0x60] sm:$0xff]
        %v3501 = vld [vmem:[%s3487 + $0x68] sm:$0xff]
        %v3502 = vld [vmem:[%s3487 + $0x70] sm:$0xff]
        %v3503 = vld [vmem:[%s3487 + $0x78] sm:$0xff]
        %v3504 = vld [vmem:[%s3487 + $0x80] sm:$0xff]
        %v3505 = vld [vmem:[%s3487 + $0x88] sm:$0xff]
        %v3506 = vld [vmem:[%s3487 + $0x90] sm:$0xff]
        %v3507 = vld [vmem:[%s3487 + $0x98] sm:$0xff]
        %v3508 = vld [vmem:[%s3487 + $0xa0] sm:$0xff]
        %v3509 = vld [vmem:[%s3487 + $0xa8] sm:$0xff]
        %v3510 = vld [vmem:[%s3487 + $0xb0] sm:$0xff]
        %v3511 = vld [vmem:[%s3487 + $0xb8] sm:$0xff]
        %v3512 = vld [vmem:[%s3487 + $0xc0] sm:$0xff]
        %v3513 = vld [vmem:[%s3487 + $0xc8] sm:$0xff]
        %v3514 = vld [vmem:[%s3487 + $0xd0] sm:$0xff]
        %v3515 = vld [vmem:[%s3487 + $0xd8] sm:$0xff]
        %v3516 = vld [vmem:[%s3487 + $0xe0] sm:$0xff]
        %v3517 = vld [vmem:[%s3487 + $0xe8] sm:$0xff]
        %v3518 = vld [vmem:[%s3487 + $0xf0] sm:$0xff]
        %v3519 = vld [vmem:[%s3487 + $0xf8] sm:$0xff]
        %v3520 = vmul.f32 %v3263, %v3488
        %v3521 = vmul.f32 %v3264, %v3489
        %v3522 = vmul.f32 %v3265, %v3490
        %v3523 = vmul.f32 %v3266, %v3491
        %v3524 = vmul.f32 %v3267, %v3492
        %v3525 = vmul.f32 %v3268, %v3493
        %v3526 = vmul.f32 %v3269, %v3494
        %v3527 = vmul.f32 %v3270, %v3495
        %v3528 = vmul.f32 %v3271, %v3496
        %v3529 = vmul.f32 %v3272, %v3497
        %v3530 = vmul.f32 %v3273, %v3498
        %v3531 = vmul.f32 %v3274, %v3499
        %v3532 = vmul.f32 %v3275, %v3500
        %v3533 = vmul.f32 %v3276, %v3501
        %v3534 = vmul.f32 %v3277, %v3502
        %v3535 = vmul.f32 %v3278, %v3503
        %v3536 = vmul.f32 %v3279, %v3504
        %v3537 = vmul.f32 %v3280, %v3505
        %v3538 = vmul.f32 %v3281, %v3506
        %v3539 = vmul.f32 %v3282, %v3507
        %v3540 = vmul.f32 %v3283, %v3508
        %v3541 = vmul.f32 %v3284, %v3509
        %v3542 = vmul.f32 %v3285, %v3510
        %v3543 = vmul.f32 %v3286, %v3511
        %v3544 = vmul.f32 %v3287, %v3512
        %v3545 = vmul.f32 %v3288, %v3513
        %v3546 = vmul.f32 %v3289, %v3514
        %v3547 = vmul.f32 %v3290, %v3515
        %v3548 = vmul.f32 %v3291, %v3516
        %v3549 = vmul.f32 %v3292, %v3517
        %v3550 = vmul.f32 %v3293, %v3518
        %v3551 = vmul.f32 %v3294, %v3519
        %v3552 = vsel %vm2471, %v3521, 0.0
        %v3553 = vadd.f32 %v3520, %v3552
        %3554 = vadd.xlane.f32.xlu0 %v3553
        %v3555 = vpop.xlane.xlu0 %3554
        %v3556 = vsel %vm2471, %v3523, 0.0
        %v3557 = vadd.f32 %v3522, %v3556
        %3558 = vadd.xlane.f32.xlu0 %v3557
        %v3559 = vpop.xlane.xlu0 %3558
        %v3560 = vsel %vm2471, %v3525, 0.0
        %v3561 = vadd.f32 %v3524, %v3560
        %3562 = vadd.xlane.f32.xlu0 %v3561
        %v3563 = vpop.xlane.xlu0 %3562
        %v3564 = vsel %vm2471, %v3527, 0.0
        %v3565 = vadd.f32 %v3526, %v3564
        %3566 = vadd.xlane.f32.xlu0 %v3565
        %v3567 = vpop.xlane.xlu0 %3566
        %v3568 = vsel %vm2471, %v3529, 0.0
        %v3569 = vadd.f32 %v3528, %v3568
        %3570 = vadd.xlane.f32.xlu0 %v3569
        %v3571 = vpop.xlane.xlu0 %3570
        %v3572 = vsel %vm2471, %v3531, 0.0
        %v3573 = vadd.f32 %v3530, %v3572
        %3574 = vadd.xlane.f32.xlu0 %v3573
        %v3575 = vpop.xlane.xlu0 %3574
        %v3576 = vsel %vm2471, %v3533, 0.0
        %v3577 = vadd.f32 %v3532, %v3576
        %3578 = vadd.xlane.f32.xlu0 %v3577
        %v3579 = vpop.xlane.xlu0 %3578
        %v3580 = vsel %vm2471, %v3535, 0.0
        %v3581 = vadd.f32 %v3534, %v3580
        %3582 = vadd.xlane.f32.xlu0 %v3581
        %v3583 = vpop.xlane.xlu0 %3582
        %v3584 = vsel %vm2471, %v3537, 0.0
        %v3585 = vadd.f32 %v3536, %v3584
        %3586 = vadd.xlane.f32.xlu0 %v3585
        %v3587 = vpop.xlane.xlu0 %3586
        %v3588 = vsel %vm2471, %v3539, 0.0
        %v3589 = vadd.f32 %v3538, %v3588
        %3590 = vadd.xlane.f32.xlu0 %v3589
        %v3591 = vpop.xlane.xlu0 %3590
        %v3592 = vsel %vm2471, %v3541, 0.0
        %v3593 = vadd.f32 %v3540, %v3592
        %3594 = vadd.xlane.f32.xlu0 %v3593
        %v3595 = vpop.xlane.xlu0 %3594
        %v3596 = vsel %vm2471, %v3543, 0.0
        %v3597 = vadd.f32 %v3542, %v3596
        %3598 = vadd.xlane.f32.xlu0 %v3597
        %v3599 = vpop.xlane.xlu0 %3598
        %v3600 = vsel %vm2471, %v3545, 0.0
        %v3601 = vadd.f32 %v3544, %v3600
        %3602 = vadd.xlane.f32.xlu0 %v3601
        %v3603 = vpop.xlane.xlu0 %3602
        %v3604 = vsel %vm2471, %v3547, 0.0
        %v3605 = vadd.f32 %v3546, %v3604
        %3606 = vadd.xlane.f32.xlu0 %v3605
        %v3607 = vpop.xlane.xlu0 %3606
        %v3608 = vsel %vm2471, %v3549, 0.0
        %v3609 = vadd.f32 %v3548, %v3608
        %3610 = vadd.xlane.f32.xlu0 %v3609
        %v3611 = vpop.xlane.xlu0 %3610
        %v3612 = vsel %vm2471, %v3551, 0.0
        %v3613 = vadd.f32 %v3550, %v3612
        %3614 = vadd.xlane.f32.xlu0 %v3613
        %v3615 = vpop.xlane.xlu0 %3614
        %s3616 = scalar_lea.vmem %s2040, 512 [#allocation4]
        %v3617 = vld [vmem:[%s3616] sm:$0xff]
        %v3618 = vld [vmem:[%s3616 + $0x8] sm:$0xff]
        %v3619 = vld [vmem:[%s3616 + $0x10] sm:$0xff]
        %v3620 = vld [vmem:[%s3616 + $0x18] sm:$0xff]
        %v3621 = vld [vmem:[%s3616 + $0x20] sm:$0xff]
        %v3622 = vld [vmem:[%s3616 + $0x28] sm:$0xff]
        %v3623 = vld [vmem:[%s3616 + $0x30] sm:$0xff]
        %v3624 = vld [vmem:[%s3616 + $0x38] sm:$0xff]
        %v3625 = vld [vmem:[%s3616 + $0x40] sm:$0xff]
        %v3626 = vld [vmem:[%s3616 + $0x48] sm:$0xff]
        %v3627 = vld [vmem:[%s3616 + $0x50] sm:$0xff]
        %v3628 = vld [vmem:[%s3616 + $0x58] sm:$0xff]
        %v3629 = vld [vmem:[%s3616 + $0x60] sm:$0xff]
        %v3630 = vld [vmem:[%s3616 + $0x68] sm:$0xff]
        %v3631 = vld [vmem:[%s3616 + $0x70] sm:$0xff]
        %v3632 = vld [vmem:[%s3616 + $0x78] sm:$0xff]
        %v3633 = vld [vmem:[%s3616 + $0x80] sm:$0xff]
        %v3634 = vld [vmem:[%s3616 + $0x88] sm:$0xff]
        %v3635 = vld [vmem:[%s3616 + $0x90] sm:$0xff]
        %v3636 = vld [vmem:[%s3616 + $0x98] sm:$0xff]
        %v3637 = vld [vmem:[%s3616 + $0xa0] sm:$0xff]
        %v3638 = vld [vmem:[%s3616 + $0xa8] sm:$0xff]
        %v3639 = vld [vmem:[%s3616 + $0xb0] sm:$0xff]
        %v3640 = vld [vmem:[%s3616 + $0xb8] sm:$0xff]
        %v3641 = vld [vmem:[%s3616 + $0xc0] sm:$0xff]
        %v3642 = vld [vmem:[%s3616 + $0xc8] sm:$0xff]
        %v3643 = vld [vmem:[%s3616 + $0xd0] sm:$0xff]
        %v3644 = vld [vmem:[%s3616 + $0xd8] sm:$0xff]
        %v3645 = vld [vmem:[%s3616 + $0xe0] sm:$0xff]
        %v3646 = vld [vmem:[%s3616 + $0xe8] sm:$0xff]
        %v3647 = vld [vmem:[%s3616 + $0xf0] sm:$0xff]
        %v3648 = vld [vmem:[%s3616 + $0xf8] sm:$0xff]
        %v3649 = vmul.f32 %v3263, %v3617
        %v3650 = vmul.f32 %v3264, %v3618
        %v3651 = vmul.f32 %v3265, %v3619
        %v3652 = vmul.f32 %v3266, %v3620
        %v3653 = vmul.f32 %v3267, %v3621
        %v3654 = vmul.f32 %v3268, %v3622
        %v3655 = vmul.f32 %v3269, %v3623
        %v3656 = vmul.f32 %v3270, %v3624
        %v3657 = vmul.f32 %v3271, %v3625
        %v3658 = vmul.f32 %v3272, %v3626
        %v3659 = vmul.f32 %v3273, %v3627
        %v3660 = vmul.f32 %v3274, %v3628
        %v3661 = vmul.f32 %v3275, %v3629
        %v3662 = vmul.f32 %v3276, %v3630
        %v3663 = vmul.f32 %v3277, %v3631
        %v3664 = vmul.f32 %v3278, %v3632
        %v3665 = vmul.f32 %v3279, %v3633
        %v3666 = vmul.f32 %v3280, %v3634
        %v3667 = vmul.f32 %v3281, %v3635
        %v3668 = vmul.f32 %v3282, %v3636
        %v3669 = vmul.f32 %v3283, %v3637
        %v3670 = vmul.f32 %v3284, %v3638
        %v3671 = vmul.f32 %v3285, %v3639
        %v3672 = vmul.f32 %v3286, %v3640
        %v3673 = vmul.f32 %v3287, %v3641
        %v3674 = vmul.f32 %v3288, %v3642
        %v3675 = vmul.f32 %v3289, %v3643
        %v3676 = vmul.f32 %v3290, %v3644
        %v3677 = vmul.f32 %v3291, %v3645
        %v3678 = vmul.f32 %v3292, %v3646
        %v3679 = vmul.f32 %v3293, %v3647
        %v3680 = vmul.f32 %v3294, %v3648
        %v3681 = vsel %vm2471, %v3650, 0.0
        %v3682 = vadd.f32 %v3649, %v3681
        %3683 = vadd.xlane.f32.xlu0 %v3682
        %v3684 = vpop.xlane.xlu0 %3683
        %v3685 = vsel %vm2471, %v3652, 0.0
        %v3686 = vadd.f32 %v3651, %v3685
        %3687 = vadd.xlane.f32.xlu0 %v3686
        %v3688 = vpop.xlane.xlu0 %3687
        %v3689 = vsel %vm2471, %v3654, 0.0
        %v3690 = vadd.f32 %v3653, %v3689
        %3691 = vadd.xlane.f32.xlu0 %v3690
        %v3692 = vpop.xlane.xlu0 %3691
        %v3693 = vsel %vm2471, %v3656, 0.0
        %v3694 = vadd.f32 %v3655, %v3693
        %3695 = vadd.xlane.f32.xlu0 %v3694
        %v3696 = vpop.xlane.xlu0 %3695
        %v3697 = vsel %vm2471, %v3658, 0.0
        %v3698 = vadd.f32 %v3657, %v3697
        %3699 = vadd.xlane.f32.xlu0 %v3698
        %v3700 = vpop.xlane.xlu0 %3699
        %v3701 = vsel %vm2471, %v3660, 0.0
        %v3702 = vadd.f32 %v3659, %v3701
        %3703 = vadd.xlane.f32.xlu0 %v3702
        %v3704 = vpop.xlane.xlu0 %3703
        %v3705 = vsel %vm2471, %v3662, 0.0
        %v3706 = vadd.f32 %v3661, %v3705
        %3707 = vadd.xlane.f32.xlu0 %v3706
        %v3708 = vpop.xlane.xlu0 %3707
        %v3709 = vsel %vm2471, %v3664, 0.0
        %v3710 = vadd.f32 %v3663, %v3709
        %3711 = vadd.xlane.f32.xlu0 %v3710
        %v3712 = vpop.xlane.xlu0 %3711
        %v3713 = vsel %vm2471, %v3666, 0.0
        %v3714 = vadd.f32 %v3665, %v3713
        %3715 = vadd.xlane.f32.xlu0 %v3714
        %v3716 = vpop.xlane.xlu0 %3715
        %v3717 = vsel %vm2471, %v3668, 0.0
        %v3718 = vadd.f32 %v3667, %v3717
        %3719 = vadd.xlane.f32.xlu0 %v3718
        %v3720 = vpop.xlane.xlu0 %3719
        %v3721 = vsel %vm2471, %v3670, 0.0
        %v3722 = vadd.f32 %v3669, %v3721
        %3723 = vadd.xlane.f32.xlu0 %v3722
        %v3724 = vpop.xlane.xlu0 %3723
        %v3725 = vsel %vm2471, %v3672, 0.0
        %v3726 = vadd.f32 %v3671, %v3725
        %3727 = vadd.xlane.f32.xlu0 %v3726
        %v3728 = vpop.xlane.xlu0 %3727
        %v3729 = vsel %vm2471, %v3674, 0.0
        %v3730 = vadd.f32 %v3673, %v3729
        %3731 = vadd.xlane.f32.xlu0 %v3730
        %v3732 = vpop.xlane.xlu0 %3731
        %v3733 = vsel %vm2471, %v3676, 0.0
        %v3734 = vadd.f32 %v3675, %v3733
        %3735 = vadd.xlane.f32.xlu0 %v3734
        %v3736 = vpop.xlane.xlu0 %3735
        %v3737 = vsel %vm2471, %v3678, 0.0
        %v3738 = vadd.f32 %v3677, %v3737
        %3739 = vadd.xlane.f32.xlu0 %v3738
        %v3740 = vpop.xlane.xlu0 %3739
        %v3741 = vsel %vm2471, %v3680, 0.0
        %v3742 = vadd.f32 %v3679, %v3741
        %3743 = vadd.xlane.f32.xlu0 %v3742
        %v3744 = vpop.xlane.xlu0 %3743
        %s3745 = scalar_lea.vmem %s2040, 768 [#allocation4]
        %v3746 = vld [vmem:[%s3745] sm:$0xff]
        %v3747 = vld [vmem:[%s3745 + $0x8] sm:$0xff]
        %v3748 = vld [vmem:[%s3745 + $0x10] sm:$0xff]
        %v3749 = vld [vmem:[%s3745 + $0x18] sm:$0xff]
        %v3750 = vld [vmem:[%s3745 + $0x20] sm:$0xff]
        %v3751 = vld [vmem:[%s3745 + $0x28] sm:$0xff]
        %v3752 = vld [vmem:[%s3745 + $0x30] sm:$0xff]
        %v3753 = vld [vmem:[%s3745 + $0x38] sm:$0xff]
        %v3754 = vld [vmem:[%s3745 + $0x40] sm:$0xff]
        %v3755 = vld [vmem:[%s3745 + $0x48] sm:$0xff]
        %v3756 = vld [vmem:[%s3745 + $0x50] sm:$0xff]
        %v3757 = vld [vmem:[%s3745 + $0x58] sm:$0xff]
        %v3758 = vld [vmem:[%s3745 + $0x60] sm:$0xff]
        %v3759 = vld [vmem:[%s3745 + $0x68] sm:$0xff]
        %v3760 = vld [vmem:[%s3745 + $0x70] sm:$0xff]
        %v3761 = vld [vmem:[%s3745 + $0x78] sm:$0xff]
        %v3762 = vld [vmem:[%s3745 + $0x80] sm:$0xff]
        %v3763 = vld [vmem:[%s3745 + $0x88] sm:$0xff]
        %v3764 = vld [vmem:[%s3745 + $0x90] sm:$0xff]
        %v3765 = vld [vmem:[%s3745 + $0x98] sm:$0xff]
        %v3766 = vld [vmem:[%s3745 + $0xa0] sm:$0xff]
        %v3767 = vld [vmem:[%s3745 + $0xa8] sm:$0xff]
        %v3768 = vld [vmem:[%s3745 + $0xb0] sm:$0xff]
        %v3769 = vld [vmem:[%s3745 + $0xb8] sm:$0xff]
        %v3770 = vld [vmem:[%s3745 + $0xc0] sm:$0xff]
        %v3771 = vld [vmem:[%s3745 + $0xc8] sm:$0xff]
        %v3772 = vld [vmem:[%s3745 + $0xd0] sm:$0xff]
        %v3773 = vld [vmem:[%s3745 + $0xd8] sm:$0xff]
        %v3774 = vld [vmem:[%s3745 + $0xe0] sm:$0xff]
        %v3775 = vld [vmem:[%s3745 + $0xe8] sm:$0xff]
        %v3776 = vld [vmem:[%s3745 + $0xf0] sm:$0xff]
        %v3777 = vld [vmem:[%s3745 + $0xf8] sm:$0xff]
        %v3778 = vmul.f32 %v3263, %v3746
        %v3779 = vmul.f32 %v3264, %v3747
        %v3780 = vmul.f32 %v3265, %v3748
        %v3781 = vmul.f32 %v3266, %v3749
        %v3782 = vmul.f32 %v3267, %v3750
        %v3783 = vmul.f32 %v3268, %v3751
        %v3784 = vmul.f32 %v3269, %v3752
        %v3785 = vmul.f32 %v3270, %v3753
        %v3786 = vmul.f32 %v3271, %v3754
        %v3787 = vmul.f32 %v3272, %v3755
        %v3788 = vmul.f32 %v3273, %v3756
        %v3789 = vmul.f32 %v3274, %v3757
        %v3790 = vmul.f32 %v3275, %v3758
        %v3791 = vmul.f32 %v3276, %v3759
        %v3792 = vmul.f32 %v3277, %v3760
        %v3793 = vmul.f32 %v3278, %v3761
        %v3794 = vmul.f32 %v3279, %v3762
        %v3795 = vmul.f32 %v3280, %v3763
        %v3796 = vmul.f32 %v3281, %v3764
        %v3797 = vmul.f32 %v3282, %v3765
        %v3798 = vmul.f32 %v3283, %v3766
        %v3799 = vmul.f32 %v3284, %v3767
        %v3800 = vmul.f32 %v3285, %v3768
        %v3801 = vmul.f32 %v3286, %v3769
        %v3802 = vmul.f32 %v3287, %v3770
        %v3803 = vmul.f32 %v3288, %v3771
        %v3804 = vmul.f32 %v3289, %v3772
        %v3805 = vmul.f32 %v3290, %v3773
        %v3806 = vmul.f32 %v3291, %v3774
        %v3807 = vmul.f32 %v3292, %v3775
        %v3808 = vmul.f32 %v3293, %v3776
        %v3809 = vmul.f32 %v3294, %v3777
        %v3810 = vsel %vm2471, %v3779, 0.0
        %v3811 = vadd.f32 %v3778, %v3810
        %3812 = vadd.xlane.f32.xlu0 %v3811
        %v3813 = vpop.xlane.xlu0 %3812
        %v3814 = vsel %vm2471, %v3781, 0.0
        %v3815 = vadd.f32 %v3780, %v3814
        %3816 = vadd.xlane.f32.xlu0 %v3815
        %v3817 = vpop.xlane.xlu0 %3816
        %v3818 = vsel %vm2471, %v3783, 0.0
        %v3819 = vadd.f32 %v3782, %v3818
        %3820 = vadd.xlane.f32.xlu0 %v3819
        %v3821 = vpop.xlane.xlu0 %3820
        %v3822 = vsel %vm2471, %v3785, 0.0
        %v3823 = vadd.f32 %v3784, %v3822
        %3824 = vadd.xlane.f32.xlu0 %v3823
        %v3825 = vpop.xlane.xlu0 %3824
        %v3826 = vsel %vm2471, %v3787, 0.0
        %v3827 = vadd.f32 %v3786, %v3826
        %3828 = vadd.xlane.f32.xlu0 %v3827
        %v3829 = vpop.xlane.xlu0 %3828
        %v3830 = vsel %vm2471, %v3789, 0.0
        %v3831 = vadd.f32 %v3788, %v3830
        %3832 = vadd.xlane.f32.xlu0 %v3831
        %v3833 = vpop.xlane.xlu0 %3832
        %v3834 = vsel %vm2471, %v3791, 0.0
        %v3835 = vadd.f32 %v3790, %v3834
        %3836 = vadd.xlane.f32.xlu0 %v3835
        %v3837 = vpop.xlane.xlu0 %3836
        %v3838 = vsel %vm2471, %v3793, 0.0
        %v3839 = vadd.f32 %v3792, %v3838
        %3840 = vadd.xlane.f32.xlu0 %v3839
        %v3841 = vpop.xlane.xlu0 %3840
        %v3842 = vsel %vm2471, %v3795, 0.0
        %v3843 = vadd.f32 %v3794, %v3842
        %3844 = vadd.xlane.f32.xlu0 %v3843
        %v3845 = vpop.xlane.xlu0 %3844
        %v3846 = vsel %vm2471, %v3797, 0.0
        %v3847 = vadd.f32 %v3796, %v3846
        %3848 = vadd.xlane.f32.xlu0 %v3847
        %v3849 = vpop.xlane.xlu0 %3848
        %v3850 = vsel %vm2471, %v3799, 0.0
        %v3851 = vadd.f32 %v3798, %v3850
        %3852 = vadd.xlane.f32.xlu0 %v3851
        %v3853 = vpop.xlane.xlu0 %3852
        %v3854 = vsel %vm2471, %v3801, 0.0
        %v3855 = vadd.f32 %v3800, %v3854
        %3856 = vadd.xlane.f32.xlu0 %v3855
        %v3857 = vpop.xlane.xlu0 %3856
        %v3858 = vsel %vm2471, %v3803, 0.0
        %v3859 = vadd.f32 %v3802, %v3858
        %3860 = vadd.xlane.f32.xlu0 %v3859
        %v3861 = vpop.xlane.xlu0 %3860
        %v3862 = vsel %vm2471, %v3805, 0.0
        %v3863 = vadd.f32 %v3804, %v3862
        %3864 = vadd.xlane.f32.xlu0 %v3863
        %v3865 = vpop.xlane.xlu0 %3864
        %v3866 = vsel %vm2471, %v3807, 0.0
        %v3867 = vadd.f32 %v3806, %v3866
        %3868 = vadd.xlane.f32.xlu0 %v3867
        %v3869 = vpop.xlane.xlu0 %3868
        %v3870 = vsel %vm2471, %v3809, 0.0
        %v3871 = vadd.f32 %v3808, %v3870
        %3872 = vadd.xlane.f32.xlu0 %v3871
        %v3873 = vpop.xlane.xlu0 %3872
        %s3874 = scalar_lea.vmem %s2040, 1024 [#allocation4]
        %v3875 = vld [vmem:[%s3874] sm:$0xff]
        %v3876 = vld [vmem:[%s3874 + $0x8] sm:$0xff]
        %v3877 = vld [vmem:[%s3874 + $0x10] sm:$0xff]
        %v3878 = vld [vmem:[%s3874 + $0x18] sm:$0xff]
        %v3879 = vld [vmem:[%s3874 + $0x20] sm:$0xff]
        %v3880 = vld [vmem:[%s3874 + $0x28] sm:$0xff]
        %v3881 = vld [vmem:[%s3874 + $0x30] sm:$0xff]
        %v3882 = vld [vmem:[%s3874 + $0x38] sm:$0xff]
        %v3883 = vld [vmem:[%s3874 + $0x40] sm:$0xff]
        %v3884 = vld [vmem:[%s3874 + $0x48] sm:$0xff]
        %v3885 = vld [vmem:[%s3874 + $0x50] sm:$0xff]
        %v3886 = vld [vmem:[%s3874 + $0x58] sm:$0xff]
        %v3887 = vld [vmem:[%s3874 + $0x60] sm:$0xff]
        %v3888 = vld [vmem:[%s3874 + $0x68] sm:$0xff]
        %v3889 = vld [vmem:[%s3874 + $0x70] sm:$0xff]
        %v3890 = vld [vmem:[%s3874 + $0x78] sm:$0xff]
        %v3891 = vld [vmem:[%s3874 + $0x80] sm:$0xff]
        %v3892 = vld [vmem:[%s3874 + $0x88] sm:$0xff]
        %v3893 = vld [vmem:[%s3874 + $0x90] sm:$0xff]
        %v3894 = vld [vmem:[%s3874 + $0x98] sm:$0xff]
        %v3895 = vld [vmem:[%s3874 + $0xa0] sm:$0xff]
        %v3896 = vld [vmem:[%s3874 + $0xa8] sm:$0xff]
        %v3897 = vld [vmem:[%s3874 + $0xb0] sm:$0xff]
        %v3898 = vld [vmem:[%s3874 + $0xb8] sm:$0xff]
        %v3899 = vld [vmem:[%s3874 + $0xc0] sm:$0xff]
        %v3900 = vld [vmem:[%s3874 + $0xc8] sm:$0xff]
        %v3901 = vld [vmem:[%s3874 + $0xd0] sm:$0xff]
        %v3902 = vld [vmem:[%s3874 + $0xd8] sm:$0xff]
        %v3903 = vld [vmem:[%s3874 + $0xe0] sm:$0xff]
        %v3904 = vld [vmem:[%s3874 + $0xe8] sm:$0xff]
        %v3905 = vld [vmem:[%s3874 + $0xf0] sm:$0xff]
        %v3906 = vld [vmem:[%s3874 + $0xf8] sm:$0xff]
        %v3907 = vmul.f32 %v3263, %v3875
        %v3908 = vmul.f32 %v3264, %v3876
        %v3909 = vmul.f32 %v3265, %v3877
        %v3910 = vmul.f32 %v3266, %v3878
        %v3911 = vmul.f32 %v3267, %v3879
        %v3912 = vmul.f32 %v3268, %v3880
        %v3913 = vmul.f32 %v3269, %v3881
        %v3914 = vmul.f32 %v3270, %v3882
        %v3915 = vmul.f32 %v3271, %v3883
        %v3916 = vmul.f32 %v3272, %v3884
        %v3917 = vmul.f32 %v3273, %v3885
        %v3918 = vmul.f32 %v3274, %v3886
        %v3919 = vmul.f32 %v3275, %v3887
        %v3920 = vmul.f32 %v3276, %v3888
        %v3921 = vmul.f32 %v3277, %v3889
        %v3922 = vmul.f32 %v3278, %v3890
        %v3923 = vmul.f32 %v3279, %v3891
        %v3924 = vmul.f32 %v3280, %v3892
        %v3925 = vmul.f32 %v3281, %v3893
        %v3926 = vmul.f32 %v3282, %v3894
        %v3927 = vmul.f32 %v3283, %v3895
        %v3928 = vmul.f32 %v3284, %v3896
        %v3929 = vmul.f32 %v3285, %v3897
        %v3930 = vmul.f32 %v3286, %v3898
        %v3931 = vmul.f32 %v3287, %v3899
        %v3932 = vmul.f32 %v3288, %v3900
        %v3933 = vmul.f32 %v3289, %v3901
        %v3934 = vmul.f32 %v3290, %v3902
        %v3935 = vmul.f32 %v3291, %v3903
        %v3936 = vmul.f32 %v3292, %v3904
        %v3937 = vmul.f32 %v3293, %v3905
        %v3938 = vmul.f32 %v3294, %v3906
        %v3939 = vsel %vm2471, %v3908, 0.0
        %v3940 = vadd.f32 %v3907, %v3939
        %3941 = vadd.xlane.f32.xlu0 %v3940
        %v3942 = vpop.xlane.xlu0 %3941
        %v3943 = vsel %vm2471, %v3910, 0.0
        %v3944 = vadd.f32 %v3909, %v3943
        %3945 = vadd.xlane.f32.xlu0 %v3944
        %v3946 = vpop.xlane.xlu0 %3945
        %v3947 = vsel %vm2471, %v3912, 0.0
        %v3948 = vadd.f32 %v3911, %v3947
        %3949 = vadd.xlane.f32.xlu0 %v3948
        %v3950 = vpop.xlane.xlu0 %3949
        %v3951 = vsel %vm2471, %v3914, 0.0
        %v3952 = vadd.f32 %v3913, %v3951
        %3953 = vadd.xlane.f32.xlu0 %v3952
        %v3954 = vpop.xlane.xlu0 %3953
        %v3955 = vsel %vm2471, %v3916, 0.0
        %v3956 = vadd.f32 %v3915, %v3955
        %3957 = vadd.xlane.f32.xlu0 %v3956
        %v3958 = vpop.xlane.xlu0 %3957
        %v3959 = vsel %vm2471, %v3918, 0.0
        %v3960 = vadd.f32 %v3917, %v3959
        %3961 = vadd.xlane.f32.xlu0 %v3960
        %v3962 = vpop.xlane.xlu0 %3961
        %v3963 = vsel %vm2471, %v3920, 0.0
        %v3964 = vadd.f32 %v3919, %v3963
        %3965 = vadd.xlane.f32.xlu0 %v3964
        %v3966 = vpop.xlane.xlu0 %3965
        %v3967 = vsel %vm2471, %v3922, 0.0
        %v3968 = vadd.f32 %v3921, %v3967
        %3969 = vadd.xlane.f32.xlu0 %v3968
        %v3970 = vpop.xlane.xlu0 %3969
        %v3971 = vsel %vm2471, %v3924, 0.0
        %v3972 = vadd.f32 %v3923, %v3971
        %3973 = vadd.xlane.f32.xlu0 %v3972
        %v3974 = vpop.xlane.xlu0 %3973
        %v3975 = vsel %vm2471, %v3926, 0.0
        %v3976 = vadd.f32 %v3925, %v3975
        %3977 = vadd.xlane.f32.xlu0 %v3976
        %v3978 = vpop.xlane.xlu0 %3977
        %v3979 = vsel %vm2471, %v3928, 0.0
        %v3980 = vadd.f32 %v3927, %v3979
        %3981 = vadd.xlane.f32.xlu0 %v3980
        %v3982 = vpop.xlane.xlu0 %3981
        %v3983 = vsel %vm2471, %v3930, 0.0
        %v3984 = vadd.f32 %v3929, %v3983
        %3985 = vadd.xlane.f32.xlu0 %v3984
        %v3986 = vpop.xlane.xlu0 %3985
        %v3987 = vsel %vm2471, %v3932, 0.0
        %v3988 = vadd.f32 %v3931, %v3987
        %3989 = vadd.xlane.f32.xlu0 %v3988
        %v3990 = vpop.xlane.xlu0 %3989
        %v3991 = vsel %vm2471, %v3934, 0.0
        %v3992 = vadd.f32 %v3933, %v3991
        %3993 = vadd.xlane.f32.xlu0 %v3992
        %v3994 = vpop.xlane.xlu0 %3993
        %v3995 = vsel %vm2471, %v3936, 0.0
        %v3996 = vadd.f32 %v3935, %v3995
        %3997 = vadd.xlane.f32.xlu0 %v3996
        %v3998 = vpop.xlane.xlu0 %3997
        %v3999 = vsel %vm2471, %v3938, 0.0
        %v4000 = vadd.f32 %v3937, %v3999
        %4001 = vadd.xlane.f32.xlu0 %v4000
        %v4002 = vpop.xlane.xlu0 %4001
        %s4003 = scalar_lea.vmem %s2040, 1280 [#allocation4]
        %v4004 = vld [vmem:[%s4003] sm:$0xff]
        %v4005 = vld [vmem:[%s4003 + $0x8] sm:$0xff]
        %v4006 = vld [vmem:[%s4003 + $0x10] sm:$0xff]
        %v4007 = vld [vmem:[%s4003 + $0x18] sm:$0xff]
        %v4008 = vld [vmem:[%s4003 + $0x20] sm:$0xff]
        %v4009 = vld [vmem:[%s4003 + $0x28] sm:$0xff]
        %v4010 = vld [vmem:[%s4003 + $0x30] sm:$0xff]
        %v4011 = vld [vmem:[%s4003 + $0x38] sm:$0xff]
        %v4012 = vld [vmem:[%s4003 + $0x40] sm:$0xff]
        %v4013 = vld [vmem:[%s4003 + $0x48] sm:$0xff]
        %v4014 = vld [vmem:[%s4003 + $0x50] sm:$0xff]
        %v4015 = vld [vmem:[%s4003 + $0x58] sm:$0xff]
        %v4016 = vld [vmem:[%s4003 + $0x60] sm:$0xff]
        %v4017 = vld [vmem:[%s4003 + $0x68] sm:$0xff]
        %v4018 = vld [vmem:[%s4003 + $0x70] sm:$0xff]
        %v4019 = vld [vmem:[%s4003 + $0x78] sm:$0xff]
        %v4020 = vld [vmem:[%s4003 + $0x80] sm:$0xff]
        %v4021 = vld [vmem:[%s4003 + $0x88] sm:$0xff]
        %v4022 = vld [vmem:[%s4003 + $0x90] sm:$0xff]
        %v4023 = vld [vmem:[%s4003 + $0x98] sm:$0xff]
        %v4024 = vld [vmem:[%s4003 + $0xa0] sm:$0xff]
        %v4025 = vld [vmem:[%s4003 + $0xa8] sm:$0xff]
        %v4026 = vld [vmem:[%s4003 + $0xb0] sm:$0xff]
        %v4027 = vld [vmem:[%s4003 + $0xb8] sm:$0xff]
        %v4028 = vld [vmem:[%s4003 + $0xc0] sm:$0xff]
        %v4029 = vld [vmem:[%s4003 + $0xc8] sm:$0xff]
        %v4030 = vld [vmem:[%s4003 + $0xd0] sm:$0xff]
        %v4031 = vld [vmem:[%s4003 + $0xd8] sm:$0xff]
        %v4032 = vld [vmem:[%s4003 + $0xe0] sm:$0xff]
        %v4033 = vld [vmem:[%s4003 + $0xe8] sm:$0xff]
        %v4034 = vld [vmem:[%s4003 + $0xf0] sm:$0xff]
        %v4035 = vld [vmem:[%s4003 + $0xf8] sm:$0xff]
        %v4036 = vmul.f32 %v3263, %v4004
        %v4037 = vmul.f32 %v3264, %v4005
        %v4038 = vmul.f32 %v3265, %v4006
        %v4039 = vmul.f32 %v3266, %v4007
        %v4040 = vmul.f32 %v3267, %v4008
        %v4041 = vmul.f32 %v3268, %v4009
        %v4042 = vmul.f32 %v3269, %v4010
        %v4043 = vmul.f32 %v3270, %v4011
        %v4044 = vmul.f32 %v3271, %v4012
        %v4045 = vmul.f32 %v3272, %v4013
        %v4046 = vmul.f32 %v3273, %v4014
        %v4047 = vmul.f32 %v3274, %v4015
        %v4048 = vmul.f32 %v3275, %v4016
        %v4049 = vmul.f32 %v3276, %v4017
        %v4050 = vmul.f32 %v3277, %v4018
        %v4051 = vmul.f32 %v3278, %v4019
        %v4052 = vmul.f32 %v3279, %v4020
        %v4053 = vmul.f32 %v3280, %v4021
        %v4054 = vmul.f32 %v3281, %v4022
        %v4055 = vmul.f32 %v3282, %v4023
        %v4056 = vmul.f32 %v3283, %v4024
        %v4057 = vmul.f32 %v3284, %v4025
        %v4058 = vmul.f32 %v3285, %v4026
        %v4059 = vmul.f32 %v3286, %v4027
        %v4060 = vmul.f32 %v3287, %v4028
        %v4061 = vmul.f32 %v3288, %v4029
        %v4062 = vmul.f32 %v3289, %v4030
        %v4063 = vmul.f32 %v3290, %v4031
        %v4064 = vmul.f32 %v3291, %v4032
        %v4065 = vmul.f32 %v3292, %v4033
        %v4066 = vmul.f32 %v3293, %v4034
        %v4067 = vmul.f32 %v3294, %v4035
        %v4068 = vsel %vm2471, %v4037, 0.0
        %v4069 = vadd.f32 %v4036, %v4068
        %4070 = vadd.xlane.f32.xlu0 %v4069
        %v4071 = vpop.xlane.xlu0 %4070
        %v4072 = vsel %vm2471, %v4039, 0.0
        %v4073 = vadd.f32 %v4038, %v4072
        %4074 = vadd.xlane.f32.xlu0 %v4073
        %v4075 = vpop.xlane.xlu0 %4074
        %v4076 = vsel %vm2471, %v4041, 0.0
        %v4077 = vadd.f32 %v4040, %v4076
        %4078 = vadd.xlane.f32.xlu0 %v4077
        %v4079 = vpop.xlane.xlu0 %4078
        %v4080 = vsel %vm2471, %v4043, 0.0
        %v4081 = vadd.f32 %v4042, %v4080
        %4082 = vadd.xlane.f32.xlu0 %v4081
        %v4083 = vpop.xlane.xlu0 %4082
        %v4084 = vsel %vm2471, %v4045, 0.0
        %v4085 = vadd.f32 %v4044, %v4084
        %4086 = vadd.xlane.f32.xlu0 %v4085
        %v4087 = vpop.xlane.xlu0 %4086
        %v4088 = vsel %vm2471, %v4047, 0.0
        %v4089 = vadd.f32 %v4046, %v4088
        %4090 = vadd.xlane.f32.xlu0 %v4089
        %v4091 = vpop.xlane.xlu0 %4090
        %v4092 = vsel %vm2471, %v4049, 0.0
        %v4093 = vadd.f32 %v4048, %v4092
        %4094 = vadd.xlane.f32.xlu0 %v4093
        %v4095 = vpop.xlane.xlu0 %4094
        %v4096 = vsel %vm2471, %v4051, 0.0
        %v4097 = vadd.f32 %v4050, %v4096
        %4098 = vadd.xlane.f32.xlu0 %v4097
        %v4099 = vpop.xlane.xlu0 %4098
        %v4100 = vsel %vm2471, %v4053, 0.0
        %v4101 = vadd.f32 %v4052, %v4100
        %4102 = vadd.xlane.f32.xlu0 %v4101
        %v4103 = vpop.xlane.xlu0 %4102
        %v4104 = vsel %vm2471, %v4055, 0.0
        %v4105 = vadd.f32 %v4054, %v4104
        %4106 = vadd.xlane.f32.xlu0 %v4105
        %v4107 = vpop.xlane.xlu0 %4106
        %v4108 = vsel %vm2471, %v4057, 0.0
        %v4109 = vadd.f32 %v4056, %v4108
        %4110 = vadd.xlane.f32.xlu0 %v4109
        %v4111 = vpop.xlane.xlu0 %4110
        %v4112 = vsel %vm2471, %v4059, 0.0
        %v4113 = vadd.f32 %v4058, %v4112
        %4114 = vadd.xlane.f32.xlu0 %v4113
        %v4115 = vpop.xlane.xlu0 %4114
        %v4116 = vsel %vm2471, %v4061, 0.0
        %v4117 = vadd.f32 %v4060, %v4116
        %4118 = vadd.xlane.f32.xlu0 %v4117
        %v4119 = vpop.xlane.xlu0 %4118
        %v4120 = vsel %vm2471, %v4063, 0.0
        %v4121 = vadd.f32 %v4062, %v4120
        %4122 = vadd.xlane.f32.xlu0 %v4121
        %v4123 = vpop.xlane.xlu0 %4122
        %v4124 = vsel %vm2471, %v4065, 0.0
        %v4125 = vadd.f32 %v4064, %v4124
        %4126 = vadd.xlane.f32.xlu0 %v4125
        %v4127 = vpop.xlane.xlu0 %4126
        %v4128 = vsel %vm2471, %v4067, 0.0
        %v4129 = vadd.f32 %v4066, %v4128
        %4130 = vadd.xlane.f32.xlu0 %v4129
        %v4131 = vpop.xlane.xlu0 %4130
        %s4132 = scalar_lea.vmem %s2040, 1536 [#allocation4]
        %v4133 = vld [vmem:[%s4132] sm:$0xff]
        %v4134 = vld [vmem:[%s4132 + $0x8] sm:$0xff]
        %v4135 = vld [vmem:[%s4132 + $0x10] sm:$0xff]
        %v4136 = vld [vmem:[%s4132 + $0x18] sm:$0xff]
        %v4137 = vld [vmem:[%s4132 + $0x20] sm:$0xff]
        %v4138 = vld [vmem:[%s4132 + $0x28] sm:$0xff]
        %v4139 = vld [vmem:[%s4132 + $0x30] sm:$0xff]
        %v4140 = vld [vmem:[%s4132 + $0x38] sm:$0xff]
        %v4141 = vld [vmem:[%s4132 + $0x40] sm:$0xff]
        %v4142 = vld [vmem:[%s4132 + $0x48] sm:$0xff]
        %v4143 = vld [vmem:[%s4132 + $0x50] sm:$0xff]
        %v4144 = vld [vmem:[%s4132 + $0x58] sm:$0xff]
        %v4145 = vld [vmem:[%s4132 + $0x60] sm:$0xff]
        %v4146 = vld [vmem:[%s4132 + $0x68] sm:$0xff]
        %v4147 = vld [vmem:[%s4132 + $0x70] sm:$0xff]
        %v4148 = vld [vmem:[%s4132 + $0x78] sm:$0xff]
        %v4149 = vld [vmem:[%s4132 + $0x80] sm:$0xff]
        %v4150 = vld [vmem:[%s4132 + $0x88] sm:$0xff]
        %v4151 = vld [vmem:[%s4132 + $0x90] sm:$0xff]
        %v4152 = vld [vmem:[%s4132 + $0x98] sm:$0xff]
        %v4153 = vld [vmem:[%s4132 + $0xa0] sm:$0xff]
        %v4154 = vld [vmem:[%s4132 + $0xa8] sm:$0xff]
        %v4155 = vld [vmem:[%s4132 + $0xb0] sm:$0xff]
        %v4156 = vld [vmem:[%s4132 + $0xb8] sm:$0xff]
        %v4157 = vld [vmem:[%s4132 + $0xc0] sm:$0xff]
        %v4158 = vld [vmem:[%s4132 + $0xc8] sm:$0xff]
        %v4159 = vld [vmem:[%s4132 + $0xd0] sm:$0xff]
        %v4160 = vld [vmem:[%s4132 + $0xd8] sm:$0xff]
        %v4161 = vld [vmem:[%s4132 + $0xe0] sm:$0xff]
        %v4162 = vld [vmem:[%s4132 + $0xe8] sm:$0xff]
        %v4163 = vld [vmem:[%s4132 + $0xf0] sm:$0xff]
        %v4164 = vld [vmem:[%s4132 + $0xf8] sm:$0xff]
        %v4165 = vmul.f32 %v3263, %v4133
        %v4166 = vmul.f32 %v3264, %v4134
        %v4167 = vmul.f32 %v3265, %v4135
        %v4168 = vmul.f32 %v3266, %v4136
        %v4169 = vmul.f32 %v3267, %v4137
        %v4170 = vmul.f32 %v3268, %v4138
        %v4171 = vmul.f32 %v3269, %v4139
        %v4172 = vmul.f32 %v3270, %v4140
        %v4173 = vmul.f32 %v3271, %v4141
        %v4174 = vmul.f32 %v3272, %v4142
        %v4175 = vmul.f32 %v3273, %v4143
        %v4176 = vmul.f32 %v3274, %v4144
        %v4177 = vmul.f32 %v3275, %v4145
        %v4178 = vmul.f32 %v3276, %v4146
        %v4179 = vmul.f32 %v3277, %v4147
        %v4180 = vmul.f32 %v3278, %v4148
        %v4181 = vmul.f32 %v3279, %v4149
        %v4182 = vmul.f32 %v3280, %v4150
        %v4183 = vmul.f32 %v3281, %v4151
        %v4184 = vmul.f32 %v3282, %v4152
        %v4185 = vmul.f32 %v3283, %v4153
        %v4186 = vmul.f32 %v3284, %v4154
        %v4187 = vmul.f32 %v3285, %v4155
        %v4188 = vmul.f32 %v3286, %v4156
        %v4189 = vmul.f32 %v3287, %v4157
        %v4190 = vmul.f32 %v3288, %v4158
        %v4191 = vmul.f32 %v3289, %v4159
        %v4192 = vmul.f32 %v3290, %v4160
        %v4193 = vmul.f32 %v3291, %v4161
        %v4194 = vmul.f32 %v3292, %v4162
        %v4195 = vmul.f32 %v3293, %v4163
        %v4196 = vmul.f32 %v3294, %v4164
        %v4197 = vsel %vm2471, %v4166, 0.0
        %v4198 = vadd.f32 %v4165, %v4197
        %4199 = vadd.xlane.f32.xlu0 %v4198
        %v4200 = vpop.xlane.xlu0 %4199
        %v4201 = vsel %vm2471, %v4168, 0.0
        %v4202 = vadd.f32 %v4167, %v4201
        %4203 = vadd.xlane.f32.xlu0 %v4202
        %v4204 = vpop.xlane.xlu0 %4203
        %v4205 = vsel %vm2471, %v4170, 0.0
        %v4206 = vadd.f32 %v4169, %v4205
        %4207 = vadd.xlane.f32.xlu0 %v4206
        %v4208 = vpop.xlane.xlu0 %4207
        %v4209 = vsel %vm2471, %v4172, 0.0
        %v4210 = vadd.f32 %v4171, %v4209
        %4211 = vadd.xlane.f32.xlu0 %v4210
        %v4212 = vpop.xlane.xlu0 %4211
        %v4213 = vsel %vm2471, %v4174, 0.0
        %v4214 = vadd.f32 %v4173, %v4213
        %4215 = vadd.xlane.f32.xlu0 %v4214
        %v4216 = vpop.xlane.xlu0 %4215
        %v4217 = vsel %vm2471, %v4176, 0.0
        %v4218 = vadd.f32 %v4175, %v4217
        %4219 = vadd.xlane.f32.xlu0 %v4218
        %v4220 = vpop.xlane.xlu0 %4219
        %v4221 = vsel %vm2471, %v4178, 0.0
        %v4222 = vadd.f32 %v4177, %v4221
        %4223 = vadd.xlane.f32.xlu0 %v4222
        %v4224 = vpop.xlane.xlu0 %4223
        %v4225 = vsel %vm2471, %v4180, 0.0
        %v4226 = vadd.f32 %v4179, %v4225
        %4227 = vadd.xlane.f32.xlu0 %v4226
        %v4228 = vpop.xlane.xlu0 %4227
        %v4229 = vsel %vm2471, %v4182, 0.0
        %v4230 = vadd.f32 %v4181, %v4229
        %4231 = vadd.xlane.f32.xlu0 %v4230
        %v4232 = vpop.xlane.xlu0 %4231
        %v4233 = vsel %vm2471, %v4184, 0.0
        %v4234 = vadd.f32 %v4183, %v4233
        %4235 = vadd.xlane.f32.xlu0 %v4234
        %v4236 = vpop.xlane.xlu0 %4235
        %v4237 = vsel %vm2471, %v4186, 0.0
        %v4238 = vadd.f32 %v4185, %v4237
        %4239 = vadd.xlane.f32.xlu0 %v4238
        %v4240 = vpop.xlane.xlu0 %4239
        %v4241 = vsel %vm2471, %v4188, 0.0
        %v4242 = vadd.f32 %v4187, %v4241
        %4243 = vadd.xlane.f32.xlu0 %v4242
        %v4244 = vpop.xlane.xlu0 %4243
        %v4245 = vsel %vm2471, %v4190, 0.0
        %v4246 = vadd.f32 %v4189, %v4245
        %4247 = vadd.xlane.f32.xlu0 %v4246
        %v4248 = vpop.xlane.xlu0 %4247
        %v4249 = vsel %vm2471, %v4192, 0.0
        %v4250 = vadd.f32 %v4191, %v4249
        %4251 = vadd.xlane.f32.xlu0 %v4250
        %v4252 = vpop.xlane.xlu0 %4251
        %v4253 = vsel %vm2471, %v4194, 0.0
        %v4254 = vadd.f32 %v4193, %v4253
        %4255 = vadd.xlane.f32.xlu0 %v4254
        %v4256 = vpop.xlane.xlu0 %4255
        %v4257 = vsel %vm2471, %v4196, 0.0
        %v4258 = vadd.f32 %v4195, %v4257
        %4259 = vadd.xlane.f32.xlu0 %v4258
        %v4260 = vpop.xlane.xlu0 %4259
        %s4261 = scalar_lea.vmem %s2040, 1792 [#allocation4]
        %v4262 = vld [vmem:[%s4261] sm:$0xff]
        %v4263 = vld [vmem:[%s4261 + $0x8] sm:$0xff]
        %v4264 = vld [vmem:[%s4261 + $0x10] sm:$0xff]
        %v4265 = vld [vmem:[%s4261 + $0x18] sm:$0xff]
        %v4266 = vld [vmem:[%s4261 + $0x20] sm:$0xff]
        %v4267 = vld [vmem:[%s4261 + $0x28] sm:$0xff]
        %v4268 = vld [vmem:[%s4261 + $0x30] sm:$0xff]
        %v4269 = vld [vmem:[%s4261 + $0x38] sm:$0xff]
        %v4270 = vld [vmem:[%s4261 + $0x40] sm:$0xff]
        %v4271 = vld [vmem:[%s4261 + $0x48] sm:$0xff]
        %v4272 = vld [vmem:[%s4261 + $0x50] sm:$0xff]
        %v4273 = vld [vmem:[%s4261 + $0x58] sm:$0xff]
        %v4274 = vld [vmem:[%s4261 + $0x60] sm:$0xff]
        %v4275 = vld [vmem:[%s4261 + $0x68] sm:$0xff]
        %v4276 = vld [vmem:[%s4261 + $0x70] sm:$0xff]
        %v4277 = vld [vmem:[%s4261 + $0x78] sm:$0xff]
        %v4278 = vld [vmem:[%s4261 + $0x80] sm:$0xff]
        %v4279 = vld [vmem:[%s4261 + $0x88] sm:$0xff]
        %v4280 = vld [vmem:[%s4261 + $0x90] sm:$0xff]
        %v4281 = vld [vmem:[%s4261 + $0x98] sm:$0xff]
        %v4282 = vld [vmem:[%s4261 + $0xa0] sm:$0xff]
        %v4283 = vld [vmem:[%s4261 + $0xa8] sm:$0xff]
        %v4284 = vld [vmem:[%s4261 + $0xb0] sm:$0xff]
        %v4285 = vld [vmem:[%s4261 + $0xb8] sm:$0xff]
        %v4286 = vld [vmem:[%s4261 + $0xc0] sm:$0xff]
        %v4287 = vld [vmem:[%s4261 + $0xc8] sm:$0xff]
        %v4288 = vld [vmem:[%s4261 + $0xd0] sm:$0xff]
        %v4289 = vld [vmem:[%s4261 + $0xd8] sm:$0xff]
        %v4290 = vld [vmem:[%s4261 + $0xe0] sm:$0xff]
        %v4291 = vld [vmem:[%s4261 + $0xe8] sm:$0xff]
        %v4292 = vld [vmem:[%s4261 + $0xf0] sm:$0xff]
        %v4293 = vld [vmem:[%s4261 + $0xf8] sm:$0xff]
        %v4294 = vmul.f32 %v3263, %v4262
        %v4295 = vmul.f32 %v3264, %v4263
        %v4296 = vmul.f32 %v3265, %v4264
        %v4297 = vmul.f32 %v3266, %v4265
        %v4298 = vmul.f32 %v3267, %v4266
        %v4299 = vmul.f32 %v3268, %v4267
        %v4300 = vmul.f32 %v3269, %v4268
        %v4301 = vmul.f32 %v3270, %v4269
        %v4302 = vmul.f32 %v3271, %v4270
        %v4303 = vmul.f32 %v3272, %v4271
        %v4304 = vmul.f32 %v3273, %v4272
        %v4305 = vmul.f32 %v3274, %v4273
        %v4306 = vmul.f32 %v3275, %v4274
        %v4307 = vmul.f32 %v3276, %v4275
        %v4308 = vmul.f32 %v3277, %v4276
        %v4309 = vmul.f32 %v3278, %v4277
        %v4310 = vmul.f32 %v3279, %v4278
        %v4311 = vmul.f32 %v3280, %v4279
        %v4312 = vmul.f32 %v3281, %v4280
        %v4313 = vmul.f32 %v3282, %v4281
        %v4314 = vmul.f32 %v3283, %v4282
        %v4315 = vmul.f32 %v3284, %v4283
        %v4316 = vmul.f32 %v3285, %v4284
        %v4317 = vmul.f32 %v3286, %v4285
        %v4318 = vmul.f32 %v3287, %v4286
        %v4319 = vmul.f32 %v3288, %v4287
        %v4320 = vmul.f32 %v3289, %v4288
        %v4321 = vmul.f32 %v3290, %v4289
        %v4322 = vmul.f32 %v3291, %v4290
        %v4323 = vmul.f32 %v3292, %v4291
        %v4324 = vmul.f32 %v3293, %v4292
        %v4325 = vmul.f32 %v3294, %v4293
        %v4326 = vsel %vm2471, %v4295, 0.0
        %v4327 = vadd.f32 %v4294, %v4326
        %4328 = vadd.xlane.f32.xlu0 %v4327
        %v4329 = vpop.xlane.xlu0 %4328
        %v4330 = vsel %vm2471, %v4297, 0.0
        %v4331 = vadd.f32 %v4296, %v4330
        %4332 = vadd.xlane.f32.xlu0 %v4331
        %v4333 = vpop.xlane.xlu0 %4332
        %v4334 = vsel %vm2471, %v4299, 0.0
        %v4335 = vadd.f32 %v4298, %v4334
        %4336 = vadd.xlane.f32.xlu0 %v4335
        %v4337 = vpop.xlane.xlu0 %4336
        %v4338 = vsel %vm2471, %v4301, 0.0
        %v4339 = vadd.f32 %v4300, %v4338
        %4340 = vadd.xlane.f32.xlu0 %v4339
        %v4341 = vpop.xlane.xlu0 %4340
        %v4342 = vsel %vm2471, %v4303, 0.0
        %v4343 = vadd.f32 %v4302, %v4342
        %4344 = vadd.xlane.f32.xlu0 %v4343
        %v4345 = vpop.xlane.xlu0 %4344
        %v4346 = vsel %vm2471, %v4305, 0.0
        %v4347 = vadd.f32 %v4304, %v4346
        %4348 = vadd.xlane.f32.xlu0 %v4347
        %v4349 = vpop.xlane.xlu0 %4348
        %v4350 = vsel %vm2471, %v4307, 0.0
        %v4351 = vadd.f32 %v4306, %v4350
        %4352 = vadd.xlane.f32.xlu0 %v4351
        %v4353 = vpop.xlane.xlu0 %4352
        %v4354 = vsel %vm2471, %v4309, 0.0
        %v4355 = vadd.f32 %v4308, %v4354
        %4356 = vadd.xlane.f32.xlu0 %v4355
        %v4357 = vpop.xlane.xlu0 %4356
        %v4358 = vsel %vm2471, %v4311, 0.0
        %v4359 = vadd.f32 %v4310, %v4358
        %4360 = vadd.xlane.f32.xlu0 %v4359
        %v4361 = vpop.xlane.xlu0 %4360
        %v4362 = vsel %vm2471, %v4313, 0.0
        %v4363 = vadd.f32 %v4312, %v4362
        %4364 = vadd.xlane.f32.xlu0 %v4363
        %v4365 = vpop.xlane.xlu0 %4364
        %v4366 = vsel %vm2471, %v4315, 0.0
        %v4367 = vadd.f32 %v4314, %v4366
        %4368 = vadd.xlane.f32.xlu0 %v4367
        %v4369 = vpop.xlane.xlu0 %4368
        %v4370 = vsel %vm2471, %v4317, 0.0
        %v4371 = vadd.f32 %v4316, %v4370
        %4372 = vadd.xlane.f32.xlu0 %v4371
        %v4373 = vpop.xlane.xlu0 %4372
        %v4374 = vsel %vm2471, %v4319, 0.0
        %v4375 = vadd.f32 %v4318, %v4374
        %4376 = vadd.xlane.f32.xlu0 %v4375
        %v4377 = vpop.xlane.xlu0 %4376
        %v4378 = vsel %vm2471, %v4321, 0.0
        %v4379 = vadd.f32 %v4320, %v4378
        %4380 = vadd.xlane.f32.xlu0 %v4379
        %v4381 = vpop.xlane.xlu0 %4380
        %v4382 = vsel %vm2471, %v4323, 0.0
        %v4383 = vadd.f32 %v4322, %v4382
        %4384 = vadd.xlane.f32.xlu0 %v4383
        %v4385 = vpop.xlane.xlu0 %4384
        %v4386 = vsel %vm2471, %v4325, 0.0
        %v4387 = vadd.f32 %v4324, %v4386
        %4388 = vadd.xlane.f32.xlu0 %v4387
        %v4389 = vpop.xlane.xlu0 %4388
        %s4390 = scalar_lea.vmem %s2040, 2048 [#allocation4]
        %v4391 = vld [vmem:[%s4390] sm:$0xff]
        %v4392 = vld [vmem:[%s4390 + $0x8] sm:$0xff]
        %v4393 = vld [vmem:[%s4390 + $0x10] sm:$0xff]
        %v4394 = vld [vmem:[%s4390 + $0x18] sm:$0xff]
        %v4395 = vld [vmem:[%s4390 + $0x20] sm:$0xff]
        %v4396 = vld [vmem:[%s4390 + $0x28] sm:$0xff]
        %v4397 = vld [vmem:[%s4390 + $0x30] sm:$0xff]
        %v4398 = vld [vmem:[%s4390 + $0x38] sm:$0xff]
        %v4399 = vld [vmem:[%s4390 + $0x40] sm:$0xff]
        %v4400 = vld [vmem:[%s4390 + $0x48] sm:$0xff]
        %v4401 = vld [vmem:[%s4390 + $0x50] sm:$0xff]
        %v4402 = vld [vmem:[%s4390 + $0x58] sm:$0xff]
        %v4403 = vld [vmem:[%s4390 + $0x60] sm:$0xff]
        %v4404 = vld [vmem:[%s4390 + $0x68] sm:$0xff]
        %v4405 = vld [vmem:[%s4390 + $0x70] sm:$0xff]
        %v4406 = vld [vmem:[%s4390 + $0x78] sm:$0xff]
        %v4407 = vld [vmem:[%s4390 + $0x80] sm:$0xff]
        %v4408 = vld [vmem:[%s4390 + $0x88] sm:$0xff]
        %v4409 = vld [vmem:[%s4390 + $0x90] sm:$0xff]
        %v4410 = vld [vmem:[%s4390 + $0x98] sm:$0xff]
        %v4411 = vld [vmem:[%s4390 + $0xa0] sm:$0xff]
        %v4412 = vld [vmem:[%s4390 + $0xa8] sm:$0xff]
        %v4413 = vld [vmem:[%s4390 + $0xb0] sm:$0xff]
        %v4414 = vld [vmem:[%s4390 + $0xb8] sm:$0xff]
        %v4415 = vld [vmem:[%s4390 + $0xc0] sm:$0xff]
        %v4416 = vld [vmem:[%s4390 + $0xc8] sm:$0xff]
        %v4417 = vld [vmem:[%s4390 + $0xd0] sm:$0xff]
        %v4418 = vld [vmem:[%s4390 + $0xd8] sm:$0xff]
        %v4419 = vld [vmem:[%s4390 + $0xe0] sm:$0xff]
        %v4420 = vld [vmem:[%s4390 + $0xe8] sm:$0xff]
        %v4421 = vld [vmem:[%s4390 + $0xf0] sm:$0xff]
        %v4422 = vld [vmem:[%s4390 + $0xf8] sm:$0xff]
        %v4423 = vmul.f32 %v3263, %v4391
        %v4424 = vmul.f32 %v3264, %v4392
        %v4425 = vmul.f32 %v3265, %v4393
        %v4426 = vmul.f32 %v3266, %v4394
        %v4427 = vmul.f32 %v3267, %v4395
        %v4428 = vmul.f32 %v3268, %v4396
        %v4429 = vmul.f32 %v3269, %v4397
        %v4430 = vmul.f32 %v3270, %v4398
        %v4431 = vmul.f32 %v3271, %v4399
        %v4432 = vmul.f32 %v3272, %v4400
        %v4433 = vmul.f32 %v3273, %v4401
        %v4434 = vmul.f32 %v3274, %v4402
        %v4435 = vmul.f32 %v3275, %v4403
        %v4436 = vmul.f32 %v3276, %v4404
        %v4437 = vmul.f32 %v3277, %v4405
        %v4438 = vmul.f32 %v3278, %v4406
        %v4439 = vmul.f32 %v3279, %v4407
        %v4440 = vmul.f32 %v3280, %v4408
        %v4441 = vmul.f32 %v3281, %v4409
        %v4442 = vmul.f32 %v3282, %v4410
        %v4443 = vmul.f32 %v3283, %v4411
        %v4444 = vmul.f32 %v3284, %v4412
        %v4445 = vmul.f32 %v3285, %v4413
        %v4446 = vmul.f32 %v3286, %v4414
        %v4447 = vmul.f32 %v3287, %v4415
        %v4448 = vmul.f32 %v3288, %v4416
        %v4449 = vmul.f32 %v3289, %v4417
        %v4450 = vmul.f32 %v3290, %v4418
        %v4451 = vmul.f32 %v3291, %v4419
        %v4452 = vmul.f32 %v3292, %v4420
        %v4453 = vmul.f32 %v3293, %v4421
        %v4454 = vmul.f32 %v3294, %v4422
        %v4455 = vsel %vm2471, %v4424, 0.0
        %v4456 = vadd.f32 %v4423, %v4455
        %4457 = vadd.xlane.f32.xlu0 %v4456
        %v4458 = vpop.xlane.xlu0 %4457
        %v4459 = vsel %vm2471, %v4426, 0.0
        %v4460 = vadd.f32 %v4425, %v4459
        %4461 = vadd.xlane.f32.xlu0 %v4460
        %v4462 = vpop.xlane.xlu0 %4461
        %v4463 = vsel %vm2471, %v4428, 0.0
        %v4464 = vadd.f32 %v4427, %v4463
        %4465 = vadd.xlane.f32.xlu0 %v4464
        %v4466 = vpop.xlane.xlu0 %4465
        %v4467 = vsel %vm2471, %v4430, 0.0
        %v4468 = vadd.f32 %v4429, %v4467
        %4469 = vadd.xlane.f32.xlu0 %v4468
        %v4470 = vpop.xlane.xlu0 %4469
        %v4471 = vsel %vm2471, %v4432, 0.0
        %v4472 = vadd.f32 %v4431, %v4471
        %4473 = vadd.xlane.f32.xlu0 %v4472
        %v4474 = vpop.xlane.xlu0 %4473
        %v4475 = vsel %vm2471, %v4434, 0.0
        %v4476 = vadd.f32 %v4433, %v4475
        %4477 = vadd.xlane.f32.xlu0 %v4476
        %v4478 = vpop.xlane.xlu0 %4477
        %v4479 = vsel %vm2471, %v4436, 0.0
        %v4480 = vadd.f32 %v4435, %v4479
        %4481 = vadd.xlane.f32.xlu0 %v4480
        %v4482 = vpop.xlane.xlu0 %4481
        %v4483 = vsel %vm2471, %v4438, 0.0
        %v4484 = vadd.f32 %v4437, %v4483
        %4485 = vadd.xlane.f32.xlu0 %v4484
        %v4486 = vpop.xlane.xlu0 %4485
        %v4487 = vsel %vm2471, %v4440, 0.0
        %v4488 = vadd.f32 %v4439, %v4487
        %4489 = vadd.xlane.f32.xlu0 %v4488
        %v4490 = vpop.xlane.xlu0 %4489
        %v4491 = vsel %vm2471, %v4442, 0.0
        %v4492 = vadd.f32 %v4441, %v4491
        %4493 = vadd.xlane.f32.xlu0 %v4492
        %v4494 = vpop.xlane.xlu0 %4493
        %v4495 = vsel %vm2471, %v4444, 0.0
        %v4496 = vadd.f32 %v4443, %v4495
        %4497 = vadd.xlane.f32.xlu0 %v4496
        %v4498 = vpop.xlane.xlu0 %4497
        %v4499 = vsel %vm2471, %v4446, 0.0
        %v4500 = vadd.f32 %v4445, %v4499
        %4501 = vadd.xlane.f32.xlu0 %v4500
        %v4502 = vpop.xlane.xlu0 %4501
        %v4503 = vsel %vm2471, %v4448, 0.0
        %v4504 = vadd.f32 %v4447, %v4503
        %4505 = vadd.xlane.f32.xlu0 %v4504
        %v4506 = vpop.xlane.xlu0 %4505
        %v4507 = vsel %vm2471, %v4450, 0.0
        %v4508 = vadd.f32 %v4449, %v4507
        %4509 = vadd.xlane.f32.xlu0 %v4508
        %v4510 = vpop.xlane.xlu0 %4509
        %v4511 = vsel %vm2471, %v4452, 0.0
        %v4512 = vadd.f32 %v4451, %v4511
        %4513 = vadd.xlane.f32.xlu0 %v4512
        %v4514 = vpop.xlane.xlu0 %4513
        %v4515 = vsel %vm2471, %v4454, 0.0
        %v4516 = vadd.f32 %v4453, %v4515
        %4517 = vadd.xlane.f32.xlu0 %v4516
        %v4518 = vpop.xlane.xlu0 %4517
        %s4519 = scalar_lea.vmem %s2040, 2304 [#allocation4]
        %v4520 = vld [vmem:[%s4519] sm:$0xff]
        %v4521 = vld [vmem:[%s4519 + $0x8] sm:$0xff]
        %v4522 = vld [vmem:[%s4519 + $0x10] sm:$0xff]
        %v4523 = vld [vmem:[%s4519 + $0x18] sm:$0xff]
        %v4524 = vld [vmem:[%s4519 + $0x20] sm:$0xff]
        %v4525 = vld [vmem:[%s4519 + $0x28] sm:$0xff]
        %v4526 = vld [vmem:[%s4519 + $0x30] sm:$0xff]
        %v4527 = vld [vmem:[%s4519 + $0x38] sm:$0xff]
        %v4528 = vld [vmem:[%s4519 + $0x40] sm:$0xff]
        %v4529 = vld [vmem:[%s4519 + $0x48] sm:$0xff]
        %v4530 = vld [vmem:[%s4519 + $0x50] sm:$0xff]
        %v4531 = vld [vmem:[%s4519 + $0x58] sm:$0xff]
        %v4532 = vld [vmem:[%s4519 + $0x60] sm:$0xff]
        %v4533 = vld [vmem:[%s4519 + $0x68] sm:$0xff]
        %v4534 = vld [vmem:[%s4519 + $0x70] sm:$0xff]
        %v4535 = vld [vmem:[%s4519 + $0x78] sm:$0xff]
        %v4536 = vld [vmem:[%s4519 + $0x80] sm:$0xff]
        %v4537 = vld [vmem:[%s4519 + $0x88] sm:$0xff]
        %v4538 = vld [vmem:[%s4519 + $0x90] sm:$0xff]
        %v4539 = vld [vmem:[%s4519 + $0x98] sm:$0xff]
        %v4540 = vld [vmem:[%s4519 + $0xa0] sm:$0xff]
        %v4541 = vld [vmem:[%s4519 + $0xa8] sm:$0xff]
        %v4542 = vld [vmem:[%s4519 + $0xb0] sm:$0xff]
        %v4543 = vld [vmem:[%s4519 + $0xb8] sm:$0xff]
        %v4544 = vld [vmem:[%s4519 + $0xc0] sm:$0xff]
        %v4545 = vld [vmem:[%s4519 + $0xc8] sm:$0xff]
        %v4546 = vld [vmem:[%s4519 + $0xd0] sm:$0xff]
        %v4547 = vld [vmem:[%s4519 + $0xd8] sm:$0xff]
        %v4548 = vld [vmem:[%s4519 + $0xe0] sm:$0xff]
        %v4549 = vld [vmem:[%s4519 + $0xe8] sm:$0xff]
        %v4550 = vld [vmem:[%s4519 + $0xf0] sm:$0xff]
        %v4551 = vld [vmem:[%s4519 + $0xf8] sm:$0xff]
        %v4552 = vmul.f32 %v3263, %v4520
        %v4553 = vmul.f32 %v3264, %v4521
        %v4554 = vmul.f32 %v3265, %v4522
        %v4555 = vmul.f32 %v3266, %v4523
        %v4556 = vmul.f32 %v3267, %v4524
        %v4557 = vmul.f32 %v3268, %v4525
        %v4558 = vmul.f32 %v3269, %v4526
        %v4559 = vmul.f32 %v3270, %v4527
        %v4560 = vmul.f32 %v3271, %v4528
        %v4561 = vmul.f32 %v3272, %v4529
        %v4562 = vmul.f32 %v3273, %v4530
        %v4563 = vmul.f32 %v3274, %v4531
        %v4564 = vmul.f32 %v3275, %v4532
        %v4565 = vmul.f32 %v3276, %v4533
        %v4566 = vmul.f32 %v3277, %v4534
        %v4567 = vmul.f32 %v3278, %v4535
        %v4568 = vmul.f32 %v3279, %v4536
        %v4569 = vmul.f32 %v3280, %v4537
        %v4570 = vmul.f32 %v3281, %v4538
        %v4571 = vmul.f32 %v3282, %v4539
        %v4572 = vmul.f32 %v3283, %v4540
        %v4573 = vmul.f32 %v3284, %v4541
        %v4574 = vmul.f32 %v3285, %v4542
        %v4575 = vmul.f32 %v3286, %v4543
        %v4576 = vmul.f32 %v3287, %v4544
        %v4577 = vmul.f32 %v3288, %v4545
        %v4578 = vmul.f32 %v3289, %v4546
        %v4579 = vmul.f32 %v3290, %v4547
        %v4580 = vmul.f32 %v3291, %v4548
        %v4581 = vmul.f32 %v3292, %v4549
        %v4582 = vmul.f32 %v3293, %v4550
        %v4583 = vmul.f32 %v3294, %v4551
        %v4584 = vsel %vm2471, %v4553, 0.0
        %v4585 = vadd.f32 %v4552, %v4584
        %4586 = vadd.xlane.f32.xlu0 %v4585
        %v4587 = vpop.xlane.xlu0 %4586
        %v4588 = vsel %vm2471, %v4555, 0.0
        %v4589 = vadd.f32 %v4554, %v4588
        %4590 = vadd.xlane.f32.xlu0 %v4589
        %v4591 = vpop.xlane.xlu0 %4590
        %v4592 = vsel %vm2471, %v4557, 0.0
        %v4593 = vadd.f32 %v4556, %v4592
        %4594 = vadd.xlane.f32.xlu0 %v4593
        %v4595 = vpop.xlane.xlu0 %4594
        %v4596 = vsel %vm2471, %v4559, 0.0
        %v4597 = vadd.f32 %v4558, %v4596
        %4598 = vadd.xlane.f32.xlu0 %v4597
        %v4599 = vpop.xlane.xlu0 %4598
        %v4600 = vsel %vm2471, %v4561, 0.0
        %v4601 = vadd.f32 %v4560, %v4600
        %4602 = vadd.xlane.f32.xlu0 %v4601
        %v4603 = vpop.xlane.xlu0 %4602
        %v4604 = vsel %vm2471, %v4563, 0.0
        %v4605 = vadd.f32 %v4562, %v4604
        %4606 = vadd.xlane.f32.xlu0 %v4605
        %v4607 = vpop.xlane.xlu0 %4606
        %v4608 = vsel %vm2471, %v4565, 0.0
        %v4609 = vadd.f32 %v4564, %v4608
        %4610 = vadd.xlane.f32.xlu0 %v4609
        %v4611 = vpop.xlane.xlu0 %4610
        %v4612 = vsel %vm2471, %v4567, 0.0
        %v4613 = vadd.f32 %v4566, %v4612
        %4614 = vadd.xlane.f32.xlu0 %v4613
        %v4615 = vpop.xlane.xlu0 %4614
        %v4616 = vsel %vm2471, %v4569, 0.0
        %v4617 = vadd.f32 %v4568, %v4616
        %4618 = vadd.xlane.f32.xlu0 %v4617
        %v4619 = vpop.xlane.xlu0 %4618
        %v4620 = vsel %vm2471, %v4571, 0.0
        %v4621 = vadd.f32 %v4570, %v4620
        %4622 = vadd.xlane.f32.xlu0 %v4621
        %v4623 = vpop.xlane.xlu0 %4622
        %v4624 = vsel %vm2471, %v4573, 0.0
        %v4625 = vadd.f32 %v4572, %v4624
        %4626 = vadd.xlane.f32.xlu0 %v4625
        %v4627 = vpop.xlane.xlu0 %4626
        %v4628 = vsel %vm2471, %v4575, 0.0
        %v4629 = vadd.f32 %v4574, %v4628
        %4630 = vadd.xlane.f32.xlu0 %v4629
        %v4631 = vpop.xlane.xlu0 %4630
        %v4632 = vsel %vm2471, %v4577, 0.0
        %v4633 = vadd.f32 %v4576, %v4632
        %4634 = vadd.xlane.f32.xlu0 %v4633
        %v4635 = vpop.xlane.xlu0 %4634
        %v4636 = vsel %vm2471, %v4579, 0.0
        %v4637 = vadd.f32 %v4578, %v4636
        %4638 = vadd.xlane.f32.xlu0 %v4637
        %v4639 = vpop.xlane.xlu0 %4638
        %v4640 = vsel %vm2471, %v4581, 0.0
        %v4641 = vadd.f32 %v4580, %v4640
        %4642 = vadd.xlane.f32.xlu0 %v4641
        %v4643 = vpop.xlane.xlu0 %4642
        %v4644 = vsel %vm2471, %v4583, 0.0
        %v4645 = vadd.f32 %v4582, %v4644
        %4646 = vadd.xlane.f32.xlu0 %v4645
        %v4647 = vpop.xlane.xlu0 %4646
        %s4648 = scalar_lea.vmem %s2040, 2560 [#allocation4]
        %v4649 = vld [vmem:[%s4648] sm:$0xff]
        %v4650 = vld [vmem:[%s4648 + $0x8] sm:$0xff]
        %v4651 = vld [vmem:[%s4648 + $0x10] sm:$0xff]
        %v4652 = vld [vmem:[%s4648 + $0x18] sm:$0xff]
        %v4653 = vld [vmem:[%s4648 + $0x20] sm:$0xff]
        %v4654 = vld [vmem:[%s4648 + $0x28] sm:$0xff]
        %v4655 = vld [vmem:[%s4648 + $0x30] sm:$0xff]
        %v4656 = vld [vmem:[%s4648 + $0x38] sm:$0xff]
        %v4657 = vld [vmem:[%s4648 + $0x40] sm:$0xff]
        %v4658 = vld [vmem:[%s4648 + $0x48] sm:$0xff]
        %v4659 = vld [vmem:[%s4648 + $0x50] sm:$0xff]
        %v4660 = vld [vmem:[%s4648 + $0x58] sm:$0xff]
        %v4661 = vld [vmem:[%s4648 + $0x60] sm:$0xff]
        %v4662 = vld [vmem:[%s4648 + $0x68] sm:$0xff]
        %v4663 = vld [vmem:[%s4648 + $0x70] sm:$0xff]
        %v4664 = vld [vmem:[%s4648 + $0x78] sm:$0xff]
        %v4665 = vld [vmem:[%s4648 + $0x80] sm:$0xff]
        %v4666 = vld [vmem:[%s4648 + $0x88] sm:$0xff]
        %v4667 = vld [vmem:[%s4648 + $0x90] sm:$0xff]
        %v4668 = vld [vmem:[%s4648 + $0x98] sm:$0xff]
        %v4669 = vld [vmem:[%s4648 + $0xa0] sm:$0xff]
        %v4670 = vld [vmem:[%s4648 + $0xa8] sm:$0xff]
        %v4671 = vld [vmem:[%s4648 + $0xb0] sm:$0xff]
        %v4672 = vld [vmem:[%s4648 + $0xb8] sm:$0xff]
        %v4673 = vld [vmem:[%s4648 + $0xc0] sm:$0xff]
        %v4674 = vld [vmem:[%s4648 + $0xc8] sm:$0xff]
        %v4675 = vld [vmem:[%s4648 + $0xd0] sm:$0xff]
        %v4676 = vld [vmem:[%s4648 + $0xd8] sm:$0xff]
        %v4677 = vld [vmem:[%s4648 + $0xe0] sm:$0xff]
        %v4678 = vld [vmem:[%s4648 + $0xe8] sm:$0xff]
        %v4679 = vld [vmem:[%s4648 + $0xf0] sm:$0xff]
        %v4680 = vld [vmem:[%s4648 + $0xf8] sm:$0xff]
        %v4681 = vmul.f32 %v3263, %v4649
        %v4682 = vmul.f32 %v3264, %v4650
        %v4683 = vmul.f32 %v3265, %v4651
        %v4684 = vmul.f32 %v3266, %v4652
        %v4685 = vmul.f32 %v3267, %v4653
        %v4686 = vmul.f32 %v3268, %v4654
        %v4687 = vmul.f32 %v3269, %v4655
        %v4688 = vmul.f32 %v3270, %v4656
        %v4689 = vmul.f32 %v3271, %v4657
        %v4690 = vmul.f32 %v3272, %v4658
        %v4691 = vmul.f32 %v3273, %v4659
        %v4692 = vmul.f32 %v3274, %v4660
        %v4693 = vmul.f32 %v3275, %v4661
        %v4694 = vmul.f32 %v3276, %v4662
        %v4695 = vmul.f32 %v3277, %v4663
        %v4696 = vmul.f32 %v3278, %v4664
        %v4697 = vmul.f32 %v3279, %v4665
        %v4698 = vmul.f32 %v3280, %v4666
        %v4699 = vmul.f32 %v3281, %v4667
        %v4700 = vmul.f32 %v3282, %v4668
        %v4701 = vmul.f32 %v3283, %v4669
        %v4702 = vmul.f32 %v3284, %v4670
        %v4703 = vmul.f32 %v3285, %v4671
        %v4704 = vmul.f32 %v3286, %v4672
        %v4705 = vmul.f32 %v3287, %v4673
        %v4706 = vmul.f32 %v3288, %v4674
        %v4707 = vmul.f32 %v3289, %v4675
        %v4708 = vmul.f32 %v3290, %v4676
        %v4709 = vmul.f32 %v3291, %v4677
        %v4710 = vmul.f32 %v3292, %v4678
        %v4711 = vmul.f32 %v3293, %v4679
        %v4712 = vmul.f32 %v3294, %v4680
        %v4713 = vsel %vm2471, %v4682, 0.0
        %v4714 = vadd.f32 %v4681, %v4713
        %4715 = vadd.xlane.f32.xlu0 %v4714
        %v4716 = vpop.xlane.xlu0 %4715
        %v4717 = vsel %vm2471, %v4684, 0.0
        %v4718 = vadd.f32 %v4683, %v4717
        %4719 = vadd.xlane.f32.xlu0 %v4718
        %v4720 = vpop.xlane.xlu0 %4719
        %v4721 = vsel %vm2471, %v4686, 0.0
        %v4722 = vadd.f32 %v4685, %v4721
        %4723 = vadd.xlane.f32.xlu0 %v4722
        %v4724 = vpop.xlane.xlu0 %4723
        %v4725 = vsel %vm2471, %v4688, 0.0
        %v4726 = vadd.f32 %v4687, %v4725
        %4727 = vadd.xlane.f32.xlu0 %v4726
        %v4728 = vpop.xlane.xlu0 %4727
        %v4729 = vsel %vm2471, %v4690, 0.0
        %v4730 = vadd.f32 %v4689, %v4729
        %4731 = vadd.xlane.f32.xlu0 %v4730
        %v4732 = vpop.xlane.xlu0 %4731
        %v4733 = vsel %vm2471, %v4692, 0.0
        %v4734 = vadd.f32 %v4691, %v4733
        %4735 = vadd.xlane.f32.xlu0 %v4734
        %v4736 = vpop.xlane.xlu0 %4735
        %v4737 = vsel %vm2471, %v4694, 0.0
        %v4738 = vadd.f32 %v4693, %v4737
        %4739 = vadd.xlane.f32.xlu0 %v4738
        %v4740 = vpop.xlane.xlu0 %4739
        %v4741 = vsel %vm2471, %v4696, 0.0
        %v4742 = vadd.f32 %v4695, %v4741
        %4743 = vadd.xlane.f32.xlu0 %v4742
        %v4744 = vpop.xlane.xlu0 %4743
        %v4745 = vsel %vm2471, %v4698, 0.0
        %v4746 = vadd.f32 %v4697, %v4745
        %4747 = vadd.xlane.f32.xlu0 %v4746
        %v4748 = vpop.xlane.xlu0 %4747
        %v4749 = vsel %vm2471, %v4700, 0.0
        %v4750 = vadd.f32 %v4699, %v4749
        %4751 = vadd.xlane.f32.xlu0 %v4750
        %v4752 = vpop.xlane.xlu0 %4751
        %v4753 = vsel %vm2471, %v4702, 0.0
        %v4754 = vadd.f32 %v4701, %v4753
        %4755 = vadd.xlane.f32.xlu0 %v4754
        %v4756 = vpop.xlane.xlu0 %4755
        %v4757 = vsel %vm2471, %v4704, 0.0
        %v4758 = vadd.f32 %v4703, %v4757
        %4759 = vadd.xlane.f32.xlu0 %v4758
        %v4760 = vpop.xlane.xlu0 %4759
        %v4761 = vsel %vm2471, %v4706, 0.0
        %v4762 = vadd.f32 %v4705, %v4761
        %4763 = vadd.xlane.f32.xlu0 %v4762
        %v4764 = vpop.xlane.xlu0 %4763
        %v4765 = vsel %vm2471, %v4708, 0.0
        %v4766 = vadd.f32 %v4707, %v4765
        %4767 = vadd.xlane.f32.xlu0 %v4766
        %v4768 = vpop.xlane.xlu0 %4767
        %v4769 = vsel %vm2471, %v4710, 0.0
        %v4770 = vadd.f32 %v4709, %v4769
        %4771 = vadd.xlane.f32.xlu0 %v4770
        %v4772 = vpop.xlane.xlu0 %4771
        %v4773 = vsel %vm2471, %v4712, 0.0
        %v4774 = vadd.f32 %v4711, %v4773
        %4775 = vadd.xlane.f32.xlu0 %v4774
        %v4776 = vpop.xlane.xlu0 %4775
        %s4777 = scalar_lea.vmem %s2040, 2816 [#allocation4]
        %v4778 = vld [vmem:[%s4777] sm:$0xff]
        %v4779 = vld [vmem:[%s4777 + $0x8] sm:$0xff]
        %v4780 = vld [vmem:[%s4777 + $0x10] sm:$0xff]
        %v4781 = vld [vmem:[%s4777 + $0x18] sm:$0xff]
        %v4782 = vld [vmem:[%s4777 + $0x20] sm:$0xff]
        %v4783 = vld [vmem:[%s4777 + $0x28] sm:$0xff]
        %v4784 = vld [vmem:[%s4777 + $0x30] sm:$0xff]
        %v4785 = vld [vmem:[%s4777 + $0x38] sm:$0xff]
        %v4786 = vld [vmem:[%s4777 + $0x40] sm:$0xff]
        %v4787 = vld [vmem:[%s4777 + $0x48] sm:$0xff]
        %v4788 = vld [vmem:[%s4777 + $0x50] sm:$0xff]
        %v4789 = vld [vmem:[%s4777 + $0x58] sm:$0xff]
        %v4790 = vld [vmem:[%s4777 + $0x60] sm:$0xff]
        %v4791 = vld [vmem:[%s4777 + $0x68] sm:$0xff]
        %v4792 = vld [vmem:[%s4777 + $0x70] sm:$0xff]
        %v4793 = vld [vmem:[%s4777 + $0x78] sm:$0xff]
        %v4794 = vld [vmem:[%s4777 + $0x80] sm:$0xff]
        %v4795 = vld [vmem:[%s4777 + $0x88] sm:$0xff]
        %v4796 = vld [vmem:[%s4777 + $0x90] sm:$0xff]
        %v4797 = vld [vmem:[%s4777 + $0x98] sm:$0xff]
        %v4798 = vld [vmem:[%s4777 + $0xa0] sm:$0xff]
        %v4799 = vld [vmem:[%s4777 + $0xa8] sm:$0xff]
        %v4800 = vld [vmem:[%s4777 + $0xb0] sm:$0xff]
        %v4801 = vld [vmem:[%s4777 + $0xb8] sm:$0xff]
        %v4802 = vld [vmem:[%s4777 + $0xc0] sm:$0xff]
        %v4803 = vld [vmem:[%s4777 + $0xc8] sm:$0xff]
        %v4804 = vld [vmem:[%s4777 + $0xd0] sm:$0xff]
        %v4805 = vld [vmem:[%s4777 + $0xd8] sm:$0xff]
        %v4806 = vld [vmem:[%s4777 + $0xe0] sm:$0xff]
        %v4807 = vld [vmem:[%s4777 + $0xe8] sm:$0xff]
        %v4808 = vld [vmem:[%s4777 + $0xf0] sm:$0xff]
        %v4809 = vld [vmem:[%s4777 + $0xf8] sm:$0xff]
        %v4810 = vmul.f32 %v3263, %v4778
        %v4811 = vmul.f32 %v3264, %v4779
        %v4812 = vmul.f32 %v3265, %v4780
        %v4813 = vmul.f32 %v3266, %v4781
        %v4814 = vmul.f32 %v3267, %v4782
        %v4815 = vmul.f32 %v3268, %v4783
        %v4816 = vmul.f32 %v3269, %v4784
        %v4817 = vmul.f32 %v3270, %v4785
        %v4818 = vmul.f32 %v3271, %v4786
        %v4819 = vmul.f32 %v3272, %v4787
        %v4820 = vmul.f32 %v3273, %v4788
        %v4821 = vmul.f32 %v3274, %v4789
        %v4822 = vmul.f32 %v3275, %v4790
        %v4823 = vmul.f32 %v3276, %v4791
        %v4824 = vmul.f32 %v3277, %v4792
        %v4825 = vmul.f32 %v3278, %v4793
        %v4826 = vmul.f32 %v3279, %v4794
        %v4827 = vmul.f32 %v3280, %v4795
        %v4828 = vmul.f32 %v3281, %v4796
        %v4829 = vmul.f32 %v3282, %v4797
        %v4830 = vmul.f32 %v3283, %v4798
        %v4831 = vmul.f32 %v3284, %v4799
        %v4832 = vmul.f32 %v3285, %v4800
        %v4833 = vmul.f32 %v3286, %v4801
        %v4834 = vmul.f32 %v3287, %v4802
        %v4835 = vmul.f32 %v3288, %v4803
        %v4836 = vmul.f32 %v3289, %v4804
        %v4837 = vmul.f32 %v3290, %v4805
        %v4838 = vmul.f32 %v3291, %v4806
        %v4839 = vmul.f32 %v3292, %v4807
        %v4840 = vmul.f32 %v3293, %v4808
        %v4841 = vmul.f32 %v3294, %v4809
        %v4842 = vsel %vm2471, %v4811, 0.0
        %v4843 = vadd.f32 %v4810, %v4842
        %4844 = vadd.xlane.f32.xlu0 %v4843
        %v4845 = vpop.xlane.xlu0 %4844
        %v4846 = vsel %vm2471, %v4813, 0.0
        %v4847 = vadd.f32 %v4812, %v4846
        %4848 = vadd.xlane.f32.xlu0 %v4847
        %v4849 = vpop.xlane.xlu0 %4848
        %v4850 = vsel %vm2471, %v4815, 0.0
        %v4851 = vadd.f32 %v4814, %v4850
        %4852 = vadd.xlane.f32.xlu0 %v4851
        %v4853 = vpop.xlane.xlu0 %4852
        %v4854 = vsel %vm2471, %v4817, 0.0
        %v4855 = vadd.f32 %v4816, %v4854
        %4856 = vadd.xlane.f32.xlu0 %v4855
        %v4857 = vpop.xlane.xlu0 %4856
        %v4858 = vsel %vm2471, %v4819, 0.0
        %v4859 = vadd.f32 %v4818, %v4858
        %4860 = vadd.xlane.f32.xlu0 %v4859
        %v4861 = vpop.xlane.xlu0 %4860
        %v4862 = vsel %vm2471, %v4821, 0.0
        %v4863 = vadd.f32 %v4820, %v4862
        %4864 = vadd.xlane.f32.xlu0 %v4863
        %v4865 = vpop.xlane.xlu0 %4864
        %v4866 = vsel %vm2471, %v4823, 0.0
        %v4867 = vadd.f32 %v4822, %v4866
        %4868 = vadd.xlane.f32.xlu0 %v4867
        %v4869 = vpop.xlane.xlu0 %4868
        %v4870 = vsel %vm2471, %v4825, 0.0
        %v4871 = vadd.f32 %v4824, %v4870
        %4872 = vadd.xlane.f32.xlu0 %v4871
        %v4873 = vpop.xlane.xlu0 %4872
        %v4874 = vsel %vm2471, %v4827, 0.0
        %v4875 = vadd.f32 %v4826, %v4874
        %4876 = vadd.xlane.f32.xlu0 %v4875
        %v4877 = vpop.xlane.xlu0 %4876
        %v4878 = vsel %vm2471, %v4829, 0.0
        %v4879 = vadd.f32 %v4828, %v4878
        %4880 = vadd.xlane.f32.xlu0 %v4879
        %v4881 = vpop.xlane.xlu0 %4880
        %v4882 = vsel %vm2471, %v4831, 0.0
        %v4883 = vadd.f32 %v4830, %v4882
        %4884 = vadd.xlane.f32.xlu0 %v4883
        %v4885 = vpop.xlane.xlu0 %4884
        %v4886 = vsel %vm2471, %v4833, 0.0
        %v4887 = vadd.f32 %v4832, %v4886
        %4888 = vadd.xlane.f32.xlu0 %v4887
        %v4889 = vpop.xlane.xlu0 %4888
        %v4890 = vsel %vm2471, %v4835, 0.0
        %v4891 = vadd.f32 %v4834, %v4890
        %4892 = vadd.xlane.f32.xlu0 %v4891
        %v4893 = vpop.xlane.xlu0 %4892
        %v4894 = vsel %vm2471, %v4837, 0.0
        %v4895 = vadd.f32 %v4836, %v4894
        %4896 = vadd.xlane.f32.xlu0 %v4895
        %v4897 = vpop.xlane.xlu0 %4896
        %v4898 = vsel %vm2471, %v4839, 0.0
        %v4899 = vadd.f32 %v4838, %v4898
        %4900 = vadd.xlane.f32.xlu0 %v4899
        %v4901 = vpop.xlane.xlu0 %4900
        %v4902 = vsel %vm2471, %v4841, 0.0
        %v4903 = vadd.f32 %v4840, %v4902
        %4904 = vadd.xlane.f32.xlu0 %v4903
        %v4905 = vpop.xlane.xlu0 %4904
        %s4906 = scalar_lea.vmem %s2040, 3072 [#allocation4]
        %v4907 = vld [vmem:[%s4906] sm:$0xff]
        %v4908 = vld [vmem:[%s4906 + $0x8] sm:$0xff]
        %v4909 = vld [vmem:[%s4906 + $0x10] sm:$0xff]
        %v4910 = vld [vmem:[%s4906 + $0x18] sm:$0xff]
        %v4911 = vld [vmem:[%s4906 + $0x20] sm:$0xff]
        %v4912 = vld [vmem:[%s4906 + $0x28] sm:$0xff]
        %v4913 = vld [vmem:[%s4906 + $0x30] sm:$0xff]
        %v4914 = vld [vmem:[%s4906 + $0x38] sm:$0xff]
        %v4915 = vld [vmem:[%s4906 + $0x40] sm:$0xff]
        %v4916 = vld [vmem:[%s4906 + $0x48] sm:$0xff]
        %v4917 = vld [vmem:[%s4906 + $0x50] sm:$0xff]
        %v4918 = vld [vmem:[%s4906 + $0x58] sm:$0xff]
        %v4919 = vld [vmem:[%s4906 + $0x60] sm:$0xff]
        %v4920 = vld [vmem:[%s4906 + $0x68] sm:$0xff]
        %v4921 = vld [vmem:[%s4906 + $0x70] sm:$0xff]
        %v4922 = vld [vmem:[%s4906 + $0x78] sm:$0xff]
        %v4923 = vld [vmem:[%s4906 + $0x80] sm:$0xff]
        %v4924 = vld [vmem:[%s4906 + $0x88] sm:$0xff]
        %v4925 = vld [vmem:[%s4906 + $0x90] sm:$0xff]
        %v4926 = vld [vmem:[%s4906 + $0x98] sm:$0xff]
        %v4927 = vld [vmem:[%s4906 + $0xa0] sm:$0xff]
        %v4928 = vld [vmem:[%s4906 + $0xa8] sm:$0xff]
        %v4929 = vld [vmem:[%s4906 + $0xb0] sm:$0xff]
        %v4930 = vld [vmem:[%s4906 + $0xb8] sm:$0xff]
        %v4931 = vld [vmem:[%s4906 + $0xc0] sm:$0xff]
        %v4932 = vld [vmem:[%s4906 + $0xc8] sm:$0xff]
        %v4933 = vld [vmem:[%s4906 + $0xd0] sm:$0xff]
        %v4934 = vld [vmem:[%s4906 + $0xd8] sm:$0xff]
        %v4935 = vld [vmem:[%s4906 + $0xe0] sm:$0xff]
        %v4936 = vld [vmem:[%s4906 + $0xe8] sm:$0xff]
        %v4937 = vld [vmem:[%s4906 + $0xf0] sm:$0xff]
        %v4938 = vld [vmem:[%s4906 + $0xf8] sm:$0xff]
        %v4939 = vmul.f32 %v3263, %v4907
        %v4940 = vmul.f32 %v3264, %v4908
        %v4941 = vmul.f32 %v3265, %v4909
        %v4942 = vmul.f32 %v3266, %v4910
        %v4943 = vmul.f32 %v3267, %v4911
        %v4944 = vmul.f32 %v3268, %v4912
        %v4945 = vmul.f32 %v3269, %v4913
        %v4946 = vmul.f32 %v3270, %v4914
        %v4947 = vmul.f32 %v3271, %v4915
        %v4948 = vmul.f32 %v3272, %v4916
        %v4949 = vmul.f32 %v3273, %v4917
        %v4950 = vmul.f32 %v3274, %v4918
        %v4951 = vmul.f32 %v3275, %v4919
        %v4952 = vmul.f32 %v3276, %v4920
        %v4953 = vmul.f32 %v3277, %v4921
        %v4954 = vmul.f32 %v3278, %v4922
        %v4955 = vmul.f32 %v3279, %v4923
        %v4956 = vmul.f32 %v3280, %v4924
        %v4957 = vmul.f32 %v3281, %v4925
        %v4958 = vmul.f32 %v3282, %v4926
        %v4959 = vmul.f32 %v3283, %v4927
        %v4960 = vmul.f32 %v3284, %v4928
        %v4961 = vmul.f32 %v3285, %v4929
        %v4962 = vmul.f32 %v3286, %v4930
        %v4963 = vmul.f32 %v3287, %v4931
        %v4964 = vmul.f32 %v3288, %v4932
        %v4965 = vmul.f32 %v3289, %v4933
        %v4966 = vmul.f32 %v3290, %v4934
        %v4967 = vmul.f32 %v3291, %v4935
        %v4968 = vmul.f32 %v3292, %v4936
        %v4969 = vmul.f32 %v3293, %v4937
        %v4970 = vmul.f32 %v3294, %v4938
        %v4971 = vsel %vm2471, %v4940, 0.0
        %v4972 = vadd.f32 %v4939, %v4971
        %4973 = vadd.xlane.f32.xlu0 %v4972
        %v4974 = vpop.xlane.xlu0 %4973
        %v4975 = vsel %vm2471, %v4942, 0.0
        %v4976 = vadd.f32 %v4941, %v4975
        %4977 = vadd.xlane.f32.xlu0 %v4976
        %v4978 = vpop.xlane.xlu0 %4977
        %v4979 = vsel %vm2471, %v4944, 0.0
        %v4980 = vadd.f32 %v4943, %v4979
        %4981 = vadd.xlane.f32.xlu0 %v4980
        %v4982 = vpop.xlane.xlu0 %4981
        %v4983 = vsel %vm2471, %v4946, 0.0
        %v4984 = vadd.f32 %v4945, %v4983
        %4985 = vadd.xlane.f32.xlu0 %v4984
        %v4986 = vpop.xlane.xlu0 %4985
        %v4987 = vsel %vm2471, %v4948, 0.0
        %v4988 = vadd.f32 %v4947, %v4987
        %4989 = vadd.xlane.f32.xlu0 %v4988
        %v4990 = vpop.xlane.xlu0 %4989
        %v4991 = vsel %vm2471, %v4950, 0.0
        %v4992 = vadd.f32 %v4949, %v4991
        %4993 = vadd.xlane.f32.xlu0 %v4992
        %v4994 = vpop.xlane.xlu0 %4993
        %v4995 = vsel %vm2471, %v4952, 0.0
        %v4996 = vadd.f32 %v4951, %v4995
        %4997 = vadd.xlane.f32.xlu0 %v4996
        %v4998 = vpop.xlane.xlu0 %4997
        %v4999 = vsel %vm2471, %v4954, 0.0
        %v5000 = vadd.f32 %v4953, %v4999
        %5001 = vadd.xlane.f32.xlu0 %v5000
        %v5002 = vpop.xlane.xlu0 %5001
        %v5003 = vsel %vm2471, %v4956, 0.0
        %v5004 = vadd.f32 %v4955, %v5003
        %5005 = vadd.xlane.f32.xlu0 %v5004
        %v5006 = vpop.xlane.xlu0 %5005
        %v5007 = vsel %vm2471, %v4958, 0.0
        %v5008 = vadd.f32 %v4957, %v5007
        %5009 = vadd.xlane.f32.xlu0 %v5008
        %v5010 = vpop.xlane.xlu0 %5009
        %v5011 = vsel %vm2471, %v4960, 0.0
        %v5012 = vadd.f32 %v4959, %v5011
        %5013 = vadd.xlane.f32.xlu0 %v5012
        %v5014 = vpop.xlane.xlu0 %5013
        %v5015 = vsel %vm2471, %v4962, 0.0
        %v5016 = vadd.f32 %v4961, %v5015
        %5017 = vadd.xlane.f32.xlu0 %v5016
        %v5018 = vpop.xlane.xlu0 %5017
        %v5019 = vsel %vm2471, %v4964, 0.0
        %v5020 = vadd.f32 %v4963, %v5019
        %5021 = vadd.xlane.f32.xlu0 %v5020
        %v5022 = vpop.xlane.xlu0 %5021
        %v5023 = vsel %vm2471, %v4966, 0.0
        %v5024 = vadd.f32 %v4965, %v5023
        %5025 = vadd.xlane.f32.xlu0 %v5024
        %v5026 = vpop.xlane.xlu0 %5025
        %v5027 = vsel %vm2471, %v4968, 0.0
        %v5028 = vadd.f32 %v4967, %v5027
        %5029 = vadd.xlane.f32.xlu0 %v5028
        %v5030 = vpop.xlane.xlu0 %5029
        %v5031 = vsel %vm2471, %v4970, 0.0
        %v5032 = vadd.f32 %v4969, %v5031
        %5033 = vadd.xlane.f32.xlu0 %v5032
        %v5034 = vpop.xlane.xlu0 %5033
        %s5035 = scalar_lea.vmem %s2040, 3328 [#allocation4]
        %v5036 = vld [vmem:[%s5035] sm:$0xff]
        %v5037 = vld [vmem:[%s5035 + $0x8] sm:$0xff]
        %v5038 = vld [vmem:[%s5035 + $0x10] sm:$0xff]
        %v5039 = vld [vmem:[%s5035 + $0x18] sm:$0xff]
        %v5040 = vld [vmem:[%s5035 + $0x20] sm:$0xff]
        %v5041 = vld [vmem:[%s5035 + $0x28] sm:$0xff]
        %v5042 = vld [vmem:[%s5035 + $0x30] sm:$0xff]
        %v5043 = vld [vmem:[%s5035 + $0x38] sm:$0xff]
        %v5044 = vld [vmem:[%s5035 + $0x40] sm:$0xff]
        %v5045 = vld [vmem:[%s5035 + $0x48] sm:$0xff]
        %v5046 = vld [vmem:[%s5035 + $0x50] sm:$0xff]
        %v5047 = vld [vmem:[%s5035 + $0x58] sm:$0xff]
        %v5048 = vld [vmem:[%s5035 + $0x60] sm:$0xff]
        %v5049 = vld [vmem:[%s5035 + $0x68] sm:$0xff]
        %v5050 = vld [vmem:[%s5035 + $0x70] sm:$0xff]
        %v5051 = vld [vmem:[%s5035 + $0x78] sm:$0xff]
        %v5052 = vld [vmem:[%s5035 + $0x80] sm:$0xff]
        %v5053 = vld [vmem:[%s5035 + $0x88] sm:$0xff]
        %v5054 = vld [vmem:[%s5035 + $0x90] sm:$0xff]
        %v5055 = vld [vmem:[%s5035 + $0x98] sm:$0xff]
        %v5056 = vld [vmem:[%s5035 + $0xa0] sm:$0xff]
        %v5057 = vld [vmem:[%s5035 + $0xa8] sm:$0xff]
        %v5058 = vld [vmem:[%s5035 + $0xb0] sm:$0xff]
        %v5059 = vld [vmem:[%s5035 + $0xb8] sm:$0xff]
        %v5060 = vld [vmem:[%s5035 + $0xc0] sm:$0xff]
        %v5061 = vld [vmem:[%s5035 + $0xc8] sm:$0xff]
        %v5062 = vld [vmem:[%s5035 + $0xd0] sm:$0xff]
        %v5063 = vld [vmem:[%s5035 + $0xd8] sm:$0xff]
        %v5064 = vld [vmem:[%s5035 + $0xe0] sm:$0xff]
        %v5065 = vld [vmem:[%s5035 + $0xe8] sm:$0xff]
        %v5066 = vld [vmem:[%s5035 + $0xf0] sm:$0xff]
        %v5067 = vld [vmem:[%s5035 + $0xf8] sm:$0xff]
        %v5068 = vmul.f32 %v3263, %v5036
        %v5069 = vmul.f32 %v3264, %v5037
        %v5070 = vmul.f32 %v3265, %v5038
        %v5071 = vmul.f32 %v3266, %v5039
        %v5072 = vmul.f32 %v3267, %v5040
        %v5073 = vmul.f32 %v3268, %v5041
        %v5074 = vmul.f32 %v3269, %v5042
        %v5075 = vmul.f32 %v3270, %v5043
        %v5076 = vmul.f32 %v3271, %v5044
        %v5077 = vmul.f32 %v3272, %v5045
        %v5078 = vmul.f32 %v3273, %v5046
        %v5079 = vmul.f32 %v3274, %v5047
        %v5080 = vmul.f32 %v3275, %v5048
        %v5081 = vmul.f32 %v3276, %v5049
        %v5082 = vmul.f32 %v3277, %v5050
        %v5083 = vmul.f32 %v3278, %v5051
        %v5084 = vmul.f32 %v3279, %v5052
        %v5085 = vmul.f32 %v3280, %v5053
        %v5086 = vmul.f32 %v3281, %v5054
        %v5087 = vmul.f32 %v3282, %v5055
        %v5088 = vmul.f32 %v3283, %v5056
        %v5089 = vmul.f32 %v3284, %v5057
        %v5090 = vmul.f32 %v3285, %v5058
        %v5091 = vmul.f32 %v3286, %v5059
        %v5092 = vmul.f32 %v3287, %v5060
        %v5093 = vmul.f32 %v3288, %v5061
        %v5094 = vmul.f32 %v3289, %v5062
        %v5095 = vmul.f32 %v3290, %v5063
        %v5096 = vmul.f32 %v3291, %v5064
        %v5097 = vmul.f32 %v3292, %v5065
        %v5098 = vmul.f32 %v3293, %v5066
        %v5099 = vmul.f32 %v3294, %v5067
        %v5100 = vsel %vm2471, %v5069, 0.0
        %v5101 = vadd.f32 %v5068, %v5100
        %5102 = vadd.xlane.f32.xlu0 %v5101
        %v5103 = vpop.xlane.xlu0 %5102
        %v5104 = vsel %vm2471, %v5071, 0.0
        %v5105 = vadd.f32 %v5070, %v5104
        %5106 = vadd.xlane.f32.xlu0 %v5105
        %v5107 = vpop.xlane.xlu0 %5106
        %v5108 = vsel %vm2471, %v5073, 0.0
        %v5109 = vadd.f32 %v5072, %v5108
        %5110 = vadd.xlane.f32.xlu0 %v5109
        %v5111 = vpop.xlane.xlu0 %5110
        %v5112 = vsel %vm2471, %v5075, 0.0
        %v5113 = vadd.f32 %v5074, %v5112
        %5114 = vadd.xlane.f32.xlu0 %v5113
        %v5115 = vpop.xlane.xlu0 %5114
        %v5116 = vsel %vm2471, %v5077, 0.0
        %v5117 = vadd.f32 %v5076, %v5116
        %5118 = vadd.xlane.f32.xlu0 %v5117
        %v5119 = vpop.xlane.xlu0 %5118
        %v5120 = vsel %vm2471, %v5079, 0.0
        %v5121 = vadd.f32 %v5078, %v5120
        %5122 = vadd.xlane.f32.xlu0 %v5121
        %v5123 = vpop.xlane.xlu0 %5122
        %v5124 = vsel %vm2471, %v5081, 0.0
        %v5125 = vadd.f32 %v5080, %v5124
        %5126 = vadd.xlane.f32.xlu0 %v5125
        %v5127 = vpop.xlane.xlu0 %5126
        %v5128 = vsel %vm2471, %v5083, 0.0
        %v5129 = vadd.f32 %v5082, %v5128
        %5130 = vadd.xlane.f32.xlu0 %v5129
        %v5131 = vpop.xlane.xlu0 %5130
        %v5132 = vsel %vm2471, %v5085, 0.0
        %v5133 = vadd.f32 %v5084, %v5132
        %5134 = vadd.xlane.f32.xlu0 %v5133
        %v5135 = vpop.xlane.xlu0 %5134
        %v5136 = vsel %vm2471, %v5087, 0.0
        %v5137 = vadd.f32 %v5086, %v5136
        %5138 = vadd.xlane.f32.xlu0 %v5137
        %v5139 = vpop.xlane.xlu0 %5138
        %v5140 = vsel %vm2471, %v5089, 0.0
        %v5141 = vadd.f32 %v5088, %v5140
        %5142 = vadd.xlane.f32.xlu0 %v5141
        %v5143 = vpop.xlane.xlu0 %5142
        %v5144 = vsel %vm2471, %v5091, 0.0
        %v5145 = vadd.f32 %v5090, %v5144
        %5146 = vadd.xlane.f32.xlu0 %v5145
        %v5147 = vpop.xlane.xlu0 %5146
        %v5148 = vsel %vm2471, %v5093, 0.0
        %v5149 = vadd.f32 %v5092, %v5148
        %5150 = vadd.xlane.f32.xlu0 %v5149
        %v5151 = vpop.xlane.xlu0 %5150
        %v5152 = vsel %vm2471, %v5095, 0.0
        %v5153 = vadd.f32 %v5094, %v5152
        %5154 = vadd.xlane.f32.xlu0 %v5153
        %v5155 = vpop.xlane.xlu0 %5154
        %v5156 = vsel %vm2471, %v5097, 0.0
        %v5157 = vadd.f32 %v5096, %v5156
        %5158 = vadd.xlane.f32.xlu0 %v5157
        %v5159 = vpop.xlane.xlu0 %5158
        %v5160 = vsel %vm2471, %v5099, 0.0
        %v5161 = vadd.f32 %v5098, %v5160
        %5162 = vadd.xlane.f32.xlu0 %v5161
        %v5163 = vpop.xlane.xlu0 %5162
        %s5164 = scalar_lea.vmem %s2040, 3584 [#allocation4]
        %v5165 = vld [vmem:[%s5164] sm:$0xff]
        %v5166 = vld [vmem:[%s5164 + $0x8] sm:$0xff]
        %v5167 = vld [vmem:[%s5164 + $0x10] sm:$0xff]
        %v5168 = vld [vmem:[%s5164 + $0x18] sm:$0xff]
        %v5169 = vld [vmem:[%s5164 + $0x20] sm:$0xff]
        %v5170 = vld [vmem:[%s5164 + $0x28] sm:$0xff]
        %v5171 = vld [vmem:[%s5164 + $0x30] sm:$0xff]
        %v5172 = vld [vmem:[%s5164 + $0x38] sm:$0xff]
        %v5173 = vld [vmem:[%s5164 + $0x40] sm:$0xff]
        %v5174 = vld [vmem:[%s5164 + $0x48] sm:$0xff]
        %v5175 = vld [vmem:[%s5164 + $0x50] sm:$0xff]
        %v5176 = vld [vmem:[%s5164 + $0x58] sm:$0xff]
        %v5177 = vld [vmem:[%s5164 + $0x60] sm:$0xff]
        %v5178 = vld [vmem:[%s5164 + $0x68] sm:$0xff]
        %v5179 = vld [vmem:[%s5164 + $0x70] sm:$0xff]
        %v5180 = vld [vmem:[%s5164 + $0x78] sm:$0xff]
        %v5181 = vld [vmem:[%s5164 + $0x80] sm:$0xff]
        %v5182 = vld [vmem:[%s5164 + $0x88] sm:$0xff]
        %v5183 = vld [vmem:[%s5164 + $0x90] sm:$0xff]
        %v5184 = vld [vmem:[%s5164 + $0x98] sm:$0xff]
        %v5185 = vld [vmem:[%s5164 + $0xa0] sm:$0xff]
        %v5186 = vld [vmem:[%s5164 + $0xa8] sm:$0xff]
        %v5187 = vld [vmem:[%s5164 + $0xb0] sm:$0xff]
        %v5188 = vld [vmem:[%s5164 + $0xb8] sm:$0xff]
        %v5189 = vld [vmem:[%s5164 + $0xc0] sm:$0xff]
        %v5190 = vld [vmem:[%s5164 + $0xc8] sm:$0xff]
        %v5191 = vld [vmem:[%s5164 + $0xd0] sm:$0xff]
        %v5192 = vld [vmem:[%s5164 + $0xd8] sm:$0xff]
        %v5193 = vld [vmem:[%s5164 + $0xe0] sm:$0xff]
        %v5194 = vld [vmem:[%s5164 + $0xe8] sm:$0xff]
        %v5195 = vld [vmem:[%s5164 + $0xf0] sm:$0xff]
        %v5196 = vld [vmem:[%s5164 + $0xf8] sm:$0xff]
        %v5197 = vmul.f32 %v3263, %v5165
        %v5198 = vmul.f32 %v3264, %v5166
        %v5199 = vmul.f32 %v3265, %v5167
        %v5200 = vmul.f32 %v3266, %v5168
        %v5201 = vmul.f32 %v3267, %v5169
        %v5202 = vmul.f32 %v3268, %v5170
        %v5203 = vmul.f32 %v3269, %v5171
        %v5204 = vmul.f32 %v3270, %v5172
        %v5205 = vmul.f32 %v3271, %v5173
        %v5206 = vmul.f32 %v3272, %v5174
        %v5207 = vmul.f32 %v3273, %v5175
        %v5208 = vmul.f32 %v3274, %v5176
        %v5209 = vmul.f32 %v3275, %v5177
        %v5210 = vmul.f32 %v3276, %v5178
        %v5211 = vmul.f32 %v3277, %v5179
        %v5212 = vmul.f32 %v3278, %v5180
        %v5213 = vmul.f32 %v3279, %v5181
        %v5214 = vmul.f32 %v3280, %v5182
        %v5215 = vmul.f32 %v3281, %v5183
        %v5216 = vmul.f32 %v3282, %v5184
        %v5217 = vmul.f32 %v3283, %v5185
        %v5218 = vmul.f32 %v3284, %v5186
        %v5219 = vmul.f32 %v3285, %v5187
        %v5220 = vmul.f32 %v3286, %v5188
        %v5221 = vmul.f32 %v3287, %v5189
        %v5222 = vmul.f32 %v3288, %v5190
        %v5223 = vmul.f32 %v3289, %v5191
        %v5224 = vmul.f32 %v3290, %v5192
        %v5225 = vmul.f32 %v3291, %v5193
        %v5226 = vmul.f32 %v3292, %v5194
        %v5227 = vmul.f32 %v3293, %v5195
        %v5228 = vmul.f32 %v3294, %v5196
        %v5229 = vsel %vm2471, %v5198, 0.0
        %v5230 = vadd.f32 %v5197, %v5229
        %5231 = vadd.xlane.f32.xlu0 %v5230
        %v5232 = vpop.xlane.xlu0 %5231
        %v5233 = vsel %vm2471, %v5200, 0.0
        %v5234 = vadd.f32 %v5199, %v5233
        %5235 = vadd.xlane.f32.xlu0 %v5234
        %v5236 = vpop.xlane.xlu0 %5235
        %v5237 = vsel %vm2471, %v5202, 0.0
        %v5238 = vadd.f32 %v5201, %v5237
        %5239 = vadd.xlane.f32.xlu0 %v5238
        %v5240 = vpop.xlane.xlu0 %5239
        %v5241 = vsel %vm2471, %v5204, 0.0
        %v5242 = vadd.f32 %v5203, %v5241
        %5243 = vadd.xlane.f32.xlu0 %v5242
        %v5244 = vpop.xlane.xlu0 %5243
        %v5245 = vsel %vm2471, %v5206, 0.0
        %v5246 = vadd.f32 %v5205, %v5245
        %5247 = vadd.xlane.f32.xlu0 %v5246
        %v5248 = vpop.xlane.xlu0 %5247
        %v5249 = vsel %vm2471, %v5208, 0.0
        %v5250 = vadd.f32 %v5207, %v5249
        %5251 = vadd.xlane.f32.xlu0 %v5250
        %v5252 = vpop.xlane.xlu0 %5251
        %v5253 = vsel %vm2471, %v5210, 0.0
        %v5254 = vadd.f32 %v5209, %v5253
        %5255 = vadd.xlane.f32.xlu0 %v5254
        %v5256 = vpop.xlane.xlu0 %5255
        %v5257 = vsel %vm2471, %v5212, 0.0
        %v5258 = vadd.f32 %v5211, %v5257
        %5259 = vadd.xlane.f32.xlu0 %v5258
        %v5260 = vpop.xlane.xlu0 %5259
        %v5261 = vsel %vm2471, %v5214, 0.0
        %v5262 = vadd.f32 %v5213, %v5261
        %5263 = vadd.xlane.f32.xlu0 %v5262
        %v5264 = vpop.xlane.xlu0 %5263
        %v5265 = vsel %vm2471, %v5216, 0.0
        %v5266 = vadd.f32 %v5215, %v5265
        %5267 = vadd.xlane.f32.xlu0 %v5266
        %v5268 = vpop.xlane.xlu0 %5267
        %v5269 = vsel %vm2471, %v5218, 0.0
        %v5270 = vadd.f32 %v5217, %v5269
        %5271 = vadd.xlane.f32.xlu0 %v5270
        %v5272 = vpop.xlane.xlu0 %5271
        %v5273 = vsel %vm2471, %v5220, 0.0
        %v5274 = vadd.f32 %v5219, %v5273
        %5275 = vadd.xlane.f32.xlu0 %v5274
        %v5276 = vpop.xlane.xlu0 %5275
        %v5277 = vsel %vm2471, %v5222, 0.0
        %v5278 = vadd.f32 %v5221, %v5277
        %5279 = vadd.xlane.f32.xlu0 %v5278
        %v5280 = vpop.xlane.xlu0 %5279
        %v5281 = vsel %vm2471, %v5224, 0.0
        %v5282 = vadd.f32 %v5223, %v5281
        %5283 = vadd.xlane.f32.xlu0 %v5282
        %v5284 = vpop.xlane.xlu0 %5283
        %v5285 = vsel %vm2471, %v5226, 0.0
        %v5286 = vadd.f32 %v5225, %v5285
        %5287 = vadd.xlane.f32.xlu0 %v5286
        %v5288 = vpop.xlane.xlu0 %5287
        %v5289 = vsel %vm2471, %v5228, 0.0
        %v5290 = vadd.f32 %v5227, %v5289
        %5291 = vadd.xlane.f32.xlu0 %v5290
        %v5292 = vpop.xlane.xlu0 %5291
        %s5293 = scalar_lea.vmem %s2040, 3840 [#allocation4]
        %v5294 = vld [vmem:[%s5293] sm:$0xff]
        %v5295 = vld [vmem:[%s5293 + $0x8] sm:$0xff]
        %v5296 = vld [vmem:[%s5293 + $0x10] sm:$0xff]
        %v5297 = vld [vmem:[%s5293 + $0x18] sm:$0xff]
        %v5298 = vld [vmem:[%s5293 + $0x20] sm:$0xff]
        %v5299 = vld [vmem:[%s5293 + $0x28] sm:$0xff]
        %v5300 = vld [vmem:[%s5293 + $0x30] sm:$0xff]
        %v5301 = vld [vmem:[%s5293 + $0x38] sm:$0xff]
        %v5302 = vld [vmem:[%s5293 + $0x40] sm:$0xff]
        %v5303 = vld [vmem:[%s5293 + $0x48] sm:$0xff]
        %v5304 = vld [vmem:[%s5293 + $0x50] sm:$0xff]
        %v5305 = vld [vmem:[%s5293 + $0x58] sm:$0xff]
        %v5306 = vld [vmem:[%s5293 + $0x60] sm:$0xff]
        %v5307 = vld [vmem:[%s5293 + $0x68] sm:$0xff]
        %v5308 = vld [vmem:[%s5293 + $0x70] sm:$0xff]
        %v5309 = vld [vmem:[%s5293 + $0x78] sm:$0xff]
        %v5310 = vld [vmem:[%s5293 + $0x80] sm:$0xff]
        %v5311 = vld [vmem:[%s5293 + $0x88] sm:$0xff]
        %v5312 = vld [vmem:[%s5293 + $0x90] sm:$0xff]
        %v5313 = vld [vmem:[%s5293 + $0x98] sm:$0xff]
        %v5314 = vld [vmem:[%s5293 + $0xa0] sm:$0xff]
        %v5315 = vld [vmem:[%s5293 + $0xa8] sm:$0xff]
        %v5316 = vld [vmem:[%s5293 + $0xb0] sm:$0xff]
        %v5317 = vld [vmem:[%s5293 + $0xb8] sm:$0xff]
        %v5318 = vld [vmem:[%s5293 + $0xc0] sm:$0xff]
        %v5319 = vld [vmem:[%s5293 + $0xc8] sm:$0xff]
        %v5320 = vld [vmem:[%s5293 + $0xd0] sm:$0xff]
        %v5321 = vld [vmem:[%s5293 + $0xd8] sm:$0xff]
        %v5322 = vld [vmem:[%s5293 + $0xe0] sm:$0xff]
        %v5323 = vld [vmem:[%s5293 + $0xe8] sm:$0xff]
        %v5324 = vld [vmem:[%s5293 + $0xf0] sm:$0xff]
        %v5325 = vld [vmem:[%s5293 + $0xf8] sm:$0xff]
        %v5326 = vmul.f32 %v3263, %v5294
        %v5327 = vmul.f32 %v3264, %v5295
        %v5328 = vmul.f32 %v3265, %v5296
        %v5329 = vmul.f32 %v3266, %v5297
        %v5330 = vmul.f32 %v3267, %v5298
        %v5331 = vmul.f32 %v3268, %v5299
        %v5332 = vmul.f32 %v3269, %v5300
        %v5333 = vmul.f32 %v3270, %v5301
        %v5334 = vmul.f32 %v3271, %v5302
        %v5335 = vmul.f32 %v3272, %v5303
        %v5336 = vmul.f32 %v3273, %v5304
        %v5337 = vmul.f32 %v3274, %v5305
        %v5338 = vmul.f32 %v3275, %v5306
        %v5339 = vmul.f32 %v3276, %v5307
        %v5340 = vmul.f32 %v3277, %v5308
        %v5341 = vmul.f32 %v3278, %v5309
        %v5342 = vmul.f32 %v3279, %v5310
        %v5343 = vmul.f32 %v3280, %v5311
        %v5344 = vmul.f32 %v3281, %v5312
        %v5345 = vmul.f32 %v3282, %v5313
        %v5346 = vmul.f32 %v3283, %v5314
        %v5347 = vmul.f32 %v3284, %v5315
        %v5348 = vmul.f32 %v3285, %v5316
        %v5349 = vmul.f32 %v3286, %v5317
        %v5350 = vmul.f32 %v3287, %v5318
        %v5351 = vmul.f32 %v3288, %v5319
        %v5352 = vmul.f32 %v3289, %v5320
        %v5353 = vmul.f32 %v3290, %v5321
        %v5354 = vmul.f32 %v3291, %v5322
        %v5355 = vmul.f32 %v3292, %v5323
        %v5356 = vmul.f32 %v3293, %v5324
        %v5357 = vmul.f32 %v3294, %v5325
        %v5358 = vsel %vm2471, %v5327, 0.0
        %v5359 = vadd.f32 %v5326, %v5358
        %5360 = vadd.xlane.f32.xlu0 %v5359
        %v5361 = vpop.xlane.xlu0 %5360
        %v5362 = vsel %vm2471, %v5329, 0.0
        %v5363 = vadd.f32 %v5328, %v5362
        %5364 = vadd.xlane.f32.xlu0 %v5363
        %v5365 = vpop.xlane.xlu0 %5364
        %v5366 = vsel %vm2471, %v5331, 0.0
        %v5367 = vadd.f32 %v5330, %v5366
        %5368 = vadd.xlane.f32.xlu0 %v5367
        %v5369 = vpop.xlane.xlu0 %5368
        %v5370 = vsel %vm2471, %v5333, 0.0
        %v5371 = vadd.f32 %v5332, %v5370
        %5372 = vadd.xlane.f32.xlu0 %v5371
        %v5373 = vpop.xlane.xlu0 %5372
        %v5374 = vsel %vm2471, %v5335, 0.0
        %v5375 = vadd.f32 %v5334, %v5374
        %5376 = vadd.xlane.f32.xlu0 %v5375
        %v5377 = vpop.xlane.xlu0 %5376
        %v5378 = vsel %vm2471, %v5337, 0.0
        %v5379 = vadd.f32 %v5336, %v5378
        %5380 = vadd.xlane.f32.xlu0 %v5379
        %v5381 = vpop.xlane.xlu0 %5380
        %v5382 = vsel %vm2471, %v5339, 0.0
        %v5383 = vadd.f32 %v5338, %v5382
        %5384 = vadd.xlane.f32.xlu0 %v5383
        %v5385 = vpop.xlane.xlu0 %5384
        %v5386 = vsel %vm2471, %v5341, 0.0
        %v5387 = vadd.f32 %v5340, %v5386
        %5388 = vadd.xlane.f32.xlu0 %v5387
        %v5389 = vpop.xlane.xlu0 %5388
        %v5390 = vsel %vm2471, %v5343, 0.0
        %v5391 = vadd.f32 %v5342, %v5390
        %5392 = vadd.xlane.f32.xlu0 %v5391
        %v5393 = vpop.xlane.xlu0 %5392
        %v5394 = vsel %vm2471, %v5345, 0.0
        %v5395 = vadd.f32 %v5344, %v5394
        %5396 = vadd.xlane.f32.xlu0 %v5395
        %v5397 = vpop.xlane.xlu0 %5396
        %v5398 = vsel %vm2471, %v5347, 0.0
        %v5399 = vadd.f32 %v5346, %v5398
        %5400 = vadd.xlane.f32.xlu0 %v5399
        %v5401 = vpop.xlane.xlu0 %5400
        %v5402 = vsel %vm2471, %v5349, 0.0
        %v5403 = vadd.f32 %v5348, %v5402
        %5404 = vadd.xlane.f32.xlu0 %v5403
        %v5405 = vpop.xlane.xlu0 %5404
        %v5406 = vsel %vm2471, %v5351, 0.0
        %v5407 = vadd.f32 %v5350, %v5406
        %5408 = vadd.xlane.f32.xlu0 %v5407
        %v5409 = vpop.xlane.xlu0 %5408
        %v5410 = vsel %vm2471, %v5353, 0.0
        %v5411 = vadd.f32 %v5352, %v5410
        %5412 = vadd.xlane.f32.xlu0 %v5411
        %v5413 = vpop.xlane.xlu0 %5412
        %v5414 = vsel %vm2471, %v5355, 0.0
        %v5415 = vadd.f32 %v5354, %v5414
        %5416 = vadd.xlane.f32.xlu0 %v5415
        %v5417 = vpop.xlane.xlu0 %5416
        %v5418 = vsel %vm2471, %v5357, 0.0
        %v5419 = vadd.f32 %v5356, %v5418
        %5420 = vadd.xlane.f32.xlu0 %v5419
        %v5421 = vpop.xlane.xlu0 %5420
        %s5422 = scalar_lea.vmem %s2040, 4096 [#allocation4]
        %v5423 = vld [vmem:[%s5422] sm:$0xff]
        %v5424 = vld [vmem:[%s5422 + $0x8] sm:$0xff]
        %v5425 = vld [vmem:[%s5422 + $0x10] sm:$0xff]
        %v5426 = vld [vmem:[%s5422 + $0x18] sm:$0xff]
        %v5427 = vld [vmem:[%s5422 + $0x20] sm:$0xff]
        %v5428 = vld [vmem:[%s5422 + $0x28] sm:$0xff]
        %v5429 = vld [vmem:[%s5422 + $0x30] sm:$0xff]
        %v5430 = vld [vmem:[%s5422 + $0x38] sm:$0xff]
        %v5431 = vld [vmem:[%s5422 + $0x40] sm:$0xff]
        %v5432 = vld [vmem:[%s5422 + $0x48] sm:$0xff]
        %v5433 = vld [vmem:[%s5422 + $0x50] sm:$0xff]
        %v5434 = vld [vmem:[%s5422 + $0x58] sm:$0xff]
        %v5435 = vld [vmem:[%s5422 + $0x60] sm:$0xff]
        %v5436 = vld [vmem:[%s5422 + $0x68] sm:$0xff]
        %v5437 = vld [vmem:[%s5422 + $0x70] sm:$0xff]
        %v5438 = vld [vmem:[%s5422 + $0x78] sm:$0xff]
        %v5439 = vld [vmem:[%s5422 + $0x80] sm:$0xff]
        %v5440 = vld [vmem:[%s5422 + $0x88] sm:$0xff]
        %v5441 = vld [vmem:[%s5422 + $0x90] sm:$0xff]
        %v5442 = vld [vmem:[%s5422 + $0x98] sm:$0xff]
        %v5443 = vld [vmem:[%s5422 + $0xa0] sm:$0xff]
        %v5444 = vld [vmem:[%s5422 + $0xa8] sm:$0xff]
        %v5445 = vld [vmem:[%s5422 + $0xb0] sm:$0xff]
        %v5446 = vld [vmem:[%s5422 + $0xb8] sm:$0xff]
        %v5447 = vld [vmem:[%s5422 + $0xc0] sm:$0xff]
        %v5448 = vld [vmem:[%s5422 + $0xc8] sm:$0xff]
        %v5449 = vld [vmem:[%s5422 + $0xd0] sm:$0xff]
        %v5450 = vld [vmem:[%s5422 + $0xd8] sm:$0xff]
        %v5451 = vld [vmem:[%s5422 + $0xe0] sm:$0xff]
        %v5452 = vld [vmem:[%s5422 + $0xe8] sm:$0xff]
        %v5453 = vld [vmem:[%s5422 + $0xf0] sm:$0xff]
        %v5454 = vld [vmem:[%s5422 + $0xf8] sm:$0xff]
        %v5455 = vmul.f32 %v3263, %v5423
        %v5456 = vmul.f32 %v3264, %v5424
        %v5457 = vmul.f32 %v3265, %v5425
        %v5458 = vmul.f32 %v3266, %v5426
        %v5459 = vmul.f32 %v3267, %v5427
        %v5460 = vmul.f32 %v3268, %v5428
        %v5461 = vmul.f32 %v3269, %v5429
        %v5462 = vmul.f32 %v3270, %v5430
        %v5463 = vmul.f32 %v3271, %v5431
        %v5464 = vmul.f32 %v3272, %v5432
        %v5465 = vmul.f32 %v3273, %v5433
        %v5466 = vmul.f32 %v3274, %v5434
        %v5467 = vmul.f32 %v3275, %v5435
        %v5468 = vmul.f32 %v3276, %v5436
        %v5469 = vmul.f32 %v3277, %v5437
        %v5470 = vmul.f32 %v3278, %v5438
        %v5471 = vmul.f32 %v3279, %v5439
        %v5472 = vmul.f32 %v3280, %v5440
        %v5473 = vmul.f32 %v3281, %v5441
        %v5474 = vmul.f32 %v3282, %v5442
        %v5475 = vmul.f32 %v3283, %v5443
        %v5476 = vmul.f32 %v3284, %v5444
        %v5477 = vmul.f32 %v3285, %v5445
        %v5478 = vmul.f32 %v3286, %v5446
        %v5479 = vmul.f32 %v3287, %v5447
        %v5480 = vmul.f32 %v3288, %v5448
        %v5481 = vmul.f32 %v3289, %v5449
        %v5482 = vmul.f32 %v3290, %v5450
        %v5483 = vmul.f32 %v3291, %v5451
        %v5484 = vmul.f32 %v3292, %v5452
        %v5485 = vmul.f32 %v3293, %v5453
        %v5486 = vmul.f32 %v3294, %v5454
        %v5487 = vsel %vm2471, %v5456, 0.0
        %v5488 = vadd.f32 %v5455, %v5487
        %5489 = vadd.xlane.f32.xlu0 %v5488
        %v5490 = vpop.xlane.xlu0 %5489
        %v5491 = vsel %vm2471, %v5458, 0.0
        %v5492 = vadd.f32 %v5457, %v5491
        %5493 = vadd.xlane.f32.xlu0 %v5492
        %v5494 = vpop.xlane.xlu0 %5493
        %v5495 = vsel %vm2471, %v5460, 0.0
        %v5496 = vadd.f32 %v5459, %v5495
        %5497 = vadd.xlane.f32.xlu0 %v5496
        %v5498 = vpop.xlane.xlu0 %5497
        %v5499 = vsel %vm2471, %v5462, 0.0
        %v5500 = vadd.f32 %v5461, %v5499
        %5501 = vadd.xlane.f32.xlu0 %v5500
        %v5502 = vpop.xlane.xlu0 %5501
        %v5503 = vsel %vm2471, %v5464, 0.0
        %v5504 = vadd.f32 %v5463, %v5503
        %5505 = vadd.xlane.f32.xlu0 %v5504
        %v5506 = vpop.xlane.xlu0 %5505
        %v5507 = vsel %vm2471, %v5466, 0.0
        %v5508 = vadd.f32 %v5465, %v5507
        %5509 = vadd.xlane.f32.xlu0 %v5508
        %v5510 = vpop.xlane.xlu0 %5509
        %v5511 = vsel %vm2471, %v5468, 0.0
        %v5512 = vadd.f32 %v5467, %v5511
        %5513 = vadd.xlane.f32.xlu0 %v5512
        %v5514 = vpop.xlane.xlu0 %5513
        %v5515 = vsel %vm2471, %v5470, 0.0
        %v5516 = vadd.f32 %v5469, %v5515
        %5517 = vadd.xlane.f32.xlu0 %v5516
        %v5518 = vpop.xlane.xlu0 %5517
        %v5519 = vsel %vm2471, %v5472, 0.0
        %v5520 = vadd.f32 %v5471, %v5519
        %5521 = vadd.xlane.f32.xlu0 %v5520
        %v5522 = vpop.xlane.xlu0 %5521
        %v5523 = vsel %vm2471, %v5474, 0.0
        %v5524 = vadd.f32 %v5473, %v5523
        %5525 = vadd.xlane.f32.xlu0 %v5524
        %v5526 = vpop.xlane.xlu0 %5525
        %v5527 = vsel %vm2471, %v5476, 0.0
        %v5528 = vadd.f32 %v5475, %v5527
        %5529 = vadd.xlane.f32.xlu0 %v5528
        %v5530 = vpop.xlane.xlu0 %5529
        %v5531 = vsel %vm2471, %v5478, 0.0
        %v5532 = vadd.f32 %v5477, %v5531
        %5533 = vadd.xlane.f32.xlu0 %v5532
        %v5534 = vpop.xlane.xlu0 %5533
        %v5535 = vsel %vm2471, %v5480, 0.0
        %v5536 = vadd.f32 %v5479, %v5535
        %5537 = vadd.xlane.f32.xlu0 %v5536
        %v5538 = vpop.xlane.xlu0 %5537
        %v5539 = vsel %vm2471, %v5482, 0.0
        %v5540 = vadd.f32 %v5481, %v5539
        %5541 = vadd.xlane.f32.xlu0 %v5540
        %v5542 = vpop.xlane.xlu0 %5541
        %v5543 = vsel %vm2471, %v5484, 0.0
        %v5544 = vadd.f32 %v5483, %v5543
        %5545 = vadd.xlane.f32.xlu0 %v5544
        %v5546 = vpop.xlane.xlu0 %5545
        %v5547 = vsel %vm2471, %v5486, 0.0
        %v5548 = vadd.f32 %v5485, %v5547
        %5549 = vadd.xlane.f32.xlu0 %v5548
        %v5550 = vpop.xlane.xlu0 %5549
        %s5551 = scalar_lea.vmem %s2040, 4352 [#allocation4]
        %v5552 = vld [vmem:[%s5551] sm:$0xff]
        %v5553 = vld [vmem:[%s5551 + $0x8] sm:$0xff]
        %v5554 = vld [vmem:[%s5551 + $0x10] sm:$0xff]
        %v5555 = vld [vmem:[%s5551 + $0x18] sm:$0xff]
        %v5556 = vld [vmem:[%s5551 + $0x20] sm:$0xff]
        %v5557 = vld [vmem:[%s5551 + $0x28] sm:$0xff]
        %v5558 = vld [vmem:[%s5551 + $0x30] sm:$0xff]
        %v5559 = vld [vmem:[%s5551 + $0x38] sm:$0xff]
        %v5560 = vld [vmem:[%s5551 + $0x40] sm:$0xff]
        %v5561 = vld [vmem:[%s5551 + $0x48] sm:$0xff]
        %v5562 = vld [vmem:[%s5551 + $0x50] sm:$0xff]
        %v5563 = vld [vmem:[%s5551 + $0x58] sm:$0xff]
        %v5564 = vld [vmem:[%s5551 + $0x60] sm:$0xff]
        %v5565 = vld [vmem:[%s5551 + $0x68] sm:$0xff]
        %v5566 = vld [vmem:[%s5551 + $0x70] sm:$0xff]
        %v5567 = vld [vmem:[%s5551 + $0x78] sm:$0xff]
        %v5568 = vld [vmem:[%s5551 + $0x80] sm:$0xff]
        %v5569 = vld [vmem:[%s5551 + $0x88] sm:$0xff]
        %v5570 = vld [vmem:[%s5551 + $0x90] sm:$0xff]
        %v5571 = vld [vmem:[%s5551 + $0x98] sm:$0xff]
        %v5572 = vld [vmem:[%s5551 + $0xa0] sm:$0xff]
        %v5573 = vld [vmem:[%s5551 + $0xa8] sm:$0xff]
        %v5574 = vld [vmem:[%s5551 + $0xb0] sm:$0xff]
        %v5575 = vld [vmem:[%s5551 + $0xb8] sm:$0xff]
        %v5576 = vld [vmem:[%s5551 + $0xc0] sm:$0xff]
        %v5577 = vld [vmem:[%s5551 + $0xc8] sm:$0xff]
        %v5578 = vld [vmem:[%s5551 + $0xd0] sm:$0xff]
        %v5579 = vld [vmem:[%s5551 + $0xd8] sm:$0xff]
        %v5580 = vld [vmem:[%s5551 + $0xe0] sm:$0xff]
        %v5581 = vld [vmem:[%s5551 + $0xe8] sm:$0xff]
        %v5582 = vld [vmem:[%s5551 + $0xf0] sm:$0xff]
        %v5583 = vld [vmem:[%s5551 + $0xf8] sm:$0xff]
        %v5584 = vmul.f32 %v3263, %v5552
        %v5585 = vmul.f32 %v3264, %v5553
        %v5586 = vmul.f32 %v3265, %v5554
        %v5587 = vmul.f32 %v3266, %v5555
        %v5588 = vmul.f32 %v3267, %v5556
        %v5589 = vmul.f32 %v3268, %v5557
        %v5590 = vmul.f32 %v3269, %v5558
        %v5591 = vmul.f32 %v3270, %v5559
        %v5592 = vmul.f32 %v3271, %v5560
        %v5593 = vmul.f32 %v3272, %v5561
        %v5594 = vmul.f32 %v3273, %v5562
        %v5595 = vmul.f32 %v3274, %v5563
        %v5596 = vmul.f32 %v3275, %v5564
        %v5597 = vmul.f32 %v3276, %v5565
        %v5598 = vmul.f32 %v3277, %v5566
        %v5599 = vmul.f32 %v3278, %v5567
        %v5600 = vmul.f32 %v3279, %v5568
        %v5601 = vmul.f32 %v3280, %v5569
        %v5602 = vmul.f32 %v3281, %v5570
        %v5603 = vmul.f32 %v3282, %v5571
        %v5604 = vmul.f32 %v3283, %v5572
        %v5605 = vmul.f32 %v3284, %v5573
        %v5606 = vmul.f32 %v3285, %v5574
        %v5607 = vmul.f32 %v3286, %v5575
        %v5608 = vmul.f32 %v3287, %v5576
        %v5609 = vmul.f32 %v3288, %v5577
        %v5610 = vmul.f32 %v3289, %v5578
        %v5611 = vmul.f32 %v3290, %v5579
        %v5612 = vmul.f32 %v3291, %v5580
        %v5613 = vmul.f32 %v3292, %v5581
        %v5614 = vmul.f32 %v3293, %v5582
        %v5615 = vmul.f32 %v3294, %v5583
        %v5616 = vsel %vm2471, %v5585, 0.0
        %v5617 = vadd.f32 %v5584, %v5616
        %5618 = vadd.xlane.f32.xlu0 %v5617
        %v5619 = vpop.xlane.xlu0 %5618
        %v5620 = vsel %vm2471, %v5587, 0.0
        %v5621 = vadd.f32 %v5586, %v5620
        %5622 = vadd.xlane.f32.xlu0 %v5621
        %v5623 = vpop.xlane.xlu0 %5622
        %v5624 = vsel %vm2471, %v5589, 0.0
        %v5625 = vadd.f32 %v5588, %v5624
        %5626 = vadd.xlane.f32.xlu0 %v5625
        %v5627 = vpop.xlane.xlu0 %5626
        %v5628 = vsel %vm2471, %v5591, 0.0
        %v5629 = vadd.f32 %v5590, %v5628
        %5630 = vadd.xlane.f32.xlu0 %v5629
        %v5631 = vpop.xlane.xlu0 %5630
        %v5632 = vsel %vm2471, %v5593, 0.0
        %v5633 = vadd.f32 %v5592, %v5632
        %5634 = vadd.xlane.f32.xlu0 %v5633
        %v5635 = vpop.xlane.xlu0 %5634
        %v5636 = vsel %vm2471, %v5595, 0.0
        %v5637 = vadd.f32 %v5594, %v5636
        %5638 = vadd.xlane.f32.xlu0 %v5637
        %v5639 = vpop.xlane.xlu0 %5638
        %v5640 = vsel %vm2471, %v5597, 0.0
        %v5641 = vadd.f32 %v5596, %v5640
        %5642 = vadd.xlane.f32.xlu0 %v5641
        %v5643 = vpop.xlane.xlu0 %5642
        %v5644 = vsel %vm2471, %v5599, 0.0
        %v5645 = vadd.f32 %v5598, %v5644
        %5646 = vadd.xlane.f32.xlu0 %v5645
        %v5647 = vpop.xlane.xlu0 %5646
        %v5648 = vsel %vm2471, %v5601, 0.0
        %v5649 = vadd.f32 %v5600, %v5648
        %5650 = vadd.xlane.f32.xlu0 %v5649
        %v5651 = vpop.xlane.xlu0 %5650
        %v5652 = vsel %vm2471, %v5603, 0.0
        %v5653 = vadd.f32 %v5602, %v5652
        %5654 = vadd.xlane.f32.xlu0 %v5653
        %v5655 = vpop.xlane.xlu0 %5654
        %v5656 = vsel %vm2471, %v5605, 0.0
        %v5657 = vadd.f32 %v5604, %v5656
        %5658 = vadd.xlane.f32.xlu0 %v5657
        %v5659 = vpop.xlane.xlu0 %5658
        %v5660 = vsel %vm2471, %v5607, 0.0
        %v5661 = vadd.f32 %v5606, %v5660
        %5662 = vadd.xlane.f32.xlu0 %v5661
        %v5663 = vpop.xlane.xlu0 %5662
        %v5664 = vsel %vm2471, %v5609, 0.0
        %v5665 = vadd.f32 %v5608, %v5664
        %5666 = vadd.xlane.f32.xlu0 %v5665
        %v5667 = vpop.xlane.xlu0 %5666
        %v5668 = vsel %vm2471, %v5611, 0.0
        %v5669 = vadd.f32 %v5610, %v5668
        %5670 = vadd.xlane.f32.xlu0 %v5669
        %v5671 = vpop.xlane.xlu0 %5670
        %v5672 = vsel %vm2471, %v5613, 0.0
        %v5673 = vadd.f32 %v5612, %v5672
        %5674 = vadd.xlane.f32.xlu0 %v5673
        %v5675 = vpop.xlane.xlu0 %5674
        %v5676 = vsel %vm2471, %v5615, 0.0
        %v5677 = vadd.f32 %v5614, %v5676
        %5678 = vadd.xlane.f32.xlu0 %v5677
        %v5679 = vpop.xlane.xlu0 %5678
        %s5680 = scalar_lea.vmem %s2040, 4608 [#allocation4]
        %v5681 = vld [vmem:[%s5680] sm:$0xff]
        %v5682 = vld [vmem:[%s5680 + $0x8] sm:$0xff]
        %v5683 = vld [vmem:[%s5680 + $0x10] sm:$0xff]
        %v5684 = vld [vmem:[%s5680 + $0x18] sm:$0xff]
        %v5685 = vld [vmem:[%s5680 + $0x20] sm:$0xff]
        %v5686 = vld [vmem:[%s5680 + $0x28] sm:$0xff]
        %v5687 = vld [vmem:[%s5680 + $0x30] sm:$0xff]
        %v5688 = vld [vmem:[%s5680 + $0x38] sm:$0xff]
        %v5689 = vld [vmem:[%s5680 + $0x40] sm:$0xff]
        %v5690 = vld [vmem:[%s5680 + $0x48] sm:$0xff]
        %v5691 = vld [vmem:[%s5680 + $0x50] sm:$0xff]
        %v5692 = vld [vmem:[%s5680 + $0x58] sm:$0xff]
        %v5693 = vld [vmem:[%s5680 + $0x60] sm:$0xff]
        %v5694 = vld [vmem:[%s5680 + $0x68] sm:$0xff]
        %v5695 = vld [vmem:[%s5680 + $0x70] sm:$0xff]
        %v5696 = vld [vmem:[%s5680 + $0x78] sm:$0xff]
        %v5697 = vld [vmem:[%s5680 + $0x80] sm:$0xff]
        %v5698 = vld [vmem:[%s5680 + $0x88] sm:$0xff]
        %v5699 = vld [vmem:[%s5680 + $0x90] sm:$0xff]
        %v5700 = vld [vmem:[%s5680 + $0x98] sm:$0xff]
        %v5701 = vld [vmem:[%s5680 + $0xa0] sm:$0xff]
        %v5702 = vld [vmem:[%s5680 + $0xa8] sm:$0xff]
        %v5703 = vld [vmem:[%s5680 + $0xb0] sm:$0xff]
        %v5704 = vld [vmem:[%s5680 + $0xb8] sm:$0xff]
        %v5705 = vld [vmem:[%s5680 + $0xc0] sm:$0xff]
        %v5706 = vld [vmem:[%s5680 + $0xc8] sm:$0xff]
        %v5707 = vld [vmem:[%s5680 + $0xd0] sm:$0xff]
        %v5708 = vld [vmem:[%s5680 + $0xd8] sm:$0xff]
        %v5709 = vld [vmem:[%s5680 + $0xe0] sm:$0xff]
        %v5710 = vld [vmem:[%s5680 + $0xe8] sm:$0xff]
        %v5711 = vld [vmem:[%s5680 + $0xf0] sm:$0xff]
        %v5712 = vld [vmem:[%s5680 + $0xf8] sm:$0xff]
        %v5713 = vmul.f32 %v3263, %v5681
        %v5714 = vmul.f32 %v3264, %v5682
        %v5715 = vmul.f32 %v3265, %v5683
        %v5716 = vmul.f32 %v3266, %v5684
        %v5717 = vmul.f32 %v3267, %v5685
        %v5718 = vmul.f32 %v3268, %v5686
        %v5719 = vmul.f32 %v3269, %v5687
        %v5720 = vmul.f32 %v3270, %v5688
        %v5721 = vmul.f32 %v3271, %v5689
        %v5722 = vmul.f32 %v3272, %v5690
        %v5723 = vmul.f32 %v3273, %v5691
        %v5724 = vmul.f32 %v3274, %v5692
        %v5725 = vmul.f32 %v3275, %v5693
        %v5726 = vmul.f32 %v3276, %v5694
        %v5727 = vmul.f32 %v3277, %v5695
        %v5728 = vmul.f32 %v3278, %v5696
        %v5729 = vmul.f32 %v3279, %v5697
        %v5730 = vmul.f32 %v3280, %v5698
        %v5731 = vmul.f32 %v3281, %v5699
        %v5732 = vmul.f32 %v3282, %v5700
        %v5733 = vmul.f32 %v3283, %v5701
        %v5734 = vmul.f32 %v3284, %v5702
        %v5735 = vmul.f32 %v3285, %v5703
        %v5736 = vmul.f32 %v3286, %v5704
        %v5737 = vmul.f32 %v3287, %v5705
        %v5738 = vmul.f32 %v3288, %v5706
        %v5739 = vmul.f32 %v3289, %v5707
        %v5740 = vmul.f32 %v3290, %v5708
        %v5741 = vmul.f32 %v3291, %v5709
        %v5742 = vmul.f32 %v3292, %v5710
        %v5743 = vmul.f32 %v3293, %v5711
        %v5744 = vmul.f32 %v3294, %v5712
        %v5745 = vsel %vm2471, %v5714, 0.0
        %v5746 = vadd.f32 %v5713, %v5745
        %5747 = vadd.xlane.f32.xlu0 %v5746
        %v5748 = vpop.xlane.xlu0 %5747
        %v5749 = vsel %vm2471, %v5716, 0.0
        %v5750 = vadd.f32 %v5715, %v5749
        %5751 = vadd.xlane.f32.xlu0 %v5750
        %v5752 = vpop.xlane.xlu0 %5751
        %v5753 = vsel %vm2471, %v5718, 0.0
        %v5754 = vadd.f32 %v5717, %v5753
        %5755 = vadd.xlane.f32.xlu0 %v5754
        %v5756 = vpop.xlane.xlu0 %5755
        %v5757 = vsel %vm2471, %v5720, 0.0
        %v5758 = vadd.f32 %v5719, %v5757
        %5759 = vadd.xlane.f32.xlu0 %v5758
        %v5760 = vpop.xlane.xlu0 %5759
        %v5761 = vsel %vm2471, %v5722, 0.0
        %v5762 = vadd.f32 %v5721, %v5761
        %5763 = vadd.xlane.f32.xlu0 %v5762
        %v5764 = vpop.xlane.xlu0 %5763
        %v5765 = vsel %vm2471, %v5724, 0.0
        %v5766 = vadd.f32 %v5723, %v5765
        %5767 = vadd.xlane.f32.xlu0 %v5766
        %v5768 = vpop.xlane.xlu0 %5767
        %v5769 = vsel %vm2471, %v5726, 0.0
        %v5770 = vadd.f32 %v5725, %v5769
        %5771 = vadd.xlane.f32.xlu0 %v5770
        %v5772 = vpop.xlane.xlu0 %5771
        %v5773 = vsel %vm2471, %v5728, 0.0
        %v5774 = vadd.f32 %v5727, %v5773
        %5775 = vadd.xlane.f32.xlu0 %v5774
        %v5776 = vpop.xlane.xlu0 %5775
        %v5777 = vsel %vm2471, %v5730, 0.0
        %v5778 = vadd.f32 %v5729, %v5777
        %5779 = vadd.xlane.f32.xlu0 %v5778
        %v5780 = vpop.xlane.xlu0 %5779
        %v5781 = vsel %vm2471, %v5732, 0.0
        %v5782 = vadd.f32 %v5731, %v5781
        %5783 = vadd.xlane.f32.xlu0 %v5782
        %v5784 = vpop.xlane.xlu0 %5783
        %v5785 = vsel %vm2471, %v5734, 0.0
        %v5786 = vadd.f32 %v5733, %v5785
        %5787 = vadd.xlane.f32.xlu0 %v5786
        %v5788 = vpop.xlane.xlu0 %5787
        %v5789 = vsel %vm2471, %v5736, 0.0
        %v5790 = vadd.f32 %v5735, %v5789
        %5791 = vadd.xlane.f32.xlu0 %v5790
        %v5792 = vpop.xlane.xlu0 %5791
        %v5793 = vsel %vm2471, %v5738, 0.0
        %v5794 = vadd.f32 %v5737, %v5793
        %5795 = vadd.xlane.f32.xlu0 %v5794
        %v5796 = vpop.xlane.xlu0 %5795
        %v5797 = vsel %vm2471, %v5740, 0.0
        %v5798 = vadd.f32 %v5739, %v5797
        %5799 = vadd.xlane.f32.xlu0 %v5798
        %v5800 = vpop.xlane.xlu0 %5799
        %v5801 = vsel %vm2471, %v5742, 0.0
        %v5802 = vadd.f32 %v5741, %v5801
        %5803 = vadd.xlane.f32.xlu0 %v5802
        %v5804 = vpop.xlane.xlu0 %5803
        %v5805 = vsel %vm2471, %v5744, 0.0
        %v5806 = vadd.f32 %v5743, %v5805
        %5807 = vadd.xlane.f32.xlu0 %v5806
        %v5808 = vpop.xlane.xlu0 %5807
        %s5809 = scalar_lea.vmem %s2040, 4864 [#allocation4]
        %v5810 = vld [vmem:[%s5809] sm:$0xff]
        %v5811 = vld [vmem:[%s5809 + $0x8] sm:$0xff]
        %v5812 = vld [vmem:[%s5809 + $0x10] sm:$0xff]
        %v5813 = vld [vmem:[%s5809 + $0x18] sm:$0xff]
        %v5814 = vld [vmem:[%s5809 + $0x20] sm:$0xff]
        %v5815 = vld [vmem:[%s5809 + $0x28] sm:$0xff]
        %v5816 = vld [vmem:[%s5809 + $0x30] sm:$0xff]
        %v5817 = vld [vmem:[%s5809 + $0x38] sm:$0xff]
        %v5818 = vld [vmem:[%s5809 + $0x40] sm:$0xff]
        %v5819 = vld [vmem:[%s5809 + $0x48] sm:$0xff]
        %v5820 = vld [vmem:[%s5809 + $0x50] sm:$0xff]
        %v5821 = vld [vmem:[%s5809 + $0x58] sm:$0xff]
        %v5822 = vld [vmem:[%s5809 + $0x60] sm:$0xff]
        %v5823 = vld [vmem:[%s5809 + $0x68] sm:$0xff]
        %v5824 = vld [vmem:[%s5809 + $0x70] sm:$0xff]
        %v5825 = vld [vmem:[%s5809 + $0x78] sm:$0xff]
        %v5826 = vld [vmem:[%s5809 + $0x80] sm:$0xff]
        %v5827 = vld [vmem:[%s5809 + $0x88] sm:$0xff]
        %v5828 = vld [vmem:[%s5809 + $0x90] sm:$0xff]
        %v5829 = vld [vmem:[%s5809 + $0x98] sm:$0xff]
        %v5830 = vld [vmem:[%s5809 + $0xa0] sm:$0xff]
        %v5831 = vld [vmem:[%s5809 + $0xa8] sm:$0xff]
        %v5832 = vld [vmem:[%s5809 + $0xb0] sm:$0xff]
        %v5833 = vld [vmem:[%s5809 + $0xb8] sm:$0xff]
        %v5834 = vld [vmem:[%s5809 + $0xc0] sm:$0xff]
        %v5835 = vld [vmem:[%s5809 + $0xc8] sm:$0xff]
        %v5836 = vld [vmem:[%s5809 + $0xd0] sm:$0xff]
        %v5837 = vld [vmem:[%s5809 + $0xd8] sm:$0xff]
        %v5838 = vld [vmem:[%s5809 + $0xe0] sm:$0xff]
        %v5839 = vld [vmem:[%s5809 + $0xe8] sm:$0xff]
        %v5840 = vld [vmem:[%s5809 + $0xf0] sm:$0xff]
        %v5841 = vld [vmem:[%s5809 + $0xf8] sm:$0xff]
        %v5842 = vmul.f32 %v3263, %v5810
        %v5843 = vmul.f32 %v3264, %v5811
        %v5844 = vmul.f32 %v3265, %v5812
        %v5845 = vmul.f32 %v3266, %v5813
        %v5846 = vmul.f32 %v3267, %v5814
        %v5847 = vmul.f32 %v3268, %v5815
        %v5848 = vmul.f32 %v3269, %v5816
        %v5849 = vmul.f32 %v3270, %v5817
        %v5850 = vmul.f32 %v3271, %v5818
        %v5851 = vmul.f32 %v3272, %v5819
        %v5852 = vmul.f32 %v3273, %v5820
        %v5853 = vmul.f32 %v3274, %v5821
        %v5854 = vmul.f32 %v3275, %v5822
        %v5855 = vmul.f32 %v3276, %v5823
        %v5856 = vmul.f32 %v3277, %v5824
        %v5857 = vmul.f32 %v3278, %v5825
        %v5858 = vmul.f32 %v3279, %v5826
        %v5859 = vmul.f32 %v3280, %v5827
        %v5860 = vmul.f32 %v3281, %v5828
        %v5861 = vmul.f32 %v3282, %v5829
        %v5862 = vmul.f32 %v3283, %v5830
        %v5863 = vmul.f32 %v3284, %v5831
        %v5864 = vmul.f32 %v3285, %v5832
        %v5865 = vmul.f32 %v3286, %v5833
        %v5866 = vmul.f32 %v3287, %v5834
        %v5867 = vmul.f32 %v3288, %v5835
        %v5868 = vmul.f32 %v3289, %v5836
        %v5869 = vmul.f32 %v3290, %v5837
        %v5870 = vmul.f32 %v3291, %v5838
        %v5871 = vmul.f32 %v3292, %v5839
        %v5872 = vmul.f32 %v3293, %v5840
        %v5873 = vmul.f32 %v3294, %v5841
        %v5874 = vsel %vm2471, %v5843, 0.0
        %v5875 = vadd.f32 %v5842, %v5874
        %5876 = vadd.xlane.f32.xlu0 %v5875
        %v5877 = vpop.xlane.xlu0 %5876
        %v5878 = vsel %vm2471, %v5845, 0.0
        %v5879 = vadd.f32 %v5844, %v5878
        %5880 = vadd.xlane.f32.xlu0 %v5879
        %v5881 = vpop.xlane.xlu0 %5880
        %v5882 = vsel %vm2471, %v5847, 0.0
        %v5883 = vadd.f32 %v5846, %v5882
        %5884 = vadd.xlane.f32.xlu0 %v5883
        %v5885 = vpop.xlane.xlu0 %5884
        %v5886 = vsel %vm2471, %v5849, 0.0
        %v5887 = vadd.f32 %v5848, %v5886
        %5888 = vadd.xlane.f32.xlu0 %v5887
        %v5889 = vpop.xlane.xlu0 %5888
        %v5890 = vsel %vm2471, %v5851, 0.0
        %v5891 = vadd.f32 %v5850, %v5890
        %5892 = vadd.xlane.f32.xlu0 %v5891
        %v5893 = vpop.xlane.xlu0 %5892
        %v5894 = vsel %vm2471, %v5853, 0.0
        %v5895 = vadd.f32 %v5852, %v5894
        %5896 = vadd.xlane.f32.xlu0 %v5895
        %v5897 = vpop.xlane.xlu0 %5896
        %v5898 = vsel %vm2471, %v5855, 0.0
        %v5899 = vadd.f32 %v5854, %v5898
        %5900 = vadd.xlane.f32.xlu0 %v5899
        %v5901 = vpop.xlane.xlu0 %5900
        %v5902 = vsel %vm2471, %v5857, 0.0
        %v5903 = vadd.f32 %v5856, %v5902
        %5904 = vadd.xlane.f32.xlu0 %v5903
        %v5905 = vpop.xlane.xlu0 %5904
        %v5906 = vsel %vm2471, %v5859, 0.0
        %v5907 = vadd.f32 %v5858, %v5906
        %5908 = vadd.xlane.f32.xlu0 %v5907
        %v5909 = vpop.xlane.xlu0 %5908
        %v5910 = vsel %vm2471, %v5861, 0.0
        %v5911 = vadd.f32 %v5860, %v5910
        %5912 = vadd.xlane.f32.xlu0 %v5911
        %v5913 = vpop.xlane.xlu0 %5912
        %v5914 = vsel %vm2471, %v5863, 0.0
        %v5915 = vadd.f32 %v5862, %v5914
        %5916 = vadd.xlane.f32.xlu0 %v5915
        %v5917 = vpop.xlane.xlu0 %5916
        %v5918 = vsel %vm2471, %v5865, 0.0
        %v5919 = vadd.f32 %v5864, %v5918
        %5920 = vadd.xlane.f32.xlu0 %v5919
        %v5921 = vpop.xlane.xlu0 %5920
        %v5922 = vsel %vm2471, %v5867, 0.0
        %v5923 = vadd.f32 %v5866, %v5922
        %5924 = vadd.xlane.f32.xlu0 %v5923
        %v5925 = vpop.xlane.xlu0 %5924
        %v5926 = vsel %vm2471, %v5869, 0.0
        %v5927 = vadd.f32 %v5868, %v5926
        %5928 = vadd.xlane.f32.xlu0 %v5927
        %v5929 = vpop.xlane.xlu0 %5928
        %v5930 = vsel %vm2471, %v5871, 0.0
        %v5931 = vadd.f32 %v5870, %v5930
        %5932 = vadd.xlane.f32.xlu0 %v5931
        %v5933 = vpop.xlane.xlu0 %5932
        %v5934 = vsel %vm2471, %v5873, 0.0
        %v5935 = vadd.f32 %v5872, %v5934
        %5936 = vadd.xlane.f32.xlu0 %v5935
        %v5937 = vpop.xlane.xlu0 %5936
        %s5938 = scalar_lea.vmem %s2040, 5120 [#allocation4]
        %v5939 = vld [vmem:[%s5938] sm:$0xff]
        %v5940 = vld [vmem:[%s5938 + $0x8] sm:$0xff]
        %v5941 = vld [vmem:[%s5938 + $0x10] sm:$0xff]
        %v5942 = vld [vmem:[%s5938 + $0x18] sm:$0xff]
        %v5943 = vld [vmem:[%s5938 + $0x20] sm:$0xff]
        %v5944 = vld [vmem:[%s5938 + $0x28] sm:$0xff]
        %v5945 = vld [vmem:[%s5938 + $0x30] sm:$0xff]
        %v5946 = vld [vmem:[%s5938 + $0x38] sm:$0xff]
        %v5947 = vld [vmem:[%s5938 + $0x40] sm:$0xff]
        %v5948 = vld [vmem:[%s5938 + $0x48] sm:$0xff]
        %v5949 = vld [vmem:[%s5938 + $0x50] sm:$0xff]
        %v5950 = vld [vmem:[%s5938 + $0x58] sm:$0xff]
        %v5951 = vld [vmem:[%s5938 + $0x60] sm:$0xff]
        %v5952 = vld [vmem:[%s5938 + $0x68] sm:$0xff]
        %v5953 = vld [vmem:[%s5938 + $0x70] sm:$0xff]
        %v5954 = vld [vmem:[%s5938 + $0x78] sm:$0xff]
        %v5955 = vld [vmem:[%s5938 + $0x80] sm:$0xff]
        %v5956 = vld [vmem:[%s5938 + $0x88] sm:$0xff]
        %v5957 = vld [vmem:[%s5938 + $0x90] sm:$0xff]
        %v5958 = vld [vmem:[%s5938 + $0x98] sm:$0xff]
        %v5959 = vld [vmem:[%s5938 + $0xa0] sm:$0xff]
        %v5960 = vld [vmem:[%s5938 + $0xa8] sm:$0xff]
        %v5961 = vld [vmem:[%s5938 + $0xb0] sm:$0xff]
        %v5962 = vld [vmem:[%s5938 + $0xb8] sm:$0xff]
        %v5963 = vld [vmem:[%s5938 + $0xc0] sm:$0xff]
        %v5964 = vld [vmem:[%s5938 + $0xc8] sm:$0xff]
        %v5965 = vld [vmem:[%s5938 + $0xd0] sm:$0xff]
        %v5966 = vld [vmem:[%s5938 + $0xd8] sm:$0xff]
        %v5967 = vld [vmem:[%s5938 + $0xe0] sm:$0xff]
        %v5968 = vld [vmem:[%s5938 + $0xe8] sm:$0xff]
        %v5969 = vld [vmem:[%s5938 + $0xf0] sm:$0xff]
        %v5970 = vld [vmem:[%s5938 + $0xf8] sm:$0xff]
        %v5971 = vmul.f32 %v3263, %v5939
        %v5972 = vmul.f32 %v3264, %v5940
        %v5973 = vmul.f32 %v3265, %v5941
        %v5974 = vmul.f32 %v3266, %v5942
        %v5975 = vmul.f32 %v3267, %v5943
        %v5976 = vmul.f32 %v3268, %v5944
        %v5977 = vmul.f32 %v3269, %v5945
        %v5978 = vmul.f32 %v3270, %v5946
        %v5979 = vmul.f32 %v3271, %v5947
        %v5980 = vmul.f32 %v3272, %v5948
        %v5981 = vmul.f32 %v3273, %v5949
        %v5982 = vmul.f32 %v3274, %v5950
        %v5983 = vmul.f32 %v3275, %v5951
        %v5984 = vmul.f32 %v3276, %v5952
        %v5985 = vmul.f32 %v3277, %v5953
        %v5986 = vmul.f32 %v3278, %v5954
        %v5987 = vmul.f32 %v3279, %v5955
        %v5988 = vmul.f32 %v3280, %v5956
        %v5989 = vmul.f32 %v3281, %v5957
        %v5990 = vmul.f32 %v3282, %v5958
        %v5991 = vmul.f32 %v3283, %v5959
        %v5992 = vmul.f32 %v3284, %v5960
        %v5993 = vmul.f32 %v3285, %v5961
        %v5994 = vmul.f32 %v3286, %v5962
        %v5995 = vmul.f32 %v3287, %v5963
        %v5996 = vmul.f32 %v3288, %v5964
        %v5997 = vmul.f32 %v3289, %v5965
        %v5998 = vmul.f32 %v3290, %v5966
        %v5999 = vmul.f32 %v3291, %v5967
        %v6000 = vmul.f32 %v3292, %v5968
        %v6001 = vmul.f32 %v3293, %v5969
        %v6002 = vmul.f32 %v3294, %v5970
        %v6003 = vsel %vm2471, %v5972, 0.0
        %v6004 = vadd.f32 %v5971, %v6003
        %6005 = vadd.xlane.f32.xlu0 %v6004
        %v6006 = vpop.xlane.xlu0 %6005
        %v6007 = vsel %vm2471, %v5974, 0.0
        %v6008 = vadd.f32 %v5973, %v6007
        %6009 = vadd.xlane.f32.xlu0 %v6008
        %v6010 = vpop.xlane.xlu0 %6009
        %v6011 = vsel %vm2471, %v5976, 0.0
        %v6012 = vadd.f32 %v5975, %v6011
        %6013 = vadd.xlane.f32.xlu0 %v6012
        %v6014 = vpop.xlane.xlu0 %6013
        %v6015 = vsel %vm2471, %v5978, 0.0
        %v6016 = vadd.f32 %v5977, %v6015
        %6017 = vadd.xlane.f32.xlu0 %v6016
        %v6018 = vpop.xlane.xlu0 %6017
        %v6019 = vsel %vm2471, %v5980, 0.0
        %v6020 = vadd.f32 %v5979, %v6019
        %6021 = vadd.xlane.f32.xlu0 %v6020
        %v6022 = vpop.xlane.xlu0 %6021
        %v6023 = vsel %vm2471, %v5982, 0.0
        %v6024 = vadd.f32 %v5981, %v6023
        %6025 = vadd.xlane.f32.xlu0 %v6024
        %v6026 = vpop.xlane.xlu0 %6025
        %v6027 = vsel %vm2471, %v5984, 0.0
        %v6028 = vadd.f32 %v5983, %v6027
        %6029 = vadd.xlane.f32.xlu0 %v6028
        %v6030 = vpop.xlane.xlu0 %6029
        %v6031 = vsel %vm2471, %v5986, 0.0
        %v6032 = vadd.f32 %v5985, %v6031
        %6033 = vadd.xlane.f32.xlu0 %v6032
        %v6034 = vpop.xlane.xlu0 %6033
        %v6035 = vsel %vm2471, %v5988, 0.0
        %v6036 = vadd.f32 %v5987, %v6035
        %6037 = vadd.xlane.f32.xlu0 %v6036
        %v6038 = vpop.xlane.xlu0 %6037
        %v6039 = vsel %vm2471, %v5990, 0.0
        %v6040 = vadd.f32 %v5989, %v6039
        %6041 = vadd.xlane.f32.xlu0 %v6040
        %v6042 = vpop.xlane.xlu0 %6041
        %v6043 = vsel %vm2471, %v5992, 0.0
        %v6044 = vadd.f32 %v5991, %v6043
        %6045 = vadd.xlane.f32.xlu0 %v6044
        %v6046 = vpop.xlane.xlu0 %6045
        %v6047 = vsel %vm2471, %v5994, 0.0
        %v6048 = vadd.f32 %v5993, %v6047
        %6049 = vadd.xlane.f32.xlu0 %v6048
        %v6050 = vpop.xlane.xlu0 %6049
        %v6051 = vsel %vm2471, %v5996, 0.0
        %v6052 = vadd.f32 %v5995, %v6051
        %6053 = vadd.xlane.f32.xlu0 %v6052
        %v6054 = vpop.xlane.xlu0 %6053
        %v6055 = vsel %vm2471, %v5998, 0.0
        %v6056 = vadd.f32 %v5997, %v6055
        %6057 = vadd.xlane.f32.xlu0 %v6056
        %v6058 = vpop.xlane.xlu0 %6057
        %v6059 = vsel %vm2471, %v6000, 0.0
        %v6060 = vadd.f32 %v5999, %v6059
        %6061 = vadd.xlane.f32.xlu0 %v6060
        %v6062 = vpop.xlane.xlu0 %6061
        %v6063 = vsel %vm2471, %v6002, 0.0
        %v6064 = vadd.f32 %v6001, %v6063
        %6065 = vadd.xlane.f32.xlu0 %v6064
        %v6066 = vpop.xlane.xlu0 %6065
        %s6067 = scalar_lea.vmem %s2040, 5376 [#allocation4]
        %v6068 = vld [vmem:[%s6067] sm:$0xff]
        %v6069 = vld [vmem:[%s6067 + $0x8] sm:$0xff]
        %v6070 = vld [vmem:[%s6067 + $0x10] sm:$0xff]
        %v6071 = vld [vmem:[%s6067 + $0x18] sm:$0xff]
        %v6072 = vld [vmem:[%s6067 + $0x20] sm:$0xff]
        %v6073 = vld [vmem:[%s6067 + $0x28] sm:$0xff]
        %v6074 = vld [vmem:[%s6067 + $0x30] sm:$0xff]
        %v6075 = vld [vmem:[%s6067 + $0x38] sm:$0xff]
        %v6076 = vld [vmem:[%s6067 + $0x40] sm:$0xff]
        %v6077 = vld [vmem:[%s6067 + $0x48] sm:$0xff]
        %v6078 = vld [vmem:[%s6067 + $0x50] sm:$0xff]
        %v6079 = vld [vmem:[%s6067 + $0x58] sm:$0xff]
        %v6080 = vld [vmem:[%s6067 + $0x60] sm:$0xff]
        %v6081 = vld [vmem:[%s6067 + $0x68] sm:$0xff]
        %v6082 = vld [vmem:[%s6067 + $0x70] sm:$0xff]
        %v6083 = vld [vmem:[%s6067 + $0x78] sm:$0xff]
        %v6084 = vld [vmem:[%s6067 + $0x80] sm:$0xff]
        %v6085 = vld [vmem:[%s6067 + $0x88] sm:$0xff]
        %v6086 = vld [vmem:[%s6067 + $0x90] sm:$0xff]
        %v6087 = vld [vmem:[%s6067 + $0x98] sm:$0xff]
        %v6088 = vld [vmem:[%s6067 + $0xa0] sm:$0xff]
        %v6089 = vld [vmem:[%s6067 + $0xa8] sm:$0xff]
        %v6090 = vld [vmem:[%s6067 + $0xb0] sm:$0xff]
        %v6091 = vld [vmem:[%s6067 + $0xb8] sm:$0xff]
        %v6092 = vld [vmem:[%s6067 + $0xc0] sm:$0xff]
        %v6093 = vld [vmem:[%s6067 + $0xc8] sm:$0xff]
        %v6094 = vld [vmem:[%s6067 + $0xd0] sm:$0xff]
        %v6095 = vld [vmem:[%s6067 + $0xd8] sm:$0xff]
        %v6096 = vld [vmem:[%s6067 + $0xe0] sm:$0xff]
        %v6097 = vld [vmem:[%s6067 + $0xe8] sm:$0xff]
        %v6098 = vld [vmem:[%s6067 + $0xf0] sm:$0xff]
        %v6099 = vld [vmem:[%s6067 + $0xf8] sm:$0xff]
        %v6100 = vmul.f32 %v3263, %v6068
        %v6101 = vmul.f32 %v3264, %v6069
        %v6102 = vmul.f32 %v3265, %v6070
        %v6103 = vmul.f32 %v3266, %v6071
        %v6104 = vmul.f32 %v3267, %v6072
        %v6105 = vmul.f32 %v3268, %v6073
        %v6106 = vmul.f32 %v3269, %v6074
        %v6107 = vmul.f32 %v3270, %v6075
        %v6108 = vmul.f32 %v3271, %v6076
        %v6109 = vmul.f32 %v3272, %v6077
        %v6110 = vmul.f32 %v3273, %v6078
        %v6111 = vmul.f32 %v3274, %v6079
        %v6112 = vmul.f32 %v3275, %v6080
        %v6113 = vmul.f32 %v3276, %v6081
        %v6114 = vmul.f32 %v3277, %v6082
        %v6115 = vmul.f32 %v3278, %v6083
        %v6116 = vmul.f32 %v3279, %v6084
        %v6117 = vmul.f32 %v3280, %v6085
        %v6118 = vmul.f32 %v3281, %v6086
        %v6119 = vmul.f32 %v3282, %v6087
        %v6120 = vmul.f32 %v3283, %v6088
        %v6121 = vmul.f32 %v3284, %v6089
        %v6122 = vmul.f32 %v3285, %v6090
        %v6123 = vmul.f32 %v3286, %v6091
        %v6124 = vmul.f32 %v3287, %v6092
        %v6125 = vmul.f32 %v3288, %v6093
        %v6126 = vmul.f32 %v3289, %v6094
        %v6127 = vmul.f32 %v3290, %v6095
        %v6128 = vmul.f32 %v3291, %v6096
        %v6129 = vmul.f32 %v3292, %v6097
        %v6130 = vmul.f32 %v3293, %v6098
        %v6131 = vmul.f32 %v3294, %v6099
        %v6132 = vsel %vm2471, %v6101, 0.0
        %v6133 = vadd.f32 %v6100, %v6132
        %6134 = vadd.xlane.f32.xlu0 %v6133
        %v6135 = vpop.xlane.xlu0 %6134
        %v6136 = vsel %vm2471, %v6103, 0.0
        %v6137 = vadd.f32 %v6102, %v6136
        %6138 = vadd.xlane.f32.xlu0 %v6137
        %v6139 = vpop.xlane.xlu0 %6138
        %v6140 = vsel %vm2471, %v6105, 0.0
        %v6141 = vadd.f32 %v6104, %v6140
        %6142 = vadd.xlane.f32.xlu0 %v6141
        %v6143 = vpop.xlane.xlu0 %6142
        %v6144 = vsel %vm2471, %v6107, 0.0
        %v6145 = vadd.f32 %v6106, %v6144
        %6146 = vadd.xlane.f32.xlu0 %v6145
        %v6147 = vpop.xlane.xlu0 %6146
        %v6148 = vsel %vm2471, %v6109, 0.0
        %v6149 = vadd.f32 %v6108, %v6148
        %6150 = vadd.xlane.f32.xlu0 %v6149
        %v6151 = vpop.xlane.xlu0 %6150
        %v6152 = vsel %vm2471, %v6111, 0.0
        %v6153 = vadd.f32 %v6110, %v6152
        %6154 = vadd.xlane.f32.xlu0 %v6153
        %v6155 = vpop.xlane.xlu0 %6154
        %v6156 = vsel %vm2471, %v6113, 0.0
        %v6157 = vadd.f32 %v6112, %v6156
        %6158 = vadd.xlane.f32.xlu0 %v6157
        %v6159 = vpop.xlane.xlu0 %6158
        %v6160 = vsel %vm2471, %v6115, 0.0
        %v6161 = vadd.f32 %v6114, %v6160
        %6162 = vadd.xlane.f32.xlu0 %v6161
        %v6163 = vpop.xlane.xlu0 %6162
        %v6164 = vsel %vm2471, %v6117, 0.0
        %v6165 = vadd.f32 %v6116, %v6164
        %6166 = vadd.xlane.f32.xlu0 %v6165
        %v6167 = vpop.xlane.xlu0 %6166
        %v6168 = vsel %vm2471, %v6119, 0.0
        %v6169 = vadd.f32 %v6118, %v6168
        %6170 = vadd.xlane.f32.xlu0 %v6169
        %v6171 = vpop.xlane.xlu0 %6170
        %v6172 = vsel %vm2471, %v6121, 0.0
        %v6173 = vadd.f32 %v6120, %v6172
        %6174 = vadd.xlane.f32.xlu0 %v6173
        %v6175 = vpop.xlane.xlu0 %6174
        %v6176 = vsel %vm2471, %v6123, 0.0
        %v6177 = vadd.f32 %v6122, %v6176
        %6178 = vadd.xlane.f32.xlu0 %v6177
        %v6179 = vpop.xlane.xlu0 %6178
        %v6180 = vsel %vm2471, %v6125, 0.0
        %v6181 = vadd.f32 %v6124, %v6180
        %6182 = vadd.xlane.f32.xlu0 %v6181
        %v6183 = vpop.xlane.xlu0 %6182
        %v6184 = vsel %vm2471, %v6127, 0.0
        %v6185 = vadd.f32 %v6126, %v6184
        %6186 = vadd.xlane.f32.xlu0 %v6185
        %v6187 = vpop.xlane.xlu0 %6186
        %v6188 = vsel %vm2471, %v6129, 0.0
        %v6189 = vadd.f32 %v6128, %v6188
        %6190 = vadd.xlane.f32.xlu0 %v6189
        %v6191 = vpop.xlane.xlu0 %6190
        %v6192 = vsel %vm2471, %v6131, 0.0
        %v6193 = vadd.f32 %v6130, %v6192
        %6194 = vadd.xlane.f32.xlu0 %v6193
        %v6195 = vpop.xlane.xlu0 %6194
        %s6196 = scalar_lea.vmem %s2040, 5632 [#allocation4]
        %v6197 = vld [vmem:[%s6196] sm:$0xff]
        %v6198 = vld [vmem:[%s6196 + $0x8] sm:$0xff]
        %v6199 = vld [vmem:[%s6196 + $0x10] sm:$0xff]
        %v6200 = vld [vmem:[%s6196 + $0x18] sm:$0xff]
        %v6201 = vld [vmem:[%s6196 + $0x20] sm:$0xff]
        %v6202 = vld [vmem:[%s6196 + $0x28] sm:$0xff]
        %v6203 = vld [vmem:[%s6196 + $0x30] sm:$0xff]
        %v6204 = vld [vmem:[%s6196 + $0x38] sm:$0xff]
        %v6205 = vld [vmem:[%s6196 + $0x40] sm:$0xff]
        %v6206 = vld [vmem:[%s6196 + $0x48] sm:$0xff]
        %v6207 = vld [vmem:[%s6196 + $0x50] sm:$0xff]
        %v6208 = vld [vmem:[%s6196 + $0x58] sm:$0xff]
        %v6209 = vld [vmem:[%s6196 + $0x60] sm:$0xff]
        %v6210 = vld [vmem:[%s6196 + $0x68] sm:$0xff]
        %v6211 = vld [vmem:[%s6196 + $0x70] sm:$0xff]
        %v6212 = vld [vmem:[%s6196 + $0x78] sm:$0xff]
        %v6213 = vld [vmem:[%s6196 + $0x80] sm:$0xff]
        %v6214 = vld [vmem:[%s6196 + $0x88] sm:$0xff]
        %v6215 = vld [vmem:[%s6196 + $0x90] sm:$0xff]
        %v6216 = vld [vmem:[%s6196 + $0x98] sm:$0xff]
        %v6217 = vld [vmem:[%s6196 + $0xa0] sm:$0xff]
        %v6218 = vld [vmem:[%s6196 + $0xa8] sm:$0xff]
        %v6219 = vld [vmem:[%s6196 + $0xb0] sm:$0xff]
        %v6220 = vld [vmem:[%s6196 + $0xb8] sm:$0xff]
        %v6221 = vld [vmem:[%s6196 + $0xc0] sm:$0xff]
        %v6222 = vld [vmem:[%s6196 + $0xc8] sm:$0xff]
        %v6223 = vld [vmem:[%s6196 + $0xd0] sm:$0xff]
        %v6224 = vld [vmem:[%s6196 + $0xd8] sm:$0xff]
        %v6225 = vld [vmem:[%s6196 + $0xe0] sm:$0xff]
        %v6226 = vld [vmem:[%s6196 + $0xe8] sm:$0xff]
        %v6227 = vld [vmem:[%s6196 + $0xf0] sm:$0xff]
        %v6228 = vld [vmem:[%s6196 + $0xf8] sm:$0xff]
        %v6229 = vmul.f32 %v3263, %v6197
        %v6230 = vmul.f32 %v3264, %v6198
        %v6231 = vmul.f32 %v3265, %v6199
        %v6232 = vmul.f32 %v3266, %v6200
        %v6233 = vmul.f32 %v3267, %v6201
        %v6234 = vmul.f32 %v3268, %v6202
        %v6235 = vmul.f32 %v3269, %v6203
        %v6236 = vmul.f32 %v3270, %v6204
        %v6237 = vmul.f32 %v3271, %v6205
        %v6238 = vmul.f32 %v3272, %v6206
        %v6239 = vmul.f32 %v3273, %v6207
        %v6240 = vmul.f32 %v3274, %v6208
        %v6241 = vmul.f32 %v3275, %v6209
        %v6242 = vmul.f32 %v3276, %v6210
        %v6243 = vmul.f32 %v3277, %v6211
        %v6244 = vmul.f32 %v3278, %v6212
        %v6245 = vmul.f32 %v3279, %v6213
        %v6246 = vmul.f32 %v3280, %v6214
        %v6247 = vmul.f32 %v3281, %v6215
        %v6248 = vmul.f32 %v3282, %v6216
        %v6249 = vmul.f32 %v3283, %v6217
        %v6250 = vmul.f32 %v3284, %v6218
        %v6251 = vmul.f32 %v3285, %v6219
        %v6252 = vmul.f32 %v3286, %v6220
        %v6253 = vmul.f32 %v3287, %v6221
        %v6254 = vmul.f32 %v3288, %v6222
        %v6255 = vmul.f32 %v3289, %v6223
        %v6256 = vmul.f32 %v3290, %v6224
        %v6257 = vmul.f32 %v3291, %v6225
        %v6258 = vmul.f32 %v3292, %v6226
        %v6259 = vmul.f32 %v3293, %v6227
        %v6260 = vmul.f32 %v3294, %v6228
        %v6261 = vsel %vm2471, %v6230, 0.0
        %v6262 = vadd.f32 %v6229, %v6261
        %6263 = vadd.xlane.f32.xlu0 %v6262
        %v6264 = vpop.xlane.xlu0 %6263
        %v6265 = vsel %vm2471, %v6232, 0.0
        %v6266 = vadd.f32 %v6231, %v6265
        %6267 = vadd.xlane.f32.xlu0 %v6266
        %v6268 = vpop.xlane.xlu0 %6267
        %v6269 = vsel %vm2471, %v6234, 0.0
        %v6270 = vadd.f32 %v6233, %v6269
        %6271 = vadd.xlane.f32.xlu0 %v6270
        %v6272 = vpop.xlane.xlu0 %6271
        %v6273 = vsel %vm2471, %v6236, 0.0
        %v6274 = vadd.f32 %v6235, %v6273
        %6275 = vadd.xlane.f32.xlu0 %v6274
        %v6276 = vpop.xlane.xlu0 %6275
        %v6277 = vsel %vm2471, %v6238, 0.0
        %v6278 = vadd.f32 %v6237, %v6277
        %6279 = vadd.xlane.f32.xlu0 %v6278
        %v6280 = vpop.xlane.xlu0 %6279
        %v6281 = vsel %vm2471, %v6240, 0.0
        %v6282 = vadd.f32 %v6239, %v6281
        %6283 = vadd.xlane.f32.xlu0 %v6282
        %v6284 = vpop.xlane.xlu0 %6283
        %v6285 = vsel %vm2471, %v6242, 0.0
        %v6286 = vadd.f32 %v6241, %v6285
        %6287 = vadd.xlane.f32.xlu0 %v6286
        %v6288 = vpop.xlane.xlu0 %6287
        %v6289 = vsel %vm2471, %v6244, 0.0
        %v6290 = vadd.f32 %v6243, %v6289
        %6291 = vadd.xlane.f32.xlu0 %v6290
        %v6292 = vpop.xlane.xlu0 %6291
        %v6293 = vsel %vm2471, %v6246, 0.0
        %v6294 = vadd.f32 %v6245, %v6293
        %6295 = vadd.xlane.f32.xlu0 %v6294
        %v6296 = vpop.xlane.xlu0 %6295
        %v6297 = vsel %vm2471, %v6248, 0.0
        %v6298 = vadd.f32 %v6247, %v6297
        %6299 = vadd.xlane.f32.xlu0 %v6298
        %v6300 = vpop.xlane.xlu0 %6299
        %v6301 = vsel %vm2471, %v6250, 0.0
        %v6302 = vadd.f32 %v6249, %v6301
        %6303 = vadd.xlane.f32.xlu0 %v6302
        %v6304 = vpop.xlane.xlu0 %6303
        %v6305 = vsel %vm2471, %v6252, 0.0
        %v6306 = vadd.f32 %v6251, %v6305
        %6307 = vadd.xlane.f32.xlu0 %v6306
        %v6308 = vpop.xlane.xlu0 %6307
        %v6309 = vsel %vm2471, %v6254, 0.0
        %v6310 = vadd.f32 %v6253, %v6309
        %6311 = vadd.xlane.f32.xlu0 %v6310
        %v6312 = vpop.xlane.xlu0 %6311
        %v6313 = vsel %vm2471, %v6256, 0.0
        %v6314 = vadd.f32 %v6255, %v6313
        %6315 = vadd.xlane.f32.xlu0 %v6314
        %v6316 = vpop.xlane.xlu0 %6315
        %v6317 = vsel %vm2471, %v6258, 0.0
        %v6318 = vadd.f32 %v6257, %v6317
        %6319 = vadd.xlane.f32.xlu0 %v6318
        %v6320 = vpop.xlane.xlu0 %6319
        %v6321 = vsel %vm2471, %v6260, 0.0
        %v6322 = vadd.f32 %v6259, %v6321
        %6323 = vadd.xlane.f32.xlu0 %v6322
        %v6324 = vpop.xlane.xlu0 %6323
        %s6325 = scalar_lea.vmem %s2040, 5888 [#allocation4]
        %v6326 = vld [vmem:[%s6325] sm:$0xff]
        %v6327 = vld [vmem:[%s6325 + $0x8] sm:$0xff]
        %v6328 = vld [vmem:[%s6325 + $0x10] sm:$0xff]
        %v6329 = vld [vmem:[%s6325 + $0x18] sm:$0xff]
        %v6330 = vld [vmem:[%s6325 + $0x20] sm:$0xff]
        %v6331 = vld [vmem:[%s6325 + $0x28] sm:$0xff]
        %v6332 = vld [vmem:[%s6325 + $0x30] sm:$0xff]
        %v6333 = vld [vmem:[%s6325 + $0x38] sm:$0xff]
        %v6334 = vld [vmem:[%s6325 + $0x40] sm:$0xff]
        %v6335 = vld [vmem:[%s6325 + $0x48] sm:$0xff]
        %v6336 = vld [vmem:[%s6325 + $0x50] sm:$0xff]
        %v6337 = vld [vmem:[%s6325 + $0x58] sm:$0xff]
        %v6338 = vld [vmem:[%s6325 + $0x60] sm:$0xff]
        %v6339 = vld [vmem:[%s6325 + $0x68] sm:$0xff]
        %v6340 = vld [vmem:[%s6325 + $0x70] sm:$0xff]
        %v6341 = vld [vmem:[%s6325 + $0x78] sm:$0xff]
        %v6342 = vld [vmem:[%s6325 + $0x80] sm:$0xff]
        %v6343 = vld [vmem:[%s6325 + $0x88] sm:$0xff]
        %v6344 = vld [vmem:[%s6325 + $0x90] sm:$0xff]
        %v6345 = vld [vmem:[%s6325 + $0x98] sm:$0xff]
        %v6346 = vld [vmem:[%s6325 + $0xa0] sm:$0xff]
        %v6347 = vld [vmem:[%s6325 + $0xa8] sm:$0xff]
        %v6348 = vld [vmem:[%s6325 + $0xb0] sm:$0xff]
        %v6349 = vld [vmem:[%s6325 + $0xb8] sm:$0xff]
        %v6350 = vld [vmem:[%s6325 + $0xc0] sm:$0xff]
        %v6351 = vld [vmem:[%s6325 + $0xc8] sm:$0xff]
        %v6352 = vld [vmem:[%s6325 + $0xd0] sm:$0xff]
        %v6353 = vld [vmem:[%s6325 + $0xd8] sm:$0xff]
        %v6354 = vld [vmem:[%s6325 + $0xe0] sm:$0xff]
        %v6355 = vld [vmem:[%s6325 + $0xe8] sm:$0xff]
        %v6356 = vld [vmem:[%s6325 + $0xf0] sm:$0xff]
        %v6357 = vld [vmem:[%s6325 + $0xf8] sm:$0xff]
        %v6358 = vmul.f32 %v3263, %v6326
        %v6359 = vmul.f32 %v3264, %v6327
        %v6360 = vmul.f32 %v3265, %v6328
        %v6361 = vmul.f32 %v3266, %v6329
        %v6362 = vmul.f32 %v3267, %v6330
        %v6363 = vmul.f32 %v3268, %v6331
        %v6364 = vmul.f32 %v3269, %v6332
        %v6365 = vmul.f32 %v3270, %v6333
        %v6366 = vmul.f32 %v3271, %v6334
        %v6367 = vmul.f32 %v3272, %v6335
        %v6368 = vmul.f32 %v3273, %v6336
        %v6369 = vmul.f32 %v3274, %v6337
        %v6370 = vmul.f32 %v3275, %v6338
        %v6371 = vmul.f32 %v3276, %v6339
        %v6372 = vmul.f32 %v3277, %v6340
        %v6373 = vmul.f32 %v3278, %v6341
        %v6374 = vmul.f32 %v3279, %v6342
        %v6375 = vmul.f32 %v3280, %v6343
        %v6376 = vmul.f32 %v3281, %v6344
        %v6377 = vmul.f32 %v3282, %v6345
        %v6378 = vmul.f32 %v3283, %v6346
        %v6379 = vmul.f32 %v3284, %v6347
        %v6380 = vmul.f32 %v3285, %v6348
        %v6381 = vmul.f32 %v3286, %v6349
        %v6382 = vmul.f32 %v3287, %v6350
        %v6383 = vmul.f32 %v3288, %v6351
        %v6384 = vmul.f32 %v3289, %v6352
        %v6385 = vmul.f32 %v3290, %v6353
        %v6386 = vmul.f32 %v3291, %v6354
        %v6387 = vmul.f32 %v3292, %v6355
        %v6388 = vmul.f32 %v3293, %v6356
        %v6389 = vmul.f32 %v3294, %v6357
        %v6390 = vsel %vm2471, %v6359, 0.0
        %v6391 = vadd.f32 %v6358, %v6390
        %6392 = vadd.xlane.f32.xlu0 %v6391
        %v6393 = vpop.xlane.xlu0 %6392
        %v6394 = vsel %vm2471, %v6361, 0.0
        %v6395 = vadd.f32 %v6360, %v6394
        %6396 = vadd.xlane.f32.xlu0 %v6395
        %v6397 = vpop.xlane.xlu0 %6396
        %v6398 = vsel %vm2471, %v6363, 0.0
        %v6399 = vadd.f32 %v6362, %v6398
        %6400 = vadd.xlane.f32.xlu0 %v6399
        %v6401 = vpop.xlane.xlu0 %6400
        %v6402 = vsel %vm2471, %v6365, 0.0
        %v6403 = vadd.f32 %v6364, %v6402
        %6404 = vadd.xlane.f32.xlu0 %v6403
        %v6405 = vpop.xlane.xlu0 %6404
        %v6406 = vsel %vm2471, %v6367, 0.0
        %v6407 = vadd.f32 %v6366, %v6406
        %6408 = vadd.xlane.f32.xlu0 %v6407
        %v6409 = vpop.xlane.xlu0 %6408
        %v6410 = vsel %vm2471, %v6369, 0.0
        %v6411 = vadd.f32 %v6368, %v6410
        %6412 = vadd.xlane.f32.xlu0 %v6411
        %v6413 = vpop.xlane.xlu0 %6412
        %v6414 = vsel %vm2471, %v6371, 0.0
        %v6415 = vadd.f32 %v6370, %v6414
        %6416 = vadd.xlane.f32.xlu0 %v6415
        %v6417 = vpop.xlane.xlu0 %6416
        %v6418 = vsel %vm2471, %v6373, 0.0
        %v6419 = vadd.f32 %v6372, %v6418
        %6420 = vadd.xlane.f32.xlu0 %v6419
        %v6421 = vpop.xlane.xlu0 %6420
        %v6422 = vsel %vm2471, %v6375, 0.0
        %v6423 = vadd.f32 %v6374, %v6422
        %6424 = vadd.xlane.f32.xlu0 %v6423
        %v6425 = vpop.xlane.xlu0 %6424
        %v6426 = vsel %vm2471, %v6377, 0.0
        %v6427 = vadd.f32 %v6376, %v6426
        %6428 = vadd.xlane.f32.xlu0 %v6427
        %v6429 = vpop.xlane.xlu0 %6428
        %v6430 = vsel %vm2471, %v6379, 0.0
        %v6431 = vadd.f32 %v6378, %v6430
        %6432 = vadd.xlane.f32.xlu0 %v6431
        %v6433 = vpop.xlane.xlu0 %6432
        %v6434 = vsel %vm2471, %v6381, 0.0
        %v6435 = vadd.f32 %v6380, %v6434
        %6436 = vadd.xlane.f32.xlu0 %v6435
        %v6437 = vpop.xlane.xlu0 %6436
        %v6438 = vsel %vm2471, %v6383, 0.0
        %v6439 = vadd.f32 %v6382, %v6438
        %6440 = vadd.xlane.f32.xlu0 %v6439
        %v6441 = vpop.xlane.xlu0 %6440
        %v6442 = vsel %vm2471, %v6385, 0.0
        %v6443 = vadd.f32 %v6384, %v6442
        %6444 = vadd.xlane.f32.xlu0 %v6443
        %v6445 = vpop.xlane.xlu0 %6444
        %v6446 = vsel %vm2471, %v6387, 0.0
        %v6447 = vadd.f32 %v6386, %v6446
        %6448 = vadd.xlane.f32.xlu0 %v6447
        %v6449 = vpop.xlane.xlu0 %6448
        %v6450 = vsel %vm2471, %v6389, 0.0
        %v6451 = vadd.f32 %v6388, %v6450
        %6452 = vadd.xlane.f32.xlu0 %v6451
        %v6453 = vpop.xlane.xlu0 %6452
        %s6454 = scalar_lea.vmem %s2040, 6144 [#allocation4]
        %v6455 = vld [vmem:[%s6454] sm:$0xff]
        %v6456 = vld [vmem:[%s6454 + $0x8] sm:$0xff]
        %v6457 = vld [vmem:[%s6454 + $0x10] sm:$0xff]
        %v6458 = vld [vmem:[%s6454 + $0x18] sm:$0xff]
        %v6459 = vld [vmem:[%s6454 + $0x20] sm:$0xff]
        %v6460 = vld [vmem:[%s6454 + $0x28] sm:$0xff]
        %v6461 = vld [vmem:[%s6454 + $0x30] sm:$0xff]
        %v6462 = vld [vmem:[%s6454 + $0x38] sm:$0xff]
        %v6463 = vld [vmem:[%s6454 + $0x40] sm:$0xff]
        %v6464 = vld [vmem:[%s6454 + $0x48] sm:$0xff]
        %v6465 = vld [vmem:[%s6454 + $0x50] sm:$0xff]
        %v6466 = vld [vmem:[%s6454 + $0x58] sm:$0xff]
        %v6467 = vld [vmem:[%s6454 + $0x60] sm:$0xff]
        %v6468 = vld [vmem:[%s6454 + $0x68] sm:$0xff]
        %v6469 = vld [vmem:[%s6454 + $0x70] sm:$0xff]
        %v6470 = vld [vmem:[%s6454 + $0x78] sm:$0xff]
        %v6471 = vld [vmem:[%s6454 + $0x80] sm:$0xff]
        %v6472 = vld [vmem:[%s6454 + $0x88] sm:$0xff]
        %v6473 = vld [vmem:[%s6454 + $0x90] sm:$0xff]
        %v6474 = vld [vmem:[%s6454 + $0x98] sm:$0xff]
        %v6475 = vld [vmem:[%s6454 + $0xa0] sm:$0xff]
        %v6476 = vld [vmem:[%s6454 + $0xa8] sm:$0xff]
        %v6477 = vld [vmem:[%s6454 + $0xb0] sm:$0xff]
        %v6478 = vld [vmem:[%s6454 + $0xb8] sm:$0xff]
        %v6479 = vld [vmem:[%s6454 + $0xc0] sm:$0xff]
        %v6480 = vld [vmem:[%s6454 + $0xc8] sm:$0xff]
        %v6481 = vld [vmem:[%s6454 + $0xd0] sm:$0xff]
        %v6482 = vld [vmem:[%s6454 + $0xd8] sm:$0xff]
        %v6483 = vld [vmem:[%s6454 + $0xe0] sm:$0xff]
        %v6484 = vld [vmem:[%s6454 + $0xe8] sm:$0xff]
        %v6485 = vld [vmem:[%s6454 + $0xf0] sm:$0xff]
        %v6486 = vld [vmem:[%s6454 + $0xf8] sm:$0xff]
        %v6487 = vmul.f32 %v3263, %v6455
        %v6488 = vmul.f32 %v3264, %v6456
        %v6489 = vmul.f32 %v3265, %v6457
        %v6490 = vmul.f32 %v3266, %v6458
        %v6491 = vmul.f32 %v3267, %v6459
        %v6492 = vmul.f32 %v3268, %v6460
        %v6493 = vmul.f32 %v3269, %v6461
        %v6494 = vmul.f32 %v3270, %v6462
        %v6495 = vmul.f32 %v3271, %v6463
        %v6496 = vmul.f32 %v3272, %v6464
        %v6497 = vmul.f32 %v3273, %v6465
        %v6498 = vmul.f32 %v3274, %v6466
        %v6499 = vmul.f32 %v3275, %v6467
        %v6500 = vmul.f32 %v3276, %v6468
        %v6501 = vmul.f32 %v3277, %v6469
        %v6502 = vmul.f32 %v3278, %v6470
        %v6503 = vmul.f32 %v3279, %v6471
        %v6504 = vmul.f32 %v3280, %v6472
        %v6505 = vmul.f32 %v3281, %v6473
        %v6506 = vmul.f32 %v3282, %v6474
        %v6507 = vmul.f32 %v3283, %v6475
        %v6508 = vmul.f32 %v3284, %v6476
        %v6509 = vmul.f32 %v3285, %v6477
        %v6510 = vmul.f32 %v3286, %v6478
        %v6511 = vmul.f32 %v3287, %v6479
        %v6512 = vmul.f32 %v3288, %v6480
        %v6513 = vmul.f32 %v3289, %v6481
        %v6514 = vmul.f32 %v3290, %v6482
        %v6515 = vmul.f32 %v3291, %v6483
        %v6516 = vmul.f32 %v3292, %v6484
        %v6517 = vmul.f32 %v3293, %v6485
        %v6518 = vmul.f32 %v3294, %v6486
        %v6519 = vsel %vm2471, %v6488, 0.0
        %v6520 = vadd.f32 %v6487, %v6519
        %6521 = vadd.xlane.f32.xlu0 %v6520
        %v6522 = vpop.xlane.xlu0 %6521
        %v6523 = vsel %vm2471, %v6490, 0.0
        %v6524 = vadd.f32 %v6489, %v6523
        %6525 = vadd.xlane.f32.xlu0 %v6524
        %v6526 = vpop.xlane.xlu0 %6525
        %v6527 = vsel %vm2471, %v6492, 0.0
        %v6528 = vadd.f32 %v6491, %v6527
        %6529 = vadd.xlane.f32.xlu0 %v6528
        %v6530 = vpop.xlane.xlu0 %6529
        %v6531 = vsel %vm2471, %v6494, 0.0
        %v6532 = vadd.f32 %v6493, %v6531
        %6533 = vadd.xlane.f32.xlu0 %v6532
        %v6534 = vpop.xlane.xlu0 %6533
        %v6535 = vsel %vm2471, %v6496, 0.0
        %v6536 = vadd.f32 %v6495, %v6535
        %6537 = vadd.xlane.f32.xlu0 %v6536
        %v6538 = vpop.xlane.xlu0 %6537
        %v6539 = vsel %vm2471, %v6498, 0.0
        %v6540 = vadd.f32 %v6497, %v6539
        %6541 = vadd.xlane.f32.xlu0 %v6540
        %v6542 = vpop.xlane.xlu0 %6541
        %v6543 = vsel %vm2471, %v6500, 0.0
        %v6544 = vadd.f32 %v6499, %v6543
        %6545 = vadd.xlane.f32.xlu0 %v6544
        %v6546 = vpop.xlane.xlu0 %6545
        %v6547 = vsel %vm2471, %v6502, 0.0
        %v6548 = vadd.f32 %v6501, %v6547
        %6549 = vadd.xlane.f32.xlu0 %v6548
        %v6550 = vpop.xlane.xlu0 %6549
        %v6551 = vsel %vm2471, %v6504, 0.0
        %v6552 = vadd.f32 %v6503, %v6551
        %6553 = vadd.xlane.f32.xlu0 %v6552
        %v6554 = vpop.xlane.xlu0 %6553
        %v6555 = vsel %vm2471, %v6506, 0.0
        %v6556 = vadd.f32 %v6505, %v6555
        %6557 = vadd.xlane.f32.xlu0 %v6556
        %v6558 = vpop.xlane.xlu0 %6557
        %v6559 = vsel %vm2471, %v6508, 0.0
        %v6560 = vadd.f32 %v6507, %v6559
        %6561 = vadd.xlane.f32.xlu0 %v6560
        %v6562 = vpop.xlane.xlu0 %6561
        %v6563 = vsel %vm2471, %v6510, 0.0
        %v6564 = vadd.f32 %v6509, %v6563
        %6565 = vadd.xlane.f32.xlu0 %v6564
        %v6566 = vpop.xlane.xlu0 %6565
        %v6567 = vsel %vm2471, %v6512, 0.0
        %v6568 = vadd.f32 %v6511, %v6567
        %6569 = vadd.xlane.f32.xlu0 %v6568
        %v6570 = vpop.xlane.xlu0 %6569
        %v6571 = vsel %vm2471, %v6514, 0.0
        %v6572 = vadd.f32 %v6513, %v6571
        %6573 = vadd.xlane.f32.xlu0 %v6572
        %v6574 = vpop.xlane.xlu0 %6573
        %v6575 = vsel %vm2471, %v6516, 0.0
        %v6576 = vadd.f32 %v6515, %v6575
        %6577 = vadd.xlane.f32.xlu0 %v6576
        %v6578 = vpop.xlane.xlu0 %6577
        %v6579 = vsel %vm2471, %v6518, 0.0
        %v6580 = vadd.f32 %v6517, %v6579
        %6581 = vadd.xlane.f32.xlu0 %v6580
        %v6582 = vpop.xlane.xlu0 %6581
        %s6583 = scalar_lea.vmem %s2040, 6400 [#allocation4]
        %v6584 = vld [vmem:[%s6583] sm:$0xff]
        %v6585 = vld [vmem:[%s6583 + $0x8] sm:$0xff]
        %v6586 = vld [vmem:[%s6583 + $0x10] sm:$0xff]
        %v6587 = vld [vmem:[%s6583 + $0x18] sm:$0xff]
        %v6588 = vld [vmem:[%s6583 + $0x20] sm:$0xff]
        %v6589 = vld [vmem:[%s6583 + $0x28] sm:$0xff]
        %v6590 = vld [vmem:[%s6583 + $0x30] sm:$0xff]
        %v6591 = vld [vmem:[%s6583 + $0x38] sm:$0xff]
        %v6592 = vld [vmem:[%s6583 + $0x40] sm:$0xff]
        %v6593 = vld [vmem:[%s6583 + $0x48] sm:$0xff]
        %v6594 = vld [vmem:[%s6583 + $0x50] sm:$0xff]
        %v6595 = vld [vmem:[%s6583 + $0x58] sm:$0xff]
        %v6596 = vld [vmem:[%s6583 + $0x60] sm:$0xff]
        %v6597 = vld [vmem:[%s6583 + $0x68] sm:$0xff]
        %v6598 = vld [vmem:[%s6583 + $0x70] sm:$0xff]
        %v6599 = vld [vmem:[%s6583 + $0x78] sm:$0xff]
        %v6600 = vld [vmem:[%s6583 + $0x80] sm:$0xff]
        %v6601 = vld [vmem:[%s6583 + $0x88] sm:$0xff]
        %v6602 = vld [vmem:[%s6583 + $0x90] sm:$0xff]
        %v6603 = vld [vmem:[%s6583 + $0x98] sm:$0xff]
        %v6604 = vld [vmem:[%s6583 + $0xa0] sm:$0xff]
        %v6605 = vld [vmem:[%s6583 + $0xa8] sm:$0xff]
        %v6606 = vld [vmem:[%s6583 + $0xb0] sm:$0xff]
        %v6607 = vld [vmem:[%s6583 + $0xb8] sm:$0xff]
        %v6608 = vld [vmem:[%s6583 + $0xc0] sm:$0xff]
        %v6609 = vld [vmem:[%s6583 + $0xc8] sm:$0xff]
        %v6610 = vld [vmem:[%s6583 + $0xd0] sm:$0xff]
        %v6611 = vld [vmem:[%s6583 + $0xd8] sm:$0xff]
        %v6612 = vld [vmem:[%s6583 + $0xe0] sm:$0xff]
        %v6613 = vld [vmem:[%s6583 + $0xe8] sm:$0xff]
        %v6614 = vld [vmem:[%s6583 + $0xf0] sm:$0xff]
        %v6615 = vld [vmem:[%s6583 + $0xf8] sm:$0xff]
        %v6616 = vmul.f32 %v3263, %v6584
        %v6617 = vmul.f32 %v3264, %v6585
        %v6618 = vmul.f32 %v3265, %v6586
        %v6619 = vmul.f32 %v3266, %v6587
        %v6620 = vmul.f32 %v3267, %v6588
        %v6621 = vmul.f32 %v3268, %v6589
        %v6622 = vmul.f32 %v3269, %v6590
        %v6623 = vmul.f32 %v3270, %v6591
        %v6624 = vmul.f32 %v3271, %v6592
        %v6625 = vmul.f32 %v3272, %v6593
        %v6626 = vmul.f32 %v3273, %v6594
        %v6627 = vmul.f32 %v3274, %v6595
        %v6628 = vmul.f32 %v3275, %v6596
        %v6629 = vmul.f32 %v3276, %v6597
        %v6630 = vmul.f32 %v3277, %v6598
        %v6631 = vmul.f32 %v3278, %v6599
        %v6632 = vmul.f32 %v3279, %v6600
        %v6633 = vmul.f32 %v3280, %v6601
        %v6634 = vmul.f32 %v3281, %v6602
        %v6635 = vmul.f32 %v3282, %v6603
        %v6636 = vmul.f32 %v3283, %v6604
        %v6637 = vmul.f32 %v3284, %v6605
        %v6638 = vmul.f32 %v3285, %v6606
        %v6639 = vmul.f32 %v3286, %v6607
        %v6640 = vmul.f32 %v3287, %v6608
        %v6641 = vmul.f32 %v3288, %v6609
        %v6642 = vmul.f32 %v3289, %v6610
        %v6643 = vmul.f32 %v3290, %v6611
        %v6644 = vmul.f32 %v3291, %v6612
        %v6645 = vmul.f32 %v3292, %v6613
        %v6646 = vmul.f32 %v3293, %v6614
        %v6647 = vmul.f32 %v3294, %v6615
        %v6648 = vsel %vm2471, %v6617, 0.0
        %v6649 = vadd.f32 %v6616, %v6648
        %6650 = vadd.xlane.f32.xlu0 %v6649
        %v6651 = vpop.xlane.xlu0 %6650
        %v6652 = vsel %vm2471, %v6619, 0.0
        %v6653 = vadd.f32 %v6618, %v6652
        %6654 = vadd.xlane.f32.xlu0 %v6653
        %v6655 = vpop.xlane.xlu0 %6654
        %v6656 = vsel %vm2471, %v6621, 0.0
        %v6657 = vadd.f32 %v6620, %v6656
        %6658 = vadd.xlane.f32.xlu0 %v6657
        %v6659 = vpop.xlane.xlu0 %6658
        %v6660 = vsel %vm2471, %v6623, 0.0
        %v6661 = vadd.f32 %v6622, %v6660
        %6662 = vadd.xlane.f32.xlu0 %v6661
        %v6663 = vpop.xlane.xlu0 %6662
        %v6664 = vsel %vm2471, %v6625, 0.0
        %v6665 = vadd.f32 %v6624, %v6664
        %6666 = vadd.xlane.f32.xlu0 %v6665
        %v6667 = vpop.xlane.xlu0 %6666
        %v6668 = vsel %vm2471, %v6627, 0.0
        %v6669 = vadd.f32 %v6626, %v6668
        %6670 = vadd.xlane.f32.xlu0 %v6669
        %v6671 = vpop.xlane.xlu0 %6670
        %v6672 = vsel %vm2471, %v6629, 0.0
        %v6673 = vadd.f32 %v6628, %v6672
        %6674 = vadd.xlane.f32.xlu0 %v6673
        %v6675 = vpop.xlane.xlu0 %6674
        %v6676 = vsel %vm2471, %v6631, 0.0
        %v6677 = vadd.f32 %v6630, %v6676
        %6678 = vadd.xlane.f32.xlu0 %v6677
        %v6679 = vpop.xlane.xlu0 %6678
        %v6680 = vsel %vm2471, %v6633, 0.0
        %v6681 = vadd.f32 %v6632, %v6680
        %6682 = vadd.xlane.f32.xlu0 %v6681
        %v6683 = vpop.xlane.xlu0 %6682
        %v6684 = vsel %vm2471, %v6635, 0.0
        %v6685 = vadd.f32 %v6634, %v6684
        %6686 = vadd.xlane.f32.xlu0 %v6685
        %v6687 = vpop.xlane.xlu0 %6686
        %v6688 = vsel %vm2471, %v6637, 0.0
        %v6689 = vadd.f32 %v6636, %v6688
        %6690 = vadd.xlane.f32.xlu0 %v6689
        %v6691 = vpop.xlane.xlu0 %6690
        %v6692 = vsel %vm2471, %v6639, 0.0
        %v6693 = vadd.f32 %v6638, %v6692
        %6694 = vadd.xlane.f32.xlu0 %v6693
        %v6695 = vpop.xlane.xlu0 %6694
        %v6696 = vsel %vm2471, %v6641, 0.0
        %v6697 = vadd.f32 %v6640, %v6696
        %6698 = vadd.xlane.f32.xlu0 %v6697
        %v6699 = vpop.xlane.xlu0 %6698
        %v6700 = vsel %vm2471, %v6643, 0.0
        %v6701 = vadd.f32 %v6642, %v6700
        %6702 = vadd.xlane.f32.xlu0 %v6701
        %v6703 = vpop.xlane.xlu0 %6702
        %v6704 = vsel %vm2471, %v6645, 0.0
        %v6705 = vadd.f32 %v6644, %v6704
        %6706 = vadd.xlane.f32.xlu0 %v6705
        %v6707 = vpop.xlane.xlu0 %6706
        %v6708 = vsel %vm2471, %v6647, 0.0
        %v6709 = vadd.f32 %v6646, %v6708
        %6710 = vadd.xlane.f32.xlu0 %v6709
        %v6711 = vpop.xlane.xlu0 %6710
        %s6712 = scalar_lea.vmem %s2040, 6656 [#allocation4]
        %v6713 = vld [vmem:[%s6712] sm:$0xff]
        %v6714 = vld [vmem:[%s6712 + $0x8] sm:$0xff]
        %v6715 = vld [vmem:[%s6712 + $0x10] sm:$0xff]
        %v6716 = vld [vmem:[%s6712 + $0x18] sm:$0xff]
        %v6717 = vld [vmem:[%s6712 + $0x20] sm:$0xff]
        %v6718 = vld [vmem:[%s6712 + $0x28] sm:$0xff]
        %v6719 = vld [vmem:[%s6712 + $0x30] sm:$0xff]
        %v6720 = vld [vmem:[%s6712 + $0x38] sm:$0xff]
        %v6721 = vld [vmem:[%s6712 + $0x40] sm:$0xff]
        %v6722 = vld [vmem:[%s6712 + $0x48] sm:$0xff]
        %v6723 = vld [vmem:[%s6712 + $0x50] sm:$0xff]
        %v6724 = vld [vmem:[%s6712 + $0x58] sm:$0xff]
        %v6725 = vld [vmem:[%s6712 + $0x60] sm:$0xff]
        %v6726 = vld [vmem:[%s6712 + $0x68] sm:$0xff]
        %v6727 = vld [vmem:[%s6712 + $0x70] sm:$0xff]
        %v6728 = vld [vmem:[%s6712 + $0x78] sm:$0xff]
        %v6729 = vld [vmem:[%s6712 + $0x80] sm:$0xff]
        %v6730 = vld [vmem:[%s6712 + $0x88] sm:$0xff]
        %v6731 = vld [vmem:[%s6712 + $0x90] sm:$0xff]
        %v6732 = vld [vmem:[%s6712 + $0x98] sm:$0xff]
        %v6733 = vld [vmem:[%s6712 + $0xa0] sm:$0xff]
        %v6734 = vld [vmem:[%s6712 + $0xa8] sm:$0xff]
        %v6735 = vld [vmem:[%s6712 + $0xb0] sm:$0xff]
        %v6736 = vld [vmem:[%s6712 + $0xb8] sm:$0xff]
        %v6737 = vld [vmem:[%s6712 + $0xc0] sm:$0xff]
        %v6738 = vld [vmem:[%s6712 + $0xc8] sm:$0xff]
        %v6739 = vld [vmem:[%s6712 + $0xd0] sm:$0xff]
        %v6740 = vld [vmem:[%s6712 + $0xd8] sm:$0xff]
        %v6741 = vld [vmem:[%s6712 + $0xe0] sm:$0xff]
        %v6742 = vld [vmem:[%s6712 + $0xe8] sm:$0xff]
        %v6743 = vld [vmem:[%s6712 + $0xf0] sm:$0xff]
        %v6744 = vld [vmem:[%s6712 + $0xf8] sm:$0xff]
        %v6745 = vmul.f32 %v3263, %v6713
        %v6746 = vmul.f32 %v3264, %v6714
        %v6747 = vmul.f32 %v3265, %v6715
        %v6748 = vmul.f32 %v3266, %v6716
        %v6749 = vmul.f32 %v3267, %v6717
        %v6750 = vmul.f32 %v3268, %v6718
        %v6751 = vmul.f32 %v3269, %v6719
        %v6752 = vmul.f32 %v3270, %v6720
        %v6753 = vmul.f32 %v3271, %v6721
        %v6754 = vmul.f32 %v3272, %v6722
        %v6755 = vmul.f32 %v3273, %v6723
        %v6756 = vmul.f32 %v3274, %v6724
        %v6757 = vmul.f32 %v3275, %v6725
        %v6758 = vmul.f32 %v3276, %v6726
        %v6759 = vmul.f32 %v3277, %v6727
        %v6760 = vmul.f32 %v3278, %v6728
        %v6761 = vmul.f32 %v3279, %v6729
        %v6762 = vmul.f32 %v3280, %v6730
        %v6763 = vmul.f32 %v3281, %v6731
        %v6764 = vmul.f32 %v3282, %v6732
        %v6765 = vmul.f32 %v3283, %v6733
        %v6766 = vmul.f32 %v3284, %v6734
        %v6767 = vmul.f32 %v3285, %v6735
        %v6768 = vmul.f32 %v3286, %v6736
        %v6769 = vmul.f32 %v3287, %v6737
        %v6770 = vmul.f32 %v3288, %v6738
        %v6771 = vmul.f32 %v3289, %v6739
        %v6772 = vmul.f32 %v3290, %v6740
        %v6773 = vmul.f32 %v3291, %v6741
        %v6774 = vmul.f32 %v3292, %v6742
        %v6775 = vmul.f32 %v3293, %v6743
        %v6776 = vmul.f32 %v3294, %v6744
        %v6777 = vsel %vm2471, %v6746, 0.0
        %v6778 = vadd.f32 %v6745, %v6777
        %6779 = vadd.xlane.f32.xlu0 %v6778
        %v6780 = vpop.xlane.xlu0 %6779
        %v6781 = vsel %vm2471, %v6748, 0.0
        %v6782 = vadd.f32 %v6747, %v6781
        %6783 = vadd.xlane.f32.xlu0 %v6782
        %v6784 = vpop.xlane.xlu0 %6783
        %v6785 = vsel %vm2471, %v6750, 0.0
        %v6786 = vadd.f32 %v6749, %v6785
        %6787 = vadd.xlane.f32.xlu0 %v6786
        %v6788 = vpop.xlane.xlu0 %6787
        %v6789 = vsel %vm2471, %v6752, 0.0
        %v6790 = vadd.f32 %v6751, %v6789
        %6791 = vadd.xlane.f32.xlu0 %v6790
        %v6792 = vpop.xlane.xlu0 %6791
        %v6793 = vsel %vm2471, %v6754, 0.0
        %v6794 = vadd.f32 %v6753, %v6793
        %6795 = vadd.xlane.f32.xlu0 %v6794
        %v6796 = vpop.xlane.xlu0 %6795
        %v6797 = vsel %vm2471, %v6756, 0.0
        %v6798 = vadd.f32 %v6755, %v6797
        %6799 = vadd.xlane.f32.xlu0 %v6798
        %v6800 = vpop.xlane.xlu0 %6799
        %v6801 = vsel %vm2471, %v6758, 0.0
        %v6802 = vadd.f32 %v6757, %v6801
        %6803 = vadd.xlane.f32.xlu0 %v6802
        %v6804 = vpop.xlane.xlu0 %6803
        %v6805 = vsel %vm2471, %v6760, 0.0
        %v6806 = vadd.f32 %v6759, %v6805
        %6807 = vadd.xlane.f32.xlu0 %v6806
        %v6808 = vpop.xlane.xlu0 %6807
        %v6809 = vsel %vm2471, %v6762, 0.0
        %v6810 = vadd.f32 %v6761, %v6809
        %6811 = vadd.xlane.f32.xlu0 %v6810
        %v6812 = vpop.xlane.xlu0 %6811
        %v6813 = vsel %vm2471, %v6764, 0.0
        %v6814 = vadd.f32 %v6763, %v6813
        %6815 = vadd.xlane.f32.xlu0 %v6814
        %v6816 = vpop.xlane.xlu0 %6815
        %v6817 = vsel %vm2471, %v6766, 0.0
        %v6818 = vadd.f32 %v6765, %v6817
        %6819 = vadd.xlane.f32.xlu0 %v6818
        %v6820 = vpop.xlane.xlu0 %6819
        %v6821 = vsel %vm2471, %v6768, 0.0
        %v6822 = vadd.f32 %v6767, %v6821
        %6823 = vadd.xlane.f32.xlu0 %v6822
        %v6824 = vpop.xlane.xlu0 %6823
        %v6825 = vsel %vm2471, %v6770, 0.0
        %v6826 = vadd.f32 %v6769, %v6825
        %6827 = vadd.xlane.f32.xlu0 %v6826
        %v6828 = vpop.xlane.xlu0 %6827
        %v6829 = vsel %vm2471, %v6772, 0.0
        %v6830 = vadd.f32 %v6771, %v6829
        %6831 = vadd.xlane.f32.xlu0 %v6830
        %v6832 = vpop.xlane.xlu0 %6831
        %v6833 = vsel %vm2471, %v6774, 0.0
        %v6834 = vadd.f32 %v6773, %v6833
        %6835 = vadd.xlane.f32.xlu0 %v6834
        %v6836 = vpop.xlane.xlu0 %6835
        %v6837 = vsel %vm2471, %v6776, 0.0
        %v6838 = vadd.f32 %v6775, %v6837
        %6839 = vadd.xlane.f32.xlu0 %v6838
        %v6840 = vpop.xlane.xlu0 %6839
        %v6841 = vmul.f32 %v2180, %v2180
        %v6842 = vmul.f32 %v2181, %v2181
        %v6843 = vmul.f32 %v2182, %v2182
        %v6844 = vmul.f32 %v2183, %v2183
        %v6845 = vmul.f32 %v2184, %v2184
        %v6846 = vmul.f32 %v2185, %v2185
        %v6847 = vmul.f32 %v2186, %v2186
        %v6848 = vmul.f32 %v2187, %v2187
        %v6849 = vmul.f32 %v2188, %v2188
        %v6850 = vmul.f32 %v2189, %v2189
        %v6851 = vmul.f32 %v2190, %v2190
        %v6852 = vmul.f32 %v2191, %v2191
        %v6853 = vmul.f32 %v2192, %v2192
        %v6854 = vmul.f32 %v2193, %v2193
        %v6855 = vmul.f32 %v2194, %v2194
        %v6856 = vmul.f32 %v2195, %v2195
        %v6857 = vmul.f32 %v2180, -0.488603
        %v6858 = vmul.f32 %v2181, -0.488603
        %v6859 = vmul.f32 %v2182, -0.488603
        %v6860 = vmul.f32 %v2183, -0.488603
        %v6861 = vmul.f32 %v2184, -0.488603
        %v6862 = vmul.f32 %v2185, -0.488603
        %v6863 = vmul.f32 %v2186, -0.488603
        %v6864 = vmul.f32 %v2187, -0.488603
        %v6865 = vmul.f32 %v2188, -0.488603
        %v6866 = vmul.f32 %v2189, -0.488603
        %v6867 = vmul.f32 %v2190, -0.488603
        %v6868 = vmul.f32 %v2191, -0.488603
        %v6869 = vmul.f32 %v2192, -0.488603
        %v6870 = vmul.f32 %v2193, -0.488603
        %v6871 = vmul.f32 %v2194, -0.488603
        %v6872 = vmul.f32 %v2195, -0.488603
        %v6873 = vmul.f32 %v2180, 0.488603
        %v6874 = vmul.f32 %v2181, 0.488603
        %v6875 = vmul.f32 %v2182, 0.488603
        %v6876 = vmul.f32 %v2183, 0.488603
        %v6877 = vmul.f32 %v2184, 0.488603
        %v6878 = vmul.f32 %v2185, 0.488603
        %v6879 = vmul.f32 %v2186, 0.488603
        %v6880 = vmul.f32 %v2187, 0.488603
        %v6881 = vmul.f32 %v2188, 0.488603
        %v6882 = vmul.f32 %v2189, 0.488603
        %v6883 = vmul.f32 %v2190, 0.488603
        %v6884 = vmul.f32 %v2191, 0.488603
        %v6885 = vmul.f32 %v2192, 0.488603
        %v6886 = vmul.f32 %v2193, 0.488603
        %v6887 = vmul.f32 %v2194, 0.488603
        %v6888 = vmul.f32 %v2195, 0.488603
        %6905 = vrot.lane.b32.xlu0 %v2180, 127
        %v6906 = vpop.permute.xlu0 %6905
        %6907 = vrot.lane.b32.xlu0 %v2181, 127
        %v6908 = vpop.permute.xlu0 %6907
        %6909 = vrot.lane.b32.xlu0 %v2182, 127
        %v6910 = vpop.permute.xlu0 %6909
        %6911 = vrot.lane.b32.xlu0 %v2183, 127
        %v6912 = vpop.permute.xlu0 %6911
        %6913 = vrot.lane.b32.xlu0 %v2184, 127
        %v6914 = vpop.permute.xlu0 %6913
        %6915 = vrot.lane.b32.xlu0 %v2185, 127
        %v6916 = vpop.permute.xlu0 %6915
        %6917 = vrot.lane.b32.xlu0 %v2186, 127
        %v6918 = vpop.permute.xlu0 %6917
        %6919 = vrot.lane.b32.xlu0 %v2187, 127
        %v6920 = vpop.permute.xlu0 %6919
        %6921 = vrot.lane.b32.xlu0 %v2188, 127
        %v6922 = vpop.permute.xlu0 %6921
        %6923 = vrot.lane.b32.xlu0 %v2189, 127
        %v6924 = vpop.permute.xlu0 %6923
        %6925 = vrot.lane.b32.xlu0 %v2190, 127
        %v6926 = vpop.permute.xlu0 %6925
        %6927 = vrot.lane.b32.xlu0 %v2191, 127
        %v6928 = vpop.permute.xlu0 %6927
        %6929 = vrot.lane.b32.xlu0 %v2192, 127
        %v6930 = vpop.permute.xlu0 %6929
        %6931 = vrot.lane.b32.xlu0 %v2193, 127
        %v6932 = vpop.permute.xlu0 %6931
        %6933 = vrot.lane.b32.xlu0 %v2194, 127
        %v6934 = vpop.permute.xlu0 %6933
        %6935 = vrot.lane.b32.xlu0 %v2195, 127
        %v6936 = vpop.permute.xlu0 %6935
        %v6953 = vmul.f32 %v2180, %v6906
        %v6954 = vmul.f32 %v2181, %v6908
        %v6955 = vmul.f32 %v2182, %v6910
        %v6956 = vmul.f32 %v2183, %v6912
        %v6957 = vmul.f32 %v2184, %v6914
        %v6958 = vmul.f32 %v2185, %v6916
        %v6959 = vmul.f32 %v2186, %v6918
        %v6960 = vmul.f32 %v2187, %v6920
        %v6961 = vmul.f32 %v2188, %v6922
        %v6962 = vmul.f32 %v2189, %v6924
        %v6963 = vmul.f32 %v2190, %v6926
        %v6964 = vmul.f32 %v2191, %v6928
        %v6965 = vmul.f32 %v2192, %v6930
        %v6966 = vmul.f32 %v2193, %v6932
        %v6967 = vmul.f32 %v2194, %v6934
        %v6968 = vmul.f32 %v2195, %v6936
        %v6969 = vmul.f32 %v6953, 1.092548
        %v6970 = vmul.f32 %v6954, 1.092548
        %v6971 = vmul.f32 %v6955, 1.092548
        %v6972 = vmul.f32 %v6956, 1.092548
        %v6973 = vmul.f32 %v6957, 1.092548
        %v6974 = vmul.f32 %v6958, 1.092548
        %v6975 = vmul.f32 %v6959, 1.092548
        %v6976 = vmul.f32 %v6960, 1.092548
        %v6977 = vmul.f32 %v6961, 1.092548
        %v6978 = vmul.f32 %v6962, 1.092548
        %v6979 = vmul.f32 %v6963, 1.092548
        %v6980 = vmul.f32 %v6964, 1.092548
        %v6981 = vmul.f32 %v6965, 1.092548
        %v6982 = vmul.f32 %v6966, 1.092548
        %v6983 = vmul.f32 %v6967, 1.092548
        %v6984 = vmul.f32 %v6968, 1.092548
        %v6985 = vmul.f32 %v6953, -1.092548
        %v6986 = vmul.f32 %v6954, -1.092548
        %v6987 = vmul.f32 %v6955, -1.092548
        %v6988 = vmul.f32 %v6956, -1.092548
        %v6989 = vmul.f32 %v6957, -1.092548
        %v6990 = vmul.f32 %v6958, -1.092548
        %v6991 = vmul.f32 %v6959, -1.092548
        %v6992 = vmul.f32 %v6960, -1.092548
        %v6993 = vmul.f32 %v6961, -1.092548
        %v6994 = vmul.f32 %v6962, -1.092548
        %v6995 = vmul.f32 %v6963, -1.092548
        %v6996 = vmul.f32 %v6964, -1.092548
        %v6997 = vmul.f32 %v6965, -1.092548
        %v6998 = vmul.f32 %v6966, -1.092548
        %v6999 = vmul.f32 %v6967, -1.092548
        %v7000 = vmul.f32 %v6968, -1.092548
        %v7001 = vmul.f32 %v6841, 2.0
        %v7002 = vmul.f32 %v6842, 2.0
        %v7003 = vmul.f32 %v6843, 2.0
        %v7004 = vmul.f32 %v6844, 2.0
        %v7005 = vmul.f32 %v6845, 2.0
        %v7006 = vmul.f32 %v6846, 2.0
        %v7007 = vmul.f32 %v6847, 2.0
        %v7008 = vmul.f32 %v6848, 2.0
        %v7009 = vmul.f32 %v6849, 2.0
        %v7010 = vmul.f32 %v6850, 2.0
        %v7011 = vmul.f32 %v6851, 2.0
        %v7012 = vmul.f32 %v6852, 2.0
        %v7013 = vmul.f32 %v6853, 2.0
        %v7014 = vmul.f32 %v6854, 2.0
        %v7015 = vmul.f32 %v6855, 2.0
        %v7016 = vmul.f32 %v6856, 2.0
        %7033 = vrot.lane.b32.xlu0 %v6841, 2
        %v7034 = vpop.permute.xlu0 %7033
        %7035 = vrot.lane.b32.xlu0 %v6842, 2
        %v7036 = vpop.permute.xlu0 %7035
        %7037 = vrot.lane.b32.xlu0 %v6843, 2
        %v7038 = vpop.permute.xlu0 %7037
        %7039 = vrot.lane.b32.xlu0 %v6844, 2
        %v7040 = vpop.permute.xlu0 %7039
        %7041 = vrot.lane.b32.xlu0 %v6845, 2
        %v7042 = vpop.permute.xlu0 %7041
        %7043 = vrot.lane.b32.xlu0 %v6846, 2
        %v7044 = vpop.permute.xlu0 %7043
        %7045 = vrot.lane.b32.xlu0 %v6847, 2
        %v7046 = vpop.permute.xlu0 %7045
        %7047 = vrot.lane.b32.xlu0 %v6848, 2
        %v7048 = vpop.permute.xlu0 %7047
        %7049 = vrot.lane.b32.xlu0 %v6849, 2
        %v7050 = vpop.permute.xlu0 %7049
        %7051 = vrot.lane.b32.xlu0 %v6850, 2
        %v7052 = vpop.permute.xlu0 %7051
        %7053 = vrot.lane.b32.xlu0 %v6851, 2
        %v7054 = vpop.permute.xlu0 %7053
        %7055 = vrot.lane.b32.xlu0 %v6852, 2
        %v7056 = vpop.permute.xlu0 %7055
        %7057 = vrot.lane.b32.xlu0 %v6853, 2
        %v7058 = vpop.permute.xlu0 %7057
        %7059 = vrot.lane.b32.xlu0 %v6854, 2
        %v7060 = vpop.permute.xlu0 %7059
        %7061 = vrot.lane.b32.xlu0 %v6855, 2
        %v7062 = vpop.permute.xlu0 %7061
        %7063 = vrot.lane.b32.xlu0 %v6856, 2
        %v7064 = vpop.permute.xlu0 %7063
        %v7081 = vsub.f32 %v7001, %v7034
        %v7082 = vsub.f32 %v7002, %v7036
        %v7083 = vsub.f32 %v7003, %v7038
        %v7084 = vsub.f32 %v7004, %v7040
        %v7085 = vsub.f32 %v7005, %v7042
        %v7086 = vsub.f32 %v7006, %v7044
        %v7087 = vsub.f32 %v7007, %v7046
        %v7088 = vsub.f32 %v7008, %v7048
        %v7089 = vsub.f32 %v7009, %v7050
        %v7090 = vsub.f32 %v7010, %v7052
        %v7091 = vsub.f32 %v7011, %v7054
        %v7092 = vsub.f32 %v7012, %v7056
        %v7093 = vsub.f32 %v7013, %v7058
        %v7094 = vsub.f32 %v7014, %v7060
        %v7095 = vsub.f32 %v7015, %v7062
        %v7096 = vsub.f32 %v7016, %v7064
        %7097 = vrot.lane.b32.xlu0 %v6841, 1
        %v7098 = vpop.permute.xlu0 %7097
        %7099 = vrot.lane.b32.xlu0 %v6842, 1
        %v7100 = vpop.permute.xlu0 %7099
        %7101 = vrot.lane.b32.xlu0 %v6843, 1
        %v7102 = vpop.permute.xlu0 %7101
        %7103 = vrot.lane.b32.xlu0 %v6844, 1
        %v7104 = vpop.permute.xlu0 %7103
        %7105 = vrot.lane.b32.xlu0 %v6845, 1
        %v7106 = vpop.permute.xlu0 %7105
        %7107 = vrot.lane.b32.xlu0 %v6846, 1
        %v7108 = vpop.permute.xlu0 %7107
        %7109 = vrot.lane.b32.xlu0 %v6847, 1
        %v7110 = vpop.permute.xlu0 %7109
        %7111 = vrot.lane.b32.xlu0 %v6848, 1
        %v7112 = vpop.permute.xlu0 %7111
        %7113 = vrot.lane.b32.xlu0 %v6849, 1
        %v7114 = vpop.permute.xlu0 %7113
        %7115 = vrot.lane.b32.xlu0 %v6850, 1
        %v7116 = vpop.permute.xlu0 %7115
        %7117 = vrot.lane.b32.xlu0 %v6851, 1
        %v7118 = vpop.permute.xlu0 %7117
        %7119 = vrot.lane.b32.xlu0 %v6852, 1
        %v7120 = vpop.permute.xlu0 %7119
        %7121 = vrot.lane.b32.xlu0 %v6853, 1
        %v7122 = vpop.permute.xlu0 %7121
        %7123 = vrot.lane.b32.xlu0 %v6854, 1
        %v7124 = vpop.permute.xlu0 %7123
        %7125 = vrot.lane.b32.xlu0 %v6855, 1
        %v7126 = vpop.permute.xlu0 %7125
        %7127 = vrot.lane.b32.xlu0 %v6856, 1
        %v7128 = vpop.permute.xlu0 %7127
        %v7145 = vsub.f32 %v7081, %v7098
        %v7146 = vsub.f32 %v7082, %v7100
        %v7147 = vsub.f32 %v7083, %v7102
        %v7148 = vsub.f32 %v7084, %v7104
        %v7149 = vsub.f32 %v7085, %v7106
        %v7150 = vsub.f32 %v7086, %v7108
        %v7151 = vsub.f32 %v7087, %v7110
        %v7152 = vsub.f32 %v7088, %v7112
        %v7153 = vsub.f32 %v7089, %v7114
        %v7154 = vsub.f32 %v7090, %v7116
        %v7155 = vsub.f32 %v7091, %v7118
        %v7156 = vsub.f32 %v7092, %v7120
        %v7157 = vsub.f32 %v7093, %v7122
        %v7158 = vsub.f32 %v7094, %v7124
        %v7159 = vsub.f32 %v7095, %v7126
        %v7160 = vsub.f32 %v7096, %v7128
        %v7161 = vmul.f32 %v7145, 0.315392
        %v7162 = vmul.f32 %v7146, 0.315392
        %v7163 = vmul.f32 %v7147, 0.315392
        %v7164 = vmul.f32 %v7148, 0.315392
        %v7165 = vmul.f32 %v7149, 0.315392
        %v7166 = vmul.f32 %v7150, 0.315392
        %v7167 = vmul.f32 %v7151, 0.315392
        %v7168 = vmul.f32 %v7152, 0.315392
        %v7169 = vmul.f32 %v7153, 0.315392
        %v7170 = vmul.f32 %v7154, 0.315392
        %v7171 = vmul.f32 %v7155, 0.315392
        %v7172 = vmul.f32 %v7156, 0.315392
        %v7173 = vmul.f32 %v7157, 0.315392
        %v7174 = vmul.f32 %v7158, 0.315392
        %v7175 = vmul.f32 %v7159, 0.315392
        %v7176 = vmul.f32 %v7160, 0.315392
        %7177 = vrot.lane.b32.xlu0 %v2180, 126
        %v7178 = vpop.permute.xlu0 %7177
        %7179 = vrot.lane.b32.xlu0 %v2181, 126
        %v7180 = vpop.permute.xlu0 %7179
        %7181 = vrot.lane.b32.xlu0 %v2182, 126
        %v7182 = vpop.permute.xlu0 %7181
        %7183 = vrot.lane.b32.xlu0 %v2183, 126
        %v7184 = vpop.permute.xlu0 %7183
        %7185 = vrot.lane.b32.xlu0 %v2184, 126
        %v7186 = vpop.permute.xlu0 %7185
        %7187 = vrot.lane.b32.xlu0 %v2185, 126
        %v7188 = vpop.permute.xlu0 %7187
        %7189 = vrot.lane.b32.xlu0 %v2186, 126
        %v7190 = vpop.permute.xlu0 %7189
        %7191 = vrot.lane.b32.xlu0 %v2187, 126
        %v7192 = vpop.permute.xlu0 %7191
        %7193 = vrot.lane.b32.xlu0 %v2188, 126
        %v7194 = vpop.permute.xlu0 %7193
        %7195 = vrot.lane.b32.xlu0 %v2189, 126
        %v7196 = vpop.permute.xlu0 %7195
        %7197 = vrot.lane.b32.xlu0 %v2190, 126
        %v7198 = vpop.permute.xlu0 %7197
        %7199 = vrot.lane.b32.xlu0 %v2191, 126
        %v7200 = vpop.permute.xlu0 %7199
        %7201 = vrot.lane.b32.xlu0 %v2192, 126
        %v7202 = vpop.permute.xlu0 %7201
        %7203 = vrot.lane.b32.xlu0 %v2193, 126
        %v7204 = vpop.permute.xlu0 %7203
        %7205 = vrot.lane.b32.xlu0 %v2194, 126
        %v7206 = vpop.permute.xlu0 %7205
        %7207 = vrot.lane.b32.xlu0 %v2195, 126
        %v7208 = vpop.permute.xlu0 %7207
        %v7225 = vmul.f32 %v2180, %v7178
        %v7226 = vmul.f32 %v2181, %v7180
        %v7227 = vmul.f32 %v2182, %v7182
        %v7228 = vmul.f32 %v2183, %v7184
        %v7229 = vmul.f32 %v2184, %v7186
        %v7230 = vmul.f32 %v2185, %v7188
        %v7231 = vmul.f32 %v2186, %v7190
        %v7232 = vmul.f32 %v2187, %v7192
        %v7233 = vmul.f32 %v2188, %v7194
        %v7234 = vmul.f32 %v2189, %v7196
        %v7235 = vmul.f32 %v2190, %v7198
        %v7236 = vmul.f32 %v2191, %v7200
        %v7237 = vmul.f32 %v2192, %v7202
        %v7238 = vmul.f32 %v2193, %v7204
        %v7239 = vmul.f32 %v2194, %v7206
        %v7240 = vmul.f32 %v2195, %v7208
        %v7241 = vmul.f32 %v7225, -1.092548
        %v7242 = vmul.f32 %v7226, -1.092548
        %v7243 = vmul.f32 %v7227, -1.092548
        %v7244 = vmul.f32 %v7228, -1.092548
        %v7245 = vmul.f32 %v7229, -1.092548
        %v7246 = vmul.f32 %v7230, -1.092548
        %v7247 = vmul.f32 %v7231, -1.092548
        %v7248 = vmul.f32 %v7232, -1.092548
        %v7249 = vmul.f32 %v7233, -1.092548
        %v7250 = vmul.f32 %v7234, -1.092548
        %v7251 = vmul.f32 %v7235, -1.092548
        %v7252 = vmul.f32 %v7236, -1.092548
        %v7253 = vmul.f32 %v7237, -1.092548
        %v7254 = vmul.f32 %v7238, -1.092548
        %v7255 = vmul.f32 %v7239, -1.092548
        %v7256 = vmul.f32 %v7240, -1.092548
        %7257 = vrot.lane.b32.xlu0 %v6841, 127
        %v7258 = vpop.permute.xlu0 %7257
        %7259 = vrot.lane.b32.xlu0 %v6842, 127
        %v7260 = vpop.permute.xlu0 %7259
        %7261 = vrot.lane.b32.xlu0 %v6843, 127
        %v7262 = vpop.permute.xlu0 %7261
        %7263 = vrot.lane.b32.xlu0 %v6844, 127
        %v7264 = vpop.permute.xlu0 %7263
        %7265 = vrot.lane.b32.xlu0 %v6845, 127
        %v7266 = vpop.permute.xlu0 %7265
        %7267 = vrot.lane.b32.xlu0 %v6846, 127
        %v7268 = vpop.permute.xlu0 %7267
        %7269 = vrot.lane.b32.xlu0 %v6847, 127
        %v7270 = vpop.permute.xlu0 %7269
        %7271 = vrot.lane.b32.xlu0 %v6848, 127
        %v7272 = vpop.permute.xlu0 %7271
        %7273 = vrot.lane.b32.xlu0 %v6849, 127
        %v7274 = vpop.permute.xlu0 %7273
        %7275 = vrot.lane.b32.xlu0 %v6850, 127
        %v7276 = vpop.permute.xlu0 %7275
        %7277 = vrot.lane.b32.xlu0 %v6851, 127
        %v7278 = vpop.permute.xlu0 %7277
        %7279 = vrot.lane.b32.xlu0 %v6852, 127
        %v7280 = vpop.permute.xlu0 %7279
        %7281 = vrot.lane.b32.xlu0 %v6853, 127
        %v7282 = vpop.permute.xlu0 %7281
        %7283 = vrot.lane.b32.xlu0 %v6854, 127
        %v7284 = vpop.permute.xlu0 %7283
        %7285 = vrot.lane.b32.xlu0 %v6855, 127
        %v7286 = vpop.permute.xlu0 %7285
        %7287 = vrot.lane.b32.xlu0 %v6856, 127
        %v7288 = vpop.permute.xlu0 %7287
        %v7305 = vsub.f32 %v6841, %v7258
        %v7306 = vsub.f32 %v6842, %v7260
        %v7307 = vsub.f32 %v6843, %v7262
        %v7308 = vsub.f32 %v6844, %v7264
        %v7309 = vsub.f32 %v6845, %v7266
        %v7310 = vsub.f32 %v6846, %v7268
        %v7311 = vsub.f32 %v6847, %v7270
        %v7312 = vsub.f32 %v6848, %v7272
        %v7313 = vsub.f32 %v6849, %v7274
        %v7314 = vsub.f32 %v6850, %v7276
        %v7315 = vsub.f32 %v6851, %v7278
        %v7316 = vsub.f32 %v6852, %v7280
        %v7317 = vsub.f32 %v6853, %v7282
        %v7318 = vsub.f32 %v6854, %v7284
        %v7319 = vsub.f32 %v6855, %v7286
        %v7320 = vsub.f32 %v6856, %v7288
        %v7321 = vmul.f32 %v7305, 0.546274
        %v7322 = vmul.f32 %v7306, 0.546274
        %v7323 = vmul.f32 %v7307, 0.546274
        %v7324 = vmul.f32 %v7308, 0.546274
        %v7325 = vmul.f32 %v7309, 0.546274
        %v7326 = vmul.f32 %v7310, 0.546274
        %v7327 = vmul.f32 %v7311, 0.546274
        %v7328 = vmul.f32 %v7312, 0.546274
        %v7329 = vmul.f32 %v7313, 0.546274
        %v7330 = vmul.f32 %v7314, 0.546274
        %v7331 = vmul.f32 %v7315, 0.546274
        %v7332 = vmul.f32 %v7316, 0.546274
        %v7333 = vmul.f32 %v7317, 0.546274
        %v7334 = vmul.f32 %v7318, 0.546274
        %v7335 = vmul.f32 %v7319, 0.546274
        %v7336 = vmul.f32 %v7320, 0.546274
        %v7337 = vmul.f32 %v3426, 0.282095
        %v7338 = vmul.f32 %v3430, 0.282095
        %v7339 = vmul.f32 %v3434, 0.282095
        %v7340 = vmul.f32 %v3438, 0.282095
        %v7341 = vmul.f32 %v3442, 0.282095
        %v7342 = vmul.f32 %v3446, 0.282095
        %v7343 = vmul.f32 %v3450, 0.282095
        %v7344 = vmul.f32 %v3454, 0.282095
        %v7345 = vmul.f32 %v3458, 0.282095
        %v7346 = vmul.f32 %v3462, 0.282095
        %v7347 = vmul.f32 %v3466, 0.282095
        %v7348 = vmul.f32 %v3470, 0.282095
        %v7349 = vmul.f32 %v3474, 0.282095
        %v7350 = vmul.f32 %v3478, 0.282095
        %v7351 = vmul.f32 %v3482, 0.282095
        %v7352 = vmul.f32 %v3486, 0.282095
        %v7353 = vmul.f32 %v6857, %v3555
        %v7354 = vmul.f32 %v6858, %v3559
        %v7355 = vmul.f32 %v6859, %v3563
        %v7356 = vmul.f32 %v6860, %v3567
        %v7357 = vmul.f32 %v6861, %v3571
        %v7358 = vmul.f32 %v6862, %v3575
        %v7359 = vmul.f32 %v6863, %v3579
        %v7360 = vmul.f32 %v6864, %v3583
        %v7361 = vmul.f32 %v6865, %v3587
        %v7362 = vmul.f32 %v6866, %v3591
        %v7363 = vmul.f32 %v6867, %v3595
        %v7364 = vmul.f32 %v6868, %v3599
        %v7365 = vmul.f32 %v6869, %v3603
        %v7366 = vmul.f32 %v6870, %v3607
        %v7367 = vmul.f32 %v6871, %v3611
        %v7368 = vmul.f32 %v6872, %v3615
        %v7369 = vadd.f32 %v7337, %v7353
        %v7370 = vadd.f32 %v7338, %v7354
        %v7371 = vadd.f32 %v7339, %v7355
        %v7372 = vadd.f32 %v7340, %v7356
        %v7373 = vadd.f32 %v7341, %v7357
        %v7374 = vadd.f32 %v7342, %v7358
        %v7375 = vadd.f32 %v7343, %v7359
        %v7376 = vadd.f32 %v7344, %v7360
        %v7377 = vadd.f32 %v7345, %v7361
        %v7378 = vadd.f32 %v7346, %v7362
        %v7379 = vadd.f32 %v7347, %v7363
        %v7380 = vadd.f32 %v7348, %v7364
        %v7381 = vadd.f32 %v7349, %v7365
        %v7382 = vadd.f32 %v7350, %v7366
        %v7383 = vadd.f32 %v7351, %v7367
        %v7384 = vadd.f32 %v7352, %v7368
        %v7385 = vmul.f32 %v6873, %v3684
        %v7386 = vmul.f32 %v6874, %v3688
        %v7387 = vmul.f32 %v6875, %v3692
        %v7388 = vmul.f32 %v6876, %v3696
        %v7389 = vmul.f32 %v6877, %v3700
        %v7390 = vmul.f32 %v6878, %v3704
        %v7391 = vmul.f32 %v6879, %v3708
        %v7392 = vmul.f32 %v6880, %v3712
        %v7393 = vmul.f32 %v6881, %v3716
        %v7394 = vmul.f32 %v6882, %v3720
        %v7395 = vmul.f32 %v6883, %v3724
        %v7396 = vmul.f32 %v6884, %v3728
        %v7397 = vmul.f32 %v6885, %v3732
        %v7398 = vmul.f32 %v6886, %v3736
        %v7399 = vmul.f32 %v6887, %v3740
        %v7400 = vmul.f32 %v6888, %v3744
        %7417 = vrot.lane.b32.xlu0 %v7385, 127
        %v7418 = vpop.permute.xlu0 %7417
        %7419 = vrot.lane.b32.xlu0 %v7386, 127
        %v7420 = vpop.permute.xlu0 %7419
        %7421 = vrot.lane.b32.xlu0 %v7387, 127
        %v7422 = vpop.permute.xlu0 %7421
        %7423 = vrot.lane.b32.xlu0 %v7388, 127
        %v7424 = vpop.permute.xlu0 %7423
        %7425 = vrot.lane.b32.xlu0 %v7389, 127
        %v7426 = vpop.permute.xlu0 %7425
        %7427 = vrot.lane.b32.xlu0 %v7390, 127
        %v7428 = vpop.permute.xlu0 %7427
        %7429 = vrot.lane.b32.xlu0 %v7391, 127
        %v7430 = vpop.permute.xlu0 %7429
        %7431 = vrot.lane.b32.xlu0 %v7392, 127
        %v7432 = vpop.permute.xlu0 %7431
        %7433 = vrot.lane.b32.xlu0 %v7393, 127
        %v7434 = vpop.permute.xlu0 %7433
        %7435 = vrot.lane.b32.xlu0 %v7394, 127
        %v7436 = vpop.permute.xlu0 %7435
        %7437 = vrot.lane.b32.xlu0 %v7395, 127
        %v7438 = vpop.permute.xlu0 %7437
        %7439 = vrot.lane.b32.xlu0 %v7396, 127
        %v7440 = vpop.permute.xlu0 %7439
        %7441 = vrot.lane.b32.xlu0 %v7397, 127
        %v7442 = vpop.permute.xlu0 %7441
        %7443 = vrot.lane.b32.xlu0 %v7398, 127
        %v7444 = vpop.permute.xlu0 %7443
        %7445 = vrot.lane.b32.xlu0 %v7399, 127
        %v7446 = vpop.permute.xlu0 %7445
        %7447 = vrot.lane.b32.xlu0 %v7400, 127
        %v7448 = vpop.permute.xlu0 %7447
        %v7465 = vadd.f32 %v7369, %v7418
        %v7466 = vadd.f32 %v7370, %v7420
        %v7467 = vadd.f32 %v7371, %v7422
        %v7468 = vadd.f32 %v7372, %v7424
        %v7469 = vadd.f32 %v7373, %v7426
        %v7470 = vadd.f32 %v7374, %v7428
        %v7471 = vadd.f32 %v7375, %v7430
        %v7472 = vadd.f32 %v7376, %v7432
        %v7473 = vadd.f32 %v7377, %v7434
        %v7474 = vadd.f32 %v7378, %v7436
        %v7475 = vadd.f32 %v7379, %v7438
        %v7476 = vadd.f32 %v7380, %v7440
        %v7477 = vadd.f32 %v7381, %v7442
        %v7478 = vadd.f32 %v7382, %v7444
        %v7479 = vadd.f32 %v7383, %v7446
        %v7480 = vadd.f32 %v7384, %v7448
        %v7481 = vmul.f32 %v6857, %v3813
        %v7482 = vmul.f32 %v6858, %v3817
        %v7483 = vmul.f32 %v6859, %v3821
        %v7484 = vmul.f32 %v6860, %v3825
        %v7485 = vmul.f32 %v6861, %v3829
        %v7486 = vmul.f32 %v6862, %v3833
        %v7487 = vmul.f32 %v6863, %v3837
        %v7488 = vmul.f32 %v6864, %v3841
        %v7489 = vmul.f32 %v6865, %v3845
        %v7490 = vmul.f32 %v6866, %v3849
        %v7491 = vmul.f32 %v6867, %v3853
        %v7492 = vmul.f32 %v6868, %v3857
        %v7493 = vmul.f32 %v6869, %v3861
        %v7494 = vmul.f32 %v6870, %v3865
        %v7495 = vmul.f32 %v6871, %v3869
        %v7496 = vmul.f32 %v6872, %v3873
        %7513 = vrot.lane.b32.xlu0 %v7481, 1
        %v7514 = vpop.permute.xlu0 %7513
        %7515 = vrot.lane.b32.xlu0 %v7482, 1
        %v7516 = vpop.permute.xlu0 %7515
        %7517 = vrot.lane.b32.xlu0 %v7483, 1
        %v7518 = vpop.permute.xlu0 %7517
        %7519 = vrot.lane.b32.xlu0 %v7484, 1
        %v7520 = vpop.permute.xlu0 %7519
        %7521 = vrot.lane.b32.xlu0 %v7485, 1
        %v7522 = vpop.permute.xlu0 %7521
        %7523 = vrot.lane.b32.xlu0 %v7486, 1
        %v7524 = vpop.permute.xlu0 %7523
        %7525 = vrot.lane.b32.xlu0 %v7487, 1
        %v7526 = vpop.permute.xlu0 %7525
        %7527 = vrot.lane.b32.xlu0 %v7488, 1
        %v7528 = vpop.permute.xlu0 %7527
        %7529 = vrot.lane.b32.xlu0 %v7489, 1
        %v7530 = vpop.permute.xlu0 %7529
        %7531 = vrot.lane.b32.xlu0 %v7490, 1
        %v7532 = vpop.permute.xlu0 %7531
        %7533 = vrot.lane.b32.xlu0 %v7491, 1
        %v7534 = vpop.permute.xlu0 %7533
        %7535 = vrot.lane.b32.xlu0 %v7492, 1
        %v7536 = vpop.permute.xlu0 %7535
        %7537 = vrot.lane.b32.xlu0 %v7493, 1
        %v7538 = vpop.permute.xlu0 %7537
        %7539 = vrot.lane.b32.xlu0 %v7494, 1
        %v7540 = vpop.permute.xlu0 %7539
        %7541 = vrot.lane.b32.xlu0 %v7495, 1
        %v7542 = vpop.permute.xlu0 %7541
        %7543 = vrot.lane.b32.xlu0 %v7496, 1
        %v7544 = vpop.permute.xlu0 %7543
        %v7561 = vadd.f32 %v7465, %v7514
        %v7562 = vadd.f32 %v7466, %v7516
        %v7563 = vadd.f32 %v7467, %v7518
        %v7564 = vadd.f32 %v7468, %v7520
        %v7565 = vadd.f32 %v7469, %v7522
        %v7566 = vadd.f32 %v7470, %v7524
        %v7567 = vadd.f32 %v7471, %v7526
        %v7568 = vadd.f32 %v7472, %v7528
        %v7569 = vadd.f32 %v7473, %v7530
        %v7570 = vadd.f32 %v7474, %v7532
        %v7571 = vadd.f32 %v7475, %v7534
        %v7572 = vadd.f32 %v7476, %v7536
        %v7573 = vadd.f32 %v7477, %v7538
        %v7574 = vadd.f32 %v7478, %v7540
        %v7575 = vadd.f32 %v7479, %v7542
        %v7576 = vadd.f32 %v7480, %v7544
        %v7577 = vmul.f32 %v6969, %v3942
        %v7578 = vmul.f32 %v6970, %v3946
        %v7579 = vmul.f32 %v6971, %v3950
        %v7580 = vmul.f32 %v6972, %v3954
        %v7581 = vmul.f32 %v6973, %v3958
        %v7582 = vmul.f32 %v6974, %v3962
        %v7583 = vmul.f32 %v6975, %v3966
        %v7584 = vmul.f32 %v6976, %v3970
        %v7585 = vmul.f32 %v6977, %v3974
        %v7586 = vmul.f32 %v6978, %v3978
        %v7587 = vmul.f32 %v6979, %v3982
        %v7588 = vmul.f32 %v6980, %v3986
        %v7589 = vmul.f32 %v6981, %v3990
        %v7590 = vmul.f32 %v6982, %v3994
        %v7591 = vmul.f32 %v6983, %v3998
        %v7592 = vmul.f32 %v6984, %v4002
        %7609 = vrot.lane.b32.xlu0 %v7577, 1
        %v7610 = vpop.permute.xlu0 %7609
        %7611 = vrot.lane.b32.xlu0 %v7578, 1
        %v7612 = vpop.permute.xlu0 %7611
        %7613 = vrot.lane.b32.xlu0 %v7579, 1
        %v7614 = vpop.permute.xlu0 %7613
        %7615 = vrot.lane.b32.xlu0 %v7580, 1
        %v7616 = vpop.permute.xlu0 %7615
        %7617 = vrot.lane.b32.xlu0 %v7581, 1
        %v7618 = vpop.permute.xlu0 %7617
        %7619 = vrot.lane.b32.xlu0 %v7582, 1
        %v7620 = vpop.permute.xlu0 %7619
        %7621 = vrot.lane.b32.xlu0 %v7583, 1
        %v7622 = vpop.permute.xlu0 %7621
        %7623 = vrot.lane.b32.xlu0 %v7584, 1
        %v7624 = vpop.permute.xlu0 %7623
        %7625 = vrot.lane.b32.xlu0 %v7585, 1
        %v7626 = vpop.permute.xlu0 %7625
        %7627 = vrot.lane.b32.xlu0 %v7586, 1
        %v7628 = vpop.permute.xlu0 %7627
        %7629 = vrot.lane.b32.xlu0 %v7587, 1
        %v7630 = vpop.permute.xlu0 %7629
        %7631 = vrot.lane.b32.xlu0 %v7588, 1
        %v7632 = vpop.permute.xlu0 %7631
        %7633 = vrot.lane.b32.xlu0 %v7589, 1
        %v7634 = vpop.permute.xlu0 %7633
        %7635 = vrot.lane.b32.xlu0 %v7590, 1
        %v7636 = vpop.permute.xlu0 %7635
        %7637 = vrot.lane.b32.xlu0 %v7591, 1
        %v7638 = vpop.permute.xlu0 %7637
        %7639 = vrot.lane.b32.xlu0 %v7592, 1
        %v7640 = vpop.permute.xlu0 %7639
        %v7657 = vadd.f32 %v7561, %v7610
        %v7658 = vadd.f32 %v7562, %v7612
        %v7659 = vadd.f32 %v7563, %v7614
        %v7660 = vadd.f32 %v7564, %v7616
        %v7661 = vadd.f32 %v7565, %v7618
        %v7662 = vadd.f32 %v7566, %v7620
        %v7663 = vadd.f32 %v7567, %v7622
        %v7664 = vadd.f32 %v7568, %v7624
        %v7665 = vadd.f32 %v7569, %v7626
        %v7666 = vadd.f32 %v7570, %v7628
        %v7667 = vadd.f32 %v7571, %v7630
        %v7668 = vadd.f32 %v7572, %v7632
        %v7669 = vadd.f32 %v7573, %v7634
        %v7670 = vadd.f32 %v7574, %v7636
        %v7671 = vadd.f32 %v7575, %v7638
        %v7672 = vadd.f32 %v7576, %v7640
        %v7673 = vmul.f32 %v6985, %v4071
        %v7674 = vmul.f32 %v6986, %v4075
        %v7675 = vmul.f32 %v6987, %v4079
        %v7676 = vmul.f32 %v6988, %v4083
        %v7677 = vmul.f32 %v6989, %v4087
        %v7678 = vmul.f32 %v6990, %v4091
        %v7679 = vmul.f32 %v6991, %v4095
        %v7680 = vmul.f32 %v6992, %v4099
        %v7681 = vmul.f32 %v6993, %v4103
        %v7682 = vmul.f32 %v6994, %v4107
        %v7683 = vmul.f32 %v6995, %v4111
        %v7684 = vmul.f32 %v6996, %v4115
        %v7685 = vmul.f32 %v6997, %v4119
        %v7686 = vmul.f32 %v6998, %v4123
        %v7687 = vmul.f32 %v6999, %v4127
        %v7688 = vmul.f32 %v7000, %v4131
        %v7689 = vadd.f32 %v7657, %v7673
        %v7690 = vadd.f32 %v7658, %v7674
        %v7691 = vadd.f32 %v7659, %v7675
        %v7692 = vadd.f32 %v7660, %v7676
        %v7693 = vadd.f32 %v7661, %v7677
        %v7694 = vadd.f32 %v7662, %v7678
        %v7695 = vadd.f32 %v7663, %v7679
        %v7696 = vadd.f32 %v7664, %v7680
        %v7697 = vadd.f32 %v7665, %v7681
        %v7698 = vadd.f32 %v7666, %v7682
        %v7699 = vadd.f32 %v7667, %v7683
        %v7700 = vadd.f32 %v7668, %v7684
        %v7701 = vadd.f32 %v7669, %v7685
        %v7702 = vadd.f32 %v7670, %v7686
        %v7703 = vadd.f32 %v7671, %v7687
        %v7704 = vadd.f32 %v7672, %v7688
        %v7705 = vmul.f32 %v7161, %v4200
        %v7706 = vmul.f32 %v7162, %v4204
        %v7707 = vmul.f32 %v7163, %v4208
        %v7708 = vmul.f32 %v7164, %v4212
        %v7709 = vmul.f32 %v7165, %v4216
        %v7710 = vmul.f32 %v7166, %v4220
        %v7711 = vmul.f32 %v7167, %v4224
        %v7712 = vmul.f32 %v7168, %v4228
        %v7713 = vmul.f32 %v7169, %v4232
        %v7714 = vmul.f32 %v7170, %v4236
        %v7715 = vmul.f32 %v7171, %v4240
        %v7716 = vmul.f32 %v7172, %v4244
        %v7717 = vmul.f32 %v7173, %v4248
        %v7718 = vmul.f32 %v7174, %v4252
        %v7719 = vmul.f32 %v7175, %v4256
        %v7720 = vmul.f32 %v7176, %v4260
        %7737 = vrot.lane.b32.xlu0 %v7705, 127
        %v7738 = vpop.permute.xlu0 %7737
        %7739 = vrot.lane.b32.xlu0 %v7706, 127
        %v7740 = vpop.permute.xlu0 %7739
        %7741 = vrot.lane.b32.xlu0 %v7707, 127
        %v7742 = vpop.permute.xlu0 %7741
        %7743 = vrot.lane.b32.xlu0 %v7708, 127
        %v7744 = vpop.permute.xlu0 %7743
        %7745 = vrot.lane.b32.xlu0 %v7709, 127
        %v7746 = vpop.permute.xlu0 %7745
        %7747 = vrot.lane.b32.xlu0 %v7710, 127
        %v7748 = vpop.permute.xlu0 %7747
        %7749 = vrot.lane.b32.xlu0 %v7711, 127
        %v7750 = vpop.permute.xlu0 %7749
        %7751 = vrot.lane.b32.xlu0 %v7712, 127
        %v7752 = vpop.permute.xlu0 %7751
        %7753 = vrot.lane.b32.xlu0 %v7713, 127
        %v7754 = vpop.permute.xlu0 %7753
        %7755 = vrot.lane.b32.xlu0 %v7714, 127
        %v7756 = vpop.permute.xlu0 %7755
        %7757 = vrot.lane.b32.xlu0 %v7715, 127
        %v7758 = vpop.permute.xlu0 %7757
        %7759 = vrot.lane.b32.xlu0 %v7716, 127
        %v7760 = vpop.permute.xlu0 %7759
        %7761 = vrot.lane.b32.xlu0 %v7717, 127
        %v7762 = vpop.permute.xlu0 %7761
        %7763 = vrot.lane.b32.xlu0 %v7718, 127
        %v7764 = vpop.permute.xlu0 %7763
        %7765 = vrot.lane.b32.xlu0 %v7719, 127
        %v7766 = vpop.permute.xlu0 %7765
        %7767 = vrot.lane.b32.xlu0 %v7720, 127
        %v7768 = vpop.permute.xlu0 %7767
        %v7785 = vadd.f32 %v7689, %v7738
        %v7786 = vadd.f32 %v7690, %v7740
        %v7787 = vadd.f32 %v7691, %v7742
        %v7788 = vadd.f32 %v7692, %v7744
        %v7789 = vadd.f32 %v7693, %v7746
        %v7790 = vadd.f32 %v7694, %v7748
        %v7791 = vadd.f32 %v7695, %v7750
        %v7792 = vadd.f32 %v7696, %v7752
        %v7793 = vadd.f32 %v7697, %v7754
        %v7794 = vadd.f32 %v7698, %v7756
        %v7795 = vadd.f32 %v7699, %v7758
        %v7796 = vadd.f32 %v7700, %v7760
        %v7797 = vadd.f32 %v7701, %v7762
        %v7798 = vadd.f32 %v7702, %v7764
        %v7799 = vadd.f32 %v7703, %v7766
        %v7800 = vadd.f32 %v7704, %v7768
        %v7801 = vmul.f32 %v7241, %v4329
        %v7802 = vmul.f32 %v7242, %v4333
        %v7803 = vmul.f32 %v7243, %v4337
        %v7804 = vmul.f32 %v7244, %v4341
        %v7805 = vmul.f32 %v7245, %v4345
        %v7806 = vmul.f32 %v7246, %v4349
        %v7807 = vmul.f32 %v7247, %v4353
        %v7808 = vmul.f32 %v7248, %v4357
        %v7809 = vmul.f32 %v7249, %v4361
        %v7810 = vmul.f32 %v7250, %v4365
        %v7811 = vmul.f32 %v7251, %v4369
        %v7812 = vmul.f32 %v7252, %v4373
        %v7813 = vmul.f32 %v7253, %v4377
        %v7814 = vmul.f32 %v7254, %v4381
        %v7815 = vmul.f32 %v7255, %v4385
        %v7816 = vmul.f32 %v7256, %v4389
        %7833 = vrot.lane.b32.xlu0 %v7801, 1
        %v7834 = vpop.permute.xlu0 %7833
        %7835 = vrot.lane.b32.xlu0 %v7802, 1
        %v7836 = vpop.permute.xlu0 %7835
        %7837 = vrot.lane.b32.xlu0 %v7803, 1
        %v7838 = vpop.permute.xlu0 %7837
        %7839 = vrot.lane.b32.xlu0 %v7804, 1
        %v7840 = vpop.permute.xlu0 %7839
        %7841 = vrot.lane.b32.xlu0 %v7805, 1
        %v7842 = vpop.permute.xlu0 %7841
        %7843 = vrot.lane.b32.xlu0 %v7806, 1
        %v7844 = vpop.permute.xlu0 %7843
        %7845 = vrot.lane.b32.xlu0 %v7807, 1
        %v7846 = vpop.permute.xlu0 %7845
        %7847 = vrot.lane.b32.xlu0 %v7808, 1
        %v7848 = vpop.permute.xlu0 %7847
        %7849 = vrot.lane.b32.xlu0 %v7809, 1
        %v7850 = vpop.permute.xlu0 %7849
        %7851 = vrot.lane.b32.xlu0 %v7810, 1
        %v7852 = vpop.permute.xlu0 %7851
        %7853 = vrot.lane.b32.xlu0 %v7811, 1
        %v7854 = vpop.permute.xlu0 %7853
        %7855 = vrot.lane.b32.xlu0 %v7812, 1
        %v7856 = vpop.permute.xlu0 %7855
        %7857 = vrot.lane.b32.xlu0 %v7813, 1
        %v7858 = vpop.permute.xlu0 %7857
        %7859 = vrot.lane.b32.xlu0 %v7814, 1
        %v7860 = vpop.permute.xlu0 %7859
        %7861 = vrot.lane.b32.xlu0 %v7815, 1
        %v7862 = vpop.permute.xlu0 %7861
        %7863 = vrot.lane.b32.xlu0 %v7816, 1
        %v7864 = vpop.permute.xlu0 %7863
        %v7881 = vadd.f32 %v7785, %v7834
        %v7882 = vadd.f32 %v7786, %v7836
        %v7883 = vadd.f32 %v7787, %v7838
        %v7884 = vadd.f32 %v7788, %v7840
        %v7885 = vadd.f32 %v7789, %v7842
        %v7886 = vadd.f32 %v7790, %v7844
        %v7887 = vadd.f32 %v7791, %v7846
        %v7888 = vadd.f32 %v7792, %v7848
        %v7889 = vadd.f32 %v7793, %v7850
        %v7890 = vadd.f32 %v7794, %v7852
        %v7891 = vadd.f32 %v7795, %v7854
        %v7892 = vadd.f32 %v7796, %v7856
        %v7893 = vadd.f32 %v7797, %v7858
        %v7894 = vadd.f32 %v7798, %v7860
        %v7895 = vadd.f32 %v7799, %v7862
        %v7896 = vadd.f32 %v7800, %v7864
        %v7897 = vmul.f32 %v7321, %v4458
        %v7898 = vmul.f32 %v7322, %v4462
        %v7899 = vmul.f32 %v7323, %v4466
        %v7900 = vmul.f32 %v7324, %v4470
        %v7901 = vmul.f32 %v7325, %v4474
        %v7902 = vmul.f32 %v7326, %v4478
        %v7903 = vmul.f32 %v7327, %v4482
        %v7904 = vmul.f32 %v7328, %v4486
        %v7905 = vmul.f32 %v7329, %v4490
        %v7906 = vmul.f32 %v7330, %v4494
        %v7907 = vmul.f32 %v7331, %v4498
        %v7908 = vmul.f32 %v7332, %v4502
        %v7909 = vmul.f32 %v7333, %v4506
        %v7910 = vmul.f32 %v7334, %v4510
        %v7911 = vmul.f32 %v7335, %v4514
        %v7912 = vmul.f32 %v7336, %v4518
        %7929 = vrot.lane.b32.xlu0 %v7897, 1
        %v7930 = vpop.permute.xlu0 %7929
        %7931 = vrot.lane.b32.xlu0 %v7898, 1
        %v7932 = vpop.permute.xlu0 %7931
        %7933 = vrot.lane.b32.xlu0 %v7899, 1
        %v7934 = vpop.permute.xlu0 %7933
        %7935 = vrot.lane.b32.xlu0 %v7900, 1
        %v7936 = vpop.permute.xlu0 %7935
        %7937 = vrot.lane.b32.xlu0 %v7901, 1
        %v7938 = vpop.permute.xlu0 %7937
        %7939 = vrot.lane.b32.xlu0 %v7902, 1
        %v7940 = vpop.permute.xlu0 %7939
        %7941 = vrot.lane.b32.xlu0 %v7903, 1
        %v7942 = vpop.permute.xlu0 %7941
        %7943 = vrot.lane.b32.xlu0 %v7904, 1
        %v7944 = vpop.permute.xlu0 %7943
        %7945 = vrot.lane.b32.xlu0 %v7905, 1
        %v7946 = vpop.permute.xlu0 %7945
        %7947 = vrot.lane.b32.xlu0 %v7906, 1
        %v7948 = vpop.permute.xlu0 %7947
        %7949 = vrot.lane.b32.xlu0 %v7907, 1
        %v7950 = vpop.permute.xlu0 %7949
        %7951 = vrot.lane.b32.xlu0 %v7908, 1
        %v7952 = vpop.permute.xlu0 %7951
        %7953 = vrot.lane.b32.xlu0 %v7909, 1
        %v7954 = vpop.permute.xlu0 %7953
        %7955 = vrot.lane.b32.xlu0 %v7910, 1
        %v7956 = vpop.permute.xlu0 %7955
        %7957 = vrot.lane.b32.xlu0 %v7911, 1
        %v7958 = vpop.permute.xlu0 %7957
        %7959 = vrot.lane.b32.xlu0 %v7912, 1
        %v7960 = vpop.permute.xlu0 %7959
        %v7977 = vadd.f32 %v7881, %v7930
        %v7978 = vadd.f32 %v7882, %v7932
        %v7979 = vadd.f32 %v7883, %v7934
        %v7980 = vadd.f32 %v7884, %v7936
        %v7981 = vadd.f32 %v7885, %v7938
        %v7982 = vadd.f32 %v7886, %v7940
        %v7983 = vadd.f32 %v7887, %v7942
        %v7984 = vadd.f32 %v7888, %v7944
        %v7985 = vadd.f32 %v7889, %v7946
        %v7986 = vadd.f32 %v7890, %v7948
        %v7987 = vadd.f32 %v7891, %v7950
        %v7988 = vadd.f32 %v7892, %v7952
        %v7989 = vadd.f32 %v7893, %v7954
        %v7990 = vadd.f32 %v7894, %v7956
        %v7991 = vadd.f32 %v7895, %v7958
        %v7992 = vadd.f32 %v7896, %v7960
        %v7993 = vmul.f32 %v4587, 0.282095
        %v7994 = vmul.f32 %v4591, 0.282095
        %v7995 = vmul.f32 %v4595, 0.282095
        %v7996 = vmul.f32 %v4599, 0.282095
        %v7997 = vmul.f32 %v4603, 0.282095
        %v7998 = vmul.f32 %v4607, 0.282095
        %v7999 = vmul.f32 %v4611, 0.282095
        %v8000 = vmul.f32 %v4615, 0.282095
        %v8001 = vmul.f32 %v4619, 0.282095
        %v8002 = vmul.f32 %v4623, 0.282095
        %v8003 = vmul.f32 %v4627, 0.282095
        %v8004 = vmul.f32 %v4631, 0.282095
        %v8005 = vmul.f32 %v4635, 0.282095
        %v8006 = vmul.f32 %v4639, 0.282095
        %v8007 = vmul.f32 %v4643, 0.282095
        %v8008 = vmul.f32 %v4647, 0.282095
        %v8009 = vmul.f32 %v6857, %v4716
        %v8010 = vmul.f32 %v6858, %v4720
        %v8011 = vmul.f32 %v6859, %v4724
        %v8012 = vmul.f32 %v6860, %v4728
        %v8013 = vmul.f32 %v6861, %v4732
        %v8014 = vmul.f32 %v6862, %v4736
        %v8015 = vmul.f32 %v6863, %v4740
        %v8016 = vmul.f32 %v6864, %v4744
        %v8017 = vmul.f32 %v6865, %v4748
        %v8018 = vmul.f32 %v6866, %v4752
        %v8019 = vmul.f32 %v6867, %v4756
        %v8020 = vmul.f32 %v6868, %v4760
        %v8021 = vmul.f32 %v6869, %v4764
        %v8022 = vmul.f32 %v6870, %v4768
        %v8023 = vmul.f32 %v6871, %v4772
        %v8024 = vmul.f32 %v6872, %v4776
        %v8025 = vadd.f32 %v7993, %v8009
        %v8026 = vadd.f32 %v7994, %v8010
        %v8027 = vadd.f32 %v7995, %v8011
        %v8028 = vadd.f32 %v7996, %v8012
        %v8029 = vadd.f32 %v7997, %v8013
        %v8030 = vadd.f32 %v7998, %v8014
        %v8031 = vadd.f32 %v7999, %v8015
        %v8032 = vadd.f32 %v8000, %v8016
        %v8033 = vadd.f32 %v8001, %v8017
        %v8034 = vadd.f32 %v8002, %v8018
        %v8035 = vadd.f32 %v8003, %v8019
        %v8036 = vadd.f32 %v8004, %v8020
        %v8037 = vadd.f32 %v8005, %v8021
        %v8038 = vadd.f32 %v8006, %v8022
        %v8039 = vadd.f32 %v8007, %v8023
        %v8040 = vadd.f32 %v8008, %v8024
        %v8041 = vmul.f32 %v6873, %v4845
        %v8042 = vmul.f32 %v6874, %v4849
        %v8043 = vmul.f32 %v6875, %v4853
        %v8044 = vmul.f32 %v6876, %v4857
        %v8045 = vmul.f32 %v6877, %v4861
        %v8046 = vmul.f32 %v6878, %v4865
        %v8047 = vmul.f32 %v6879, %v4869
        %v8048 = vmul.f32 %v6880, %v4873
        %v8049 = vmul.f32 %v6881, %v4877
        %v8050 = vmul.f32 %v6882, %v4881
        %v8051 = vmul.f32 %v6883, %v4885
        %v8052 = vmul.f32 %v6884, %v4889
        %v8053 = vmul.f32 %v6885, %v4893
        %v8054 = vmul.f32 %v6886, %v4897
        %v8055 = vmul.f32 %v6887, %v4901
        %v8056 = vmul.f32 %v6888, %v4905
        %8073 = vrot.lane.b32.xlu0 %v8041, 127
        %v8074 = vpop.permute.xlu0 %8073
        %8075 = vrot.lane.b32.xlu0 %v8042, 127
        %v8076 = vpop.permute.xlu0 %8075
        %8077 = vrot.lane.b32.xlu0 %v8043, 127
        %v8078 = vpop.permute.xlu0 %8077
        %8079 = vrot.lane.b32.xlu0 %v8044, 127
        %v8080 = vpop.permute.xlu0 %8079
        %8081 = vrot.lane.b32.xlu0 %v8045, 127
        %v8082 = vpop.permute.xlu0 %8081
        %8083 = vrot.lane.b32.xlu0 %v8046, 127
        %v8084 = vpop.permute.xlu0 %8083
        %8085 = vrot.lane.b32.xlu0 %v8047, 127
        %v8086 = vpop.permute.xlu0 %8085
        %8087 = vrot.lane.b32.xlu0 %v8048, 127
        %v8088 = vpop.permute.xlu0 %8087
        %8089 = vrot.lane.b32.xlu0 %v8049, 127
        %v8090 = vpop.permute.xlu0 %8089
        %8091 = vrot.lane.b32.xlu0 %v8050, 127
        %v8092 = vpop.permute.xlu0 %8091
        %8093 = vrot.lane.b32.xlu0 %v8051, 127
        %v8094 = vpop.permute.xlu0 %8093
        %8095 = vrot.lane.b32.xlu0 %v8052, 127
        %v8096 = vpop.permute.xlu0 %8095
        %8097 = vrot.lane.b32.xlu0 %v8053, 127
        %v8098 = vpop.permute.xlu0 %8097
        %8099 = vrot.lane.b32.xlu0 %v8054, 127
        %v8100 = vpop.permute.xlu0 %8099
        %8101 = vrot.lane.b32.xlu0 %v8055, 127
        %v8102 = vpop.permute.xlu0 %8101
        %8103 = vrot.lane.b32.xlu0 %v8056, 127
        %v8104 = vpop.permute.xlu0 %8103
        %v8121 = vadd.f32 %v8025, %v8074
        %v8122 = vadd.f32 %v8026, %v8076
        %v8123 = vadd.f32 %v8027, %v8078
        %v8124 = vadd.f32 %v8028, %v8080
        %v8125 = vadd.f32 %v8029, %v8082
        %v8126 = vadd.f32 %v8030, %v8084
        %v8127 = vadd.f32 %v8031, %v8086
        %v8128 = vadd.f32 %v8032, %v8088
        %v8129 = vadd.f32 %v8033, %v8090
        %v8130 = vadd.f32 %v8034, %v8092
        %v8131 = vadd.f32 %v8035, %v8094
        %v8132 = vadd.f32 %v8036, %v8096
        %v8133 = vadd.f32 %v8037, %v8098
        %v8134 = vadd.f32 %v8038, %v8100
        %v8135 = vadd.f32 %v8039, %v8102
        %v8136 = vadd.f32 %v8040, %v8104
        %v8137 = vmul.f32 %v6857, %v4974
        %v8138 = vmul.f32 %v6858, %v4978
        %v8139 = vmul.f32 %v6859, %v4982
        %v8140 = vmul.f32 %v6860, %v4986
        %v8141 = vmul.f32 %v6861, %v4990
        %v8142 = vmul.f32 %v6862, %v4994
        %v8143 = vmul.f32 %v6863, %v4998
        %v8144 = vmul.f32 %v6864, %v5002
        %v8145 = vmul.f32 %v6865, %v5006
        %v8146 = vmul.f32 %v6866, %v5010
        %v8147 = vmul.f32 %v6867, %v5014
        %v8148 = vmul.f32 %v6868, %v5018
        %v8149 = vmul.f32 %v6869, %v5022
        %v8150 = vmul.f32 %v6870, %v5026
        %v8151 = vmul.f32 %v6871, %v5030
        %v8152 = vmul.f32 %v6872, %v5034
        %8169 = vrot.lane.b32.xlu0 %v8137, 1
        %v8170 = vpop.permute.xlu0 %8169
        %8171 = vrot.lane.b32.xlu0 %v8138, 1
        %v8172 = vpop.permute.xlu0 %8171
        %8173 = vrot.lane.b32.xlu0 %v8139, 1
        %v8174 = vpop.permute.xlu0 %8173
        %8175 = vrot.lane.b32.xlu0 %v8140, 1
        %v8176 = vpop.permute.xlu0 %8175
        %8177 = vrot.lane.b32.xlu0 %v8141, 1
        %v8178 = vpop.permute.xlu0 %8177
        %8179 = vrot.lane.b32.xlu0 %v8142, 1
        %v8180 = vpop.permute.xlu0 %8179
        %8181 = vrot.lane.b32.xlu0 %v8143, 1
        %v8182 = vpop.permute.xlu0 %8181
        %8183 = vrot.lane.b32.xlu0 %v8144, 1
        %v8184 = vpop.permute.xlu0 %8183
        %8185 = vrot.lane.b32.xlu0 %v8145, 1
        %v8186 = vpop.permute.xlu0 %8185
        %8187 = vrot.lane.b32.xlu0 %v8146, 1
        %v8188 = vpop.permute.xlu0 %8187
        %8189 = vrot.lane.b32.xlu0 %v8147, 1
        %v8190 = vpop.permute.xlu0 %8189
        %8191 = vrot.lane.b32.xlu0 %v8148, 1
        %v8192 = vpop.permute.xlu0 %8191
        %8193 = vrot.lane.b32.xlu0 %v8149, 1
        %v8194 = vpop.permute.xlu0 %8193
        %8195 = vrot.lane.b32.xlu0 %v8150, 1
        %v8196 = vpop.permute.xlu0 %8195
        %8197 = vrot.lane.b32.xlu0 %v8151, 1
        %v8198 = vpop.permute.xlu0 %8197
        %8199 = vrot.lane.b32.xlu0 %v8152, 1
        %v8200 = vpop.permute.xlu0 %8199
        %v8217 = vadd.f32 %v8121, %v8170
        %v8218 = vadd.f32 %v8122, %v8172
        %v8219 = vadd.f32 %v8123, %v8174
        %v8220 = vadd.f32 %v8124, %v8176
        %v8221 = vadd.f32 %v8125, %v8178
        %v8222 = vadd.f32 %v8126, %v8180
        %v8223 = vadd.f32 %v8127, %v8182
        %v8224 = vadd.f32 %v8128, %v8184
        %v8225 = vadd.f32 %v8129, %v8186
        %v8226 = vadd.f32 %v8130, %v8188
        %v8227 = vadd.f32 %v8131, %v8190
        %v8228 = vadd.f32 %v8132, %v8192
        %v8229 = vadd.f32 %v8133, %v8194
        %v8230 = vadd.f32 %v8134, %v8196
        %v8231 = vadd.f32 %v8135, %v8198
        %v8232 = vadd.f32 %v8136, %v8200
        %v8233 = vmul.f32 %v6969, %v5103
        %v8234 = vmul.f32 %v6970, %v5107
        %v8235 = vmul.f32 %v6971, %v5111
        %v8236 = vmul.f32 %v6972, %v5115
        %v8237 = vmul.f32 %v6973, %v5119
        %v8238 = vmul.f32 %v6974, %v5123
        %v8239 = vmul.f32 %v6975, %v5127
        %v8240 = vmul.f32 %v6976, %v5131
        %v8241 = vmul.f32 %v6977, %v5135
        %v8242 = vmul.f32 %v6978, %v5139
        %v8243 = vmul.f32 %v6979, %v5143
        %v8244 = vmul.f32 %v6980, %v5147
        %v8245 = vmul.f32 %v6981, %v5151
        %v8246 = vmul.f32 %v6982, %v5155
        %v8247 = vmul.f32 %v6983, %v5159
        %v8248 = vmul.f32 %v6984, %v5163
        %8265 = vrot.lane.b32.xlu0 %v8233, 1
        %v8266 = vpop.permute.xlu0 %8265
        %8267 = vrot.lane.b32.xlu0 %v8234, 1
        %v8268 = vpop.permute.xlu0 %8267
        %8269 = vrot.lane.b32.xlu0 %v8235, 1
        %v8270 = vpop.permute.xlu0 %8269
        %8271 = vrot.lane.b32.xlu0 %v8236, 1
        %v8272 = vpop.permute.xlu0 %8271
        %8273 = vrot.lane.b32.xlu0 %v8237, 1
        %v8274 = vpop.permute.xlu0 %8273
        %8275 = vrot.lane.b32.xlu0 %v8238, 1
        %v8276 = vpop.permute.xlu0 %8275
        %8277 = vrot.lane.b32.xlu0 %v8239, 1
        %v8278 = vpop.permute.xlu0 %8277
        %8279 = vrot.lane.b32.xlu0 %v8240, 1
        %v8280 = vpop.permute.xlu0 %8279
        %8281 = vrot.lane.b32.xlu0 %v8241, 1
        %v8282 = vpop.permute.xlu0 %8281
        %8283 = vrot.lane.b32.xlu0 %v8242, 1
        %v8284 = vpop.permute.xlu0 %8283
        %8285 = vrot.lane.b32.xlu0 %v8243, 1
        %v8286 = vpop.permute.xlu0 %8285
        %8287 = vrot.lane.b32.xlu0 %v8244, 1
        %v8288 = vpop.permute.xlu0 %8287
        %8289 = vrot.lane.b32.xlu0 %v8245, 1
        %v8290 = vpop.permute.xlu0 %8289
        %8291 = vrot.lane.b32.xlu0 %v8246, 1
        %v8292 = vpop.permute.xlu0 %8291
        %8293 = vrot.lane.b32.xlu0 %v8247, 1
        %v8294 = vpop.permute.xlu0 %8293
        %8295 = vrot.lane.b32.xlu0 %v8248, 1
        %v8296 = vpop.permute.xlu0 %8295
        %v8313 = vadd.f32 %v8217, %v8266
        %v8314 = vadd.f32 %v8218, %v8268
        %v8315 = vadd.f32 %v8219, %v8270
        %v8316 = vadd.f32 %v8220, %v8272
        %v8317 = vadd.f32 %v8221, %v8274
        %v8318 = vadd.f32 %v8222, %v8276
        %v8319 = vadd.f32 %v8223, %v8278
        %v8320 = vadd.f32 %v8224, %v8280
        %v8321 = vadd.f32 %v8225, %v8282
        %v8322 = vadd.f32 %v8226, %v8284
        %v8323 = vadd.f32 %v8227, %v8286
        %v8324 = vadd.f32 %v8228, %v8288
        %v8325 = vadd.f32 %v8229, %v8290
        %v8326 = vadd.f32 %v8230, %v8292
        %v8327 = vadd.f32 %v8231, %v8294
        %v8328 = vadd.f32 %v8232, %v8296
        %v8329 = vmul.f32 %v6985, %v5232
        %v8330 = vmul.f32 %v6986, %v5236
        %v8331 = vmul.f32 %v6987, %v5240
        %v8332 = vmul.f32 %v6988, %v5244
        %v8333 = vmul.f32 %v6989, %v5248
        %v8334 = vmul.f32 %v6990, %v5252
        %v8335 = vmul.f32 %v6991, %v5256
        %v8336 = vmul.f32 %v6992, %v5260
        %v8337 = vmul.f32 %v6993, %v5264
        %v8338 = vmul.f32 %v6994, %v5268
        %v8339 = vmul.f32 %v6995, %v5272
        %v8340 = vmul.f32 %v6996, %v5276
        %v8341 = vmul.f32 %v6997, %v5280
        %v8342 = vmul.f32 %v6998, %v5284
        %v8343 = vmul.f32 %v6999, %v5288
        %v8344 = vmul.f32 %v7000, %v5292
        %v8345 = vadd.f32 %v8313, %v8329
        %v8346 = vadd.f32 %v8314, %v8330
        %v8347 = vadd.f32 %v8315, %v8331
        %v8348 = vadd.f32 %v8316, %v8332
        %v8349 = vadd.f32 %v8317, %v8333
        %v8350 = vadd.f32 %v8318, %v8334
        %v8351 = vadd.f32 %v8319, %v8335
        %v8352 = vadd.f32 %v8320, %v8336
        %v8353 = vadd.f32 %v8321, %v8337
        %v8354 = vadd.f32 %v8322, %v8338
        %v8355 = vadd.f32 %v8323, %v8339
        %v8356 = vadd.f32 %v8324, %v8340
        %v8357 = vadd.f32 %v8325, %v8341
        %v8358 = vadd.f32 %v8326, %v8342
        %v8359 = vadd.f32 %v8327, %v8343
        %v8360 = vadd.f32 %v8328, %v8344
        %v8361 = vmul.f32 %v7161, %v5361
        %v8362 = vmul.f32 %v7162, %v5365
        %v8363 = vmul.f32 %v7163, %v5369
        %v8364 = vmul.f32 %v7164, %v5373
        %v8365 = vmul.f32 %v7165, %v5377
        %v8366 = vmul.f32 %v7166, %v5381
        %v8367 = vmul.f32 %v7167, %v5385
        %v8368 = vmul.f32 %v7168, %v5389
        %v8369 = vmul.f32 %v7169, %v5393
        %v8370 = vmul.f32 %v7170, %v5397
        %v8371 = vmul.f32 %v7171, %v5401
        %v8372 = vmul.f32 %v7172, %v5405
        %v8373 = vmul.f32 %v7173, %v5409
        %v8374 = vmul.f32 %v7174, %v5413
        %v8375 = vmul.f32 %v7175, %v5417
        %v8376 = vmul.f32 %v7176, %v5421
        %8393 = vrot.lane.b32.xlu0 %v8361, 127
        %v8394 = vpop.permute.xlu0 %8393
        %8395 = vrot.lane.b32.xlu0 %v8362, 127
        %v8396 = vpop.permute.xlu0 %8395
        %8397 = vrot.lane.b32.xlu0 %v8363, 127
        %v8398 = vpop.permute.xlu0 %8397
        %8399 = vrot.lane.b32.xlu0 %v8364, 127
        %v8400 = vpop.permute.xlu0 %8399
        %8401 = vrot.lane.b32.xlu0 %v8365, 127
        %v8402 = vpop.permute.xlu0 %8401
        %8403 = vrot.lane.b32.xlu0 %v8366, 127
        %v8404 = vpop.permute.xlu0 %8403
        %8405 = vrot.lane.b32.xlu0 %v8367, 127
        %v8406 = vpop.permute.xlu0 %8405
        %8407 = vrot.lane.b32.xlu0 %v8368, 127
        %v8408 = vpop.permute.xlu0 %8407
        %8409 = vrot.lane.b32.xlu0 %v8369, 127
        %v8410 = vpop.permute.xlu0 %8409
        %8411 = vrot.lane.b32.xlu0 %v8370, 127
        %v8412 = vpop.permute.xlu0 %8411
        %8413 = vrot.lane.b32.xlu0 %v8371, 127
        %v8414 = vpop.permute.xlu0 %8413
        %8415 = vrot.lane.b32.xlu0 %v8372, 127
        %v8416 = vpop.permute.xlu0 %8415
        %8417 = vrot.lane.b32.xlu0 %v8373, 127
        %v8418 = vpop.permute.xlu0 %8417
        %8419 = vrot.lane.b32.xlu0 %v8374, 127
        %v8420 = vpop.permute.xlu0 %8419
        %8421 = vrot.lane.b32.xlu0 %v8375, 127
        %v8422 = vpop.permute.xlu0 %8421
        %8423 = vrot.lane.b32.xlu0 %v8376, 127
        %v8424 = vpop.permute.xlu0 %8423
        %v8441 = vadd.f32 %v8345, %v8394
        %v8442 = vadd.f32 %v8346, %v8396
        %v8443 = vadd.f32 %v8347, %v8398
        %v8444 = vadd.f32 %v8348, %v8400
        %v8445 = vadd.f32 %v8349, %v8402
        %v8446 = vadd.f32 %v8350, %v8404
        %v8447 = vadd.f32 %v8351, %v8406
        %v8448 = vadd.f32 %v8352, %v8408
        %v8449 = vadd.f32 %v8353, %v8410
        %v8450 = vadd.f32 %v8354, %v8412
        %v8451 = vadd.f32 %v8355, %v8414
        %v8452 = vadd.f32 %v8356, %v8416
        %v8453 = vadd.f32 %v8357, %v8418
        %v8454 = vadd.f32 %v8358, %v8420
        %v8455 = vadd.f32 %v8359, %v8422
        %v8456 = vadd.f32 %v8360, %v8424
        %v8457 = vmul.f32 %v7241, %v5490
        %v8458 = vmul.f32 %v7242, %v5494
        %v8459 = vmul.f32 %v7243, %v5498
        %v8460 = vmul.f32 %v7244, %v5502
        %v8461 = vmul.f32 %v7245, %v5506
        %v8462 = vmul.f32 %v7246, %v5510
        %v8463 = vmul.f32 %v7247, %v5514
        %v8464 = vmul.f32 %v7248, %v5518
        %v8465 = vmul.f32 %v7249, %v5522
        %v8466 = vmul.f32 %v7250, %v5526
        %v8467 = vmul.f32 %v7251, %v5530
        %v8468 = vmul.f32 %v7252, %v5534
        %v8469 = vmul.f32 %v7253, %v5538
        %v8470 = vmul.f32 %v7254, %v5542
        %v8471 = vmul.f32 %v7255, %v5546
        %v8472 = vmul.f32 %v7256, %v5550
        %8489 = vrot.lane.b32.xlu0 %v8457, 1
        %v8490 = vpop.permute.xlu0 %8489
        %8491 = vrot.lane.b32.xlu0 %v8458, 1
        %v8492 = vpop.permute.xlu0 %8491
        %8493 = vrot.lane.b32.xlu0 %v8459, 1
        %v8494 = vpop.permute.xlu0 %8493
        %8495 = vrot.lane.b32.xlu0 %v8460, 1
        %v8496 = vpop.permute.xlu0 %8495
        %8497 = vrot.lane.b32.xlu0 %v8461, 1
        %v8498 = vpop.permute.xlu0 %8497
        %8499 = vrot.lane.b32.xlu0 %v8462, 1
        %v8500 = vpop.permute.xlu0 %8499
        %8501 = vrot.lane.b32.xlu0 %v8463, 1
        %v8502 = vpop.permute.xlu0 %8501
        %8503 = vrot.lane.b32.xlu0 %v8464, 1
        %v8504 = vpop.permute.xlu0 %8503
        %8505 = vrot.lane.b32.xlu0 %v8465, 1
        %v8506 = vpop.permute.xlu0 %8505
        %8507 = vrot.lane.b32.xlu0 %v8466, 1
        %v8508 = vpop.permute.xlu0 %8507
        %8509 = vrot.lane.b32.xlu0 %v8467, 1
        %v8510 = vpop.permute.xlu0 %8509
        %8511 = vrot.lane.b32.xlu0 %v8468, 1
        %v8512 = vpop.permute.xlu0 %8511
        %8513 = vrot.lane.b32.xlu0 %v8469, 1
        %v8514 = vpop.permute.xlu0 %8513
        %8515 = vrot.lane.b32.xlu0 %v8470, 1
        %v8516 = vpop.permute.xlu0 %8515
        %8517 = vrot.lane.b32.xlu0 %v8471, 1
        %v8518 = vpop.permute.xlu0 %8517
        %8519 = vrot.lane.b32.xlu0 %v8472, 1
        %v8520 = vpop.permute.xlu0 %8519
        %v8537 = vadd.f32 %v8441, %v8490
        %v8538 = vadd.f32 %v8442, %v8492
        %v8539 = vadd.f32 %v8443, %v8494
        %v8540 = vadd.f32 %v8444, %v8496
        %v8541 = vadd.f32 %v8445, %v8498
        %v8542 = vadd.f32 %v8446, %v8500
        %v8543 = vadd.f32 %v8447, %v8502
        %v8544 = vadd.f32 %v8448, %v8504
        %v8545 = vadd.f32 %v8449, %v8506
        %v8546 = vadd.f32 %v8450, %v8508
        %v8547 = vadd.f32 %v8451, %v8510
        %v8548 = vadd.f32 %v8452, %v8512
        %v8549 = vadd.f32 %v8453, %v8514
        %v8550 = vadd.f32 %v8454, %v8516
        %v8551 = vadd.f32 %v8455, %v8518
        %v8552 = vadd.f32 %v8456, %v8520
        %v8553 = vmul.f32 %v7321, %v5619
        %v8554 = vmul.f32 %v7322, %v5623
        %v8555 = vmul.f32 %v7323, %v5627
        %v8556 = vmul.f32 %v7324, %v5631
        %v8557 = vmul.f32 %v7325, %v5635
        %v8558 = vmul.f32 %v7326, %v5639
        %v8559 = vmul.f32 %v7327, %v5643
        %v8560 = vmul.f32 %v7328, %v5647
        %v8561 = vmul.f32 %v7329, %v5651
        %v8562 = vmul.f32 %v7330, %v5655
        %v8563 = vmul.f32 %v7331, %v5659
        %v8564 = vmul.f32 %v7332, %v5663
        %v8565 = vmul.f32 %v7333, %v5667
        %v8566 = vmul.f32 %v7334, %v5671
        %v8567 = vmul.f32 %v7335, %v5675
        %v8568 = vmul.f32 %v7336, %v5679
        %8585 = vrot.lane.b32.xlu0 %v8553, 1
        %v8586 = vpop.permute.xlu0 %8585
        %8587 = vrot.lane.b32.xlu0 %v8554, 1
        %v8588 = vpop.permute.xlu0 %8587
        %8589 = vrot.lane.b32.xlu0 %v8555, 1
        %v8590 = vpop.permute.xlu0 %8589
        %8591 = vrot.lane.b32.xlu0 %v8556, 1
        %v8592 = vpop.permute.xlu0 %8591
        %8593 = vrot.lane.b32.xlu0 %v8557, 1
        %v8594 = vpop.permute.xlu0 %8593
        %8595 = vrot.lane.b32.xlu0 %v8558, 1
        %v8596 = vpop.permute.xlu0 %8595
        %8597 = vrot.lane.b32.xlu0 %v8559, 1
        %v8598 = vpop.permute.xlu0 %8597
        %8599 = vrot.lane.b32.xlu0 %v8560, 1
        %v8600 = vpop.permute.xlu0 %8599
        %8601 = vrot.lane.b32.xlu0 %v8561, 1
        %v8602 = vpop.permute.xlu0 %8601
        %8603 = vrot.lane.b32.xlu0 %v8562, 1
        %v8604 = vpop.permute.xlu0 %8603
        %8605 = vrot.lane.b32.xlu0 %v8563, 1
        %v8606 = vpop.permute.xlu0 %8605
        %8607 = vrot.lane.b32.xlu0 %v8564, 1
        %v8608 = vpop.permute.xlu0 %8607
        %8609 = vrot.lane.b32.xlu0 %v8565, 1
        %v8610 = vpop.permute.xlu0 %8609
        %8611 = vrot.lane.b32.xlu0 %v8566, 1
        %v8612 = vpop.permute.xlu0 %8611
        %8613 = vrot.lane.b32.xlu0 %v8567, 1
        %v8614 = vpop.permute.xlu0 %8613
        %8615 = vrot.lane.b32.xlu0 %v8568, 1
        %v8616 = vpop.permute.xlu0 %8615
        %v8633 = vadd.f32 %v8537, %v8586
        %v8634 = vadd.f32 %v8538, %v8588
        %v8635 = vadd.f32 %v8539, %v8590
        %v8636 = vadd.f32 %v8540, %v8592
        %v8637 = vadd.f32 %v8541, %v8594
        %v8638 = vadd.f32 %v8542, %v8596
        %v8639 = vadd.f32 %v8543, %v8598
        %v8640 = vadd.f32 %v8544, %v8600
        %v8641 = vadd.f32 %v8545, %v8602
        %v8642 = vadd.f32 %v8546, %v8604
        %v8643 = vadd.f32 %v8547, %v8606
        %v8644 = vadd.f32 %v8548, %v8608
        %v8645 = vadd.f32 %v8549, %v8610
        %v8646 = vadd.f32 %v8550, %v8612
        %v8647 = vadd.f32 %v8551, %v8614
        %v8648 = vadd.f32 %v8552, %v8616
        %v8649 = vmul.f32 %v5748, 0.282095
        %v8650 = vmul.f32 %v5752, 0.282095
        %v8651 = vmul.f32 %v5756, 0.282095
        %v8652 = vmul.f32 %v5760, 0.282095
        %v8653 = vmul.f32 %v5764, 0.282095
        %v8654 = vmul.f32 %v5768, 0.282095
        %v8655 = vmul.f32 %v5772, 0.282095
        %v8656 = vmul.f32 %v5776, 0.282095
        %v8657 = vmul.f32 %v5780, 0.282095
        %v8658 = vmul.f32 %v5784, 0.282095
        %v8659 = vmul.f32 %v5788, 0.282095
        %v8660 = vmul.f32 %v5792, 0.282095
        %v8661 = vmul.f32 %v5796, 0.282095
        %v8662 = vmul.f32 %v5800, 0.282095
        %v8663 = vmul.f32 %v5804, 0.282095
        %v8664 = vmul.f32 %v5808, 0.282095
        %v8665 = vmul.f32 %v6857, %v5877
        %v8666 = vmul.f32 %v6858, %v5881
        %v8667 = vmul.f32 %v6859, %v5885
        %v8668 = vmul.f32 %v6860, %v5889
        %v8669 = vmul.f32 %v6861, %v5893
        %v8670 = vmul.f32 %v6862, %v5897
        %v8671 = vmul.f32 %v6863, %v5901
        %v8672 = vmul.f32 %v6864, %v5905
        %v8673 = vmul.f32 %v6865, %v5909
        %v8674 = vmul.f32 %v6866, %v5913
        %v8675 = vmul.f32 %v6867, %v5917
        %v8676 = vmul.f32 %v6868, %v5921
        %v8677 = vmul.f32 %v6869, %v5925
        %v8678 = vmul.f32 %v6870, %v5929
        %v8679 = vmul.f32 %v6871, %v5933
        %v8680 = vmul.f32 %v6872, %v5937
        %v8681 = vadd.f32 %v8649, %v8665
        %v8682 = vadd.f32 %v8650, %v8666
        %v8683 = vadd.f32 %v8651, %v8667
        %v8684 = vadd.f32 %v8652, %v8668
        %v8685 = vadd.f32 %v8653, %v8669
        %v8686 = vadd.f32 %v8654, %v8670
        %v8687 = vadd.f32 %v8655, %v8671
        %v8688 = vadd.f32 %v8656, %v8672
        %v8689 = vadd.f32 %v8657, %v8673
        %v8690 = vadd.f32 %v8658, %v8674
        %v8691 = vadd.f32 %v8659, %v8675
        %v8692 = vadd.f32 %v8660, %v8676
        %v8693 = vadd.f32 %v8661, %v8677
        %v8694 = vadd.f32 %v8662, %v8678
        %v8695 = vadd.f32 %v8663, %v8679
        %v8696 = vadd.f32 %v8664, %v8680
        %v8697 = vmul.f32 %v6873, %v6006
        %v8698 = vmul.f32 %v6874, %v6010
        %v8699 = vmul.f32 %v6875, %v6014
        %v8700 = vmul.f32 %v6876, %v6018
        %v8701 = vmul.f32 %v6877, %v6022
        %v8702 = vmul.f32 %v6878, %v6026
        %v8703 = vmul.f32 %v6879, %v6030
        %v8704 = vmul.f32 %v6880, %v6034
        %v8705 = vmul.f32 %v6881, %v6038
        %v8706 = vmul.f32 %v6882, %v6042
        %v8707 = vmul.f32 %v6883, %v6046
        %v8708 = vmul.f32 %v6884, %v6050
        %v8709 = vmul.f32 %v6885, %v6054
        %v8710 = vmul.f32 %v6886, %v6058
        %v8711 = vmul.f32 %v6887, %v6062
        %v8712 = vmul.f32 %v6888, %v6066
        %8729 = vrot.lane.b32.xlu0 %v8697, 127
        %v8730 = vpop.permute.xlu0 %8729
        %8731 = vrot.lane.b32.xlu0 %v8698, 127
        %v8732 = vpop.permute.xlu0 %8731
        %8733 = vrot.lane.b32.xlu0 %v8699, 127
        %v8734 = vpop.permute.xlu0 %8733
        %8735 = vrot.lane.b32.xlu0 %v8700, 127
        %v8736 = vpop.permute.xlu0 %8735
        %8737 = vrot.lane.b32.xlu0 %v8701, 127
        %v8738 = vpop.permute.xlu0 %8737
        %8739 = vrot.lane.b32.xlu0 %v8702, 127
        %v8740 = vpop.permute.xlu0 %8739
        %8741 = vrot.lane.b32.xlu0 %v8703, 127
        %v8742 = vpop.permute.xlu0 %8741
        %8743 = vrot.lane.b32.xlu0 %v8704, 127
        %v8744 = vpop.permute.xlu0 %8743
        %8745 = vrot.lane.b32.xlu0 %v8705, 127
        %v8746 = vpop.permute.xlu0 %8745
        %8747 = vrot.lane.b32.xlu0 %v8706, 127
        %v8748 = vpop.permute.xlu0 %8747
        %8749 = vrot.lane.b32.xlu0 %v8707, 127
        %v8750 = vpop.permute.xlu0 %8749
        %8751 = vrot.lane.b32.xlu0 %v8708, 127
        %v8752 = vpop.permute.xlu0 %8751
        %8753 = vrot.lane.b32.xlu0 %v8709, 127
        %v8754 = vpop.permute.xlu0 %8753
        %8755 = vrot.lane.b32.xlu0 %v8710, 127
        %v8756 = vpop.permute.xlu0 %8755
        %8757 = vrot.lane.b32.xlu0 %v8711, 127
        %v8758 = vpop.permute.xlu0 %8757
        %8759 = vrot.lane.b32.xlu0 %v8712, 127
        %v8760 = vpop.permute.xlu0 %8759
        %v8777 = vadd.f32 %v8681, %v8730
        %v8778 = vadd.f32 %v8682, %v8732
        %v8779 = vadd.f32 %v8683, %v8734
        %v8780 = vadd.f32 %v8684, %v8736
        %v8781 = vadd.f32 %v8685, %v8738
        %v8782 = vadd.f32 %v8686, %v8740
        %v8783 = vadd.f32 %v8687, %v8742
        %v8784 = vadd.f32 %v8688, %v8744
        %v8785 = vadd.f32 %v8689, %v8746
        %v8786 = vadd.f32 %v8690, %v8748
        %v8787 = vadd.f32 %v8691, %v8750
        %v8788 = vadd.f32 %v8692, %v8752
        %v8789 = vadd.f32 %v8693, %v8754
        %v8790 = vadd.f32 %v8694, %v8756
        %v8791 = vadd.f32 %v8695, %v8758
        %v8792 = vadd.f32 %v8696, %v8760
        %v8793 = vmul.f32 %v6857, %v6135
        %v8794 = vmul.f32 %v6858, %v6139
        %v8795 = vmul.f32 %v6859, %v6143
        %v8796 = vmul.f32 %v6860, %v6147
        %v8797 = vmul.f32 %v6861, %v6151
        %v8798 = vmul.f32 %v6862, %v6155
        %v8799 = vmul.f32 %v6863, %v6159
        %v8800 = vmul.f32 %v6864, %v6163
        %v8801 = vmul.f32 %v6865, %v6167
        %v8802 = vmul.f32 %v6866, %v6171
        %v8803 = vmul.f32 %v6867, %v6175
        %v8804 = vmul.f32 %v6868, %v6179
        %v8805 = vmul.f32 %v6869, %v6183
        %v8806 = vmul.f32 %v6870, %v6187
        %v8807 = vmul.f32 %v6871, %v6191
        %v8808 = vmul.f32 %v6872, %v6195
        %8825 = vrot.lane.b32.xlu0 %v8793, 1
        %v8826 = vpop.permute.xlu0 %8825
        %8827 = vrot.lane.b32.xlu0 %v8794, 1
        %v8828 = vpop.permute.xlu0 %8827
        %8829 = vrot.lane.b32.xlu0 %v8795, 1
        %v8830 = vpop.permute.xlu0 %8829
        %8831 = vrot.lane.b32.xlu0 %v8796, 1
        %v8832 = vpop.permute.xlu0 %8831
        %8833 = vrot.lane.b32.xlu0 %v8797, 1
        %v8834 = vpop.permute.xlu0 %8833
        %8835 = vrot.lane.b32.xlu0 %v8798, 1
        %v8836 = vpop.permute.xlu0 %8835
        %8837 = vrot.lane.b32.xlu0 %v8799, 1
        %v8838 = vpop.permute.xlu0 %8837
        %8839 = vrot.lane.b32.xlu0 %v8800, 1
        %v8840 = vpop.permute.xlu0 %8839
        %8841 = vrot.lane.b32.xlu0 %v8801, 1
        %v8842 = vpop.permute.xlu0 %8841
        %8843 = vrot.lane.b32.xlu0 %v8802, 1
        %v8844 = vpop.permute.xlu0 %8843
        %8845 = vrot.lane.b32.xlu0 %v8803, 1
        %v8846 = vpop.permute.xlu0 %8845
        %8847 = vrot.lane.b32.xlu0 %v8804, 1
        %v8848 = vpop.permute.xlu0 %8847
        %8849 = vrot.lane.b32.xlu0 %v8805, 1
        %v8850 = vpop.permute.xlu0 %8849
        %8851 = vrot.lane.b32.xlu0 %v8806, 1
        %v8852 = vpop.permute.xlu0 %8851
        %8853 = vrot.lane.b32.xlu0 %v8807, 1
        %v8854 = vpop.permute.xlu0 %8853
        %8855 = vrot.lane.b32.xlu0 %v8808, 1
        %v8856 = vpop.permute.xlu0 %8855
        %v8873 = vadd.f32 %v8777, %v8826
        %v8874 = vadd.f32 %v8778, %v8828
        %v8875 = vadd.f32 %v8779, %v8830
        %v8876 = vadd.f32 %v8780, %v8832
        %v8877 = vadd.f32 %v8781, %v8834
        %v8878 = vadd.f32 %v8782, %v8836
        %v8879 = vadd.f32 %v8783, %v8838
        %v8880 = vadd.f32 %v8784, %v8840
        %v8881 = vadd.f32 %v8785, %v8842
        %v8882 = vadd.f32 %v8786, %v8844
        %v8883 = vadd.f32 %v8787, %v8846
        %v8884 = vadd.f32 %v8788, %v8848
        %v8885 = vadd.f32 %v8789, %v8850
        %v8886 = vadd.f32 %v8790, %v8852
        %v8887 = vadd.f32 %v8791, %v8854
        %v8888 = vadd.f32 %v8792, %v8856
        %v8889 = vmul.f32 %v6969, %v6264
        %v8890 = vmul.f32 %v6970, %v6268
        %v8891 = vmul.f32 %v6971, %v6272
        %v8892 = vmul.f32 %v6972, %v6276
        %v8893 = vmul.f32 %v6973, %v6280
        %v8894 = vmul.f32 %v6974, %v6284
        %v8895 = vmul.f32 %v6975, %v6288
        %v8896 = vmul.f32 %v6976, %v6292
        %v8897 = vmul.f32 %v6977, %v6296
        %v8898 = vmul.f32 %v6978, %v6300
        %v8899 = vmul.f32 %v6979, %v6304
        %v8900 = vmul.f32 %v6980, %v6308
        %v8901 = vmul.f32 %v6981, %v6312
        %v8902 = vmul.f32 %v6982, %v6316
        %v8903 = vmul.f32 %v6983, %v6320
        %v8904 = vmul.f32 %v6984, %v6324
        %8921 = vrot.lane.b32.xlu0 %v8889, 1
        %v8922 = vpop.permute.xlu0 %8921
        %8923 = vrot.lane.b32.xlu0 %v8890, 1
        %v8924 = vpop.permute.xlu0 %8923
        %8925 = vrot.lane.b32.xlu0 %v8891, 1
        %v8926 = vpop.permute.xlu0 %8925
        %8927 = vrot.lane.b32.xlu0 %v8892, 1
        %v8928 = vpop.permute.xlu0 %8927
        %8929 = vrot.lane.b32.xlu0 %v8893, 1
        %v8930 = vpop.permute.xlu0 %8929
        %8931 = vrot.lane.b32.xlu0 %v8894, 1
        %v8932 = vpop.permute.xlu0 %8931
        %8933 = vrot.lane.b32.xlu0 %v8895, 1
        %v8934 = vpop.permute.xlu0 %8933
        %8935 = vrot.lane.b32.xlu0 %v8896, 1
        %v8936 = vpop.permute.xlu0 %8935
        %8937 = vrot.lane.b32.xlu0 %v8897, 1
        %v8938 = vpop.permute.xlu0 %8937
        %8939 = vrot.lane.b32.xlu0 %v8898, 1
        %v8940 = vpop.permute.xlu0 %8939
        %8941 = vrot.lane.b32.xlu0 %v8899, 1
        %v8942 = vpop.permute.xlu0 %8941
        %8943 = vrot.lane.b32.xlu0 %v8900, 1
        %v8944 = vpop.permute.xlu0 %8943
        %8945 = vrot.lane.b32.xlu0 %v8901, 1
        %v8946 = vpop.permute.xlu0 %8945
        %8947 = vrot.lane.b32.xlu0 %v8902, 1
        %v8948 = vpop.permute.xlu0 %8947
        %8949 = vrot.lane.b32.xlu0 %v8903, 1
        %v8950 = vpop.permute.xlu0 %8949
        %8951 = vrot.lane.b32.xlu0 %v8904, 1
        %v8952 = vpop.permute.xlu0 %8951
        %v8969 = vadd.f32 %v8873, %v8922
        %v8970 = vadd.f32 %v8874, %v8924
        %v8971 = vadd.f32 %v8875, %v8926
        %v8972 = vadd.f32 %v8876, %v8928
        %v8973 = vadd.f32 %v8877, %v8930
        %v8974 = vadd.f32 %v8878, %v8932
        %v8975 = vadd.f32 %v8879, %v8934
        %v8976 = vadd.f32 %v8880, %v8936
        %v8977 = vadd.f32 %v8881, %v8938
        %v8978 = vadd.f32 %v8882, %v8940
        %v8979 = vadd.f32 %v8883, %v8942
        %v8980 = vadd.f32 %v8884, %v8944
        %v8981 = vadd.f32 %v8885, %v8946
        %v8982 = vadd.f32 %v8886, %v8948
        %v8983 = vadd.f32 %v8887, %v8950
        %v8984 = vadd.f32 %v8888, %v8952
        %v8985 = vmul.f32 %v6985, %v6393
        %v8986 = vmul.f32 %v6986, %v6397
        %v8987 = vmul.f32 %v6987, %v6401
        %v8988 = vmul.f32 %v6988, %v6405
        %v8989 = vmul.f32 %v6989, %v6409
        %v8990 = vmul.f32 %v6990, %v6413
        %v8991 = vmul.f32 %v6991, %v6417
        %v8992 = vmul.f32 %v6992, %v6421
        %v8993 = vmul.f32 %v6993, %v6425
        %v8994 = vmul.f32 %v6994, %v6429
        %v8995 = vmul.f32 %v6995, %v6433
        %v8996 = vmul.f32 %v6996, %v6437
        %v8997 = vmul.f32 %v6997, %v6441
        %v8998 = vmul.f32 %v6998, %v6445
        %v8999 = vmul.f32 %v6999, %v6449
        %v9000 = vmul.f32 %v7000, %v6453
        %v9001 = vadd.f32 %v8969, %v8985
        %v9002 = vadd.f32 %v8970, %v8986
        %v9003 = vadd.f32 %v8971, %v8987
        %v9004 = vadd.f32 %v8972, %v8988
        %v9005 = vadd.f32 %v8973, %v8989
        %v9006 = vadd.f32 %v8974, %v8990
        %v9007 = vadd.f32 %v8975, %v8991
        %v9008 = vadd.f32 %v8976, %v8992
        %v9009 = vadd.f32 %v8977, %v8993
        %v9010 = vadd.f32 %v8978, %v8994
        %v9011 = vadd.f32 %v8979, %v8995
        %v9012 = vadd.f32 %v8980, %v8996
        %v9013 = vadd.f32 %v8981, %v8997
        %v9014 = vadd.f32 %v8982, %v8998
        %v9015 = vadd.f32 %v8983, %v8999
        %v9016 = vadd.f32 %v8984, %v9000
        %v9017 = vmul.f32 %v7161, %v6522
        %v9018 = vmul.f32 %v7162, %v6526
        %v9019 = vmul.f32 %v7163, %v6530
        %v9020 = vmul.f32 %v7164, %v6534
        %v9021 = vmul.f32 %v7165, %v6538
        %v9022 = vmul.f32 %v7166, %v6542
        %v9023 = vmul.f32 %v7167, %v6546
        %v9024 = vmul.f32 %v7168, %v6550
        %v9025 = vmul.f32 %v7169, %v6554
        %v9026 = vmul.f32 %v7170, %v6558
        %v9027 = vmul.f32 %v7171, %v6562
        %v9028 = vmul.f32 %v7172, %v6566
        %v9029 = vmul.f32 %v7173, %v6570
        %v9030 = vmul.f32 %v7174, %v6574
        %v9031 = vmul.f32 %v7175, %v6578
        %v9032 = vmul.f32 %v7176, %v6582
        %9049 = vrot.lane.b32.xlu0 %v9017, 127
        %v9050 = vpop.permute.xlu0 %9049
        %9051 = vrot.lane.b32.xlu0 %v9018, 127
        %v9052 = vpop.permute.xlu0 %9051
        %9053 = vrot.lane.b32.xlu0 %v9019, 127
        %v9054 = vpop.permute.xlu0 %9053
        %9055 = vrot.lane.b32.xlu0 %v9020, 127
        %v9056 = vpop.permute.xlu0 %9055
        %9057 = vrot.lane.b32.xlu0 %v9021, 127
        %v9058 = vpop.permute.xlu0 %9057
        %9059 = vrot.lane.b32.xlu0 %v9022, 127
        %v9060 = vpop.permute.xlu0 %9059
        %9061 = vrot.lane.b32.xlu0 %v9023, 127
        %v9062 = vpop.permute.xlu0 %9061
        %9063 = vrot.lane.b32.xlu0 %v9024, 127
        %v9064 = vpop.permute.xlu0 %9063
        %9065 = vrot.lane.b32.xlu0 %v9025, 127
        %v9066 = vpop.permute.xlu0 %9065
        %9067 = vrot.lane.b32.xlu0 %v9026, 127
        %v9068 = vpop.permute.xlu0 %9067
        %9069 = vrot.lane.b32.xlu0 %v9027, 127
        %v9070 = vpop.permute.xlu0 %9069
        %9071 = vrot.lane.b32.xlu0 %v9028, 127
        %v9072 = vpop.permute.xlu0 %9071
        %9073 = vrot.lane.b32.xlu0 %v9029, 127
        %v9074 = vpop.permute.xlu0 %9073
        %9075 = vrot.lane.b32.xlu0 %v9030, 127
        %v9076 = vpop.permute.xlu0 %9075
        %9077 = vrot.lane.b32.xlu0 %v9031, 127
        %v9078 = vpop.permute.xlu0 %9077
        %9079 = vrot.lane.b32.xlu0 %v9032, 127
        %v9080 = vpop.permute.xlu0 %9079
        %v9097 = vadd.f32 %v9001, %v9050
        %v9098 = vadd.f32 %v9002, %v9052
        %v9099 = vadd.f32 %v9003, %v9054
        %v9100 = vadd.f32 %v9004, %v9056
        %v9101 = vadd.f32 %v9005, %v9058
        %v9102 = vadd.f32 %v9006, %v9060
        %v9103 = vadd.f32 %v9007, %v9062
        %v9104 = vadd.f32 %v9008, %v9064
        %v9105 = vadd.f32 %v9009, %v9066
        %v9106 = vadd.f32 %v9010, %v9068
        %v9107 = vadd.f32 %v9011, %v9070
        %v9108 = vadd.f32 %v9012, %v9072
        %v9109 = vadd.f32 %v9013, %v9074
        %v9110 = vadd.f32 %v9014, %v9076
        %v9111 = vadd.f32 %v9015, %v9078
        %v9112 = vadd.f32 %v9016, %v9080
        %v9113 = vmul.f32 %v7241, %v6651
        %v9114 = vmul.f32 %v7242, %v6655
        %v9115 = vmul.f32 %v7243, %v6659
        %v9116 = vmul.f32 %v7244, %v6663
        %v9117 = vmul.f32 %v7245, %v6667
        %v9118 = vmul.f32 %v7246, %v6671
        %v9119 = vmul.f32 %v7247, %v6675
        %v9120 = vmul.f32 %v7248, %v6679
        %v9121 = vmul.f32 %v7249, %v6683
        %v9122 = vmul.f32 %v7250, %v6687
        %v9123 = vmul.f32 %v7251, %v6691
        %v9124 = vmul.f32 %v7252, %v6695
        %v9125 = vmul.f32 %v7253, %v6699
        %v9126 = vmul.f32 %v7254, %v6703
        %v9127 = vmul.f32 %v7255, %v6707
        %v9128 = vmul.f32 %v7256, %v6711
        %9145 = vrot.lane.b32.xlu0 %v9113, 1
        %v9146 = vpop.permute.xlu0 %9145
        %9147 = vrot.lane.b32.xlu0 %v9114, 1
        %v9148 = vpop.permute.xlu0 %9147
        %9149 = vrot.lane.b32.xlu0 %v9115, 1
        %v9150 = vpop.permute.xlu0 %9149
        %9151 = vrot.lane.b32.xlu0 %v9116, 1
        %v9152 = vpop.permute.xlu0 %9151
        %9153 = vrot.lane.b32.xlu0 %v9117, 1
        %v9154 = vpop.permute.xlu0 %9153
        %9155 = vrot.lane.b32.xlu0 %v9118, 1
        %v9156 = vpop.permute.xlu0 %9155
        %9157 = vrot.lane.b32.xlu0 %v9119, 1
        %v9158 = vpop.permute.xlu0 %9157
        %9159 = vrot.lane.b32.xlu0 %v9120, 1
        %v9160 = vpop.permute.xlu0 %9159
        %9161 = vrot.lane.b32.xlu0 %v9121, 1
        %v9162 = vpop.permute.xlu0 %9161
        %9163 = vrot.lane.b32.xlu0 %v9122, 1
        %v9164 = vpop.permute.xlu0 %9163
        %9165 = vrot.lane.b32.xlu0 %v9123, 1
        %v9166 = vpop.permute.xlu0 %9165
        %9167 = vrot.lane.b32.xlu0 %v9124, 1
        %v9168 = vpop.permute.xlu0 %9167
        %9169 = vrot.lane.b32.xlu0 %v9125, 1
        %v9170 = vpop.permute.xlu0 %9169
        %9171 = vrot.lane.b32.xlu0 %v9126, 1
        %v9172 = vpop.permute.xlu0 %9171
        %9173 = vrot.lane.b32.xlu0 %v9127, 1
        %v9174 = vpop.permute.xlu0 %9173
        %9175 = vrot.lane.b32.xlu0 %v9128, 1
        %v9176 = vpop.permute.xlu0 %9175
        %v9193 = vadd.f32 %v9097, %v9146
        %v9194 = vadd.f32 %v9098, %v9148
        %v9195 = vadd.f32 %v9099, %v9150
        %v9196 = vadd.f32 %v9100, %v9152
        %v9197 = vadd.f32 %v9101, %v9154
        %v9198 = vadd.f32 %v9102, %v9156
        %v9199 = vadd.f32 %v9103, %v9158
        %v9200 = vadd.f32 %v9104, %v9160
        %v9201 = vadd.f32 %v9105, %v9162
        %v9202 = vadd.f32 %v9106, %v9164
        %v9203 = vadd.f32 %v9107, %v9166
        %v9204 = vadd.f32 %v9108, %v9168
        %v9205 = vadd.f32 %v9109, %v9170
        %v9206 = vadd.f32 %v9110, %v9172
        %v9207 = vadd.f32 %v9111, %v9174
        %v9208 = vadd.f32 %v9112, %v9176
        %v9209 = vmul.f32 %v7321, %v6780
        %v9210 = vmul.f32 %v7322, %v6784
        %v9211 = vmul.f32 %v7323, %v6788
        %v9212 = vmul.f32 %v7324, %v6792
        %v9213 = vmul.f32 %v7325, %v6796
        %v9214 = vmul.f32 %v7326, %v6800
        %v9215 = vmul.f32 %v7327, %v6804
        %v9216 = vmul.f32 %v7328, %v6808
        %v9217 = vmul.f32 %v7329, %v6812
        %v9218 = vmul.f32 %v7330, %v6816
        %v9219 = vmul.f32 %v7331, %v6820
        %v9220 = vmul.f32 %v7332, %v6824
        %v9221 = vmul.f32 %v7333, %v6828
        %v9222 = vmul.f32 %v7334, %v6832
        %v9223 = vmul.f32 %v7335, %v6836
        %v9224 = vmul.f32 %v7336, %v6840
        %9241 = vrot.lane.b32.xlu0 %v9209, 1
        %v9242 = vpop.permute.xlu0 %9241
        %9243 = vrot.lane.b32.xlu0 %v9210, 1
        %v9244 = vpop.permute.xlu0 %9243
        %9245 = vrot.lane.b32.xlu0 %v9211, 1
        %v9246 = vpop.permute.xlu0 %9245
        %9247 = vrot.lane.b32.xlu0 %v9212, 1
        %v9248 = vpop.permute.xlu0 %9247
        %9249 = vrot.lane.b32.xlu0 %v9213, 1
        %v9250 = vpop.permute.xlu0 %9249
        %9251 = vrot.lane.b32.xlu0 %v9214, 1
        %v9252 = vpop.permute.xlu0 %9251
        %9253 = vrot.lane.b32.xlu0 %v9215, 1
        %v9254 = vpop.permute.xlu0 %9253
        %9255 = vrot.lane.b32.xlu0 %v9216, 1
        %v9256 = vpop.permute.xlu0 %9255
        %9257 = vrot.lane.b32.xlu0 %v9217, 1
        %v9258 = vpop.permute.xlu0 %9257
        %9259 = vrot.lane.b32.xlu0 %v9218, 1
        %v9260 = vpop.permute.xlu0 %9259
        %9261 = vrot.lane.b32.xlu0 %v9219, 1
        %v9262 = vpop.permute.xlu0 %9261
        %9263 = vrot.lane.b32.xlu0 %v9220, 1
        %v9264 = vpop.permute.xlu0 %9263
        %9265 = vrot.lane.b32.xlu0 %v9221, 1
        %v9266 = vpop.permute.xlu0 %9265
        %9267 = vrot.lane.b32.xlu0 %v9222, 1
        %v9268 = vpop.permute.xlu0 %9267
        %9269 = vrot.lane.b32.xlu0 %v9223, 1
        %v9270 = vpop.permute.xlu0 %9269
        %9271 = vrot.lane.b32.xlu0 %v9224, 1
        %v9272 = vpop.permute.xlu0 %9271
        %v9289 = vadd.f32 %v9193, %v9242
        %v9290 = vadd.f32 %v9194, %v9244
        %v9291 = vadd.f32 %v9195, %v9246
        %v9292 = vadd.f32 %v9196, %v9248
        %v9293 = vadd.f32 %v9197, %v9250
        %v9294 = vadd.f32 %v9198, %v9252
        %v9295 = vadd.f32 %v9199, %v9254
        %v9296 = vadd.f32 %v9200, %v9256
        %v9297 = vadd.f32 %v9201, %v9258
        %v9298 = vadd.f32 %v9202, %v9260
        %v9299 = vadd.f32 %v9203, %v9262
        %v9300 = vadd.f32 %v9204, %v9264
        %v9301 = vadd.f32 %v9205, %v9266
        %v9302 = vadd.f32 %v9206, %v9268
        %v9303 = vadd.f32 %v9207, %v9270
        %v9304 = vadd.f32 %v9208, %v9272
        %9321 = vrot.lane.b32.xlu0 %v7977, 127
        %v9322 = vpop.permute.xlu0 %9321
        %9323 = vrot.lane.b32.xlu0 %v7978, 127
        %v9324 = vpop.permute.xlu0 %9323
        %9325 = vrot.lane.b32.xlu0 %v7979, 127
        %v9326 = vpop.permute.xlu0 %9325
        %9327 = vrot.lane.b32.xlu0 %v7980, 127
        %v9328 = vpop.permute.xlu0 %9327
        %9329 = vrot.lane.b32.xlu0 %v7981, 127
        %v9330 = vpop.permute.xlu0 %9329
        %9331 = vrot.lane.b32.xlu0 %v7982, 127
        %v9332 = vpop.permute.xlu0 %9331
        %9333 = vrot.lane.b32.xlu0 %v7983, 127
        %v9334 = vpop.permute.xlu0 %9333
        %9335 = vrot.lane.b32.xlu0 %v7984, 127
        %v9336 = vpop.permute.xlu0 %9335
        %9337 = vrot.lane.b32.xlu0 %v7985, 127
        %v9338 = vpop.permute.xlu0 %9337
        %9339 = vrot.lane.b32.xlu0 %v7986, 127
        %v9340 = vpop.permute.xlu0 %9339
        %9341 = vrot.lane.b32.xlu0 %v7987, 127
        %v9342 = vpop.permute.xlu0 %9341
        %9343 = vrot.lane.b32.xlu0 %v7988, 127
        %v9344 = vpop.permute.xlu0 %9343
        %9345 = vrot.lane.b32.xlu0 %v7989, 127
        %v9346 = vpop.permute.xlu0 %9345
        %9347 = vrot.lane.b32.xlu0 %v7990, 127
        %v9348 = vpop.permute.xlu0 %9347
        %9349 = vrot.lane.b32.xlu0 %v7991, 127
        %v9350 = vpop.permute.xlu0 %9349
        %9351 = vrot.lane.b32.xlu0 %v7992, 127
        %v9352 = vpop.permute.xlu0 %9351
        %9385 = vrot.lane.b32.xlu0 %v9289, 1
        %v9386 = vpop.permute.xlu0 %9385
        %9387 = vrot.lane.b32.xlu0 %v9290, 1
        %v9388 = vpop.permute.xlu0 %9387
        %9389 = vrot.lane.b32.xlu0 %v9291, 1
        %v9390 = vpop.permute.xlu0 %9389
        %9391 = vrot.lane.b32.xlu0 %v9292, 1
        %v9392 = vpop.permute.xlu0 %9391
        %9393 = vrot.lane.b32.xlu0 %v9293, 1
        %v9394 = vpop.permute.xlu0 %9393
        %9395 = vrot.lane.b32.xlu0 %v9294, 1
        %v9396 = vpop.permute.xlu0 %9395
        %9397 = vrot.lane.b32.xlu0 %v9295, 1
        %v9398 = vpop.permute.xlu0 %9397
        %9399 = vrot.lane.b32.xlu0 %v9296, 1
        %v9400 = vpop.permute.xlu0 %9399
        %9401 = vrot.lane.b32.xlu0 %v9297, 1
        %v9402 = vpop.permute.xlu0 %9401
        %9403 = vrot.lane.b32.xlu0 %v9298, 1
        %v9404 = vpop.permute.xlu0 %9403
        %9405 = vrot.lane.b32.xlu0 %v9299, 1
        %v9406 = vpop.permute.xlu0 %9405
        %9407 = vrot.lane.b32.xlu0 %v9300, 1
        %v9408 = vpop.permute.xlu0 %9407
        %9409 = vrot.lane.b32.xlu0 %v9301, 1
        %v9410 = vpop.permute.xlu0 %9409
        %9411 = vrot.lane.b32.xlu0 %v9302, 1
        %v9412 = vpop.permute.xlu0 %9411
        %9413 = vrot.lane.b32.xlu0 %v9303, 1
        %v9414 = vpop.permute.xlu0 %9413
        %9415 = vrot.lane.b32.xlu0 %v9304, 1
        %v9416 = vpop.permute.xlu0 %9415
        %vm9433 = vcmask 7168
        %v9434 = vsel %vm9433, %v9322, %v8633
        %v9435 = vsel %vm9433, %v9324, %v8634
        %v9436 = vsel %vm9433, %v9326, %v8635
        %v9437 = vsel %vm9433, %v9328, %v8636
        %v9438 = vsel %vm9433, %v9330, %v8637
        %v9439 = vsel %vm9433, %v9332, %v8638
        %v9440 = vsel %vm9433, %v9334, %v8639
        %v9441 = vsel %vm9433, %v9336, %v8640
        %v9442 = vsel %vm9433, %v9338, %v8641
        %v9443 = vsel %vm9433, %v9340, %v8642
        %v9444 = vsel %vm9433, %v9342, %v8643
        %v9445 = vsel %vm9433, %v9344, %v8644
        %v9446 = vsel %vm9433, %v9346, %v8645
        %v9447 = vsel %vm9433, %v9348, %v8646
        %v9448 = vsel %vm9433, %v9350, %v8647
        %v9449 = vsel %vm9433, %v9352, %v8648
        %vm9450 = vcmask 15360
        %v9451 = vsel %vm9450, %v9434, %v9386
        %v9452 = vsel %vm9450, %v9435, %v9388
        %v9453 = vsel %vm9450, %v9436, %v9390
        %v9454 = vsel %vm9450, %v9437, %v9392
        %v9455 = vsel %vm9450, %v9438, %v9394
        %v9456 = vsel %vm9450, %v9439, %v9396
        %v9457 = vsel %vm9450, %v9440, %v9398
        %v9458 = vsel %vm9450, %v9441, %v9400
        %v9459 = vsel %vm9450, %v9442, %v9402
        %v9460 = vsel %vm9450, %v9443, %v9404
        %v9461 = vsel %vm9450, %v9444, %v9406
        %v9462 = vsel %vm9450, %v9445, %v9408
        %v9463 = vsel %vm9450, %v9446, %v9410
        %v9464 = vsel %vm9450, %v9447, %v9412
        %v9465 = vsel %vm9450, %v9448, %v9414
        %v9466 = vsel %vm9450, %v9449, %v9416
        %v9467 = vadd.f32 %v9451, 1.0
        %v9468 = vadd.f32 %v9452, 1.0
        %v9469 = vadd.f32 %v9453, 1.0
        %v9470 = vadd.f32 %v9454, 1.0
        %v9471 = vadd.f32 %v9455, 1.0
        %v9472 = vadd.f32 %v9456, 1.0
        %v9473 = vadd.f32 %v9457, 1.0
        %v9474 = vadd.f32 %v9458, 1.0
        %v9475 = vadd.f32 %v9459, 1.0
        %v9476 = vadd.f32 %v9460, 1.0
        %v9477 = vadd.f32 %v9461, 1.0
        %v9478 = vadd.f32 %v9462, 1.0
        %v9479 = vadd.f32 %v9463, 1.0
        %v9480 = vadd.f32 %v9464, 1.0
        %v9481 = vadd.f32 %v9465, 1.0
        %v9482 = vadd.f32 %v9466, 1.0
        %v9483 = vsub.f32 %v9467, %v3298
        %v9484 = vsub.f32 %v9468, %v3302
        %v9485 = vsub.f32 %v9469, %v3306
        %v9486 = vsub.f32 %v9470, %v3310
        %v9487 = vsub.f32 %v9471, %v3314
        %v9488 = vsub.f32 %v9472, %v3318
        %v9489 = vsub.f32 %v9473, %v3322
        %v9490 = vsub.f32 %v9474, %v3326
        %v9491 = vsub.f32 %v9475, %v3330
        %v9492 = vsub.f32 %v9476, %v3334
        %v9493 = vsub.f32 %v9477, %v3338
        %v9494 = vsub.f32 %v9478, %v3342
        %v9495 = vsub.f32 %v9479, %v3346
        %v9496 = vsub.f32 %v9480, %v3350
        %v9497 = vsub.f32 %v9481, %v3354
        %v9498 = vsub.f32 %v9482, %v3358
        %vm9499 = vcmask 23552
        %9500 = vst.msk [vmem:[%s2112] sm:$0xff] %vm9499, %v9483
        %9501 = vst.msk [vmem:[%s2112 + $0x8] sm:$0xff] %vm9499, %v9484
        %9502 = vst.msk [vmem:[%s2112 + $0x10] sm:$0xff] %vm9499, %v9485
        %9503 = vst.msk [vmem:[%s2112 + $0x18] sm:$0xff] %vm9499, %v9486
        %9504 = vst.msk [vmem:[%s2112 + $0x20] sm:$0xff] %vm9499, %v9487
        %9505 = vst.msk [vmem:[%s2112 + $0x28] sm:$0xff] %vm9499, %v9488
        %9506 = vst.msk [vmem:[%s2112 + $0x30] sm:$0xff] %vm9499, %v9489
        %9507 = vst.msk [vmem:[%s2112 + $0x38] sm:$0xff] %vm9499, %v9490
        %9508 = vst.msk [vmem:[%s2112 + $0x40] sm:$0xff] %vm9499, %v9491
        %9509 = vst.msk [vmem:[%s2112 + $0x48] sm:$0xff] %vm9499, %v9492
        %9510 = vst.msk [vmem:[%s2112 + $0x50] sm:$0xff] %vm9499, %v9493
        %9511 = vst.msk [vmem:[%s2112 + $0x58] sm:$0xff] %vm9499, %v9494
        %9512 = vst.msk [vmem:[%s2112 + $0x60] sm:$0xff] %vm9499, %v9495
        %9513 = vst.msk [vmem:[%s2112 + $0x68] sm:$0xff] %vm9499, %v9496
        %9514 = vst.msk [vmem:[%s2112 + $0x70] sm:$0xff] %vm9499, %v9497
        %9515 = vst.msk [vmem:[%s2112 + $0x78] sm:$0xff] %vm9499, %v9498
        %s9516 = smul.u32 16, %s19
        %p9517 = scmp.lt.s32.totalorder %s9516, 31
        %s9518 = scalar_select %p9517, %s9516, 31
        %s9519 = smul.addr %s9518, 8
        %s9520 = scalar_lea.vmem %s7, %s9519
        // Predicated region
        $region76: #{sdf_to_nerf_forward.3} parent=66 // pred_check
          %p9521 = pneg %p204
        $region77: #{sdf_to_nerf_forward.3} parent=66 // pred_check_branch
          %9523 = sbr.rel (%p9521) target = $region79
        $region78: #{sdf_to_nerf_forward.3} parent=66 // pred_region
          %s9524 = smul.u32 16, %s19
        $region79: #{sdf_to_nerf_forward.3} parent=66 // pred_fallthru
          _
      $region67: #{sdf_to_nerf_forward.3} parent=5 // pred_fallthru
        _
      %p9525 = scmp.le.s32.totalorder 2, %s14
      // Predicated region
      $region80: #{sdf_to_nerf_forward.3} parent=5 // pred_check
        %p9526 = pneg %p9525
      $region81: #{sdf_to_nerf_forward.3} parent=5 // pred_check_branch
        %9528 = sbr.rel (%p9526) target = $region83
      $region82: #{sdf_to_nerf_forward.3} parent=5 // pred_region
        %s9529 = ssub.s32 %s14, 2
        // Predicated region
        $region84: #{sdf_to_nerf_forward.3} parent=82 // pred_check
          %p9530 = pneg %p210
        $region85: #{sdf_to_nerf_forward.3} parent=82 // pred_check_branch
          %9532 = sbr.rel (%p9530) target = $region87
        $region86: #{sdf_to_nerf_forward.3} parent=82 // pred_region
          %s9533 = smul.u32 16, %s20
          %p9534 = scmp.lt.s32.totalorder %s9533, 31
          %s9535 = scalar_select %p9534, %s9533, 31
          %s9536 = smul.addr %s9535, 8
          %s9537 = scalar_lea.vmem %s7, %s9536
        $region87: #{sdf_to_nerf_forward.3} parent=82 // pred_fallthru
          _
      $region83: #{sdf_to_nerf_forward.3} parent=5 // pred_fallthru
        _
    $region6: #{sdf_to_nerf_forward.3} parent=1 // loop_footer
      %s18 = sadd.s32 1, %s14
    $region7: #{sdf_to_nerf_forward.3} parent=1 // loop_footer_branch
      %13 = sbr.rel target = $region3
    $region8: #{sdf_to_nerf_forward.3} parent=1 // loop_exit
      _
    %9538 = vsyncpa [#allocation3], 1
    %s9539 = scalar_lea.sflag [#allocation3], 1
    %9540 = vsyncpa %s9539, 1

</llo_original>
